<compile_context>
chip_gen: v5e
topology: v5e:2x2
jax: 0.10.0
libtpu: 0.0.40
codegen_flags: <defaults>
</compile_context>

<pallas_src>
import jax
import jax.numpy as jnp
from jax import lax
from jax.experimental import pallas as pl
from jax.experimental.pallas import tpu as pltpu

_BN_EPS = 1e-5


# ------------------------------ Pallas kernels ------------------------------

def _l1_matmul_bn_relu_kernel(x_ref, w_ref, g_ref, b_ref, o_ref):
    """(N, Ci) @ (Ci, HW*Co) matmul with fused BatchNorm (batch stats) + ReLU.

    Output columns are ordered (spatial position, channel); per-channel stats
    are accumulated over the HW lane-groups of width Co (all 128-aligned).
    """
    n = o_ref.shape[0]
    co = g_ref.shape[1]
    hw = o_ref.shape[1] // co
    cnt = float(n * hw)

    o_ref[...] = jnp.dot(x_ref[...], w_ref[...],
                         preferred_element_type=jnp.float32)

    s = jnp.zeros((1, co), jnp.float32)
    for q in range(hw):
        s = s + jnp.sum(o_ref[:, q * co:(q + 1) * co], axis=0, keepdims=True)
    mean = s / cnt

    ss = jnp.zeros((1, co), jnp.float32)
    for q in range(hw):
        d = o_ref[:, q * co:(q + 1) * co] - mean
        ss = ss + jnp.sum(d * d, axis=0, keepdims=True)
    var = ss / cnt                  # biased variance (PyTorch normalization)

    scale = g_ref[...] * lax.rsqrt(var + _BN_EPS)
    shift = b_ref[...] - mean * scale
    for q in range(hw):
        blk = o_ref[:, q * co:(q + 1) * co]
        o_ref[:, q * co:(q + 1) * co] = jnp.maximum(blk * scale + shift, 0.0)


def _convt_bn_relu_kernel(a_ref, b_ref, g_ref, bt_ref, o_ref):
    """Per-phase matmul into a resident output block; BatchNorm over all
    phases (i.e. over N,H,W) + ReLU fused in the last grid step."""
    nph, m, co = o_ref.shape
    p = pl.program_id(0)

    o_ref[p] = jnp.dot(a_ref[0], b_ref[0], preferred_element_type=jnp.float32)

    @pl.when(p == nph - 1)
    def _():
        cnt = float(nph * m)
        s = jnp.zeros((1, co), jnp.float32)
        for q in range(nph):
            s = s + jnp.sum(o_ref[q], axis=0, keepdims=True)
        mean = s / cnt
        ss = jnp.zeros((1, co), jnp.float32)
        for q in range(nph):
            d = o_ref[q] - mean
            ss = ss + jnp.sum(d * d, axis=0, keepdims=True)
        var = ss / cnt
        scale = g_ref[...] * lax.rsqrt(var + _BN_EPS)
        shift = bt_ref[...] - mean * scale
        for q in range(nph):
            o_ref[q] = jnp.maximum(o_ref[q] * scale + shift, 0.0)


def _convt_tanh_kernel(a_ref, b_ref, o_ref):
    """Per-phase matmul with tanh fused in the epilogue (EUP, ~free)."""
    y = jnp.dot(a_ref[0], b_ref[0], preferred_element_type=jnp.float32)
    o_ref[0] = jnp.tanh(y)


# ----------------------------- pallas_call wrappers --------------------------

def _l1_call(x2d, w2d, gamma, beta):
    n, k = x2d.shape
    kn = w2d.shape[1]
    co = gamma.shape[1]
    return pl.pallas_call(
        _l1_matmul_bn_relu_kernel,
        out_shape=jax.ShapeDtypeStruct((n, kn), jnp.float32),
        grid=(1,),
        in_specs=[pl.BlockSpec((n, k), lambda i: (0, 0)),
                  pl.BlockSpec((k, kn), lambda i: (0, 0)),
                  pl.BlockSpec((1, co), lambda i: (0, 0)),
                  pl.BlockSpec((1, co), lambda i: (0, 0))],
        out_specs=pl.BlockSpec((n, kn), lambda i: (0, 0)),
    )(x2d, w2d, gamma, beta)


def _convt_bn_relu_call(a, b, gamma, beta):
    nph, m, k = a.shape
    co = b.shape[2]
    return pl.pallas_call(
        _convt_bn_relu_kernel,
        out_shape=jax.ShapeDtypeStruct((nph, m, co), jnp.float32),
        grid=(nph,),
        in_specs=[pl.BlockSpec((1, m, k), lambda p: (p, 0, 0)),
                  pl.BlockSpec((1, k, co), lambda p: (p, 0, 0)),
                  pl.BlockSpec((1, co), lambda p: (0, 0)),
                  pl.BlockSpec((1, co), lambda p: (0, 0))],
        out_specs=pl.BlockSpec((nph, m, co), lambda p: (0, 0, 0)),
        compiler_params=pltpu.CompilerParams(
            dimension_semantics=("arbitrary",)),
    )(a, b, gamma, beta)


def _convt_tanh_call(a, b):
    nph, m, k = a.shape
    co = b.shape[2]
    return pl.pallas_call(
        _convt_tanh_kernel,
        out_shape=jax.ShapeDtypeStruct((nph, m, co), jnp.float32),
        grid=(nph,),
        in_specs=[pl.BlockSpec((1, m, k), lambda p: (p, 0, 0)),
                  pl.BlockSpec((1, k, co), lambda p: (p, 0, 0))],
        out_specs=pl.BlockSpec((1, m, co), lambda p: (p, 0, 0)),
        compiler_params=pltpu.CompilerParams(
            dimension_semantics=("parallel",)),
    )(a, b)


# --------------------------------- glue --------------------------------------

def _subpixel_operands(x_nhwc, w):
    """Operands for ConvTranspose2d(k=4, s=2, p=1, bias=False), sub-pixel form.

    Returns A: (4, N*H*W, 4*Ci) bf16 and B: (4, 4*Ci, Co) bf16 such that phase
    p = py*2+px (parity of output row / column) of the output is A[p] @ B[p].
    """
    n, h, wd, ci = x_nhwc.shape
    xp = jnp.pad(x_nhwc, ((0, 0), (1, 1), (1, 1), (0, 0)))
    a_phases, b_phases = [], []
    for py in range(2):
        for px in range(2):
            taps, wsub = [], []
            for dy in range(2):
                for dx in range(2):
                    win = xp[:, py + dy:py + dy + h, px + dx:px + dx + wd, :]
                    taps.append(win.reshape(n * h * wd, ci))
                    wsub.append(w[:, :, 3 - py - 2 * dy, 3 - px - 2 * dx])
            a_phases.append(jnp.concatenate(taps, axis=1))
            b_phases.append(jnp.concatenate(wsub, axis=0))
    a = jnp.stack(a_phases).astype(jnp.bfloat16)
    b = jnp.stack(b_phases).astype(jnp.bfloat16)
    return a, b


def _interleave_phases(y, n, h, w):
    """(4, N*H*W, Co) phase-major -> (N, 2H, 2W, Co) NHWC."""
    co = y.shape[-1]
    y = y.reshape(2, 2, n, h, w, co)          # (py, px, n, m, l, co)
    y = y.transpose(2, 3, 0, 4, 1, 5)         # (n, m, py, l, px, co)
    return y.reshape(n, 2 * h, 2 * w, co)


# ------------------------------- Generator -----------------------------------

def generator_forward(x, params):
    # TODO(synk): BatchNorm running-stat buffers (eval mode) are not modeled;
    # batch statistics are used, matching the module's default training mode.
    n, latent = x.shape[0], x.shape[1]
    co1 = params["g1"].shape[0]               # 256
    co2 = params["g2"].shape[0]               # 128
    img_c = params["w3"].shape[1]             # image channels

    # Layer 1: ConvTranspose2d(latent, 256, 7, 1, 0) on 1x1 input == matmul.
    w1 = params["w1"]
    k1 = w1.shape[2]                          # 7
    x2d = x.reshape(n, latent).astype(jnp.bfloat16)
    b1 = w1.transpose(0, 2, 3, 1).reshape(latent, k1 * k1 * co1)
    y1 = _l1_call(x2d, b1.astype(jnp.bfloat16),
                  params["g1"].reshape(1, co1), params["b1"].reshape(1, co1))
    h1 = y1.reshape(n, k1, k1, co1)           # NHWC (free row-major reshape)

    # Layer 2: ConvTranspose2d(256, 128, 4, 2, 1) + BN + ReLU (fused).
    a2, b2 = _subpixel_operands(h1, params["w2"])
    y2 = _convt_bn_relu_call(a2, b2,
                             params["g2"].reshape(1, co2),
                             params["b2"].reshape(1, co2))
    h2 = _interleave_phases(y2, n, h1.shape[1], h1.shape[2])   # (N,14,14,128)

    # Layer 3: ConvTranspose2d(128, img_c, 4, 2, 1) + Tanh, Co padded to 128.
    co_pad = 128
    w3p = jnp.pad(params["w3"], ((0, 0), (0, co_pad - img_c), (0, 0), (0, 0)))
    a3, b3 = _subpixel_operands(h2, w3p)
    y3 = _convt_tanh_call(a3, b3)
    h3 = _interleave_phases(y3, n, h2.shape[1], h2.shape[2])[..., :img_c]
    return h3.transpose(0, 3, 1, 2)           # NCHW, like the PyTorch module


def init_params(key, latent_dim, img_channels):
    k1, k2, k3, k4, k5 = jax.random.split(key, 5)
    return {
        # ConvTranspose2d weights in PyTorch layout (in_ch, out_ch, kH, kW)
        "w1": 0.05 * jax.random.normal(k1, (latent_dim, 256, 7, 7), jnp.float32),
        "w2": 0.05 * jax.random.normal(k2, (256, 128, 4, 4), jnp.float32),
        "w3": 0.05 * jax.random.normal(k3, (128, img_channels, 4, 4), jnp.float32),
        # BatchNorm affine params
        "g1": 1.0 + 0.1 * jax.random.normal(k4, (256,), jnp.float32),
        "b1": jnp.zeros((256,), jnp.float32),
        "g2": 1.0 + 0.1 * jax.random.normal(k5, (128,), jnp.float32),
        "b2": jnp.zeros((128,), jnp.float32),
    }


if __name__ == "__main__":
    latent_dim, img_channels, batch = 16, 3, 2
    key = jax.random.PRNGKey(0)
    kx, kp = jax.random.split(key)
    x = jax.random.normal(kx, (batch, latent_dim, 1, 1), jnp.float32)
    params = init_params(kp, latent_dim, img_channels)

    out = jax.jit(generator_forward)(x, params)
    out = jax.block_until_ready(out)

    assert out.shape == (batch, img_channels, 28, 28), out.shape
    assert bool(jnp.all(jnp.isfinite(out)))
    assert bool(jnp.all(jnp.abs(out) <= 1.0 + 1e-6))  # tanh range
    print("KERNEL_OK")
</pallas_src>

<mosaic_0001>
module attributes {stable_mosaic.version = 11 : i64} {
  func.func @_l1_matmul_bn_relu_kernel(%arg0: i32, %arg1: memref<2x16xbf16, #tpu.memory_space<vmem>>, %arg2: memref<16x12544xbf16, #tpu.memory_space<vmem>>, %arg3: memref<1x256xf32, #tpu.memory_space<vmem>>, %arg4: memref<1x256xf32, #tpu.memory_space<vmem>>, %arg5: memref<2x12544xf32, #tpu.memory_space<vmem>>) attributes {dimension_semantics = [#tpu.dimension_semantics<arbitrary>], iteration_bounds = array<i64: 1>, scalar_prefetch = 0 : i64, scratch_operands = 0 : i64, tpu.core_type = #tpu.core_type<tc>, window_params = [{pipeline_mode = #tpu.pipeline_mode<synchronous>, transform_indices = @transform_0, window_bounds = array<i64: 2, 16>}, {pipeline_mode = #tpu.pipeline_mode<synchronous>, transform_indices = @transform_1, window_bounds = array<i64: 16, 12544>}, {pipeline_mode = #tpu.pipeline_mode<synchronous>, transform_indices = @transform_2, window_bounds = array<i64: 1, 256>}, {pipeline_mode = #tpu.pipeline_mode<synchronous>, transform_indices = @transform_3, window_bounds = array<i64: 1, 256>}, {pipeline_mode = #tpu.pipeline_mode<synchronous>, transform_indices = @transform_4, window_bounds = array<i64: 2, 12544>}]} {
    %c0 = arith.constant 0 : index
    %c0_0 = arith.constant 0 : index
    %0 = vector.load %arg1[%c0, %c0_0] : memref<2x16xbf16, #tpu.memory_space<vmem>>, vector<2x16xbf16>
    %c0_1 = arith.constant 0 : index
    %c0_2 = arith.constant 0 : index
    %1 = vector.load %arg2[%c0_1, %c0_2] : memref<16x12544xbf16, #tpu.memory_space<vmem>>, vector<16x12544xbf16>
    %cst = arith.constant dense<0.000000e+00> : vector<2x12544xf32>
    %2 = tpu.matmul %0, %1, %cst {dimension_numbers = #tpu.dot_dimension_numbers<[1], [0], [0], [1], [0, 0, 1, 1], [], []>} : vector<2x16xbf16>, vector<16x12544xbf16>, vector<2x12544xf32> -> vector<2x12544xf32>
    %c0_3 = arith.constant 0 : index
    %c0_4 = arith.constant 0 : index
    %3 = vector.load %arg5[%c0_3, %c0_4] : memref<2x12544xf32, #tpu.memory_space<vmem>>, vector<2x12544xf32>
    tpu.vector_store %arg5[%c0_3, %c0_4], %2 {strides = array<i32>} : memref<2x12544xf32, #tpu.memory_space<vmem>>, vector<2x12544xf32>,
    %cst_5 = arith.constant 0.000000e+00 : f32
    %4 = vector.broadcast %cst_5 : f32 to vector<1x256xf32>
    %c0_6 = arith.constant 0 : index
    %c0_7 = arith.constant 0 : index
    %5 = vector.load %arg5[%c0_6, %c0_7] : memref<2x12544xf32, #tpu.memory_space<vmem>>, vector<2x256xf32>
    %cst_8 = arith.constant dense<0.000000e+00> : vector<256xf32>
    %6 = vector.multi_reduction <add>, %5, %cst_8 [0] : vector<2x256xf32> to vector<256xf32>
    %7 = vector.shape_cast %6 : vector<256xf32> to vector<1x256xf32>
    %8 = arith.addf %4, %7 : vector<1x256xf32>
    %c0_9 = arith.constant 0 : index
    %c256 = arith.constant 256 : index
    %9 = vector.load %arg5[%c0_9, %c256] : memref<2x12544xf32, #tpu.memory_space<vmem>>, vector<2x256xf32>
    %cst_10 = arith.constant dense<0.000000e+00> : vector<256xf32>
    %10 = vector.multi_reduction <add>, %9, %cst_10 [0] : vector<2x256xf32> to vector<256xf32>
    %11 = vector.shape_cast %10 : vector<256xf32> to vector<1x256xf32>
    %12 = arith.addf %8, %11 : vector<1x256xf32>
    %c0_11 = arith.constant 0 : index
    %c512 = arith.constant 512 : index
    %13 = vector.load %arg5[%c0_11, %c512] : memref<2x12544xf32, #tpu.memory_space<vmem>>, vector<2x256xf32>
    %cst_12 = arith.constant dense<0.000000e+00> : vector<256xf32>
    %14 = vector.multi_reduction <add>, %13, %cst_12 [0] : vector<2x256xf32> to vector<256xf32>
    %15 = vector.shape_cast %14 : vector<256xf32> to vector<1x256xf32>
    %16 = arith.addf %12, %15 : vector<1x256xf32>
    %c0_13 = arith.constant 0 : index
    %c768 = arith.constant 768 : index
    %17 = vector.load %arg5[%c0_13, %c768] : memref<2x12544xf32, #tpu.memory_space<vmem>>, vector<2x256xf32>
    %cst_14 = arith.constant dense<0.000000e+00> : vector<256xf32>
    %18 = vector.multi_reduction <add>, %17, %cst_14 [0] : vector<2x256xf32> to vector<256xf32>
    %19 = vector.shape_cast %18 : vector<256xf32> to vector<1x256xf32>
    %20 = arith.addf %16, %19 : vector<1x256xf32>
    %c0_15 = arith.constant 0 : index
    %c1024 = arith.constant 1024 : index
    %21 = vector.load %arg5[%c0_15, %c1024] : memref<2x12544xf32, #tpu.memory_space<vmem>>, vector<2x256xf32>
    %cst_16 = arith.constant dense<0.000000e+00> : vector<256xf32>
    %22 = vector.multi_reduction <add>, %21, %cst_16 [0] : vector<2x256xf32> to vector<256xf32>
    %23 = vector.shape_cast %22 : vector<256xf32> to vector<1x256xf32>
    %24 = arith.addf %20, %23 : vector<1x256xf32>
    %c0_17 = arith.constant 0 : index
    %c1280 = arith.constant 1280 : index
    %25 = vector.load %arg5[%c0_17, %c1280] : memref<2x12544xf32, #tpu.memory_space<vmem>>, vector<2x256xf32>
    %cst_18 = arith.constant dense<0.000000e+00> : vector<256xf32>
    %26 = vector.multi_reduction <add>, %25, %cst_18 [0] : vector<2x256xf32> to vector<256xf32>
    %27 = vector.shape_cast %26 : vector<256xf32> to vector<1x256xf32>
    %28 = arith.addf %24, %27 : vector<1x256xf32>
    %c0_19 = arith.constant 0 : index
    %c1536 = arith.constant 1536 : index
    %29 = vector.load %arg5[%c0_19, %c1536] : memref<2x12544xf32, #tpu.memory_space<vmem>>, vector<2x256xf32>
    %cst_20 = arith.constant dense<0.000000e+00> : vector<256xf32>
    %30 = vector.multi_reduction <add>, %29, %cst_20 [0] : vector<2x256xf32> to vector<256xf32>
    %31 = vector.shape_cast %30 : vector<256xf32> to vector<1x256xf32>
    %32 = arith.addf %28, %31 : vector<1x256xf32>
    %c0_21 = arith.constant 0 : index
    %c1792 = arith.constant 1792 : index
    %33 = vector.load %arg5[%c0_21, %c1792] : memref<2x12544xf32, #tpu.memory_space<vmem>>, vector<2x256xf32>
    %cst_22 = arith.constant dense<0.000000e+00> : vector<256xf32>
    %34 = vector.multi_reduction <add>, %33, %cst_22 [0] : vector<2x256xf32> to vector<256xf32>
    %35 = vector.shape_cast %34 : vector<256xf32> to vector<1x256xf32>
    %36 = arith.addf %32, %35 : vector<1x256xf32>
    %c0_23 = arith.constant 0 : index
    %c2048 = arith.constant 2048 : index
    %37 = vector.load %arg5[%c0_23, %c2048] : memref<2x12544xf32, #tpu.memory_space<vmem>>, vector<2x256xf32>
    %cst_24 = arith.constant dense<0.000000e+00> : vector<256xf32>
    %38 = vector.multi_reduction <add>, %37, %cst_24 [0] : vector<2x256xf32> to vector<256xf32>
    %39 = vector.shape_cast %38 : vector<256xf32> to vector<1x256xf32>
    %40 = arith.addf %36, %39 : vector<1x256xf32>
    %c0_25 = arith.constant 0 : index
    %c2304 = arith.constant 2304 : index
    %41 = vector.load %arg5[%c0_25, %c2304] : memref<2x12544xf32, #tpu.memory_space<vmem>>, vector<2x256xf32>
    %cst_26 = arith.constant dense<0.000000e+00> : vector<256xf32>
    %42 = vector.multi_reduction <add>, %41, %cst_26 [0] : vector<2x256xf32> to vector<256xf32>
    %43 = vector.shape_cast %42 : vector<256xf32> to vector<1x256xf32>
    %44 = arith.addf %40, %43 : vector<1x256xf32>
    %c0_27 = arith.constant 0 : index
    %c2560 = arith.constant 2560 : index
    %45 = vector.load %arg5[%c0_27, %c2560] : memref<2x12544xf32, #tpu.memory_space<vmem>>, vector<2x256xf32>
    %cst_28 = arith.constant dense<0.000000e+00> : vector<256xf32>
    %46 = vector.multi_reduction <add>, %45, %cst_28 [0] : vector<2x256xf32> to vector<256xf32>
    %47 = vector.shape_cast %46 : vector<256xf32> to vector<1x256xf32>
    %48 = arith.addf %44, %47 : vector<1x256xf32>
    %c0_29 = arith.constant 0 : index
    %c2816 = arith.constant 2816 : index
    %49 = vector.load %arg5[%c0_29, %c2816] : memref<2x12544xf32, #tpu.memory_space<vmem>>, vector<2x256xf32>
    %cst_30 = arith.constant dense<0.000000e+00> : vector<256xf32>
    %50 = vector.multi_reduction <add>, %49, %cst_30 [0] : vector<2x256xf32> to vector<256xf32>
    %51 = vector.shape_cast %50 : vector<256xf32> to vector<1x256xf32>
    %52 = arith.addf %48, %51 : vector<1x256xf32>
    %c0_31 = arith.constant 0 : index
    %c3072 = arith.constant 3072 : index
    %53 = vector.load %arg5[%c0_31, %c3072] : memref<2x12544xf32, #tpu.memory_space<vmem>>, vector<2x256xf32>
    %cst_32 = arith.constant dense<0.000000e+00> : vector<256xf32>
    %54 = vector.multi_reduction <add>, %53, %cst_32 [0] : vector<2x256xf32> to vector<256xf32>
    %55 = vector.shape_cast %54 : vector<256xf32> to vector<1x256xf32>
    %56 = arith.addf %52, %55 : vector<1x256xf32>
    %c0_33 = arith.constant 0 : index
    %c3328 = arith.constant 3328 : index
    %57 = vector.load %arg5[%c0_33, %c3328] : memref<2x12544xf32, #tpu.memory_space<vmem>>, vector<2x256xf32>
    %cst_34 = arith.constant dense<0.000000e+00> : vector<256xf32>
    %58 = vector.multi_reduction <add>, %57, %cst_34 [0] : vector<2x256xf32> to vector<256xf32>
    %59 = vector.shape_cast %58 : vector<256xf32> to vector<1x256xf32>
    %60 = arith.addf %56, %59 : vector<1x256xf32>
    %c0_35 = arith.constant 0 : index
    %c3584 = arith.constant 3584 : index
    %61 = vector.load %arg5[%c0_35, %c3584] : memref<2x12544xf32, #tpu.memory_space<vmem>>, vector<2x256xf32>
    %cst_36 = arith.constant dense<0.000000e+00> : vector<256xf32>
    %62 = vector.multi_reduction <add>, %61, %cst_36 [0] : vector<2x256xf32> to vector<256xf32>
    %63 = vector.shape_cast %62 : vector<256xf32> to vector<1x256xf32>
    %64 = arith.addf %60, %63 : vector<1x256xf32>
    %c0_37 = arith.constant 0 : index
    %c3840 = arith.constant 3840 : index
    %65 = vector.load %arg5[%c0_37, %c3840] : memref<2x12544xf32, #tpu.memory_space<vmem>>, vector<2x256xf32>
    %cst_38 = arith.constant dense<0.000000e+00> : vector<256xf32>
    %66 = vector.multi_reduction <add>, %65, %cst_38 [0] : vector<2x256xf32> to vector<256xf32>
    %67 = vector.shape_cast %66 : vector<256xf32> to vector<1x256xf32>
    %68 = arith.addf %64, %67 : vector<1x256xf32>
    %c0_39 = arith.constant 0 : index
    %c4096 = arith.constant 4096 : index
    %69 = vector.load %arg5[%c0_39, %c4096] : memref<2x12544xf32, #tpu.memory_space<vmem>>, vector<2x256xf32>
    %cst_40 = arith.constant dense<0.000000e+00> : vector<256xf32>
    %70 = vector.multi_reduction <add>, %69, %cst_40 [0] : vector<2x256xf32> to vector<256xf32>
    %71 = vector.shape_cast %70 : vector<256xf32> to vector<1x256xf32>
    %72 = arith.addf %68, %71 : vector<1x256xf32>
    %c0_41 = arith.constant 0 : index
    %c4352 = arith.constant 4352 : index
    %73 = vector.load %arg5[%c0_41, %c4352] : memref<2x12544xf32, #tpu.memory_space<vmem>>, vector<2x256xf32>
    %cst_42 = arith.constant dense<0.000000e+00> : vector<256xf32>
    %74 = vector.multi_reduction <add>, %73, %cst_42 [0] : vector<2x256xf32> to vector<256xf32>
    %75 = vector.shape_cast %74 : vector<256xf32> to vector<1x256xf32>
    %76 = arith.addf %72, %75 : vector<1x256xf32>
    %c0_43 = arith.constant 0 : index
    %c4608 = arith.constant 4608 : index
    %77 = vector.load %arg5[%c0_43, %c4608] : memref<2x12544xf32, #tpu.memory_space<vmem>>, vector<2x256xf32>
    %cst_44 = arith.constant dense<0.000000e+00> : vector<256xf32>
    %78 = vector.multi_reduction <add>, %77, %cst_44 [0] : vector<2x256xf32> to vector<256xf32>
    %79 = vector.shape_cast %78 : vector<256xf32> to vector<1x256xf32>
    %80 = arith.addf %76, %79 : vector<1x256xf32>
    %c0_45 = arith.constant 0 : index
    %c4864 = arith.constant 4864 : index
    %81 = vector.load %arg5[%c0_45, %c4864] : memref<2x12544xf32, #tpu.memory_space<vmem>>, vector<2x256xf32>
    %cst_46 = arith.constant dense<0.000000e+00> : vector<256xf32>
    %82 = vector.multi_reduction <add>, %81, %cst_46 [0] : vector<2x256xf32> to vector<256xf32>
    %83 = vector.shape_cast %82 : vector<256xf32> to vector<1x256xf32>
    %84 = arith.addf %80, %83 : vector<1x256xf32>
    %c0_47 = arith.constant 0 : index
    %c5120 = arith.constant 5120 : index
    %85 = vector.load %arg5[%c0_47, %c5120] : memref<2x12544xf32, #tpu.memory_space<vmem>>, vector<2x256xf32>
    %cst_48 = arith.constant dense<0.000000e+00> : vector<256xf32>
    %86 = vector.multi_reduction <add>, %85, %cst_48 [0] : vector<2x256xf32> to vector<256xf32>
    %87 = vector.shape_cast %86 : vector<256xf32> to vector<1x256xf32>
    %88 = arith.addf %84, %87 : vector<1x256xf32>
    %c0_49 = arith.constant 0 : index
    %c5376 = arith.constant 5376 : index
    %89 = vector.load %arg5[%c0_49, %c5376] : memref<2x12544xf32, #tpu.memory_space<vmem>>, vector<2x256xf32>
    %cst_50 = arith.constant dense<0.000000e+00> : vector<256xf32>
    %90 = vector.multi_reduction <add>, %89, %cst_50 [0] : vector<2x256xf32> to vector<256xf32>
    %91 = vector.shape_cast %90 : vector<256xf32> to vector<1x256xf32>
    %92 = arith.addf %88, %91 : vector<1x256xf32>
    %c0_51 = arith.constant 0 : index
    %c5632 = arith.constant 5632 : index
    %93 = vector.load %arg5[%c0_51, %c5632] : memref<2x12544xf32, #tpu.memory_space<vmem>>, vector<2x256xf32>
    %cst_52 = arith.constant dense<0.000000e+00> : vector<256xf32>
    %94 = vector.multi_reduction <add>, %93, %cst_52 [0] : vector<2x256xf32> to vector<256xf32>
    %95 = vector.shape_cast %94 : vector<256xf32> to vector<1x256xf32>
    %96 = arith.addf %92, %95 : vector<1x256xf32>
    %c0_53 = arith.constant 0 : index
    %c5888 = arith.constant 5888 : index
    %97 = vector.load %arg5[%c0_53, %c5888] : memref<2x12544xf32, #tpu.memory_space<vmem>>, vector<2x256xf32>
    %cst_54 = arith.constant dense<0.000000e+00> : vector<256xf32>
    %98 = vector.multi_reduction <add>, %97, %cst_54 [0] : vector<2x256xf32> to vector<256xf32>
    %99 = vector.shape_cast %98 : vector<256xf32> to vector<1x256xf32>
    %100 = arith.addf %96, %99 : vector<1x256xf32>
    %c0_55 = arith.constant 0 : index
    %c6144 = arith.constant 6144 : index
    %101 = vector.load %arg5[%c0_55, %c6144] : memref<2x12544xf32, #tpu.memory_space<vmem>>, vector<2x256xf32>
    %cst_56 = arith.constant dense<0.000000e+00> : vector<256xf32>
    %102 = vector.multi_reduction <add>, %101, %cst_56 [0] : vector<2x256xf32> to vector<256xf32>
    %103 = vector.shape_cast %102 : vector<256xf32> to vector<1x256xf32>
    %104 = arith.addf %100, %103 : vector<1x256xf32>
    %c0_57 = arith.constant 0 : index
    %c6400 = arith.constant 6400 : index
    %105 = vector.load %arg5[%c0_57, %c6400] : memref<2x12544xf32, #tpu.memory_space<vmem>>, vector<2x256xf32>
    %cst_58 = arith.constant dense<0.000000e+00> : vector<256xf32>
    %106 = vector.multi_reduction <add>, %105, %cst_58 [0] : vector<2x256xf32> to vector<256xf32>
    %107 = vector.shape_cast %106 : vector<256xf32> to vector<1x256xf32>
    %108 = arith.addf %104, %107 : vector<1x256xf32>
    %c0_59 = arith.constant 0 : index
    %c6656 = arith.constant 6656 : index
    %109 = vector.load %arg5[%c0_59, %c6656] : memref<2x12544xf32, #tpu.memory_space<vmem>>, vector<2x256xf32>
    %cst_60 = arith.constant dense<0.000000e+00> : vector<256xf32>
    %110 = vector.multi_reduction <add>, %109, %cst_60 [0] : vector<2x256xf32> to vector<256xf32>
    %111 = vector.shape_cast %110 : vector<256xf32> to vector<1x256xf32>
    %112 = arith.addf %108, %111 : vector<1x256xf32>
    %c0_61 = arith.constant 0 : index
    %c6912 = arith.constant 6912 : index
    %113 = vector.load %arg5[%c0_61, %c6912] : memref<2x12544xf32, #tpu.memory_space<vmem>>, vector<2x256xf32>
    %cst_62 = arith.constant dense<0.000000e+00> : vector<256xf32>
    %114 = vector.multi_reduction <add>, %113, %cst_62 [0] : vector<2x256xf32> to vector<256xf32>
    %115 = vector.shape_cast %114 : vector<256xf32> to vector<1x256xf32>
    %116 = arith.addf %112, %115 : vector<1x256xf32>
    %c0_63 = arith.constant 0 : index
    %c7168 = arith.constant 7168 : index
    %117 = vector.load %arg5[%c0_63, %c7168] : memref<2x12544xf32, #tpu.memory_space<vmem>>, vector<2x256xf32>
    %cst_64 = arith.constant dense<0.000000e+00> : vector<256xf32>
    %118 = vector.multi_reduction <add>, %117, %cst_64 [0] : vector<2x256xf32> to vector<256xf32>
    %119 = vector.shape_cast %118 : vector<256xf32> to vector<1x256xf32>
    %120 = arith.addf %116, %119 : vector<1x256xf32>
    %c0_65 = arith.constant 0 : index
    %c7424 = arith.constant 7424 : index
    %121 = vector.load %arg5[%c0_65, %c7424] : memref<2x12544xf32, #tpu.memory_space<vmem>>, vector<2x256xf32>
    %cst_66 = arith.constant dense<0.000000e+00> : vector<256xf32>
    %122 = vector.multi_reduction <add>, %121, %cst_66 [0] : vector<2x256xf32> to vector<256xf32>
    %123 = vector.shape_cast %122 : vector<256xf32> to vector<1x256xf32>
    %124 = arith.addf %120, %123 : vector<1x256xf32>
    %c0_67 = arith.constant 0 : index
    %c7680 = arith.constant 7680 : index
    %125 = vector.load %arg5[%c0_67, %c7680] : memref<2x12544xf32, #tpu.memory_space<vmem>>, vector<2x256xf32>
    %cst_68 = arith.constant dense<0.000000e+00> : vector<256xf32>
    %126 = vector.multi_reduction <add>, %125, %cst_68 [0] : vector<2x256xf32> to vector<256xf32>
    %127 = vector.shape_cast %126 : vector<256xf32> to vector<1x256xf32>
    %128 = arith.addf %124, %127 : vector<1x256xf32>
    %c0_69 = arith.constant 0 : index
    %c7936 = arith.constant 7936 : index
    %129 = vector.load %arg5[%c0_69, %c7936] : memref<2x12544xf32, #tpu.memory_space<vmem>>, vector<2x256xf32>
    %cst_70 = arith.constant dense<0.000000e+00> : vector<256xf32>
    %130 = vector.multi_reduction <add>, %129, %cst_70 [0] : vector<2x256xf32> to vector<256xf32>
    %131 = vector.shape_cast %130 : vector<256xf32> to vector<1x256xf32>
    %132 = arith.addf %128, %131 : vector<1x256xf32>
    %c0_71 = arith.constant 0 : index
    %c8192 = arith.constant 8192 : index
    %133 = vector.load %arg5[%c0_71, %c8192] : memref<2x12544xf32, #tpu.memory_space<vmem>>, vector<2x256xf32>
    %cst_72 = arith.constant dense<0.000000e+00> : vector<256xf32>
    %134 = vector.multi_reduction <add>, %133, %cst_72 [0] : vector<2x256xf32> to vector<256xf32>
    %135 = vector.shape_cast %134 : vector<256xf32> to vector<1x256xf32>
    %136 = arith.addf %132, %135 : vector<1x256xf32>
    %c0_73 = arith.constant 0 : index
    %c8448 = arith.constant 8448 : index
    %137 = vector.load %arg5[%c0_73, %c8448] : memref<2x12544xf32, #tpu.memory_space<vmem>>, vector<2x256xf32>
    %cst_74 = arith.constant dense<0.000000e+00> : vector<256xf32>
    %138 = vector.multi_reduction <add>, %137, %cst_74 [0] : vector<2x256xf32> to vector<256xf32>
    %139 = vector.shape_cast %138 : vector<256xf32> to vector<1x256xf32>
    %140 = arith.addf %136, %139 : vector<1x256xf32>
    %c0_75 = arith.constant 0 : index
    %c8704 = arith.constant 8704 : index
    %141 = vector.load %arg5[%c0_75, %c8704] : memref<2x12544xf32, #tpu.memory_space<vmem>>, vector<2x256xf32>
    %cst_76 = arith.constant dense<0.000000e+00> : vector<256xf32>
    %142 = vector.multi_reduction <add>, %141, %cst_76 [0] : vector<2x256xf32> to vector<256xf32>
    %143 = vector.shape_cast %142 : vector<256xf32> to vector<1x256xf32>
    %144 = arith.addf %140, %143 : vector<1x256xf32>
    %c0_77 = arith.constant 0 : index
    %c8960 = arith.constant 8960 : index
    %145 = vector.load %arg5[%c0_77, %c8960] : memref<2x12544xf32, #tpu.memory_space<vmem>>, vector<2x256xf32>
    %cst_78 = arith.constant dense<0.000000e+00> : vector<256xf32>
    %146 = vector.multi_reduction <add>, %145, %cst_78 [0] : vector<2x256xf32> to vector<256xf32>
    %147 = vector.shape_cast %146 : vector<256xf32> to vector<1x256xf32>
    %148 = arith.addf %144, %147 : vector<1x256xf32>
    %c0_79 = arith.constant 0 : index
    %c9216 = arith.constant 9216 : index
    %149 = vector.load %arg5[%c0_79, %c9216] : memref<2x12544xf32, #tpu.memory_space<vmem>>, vector<2x256xf32>
    %cst_80 = arith.constant dense<0.000000e+00> : vector<256xf32>
    %150 = vector.multi_reduction <add>, %149, %cst_80 [0] : vector<2x256xf32> to vector<256xf32>
    %151 = vector.shape_cast %150 : vector<256xf32> to vector<1x256xf32>
    %152 = arith.addf %148, %151 : vector<1x256xf32>
    %c0_81 = arith.constant 0 : index
    %c9472 = arith.constant 9472 : index
    %153 = vector.load %arg5[%c0_81, %c9472] : memref<2x12544xf32, #tpu.memory_space<vmem>>, vector<2x256xf32>
    %cst_82 = arith.constant dense<0.000000e+00> : vector<256xf32>
    %154 = vector.multi_reduction <add>, %153, %cst_82 [0] : vector<2x256xf32> to vector<256xf32>
    %155 = vector.shape_cast %154 : vector<256xf32> to vector<1x256xf32>
    %156 = arith.addf %152, %155 : vector<1x256xf32>
    %c0_83 = arith.constant 0 : index
    %c9728 = arith.constant 9728 : index
    %157 = vector.load %arg5[%c0_83, %c9728] : memref<2x12544xf32, #tpu.memory_space<vmem>>, vector<2x256xf32>
    %cst_84 = arith.constant dense<0.000000e+00> : vector<256xf32>
    %158 = vector.multi_reduction <add>, %157, %cst_84 [0] : vector<2x256xf32> to vector<256xf32>
    %159 = vector.shape_cast %158 : vector<256xf32> to vector<1x256xf32>
    %160 = arith.addf %156, %159 : vector<1x256xf32>
    %c0_85 = arith.constant 0 : index
    %c9984 = arith.constant 9984 : index
    %161 = vector.load %arg5[%c0_85, %c9984] : memref<2x12544xf32, #tpu.memory_space<vmem>>, vector<2x256xf32>
    %cst_86 = arith.constant dense<0.000000e+00> : vector<256xf32>
    %162 = vector.multi_reduction <add>, %161, %cst_86 [0] : vector<2x256xf32> to vector<256xf32>
    %163 = vector.shape_cast %162 : vector<256xf32> to vector<1x256xf32>
    %164 = arith.addf %160, %163 : vector<1x256xf32>
    %c0_87 = arith.constant 0 : index
    %c10240 = arith.constant 10240 : index
    %165 = vector.load %arg5[%c0_87, %c10240] : memref<2x12544xf32, #tpu.memory_space<vmem>>, vector<2x256xf32>
    %cst_88 = arith.constant dense<0.000000e+00> : vector<256xf32>
    %166 = vector.multi_reduction <add>, %165, %cst_88 [0] : vector<2x256xf32> to vector<256xf32>
    %167 = vector.shape_cast %166 : vector<256xf32> to vector<1x256xf32>
    %168 = arith.addf %164, %167 : vector<1x256xf32>
    %c0_89 = arith.constant 0 : index
    %c10496 = arith.constant 10496 : index
    %169 = vector.load %arg5[%c0_89, %c10496] : memref<2x12544xf32, #tpu.memory_space<vmem>>, vector<2x256xf32>
    %cst_90 = arith.constant dense<0.000000e+00> : vector<256xf32>
    %170 = vector.multi_reduction <add>, %169, %cst_90 [0] : vector<2x256xf32> to vector<256xf32>
    %171 = vector.shape_cast %170 : vector<256xf32> to vector<1x256xf32>
    %172 = arith.addf %168, %171 : vector<1x256xf32>
    %c0_91 = arith.constant 0 : index
    %c10752 = arith.constant 10752 : index
    %173 = vector.load %arg5[%c0_91, %c10752] : memref<2x12544xf32, #tpu.memory_space<vmem>>, vector<2x256xf32>
    %cst_92 = arith.constant dense<0.000000e+00> : vector<256xf32>
    %174 = vector.multi_reduction <add>, %173, %cst_92 [0] : vector<2x256xf32> to vector<256xf32>
    %175 = vector.shape_cast %174 : vector<256xf32> to vector<1x256xf32>
    %176 = arith.addf %172, %175 : vector<1x256xf32>
    %c0_93 = arith.constant 0 : index
    %c11008 = arith.constant 11008 : index
    %177 = vector.load %arg5[%c0_93, %c11008] : memref<2x12544xf32, #tpu.memory_space<vmem>>, vector<2x256xf32>
    %cst_94 = arith.constant dense<0.000000e+00> : vector<256xf32>
    %178 = vector.multi_reduction <add>, %177, %cst_94 [0] : vector<2x256xf32> to vector<256xf32>
    %179 = vector.shape_cast %178 : vector<256xf32> to vector<1x256xf32>
    %180 = arith.addf %176, %179 : vector<1x256xf32>
    %c0_95 = arith.constant 0 : index
    %c11264 = arith.constant 11264 : index
    %181 = vector.load %arg5[%c0_95, %c11264] : memref<2x12544xf32, #tpu.memory_space<vmem>>, vector<2x256xf32>
    %cst_96 = arith.constant dense<0.000000e+00> : vector<256xf32>
    %182 = vector.multi_reduction <add>, %181, %cst_96 [0] : vector<2x256xf32> to vector<256xf32>
    %183 = vector.shape_cast %182 : vector<256xf32> to vector<1x256xf32>
    %184 = arith.addf %180, %183 : vector<1x256xf32>
    %c0_97 = arith.constant 0 : index
    %c11520 = arith.constant 11520 : index
    %185 = vector.load %arg5[%c0_97, %c11520] : memref<2x12544xf32, #tpu.memory_space<vmem>>, vector<2x256xf32>
    %cst_98 = arith.constant dense<0.000000e+00> : vector<256xf32>
    %186 = vector.multi_reduction <add>, %185, %cst_98 [0] : vector<2x256xf32> to vector<256xf32>
    %187 = vector.shape_cast %186 : vector<256xf32> to vector<1x256xf32>
    %188 = arith.addf %184, %187 : vector<1x256xf32>
    %c0_99 = arith.constant 0 : index
    %c11776 = arith.constant 11776 : index
    %189 = vector.load %arg5[%c0_99, %c11776] : memref<2x12544xf32, #tpu.memory_space<vmem>>, vector<2x256xf32>
    %cst_100 = arith.constant dense<0.000000e+00> : vector<256xf32>
    %190 = vector.multi_reduction <add>, %189, %cst_100 [0] : vector<2x256xf32> to vector<256xf32>
    %191 = vector.shape_cast %190 : vector<256xf32> to vector<1x256xf32>
    %192 = arith.addf %188, %191 : vector<1x256xf32>
    %c0_101 = arith.constant 0 : index
    %c12032 = arith.constant 12032 : index
    %193 = vector.load %arg5[%c0_101, %c12032] : memref<2x12544xf32, #tpu.memory_space<vmem>>, vector<2x256xf32>
    %cst_102 = arith.constant dense<0.000000e+00> : vector<256xf32>
    %194 = vector.multi_reduction <add>, %193, %cst_102 [0] : vector<2x256xf32> to vector<256xf32>
    %195 = vector.shape_cast %194 : vector<256xf32> to vector<1x256xf32>
    %196 = arith.addf %192, %195 : vector<1x256xf32>
    %c0_103 = arith.constant 0 : index
    %c12288 = arith.constant 12288 : index
    %197 = vector.load %arg5[%c0_103, %c12288] : memref<2x12544xf32, #tpu.memory_space<vmem>>, vector<2x256xf32>
    %cst_104 = arith.constant dense<0.000000e+00> : vector<256xf32>
    %198 = vector.multi_reduction <add>, %197, %cst_104 [0] : vector<2x256xf32> to vector<256xf32>
    %199 = vector.shape_cast %198 : vector<256xf32> to vector<1x256xf32>
    %200 = arith.addf %196, %199 : vector<1x256xf32>
    %cst_105 = arith.constant 9.800000e+01 : f32
    %201 = vector.broadcast %cst_105 : f32 to vector<1x256xf32>
    %202 = arith.divf %200, %201 : vector<1x256xf32>
    %cst_106 = arith.constant 0.000000e+00 : f32
    %203 = vector.broadcast %cst_106 : f32 to vector<1x256xf32>
    %c0_107 = arith.constant 0 : index
    %c0_108 = arith.constant 0 : index
    %204 = vector.load %arg5[%c0_107, %c0_108] : memref<2x12544xf32, #tpu.memory_space<vmem>>, vector<2x256xf32>
    %205 = vector.broadcast %202 : vector<1x256xf32> to vector<2x256xf32>
    %206 = arith.subf %204, %205 : vector<2x256xf32>
    %207 = arith.mulf %206, %206 : vector<2x256xf32>
    %cst_109 = arith.constant dense<0.000000e+00> : vector<256xf32>
    %208 = vector.multi_reduction <add>, %207, %cst_109 [0] : vector<2x256xf32> to vector<256xf32>
    %209 = vector.shape_cast %208 : vector<256xf32> to vector<1x256xf32>
    %210 = arith.addf %203, %209 : vector<1x256xf32>
    %c0_110 = arith.constant 0 : index
    %c256_111 = arith.constant 256 : index
    %211 = vector.load %arg5[%c0_110, %c256_111] : memref<2x12544xf32, #tpu.memory_space<vmem>>, vector<2x256xf32>
    %212 = vector.broadcast %202 : vector<1x256xf32> to vector<2x256xf32>
    %213 = arith.subf %211, %212 : vector<2x256xf32>
    %214 = arith.mulf %213, %213 : vector<2x256xf32>
    %cst_112 = arith.constant dense<0.000000e+00> : vector<256xf32>
    %215 = vector.multi_reduction <add>, %214, %cst_112 [0] : vector<2x256xf32> to vector<256xf32>
    %216 = vector.shape_cast %215 : vector<256xf32> to vector<1x256xf32>
    %217 = arith.addf %210, %216 : vector<1x256xf32>
    %c0_113 = arith.constant 0 : index
    %c512_114 = arith.constant 512 : index
    %218 = vector.load %arg5[%c0_113, %c512_114] : memref<2x12544xf32, #tpu.memory_space<vmem>>, vector<2x256xf32>
    %219 = vector.broadcast %202 : vector<1x256xf32> to vector<2x256xf32>
    %220 = arith.subf %218, %219 : vector<2x256xf32>
    %221 = arith.mulf %220, %220 : vector<2x256xf32>
    %cst_115 = arith.constant dense<0.000000e+00> : vector<256xf32>
    %222 = vector.multi_reduction <add>, %221, %cst_115 [0] : vector<2x256xf32> to vector<256xf32>
    %223 = vector.shape_cast %222 : vector<256xf32> to vector<1x256xf32>
    %224 = arith.addf %217, %223 : vector<1x256xf32>
    %c0_116 = arith.constant 0 : index
    %c768_117 = arith.constant 768 : index
    %225 = vector.load %arg5[%c0_116, %c768_117] : memref<2x12544xf32, #tpu.memory_space<vmem>>, vector<2x256xf32>
    %226 = vector.broadcast %202 : vector<1x256xf32> to vector<2x256xf32>
    %227 = arith.subf %225, %226 : vector<2x256xf32>
    %228 = arith.mulf %227, %227 : vector<2x256xf32>
    %cst_118 = arith.constant dense<0.000000e+00> : vector<256xf32>
    %229 = vector.multi_reduction <add>, %228, %cst_118 [0] : vector<2x256xf32> to vector<256xf32>
    %230 = vector.shape_cast %229 : vector<256xf32> to vector<1x256xf32>
    %231 = arith.addf %224, %230 : vector<1x256xf32>
    %c0_119 = arith.constant 0 : index
    %c1024_120 = arith.constant 1024 : index
    %232 = vector.load %arg5[%c0_119, %c1024_120] : memref<2x12544xf32, #tpu.memory_space<vmem>>, vector<2x256xf32>
    %233 = vector.broadcast %202 : vector<1x256xf32> to vector<2x256xf32>
    %234 = arith.subf %232, %233 : vector<2x256xf32>
    %235 = arith.mulf %234, %234 : vector<2x256xf32>
    %cst_121 = arith.constant dense<0.000000e+00> : vector<256xf32>
    %236 = vector.multi_reduction <add>, %235, %cst_121 [0] : vector<2x256xf32> to vector<256xf32>
    %237 = vector.shape_cast %236 : vector<256xf32> to vector<1x256xf32>
    %238 = arith.addf %231, %237 : vector<1x256xf32>
    %c0_122 = arith.constant 0 : index
    %c1280_123 = arith.constant 1280 : index
    %239 = vector.load %arg5[%c0_122, %c1280_123] : memref<2x12544xf32, #tpu.memory_space<vmem>>, vector<2x256xf32>
    %240 = vector.broadcast %202 : vector<1x256xf32> to vector<2x256xf32>
    %241 = arith.subf %239, %240 : vector<2x256xf32>
    %242 = arith.mulf %241, %241 : vector<2x256xf32>
    %cst_124 = arith.constant dense<0.000000e+00> : vector<256xf32>
    %243 = vector.multi_reduction <add>, %242, %cst_124 [0] : vector<2x256xf32> to vector<256xf32>
    %244 = vector.shape_cast %243 : vector<256xf32> to vector<1x256xf32>
    %245 = arith.addf %238, %244 : vector<1x256xf32>
    %c0_125 = arith.constant 0 : index
    %c1536_126 = arith.constant 1536 : index
    %246 = vector.load %arg5[%c0_125, %c1536_126] : memref<2x12544xf32, #tpu.memory_space<vmem>>, vector<2x256xf32>
    %247 = vector.broadcast %202 : vector<1x256xf32> to vector<2x256xf32>
    %248 = arith.subf %246, %247 : vector<2x256xf32>
    %249 = arith.mulf %248, %248 : vector<2x256xf32>
    %cst_127 = arith.constant dense<0.000000e+00> : vector<256xf32>
    %250 = vector.multi_reduction <add>, %249, %cst_127 [0] : vector<2x256xf32> to vector<256xf32>
    %251 = vector.shape_cast %250 : vector<256xf32> to vector<1x256xf32>
    %252 = arith.addf %245, %251 : vector<1x256xf32>
    %c0_128 = arith.constant 0 : index
    %c1792_129 = arith.constant 1792 : index
    %253 = vector.load %arg5[%c0_128, %c1792_129] : memref<2x12544xf32, #tpu.memory_space<vmem>>, vector<2x256xf32>
    %254 = vector.broadcast %202 : vector<1x256xf32> to vector<2x256xf32>
    %255 = arith.subf %253, %254 : vector<2x256xf32>
    %256 = arith.mulf %255, %255 : vector<2x256xf32>
    %cst_130 = arith.constant dense<0.000000e+00> : vector<256xf32>
    %257 = vector.multi_reduction <add>, %256, %cst_130 [0] : vector<2x256xf32> to vector<256xf32>
    %258 = vector.shape_cast %257 : vector<256xf32> to vector<1x256xf32>
    %259 = arith.addf %252, %258 : vector<1x256xf32>
    %c0_131 = arith.constant 0 : index
    %c2048_132 = arith.constant 2048 : index
    %260 = vector.load %arg5[%c0_131, %c2048_132] : memref<2x12544xf32, #tpu.memory_space<vmem>>, vector<2x256xf32>
    %261 = vector.broadcast %202 : vector<1x256xf32> to vector<2x256xf32>
    %262 = arith.subf %260, %261 : vector<2x256xf32>
    %263 = arith.mulf %262, %262 : vector<2x256xf32>
    %cst_133 = arith.constant dense<0.000000e+00> : vector<256xf32>
    %264 = vector.multi_reduction <add>, %263, %cst_133 [0] : vector<2x256xf32> to vector<256xf32>
    %265 = vector.shape_cast %264 : vector<256xf32> to vector<1x256xf32>
    %266 = arith.addf %259, %265 : vector<1x256xf32>
    %c0_134 = arith.constant 0 : index
    %c2304_135 = arith.constant 2304 : index
    %267 = vector.load %arg5[%c0_134, %c2304_135] : memref<2x12544xf32, #tpu.memory_space<vmem>>, vector<2x256xf32>
    %268 = vector.broadcast %202 : vector<1x256xf32> to vector<2x256xf32>
    %269 = arith.subf %267, %268 : vector<2x256xf32>
    %270 = arith.mulf %269, %269 : vector<2x256xf32>
    %cst_136 = arith.constant dense<0.000000e+00> : vector<256xf32>
    %271 = vector.multi_reduction <add>, %270, %cst_136 [0] : vector<2x256xf32> to vector<256xf32>
    %272 = vector.shape_cast %271 : vector<256xf32> to vector<1x256xf32>
    %273 = arith.addf %266, %272 : vector<1x256xf32>
    %c0_137 = arith.constant 0 : index
    %c2560_138 = arith.constant 2560 : index
    %274 = vector.load %arg5[%c0_137, %c2560_138] : memref<2x12544xf32, #tpu.memory_space<vmem>>, vector<2x256xf32>
    %275 = vector.broadcast %202 : vector<1x256xf32> to vector<2x256xf32>
    %276 = arith.subf %274, %275 : vector<2x256xf32>
    %277 = arith.mulf %276, %276 : vector<2x256xf32>
    %cst_139 = arith.constant dense<0.000000e+00> : vector<256xf32>
    %278 = vector.multi_reduction <add>, %277, %cst_139 [0] : vector<2x256xf32> to vector<256xf32>
    %279 = vector.shape_cast %278 : vector<256xf32> to vector<1x256xf32>
    %280 = arith.addf %273, %279 : vector<1x256xf32>
    %c0_140 = arith.constant 0 : index
    %c2816_141 = arith.constant 2816 : index
    %281 = vector.load %arg5[%c0_140, %c2816_141] : memref<2x12544xf32, #tpu.memory_space<vmem>>, vector<2x256xf32>
    %282 = vector.broadcast %202 : vector<1x256xf32> to vector<2x256xf32>
    %283 = arith.subf %281, %282 : vector<2x256xf32>
    %284 = arith.mulf %283, %283 : vector<2x256xf32>
    %cst_142 = arith.constant dense<0.000000e+00> : vector<256xf32>
    %285 = vector.multi_reduction <add>, %284, %cst_142 [0] : vector<2x256xf32> to vector<256xf32>
    %286 = vector.shape_cast %285 : vector<256xf32> to vector<1x256xf32>
    %287 = arith.addf %280, %286 : vector<1x256xf32>
    %c0_143 = arith.constant 0 : index
    %c3072_144 = arith.constant 3072 : index
    %288 = vector.load %arg5[%c0_143, %c3072_144] : memref<2x12544xf32, #tpu.memory_space<vmem>>, vector<2x256xf32>
    %289 = vector.broadcast %202 : vector<1x256xf32> to vector<2x256xf32>
    %290 = arith.subf %288, %289 : vector<2x256xf32>
    %291 = arith.mulf %290, %290 : vector<2x256xf32>
    %cst_145 = arith.constant dense<0.000000e+00> : vector<256xf32>
    %292 = vector.multi_reduction <add>, %291, %cst_145 [0] : vector<2x256xf32> to vector<256xf32>
    %293 = vector.shape_cast %292 : vector<256xf32> to vector<1x256xf32>
    %294 = arith.addf %287, %293 : vector<1x256xf32>
    %c0_146 = arith.constant 0 : index
    %c3328_147 = arith.constant 3328 : index
    %295 = vector.load %arg5[%c0_146, %c3328_147] : memref<2x12544xf32, #tpu.memory_space<vmem>>, vector<2x256xf32>
    %296 = vector.broadcast %202 : vector<1x256xf32> to vector<2x256xf32>
    %297 = arith.subf %295, %296 : vector<2x256xf32>
    %298 = arith.mulf %297, %297 : vector<2x256xf32>
    %cst_148 = arith.constant dense<0.000000e+00> : vector<256xf32>
    %299 = vector.multi_reduction <add>, %298, %cst_148 [0] : vector<2x256xf32> to vector<256xf32>
    %300 = vector.shape_cast %299 : vector<256xf32> to vector<1x256xf32>
    %301 = arith.addf %294, %300 : vector<1x256xf32>
    %c0_149 = arith.constant 0 : index
    %c3584_150 = arith.constant 3584 : index
    %302 = vector.load %arg5[%c0_149, %c3584_150] : memref<2x12544xf32, #tpu.memory_space<vmem>>, vector<2x256xf32>
    %303 = vector.broadcast %202 : vector<1x256xf32> to vector<2x256xf32>
    %304 = arith.subf %302, %303 : vector<2x256xf32>
    %305 = arith.mulf %304, %304 : vector<2x256xf32>
    %cst_151 = arith.constant dense<0.000000e+00> : vector<256xf32>
    %306 = vector.multi_reduction <add>, %305, %cst_151 [0] : vector<2x256xf32> to vector<256xf32>
    %307 = vector.shape_cast %306 : vector<256xf32> to vector<1x256xf32>
    %308 = arith.addf %301, %307 : vector<1x256xf32>
    %c0_152 = arith.constant 0 : index
    %c3840_153 = arith.constant 3840 : index
    %309 = vector.load %arg5[%c0_152, %c3840_153] : memref<2x12544xf32, #tpu.memory_space<vmem>>, vector<2x256xf32>
    %310 = vector.broadcast %202 : vector<1x256xf32> to vector<2x256xf32>
    %311 = arith.subf %309, %310 : vector<2x256xf32>
    %312 = arith.mulf %311, %311 : vector<2x256xf32>
    %cst_154 = arith.constant dense<0.000000e+00> : vector<256xf32>
    %313 = vector.multi_reduction <add>, %312, %cst_154 [0] : vector<2x256xf32> to vector<256xf32>
    %314 = vector.shape_cast %313 : vector<256xf32> to vector<1x256xf32>
    %315 = arith.addf %308, %314 : vector<1x256xf32>
    %c0_155 = arith.constant 0 : index
    %c4096_156 = arith.constant 4096 : index
    %316 = vector.load %arg5[%c0_155, %c4096_156] : memref<2x12544xf32, #tpu.memory_space<vmem>>, vector<2x256xf32>
    %317 = vector.broadcast %202 : vector<1x256xf32> to vector<2x256xf32>
    %318 = arith.subf %316, %317 : vector<2x256xf32>
    %319 = arith.mulf %318, %318 : vector<2x256xf32>
    %cst_157 = arith.constant dense<0.000000e+00> : vector<256xf32>
    %320 = vector.multi_reduction <add>, %319, %cst_157 [0] : vector<2x256xf32> to vector<256xf32>
    %321 = vector.shape_cast %320 : vector<256xf32> to vector<1x256xf32>
    %322 = arith.addf %315, %321 : vector<1x256xf32>
    %c0_158 = arith.constant 0 : index
    %c4352_159 = arith.constant 4352 : index
    %323 = vector.load %arg5[%c0_158, %c4352_159] : memref<2x12544xf32, #tpu.memory_space<vmem>>, vector<2x256xf32>
    %324 = vector.broadcast %202 : vector<1x256xf32> to vector<2x256xf32>
    %325 = arith.subf %323, %324 : vector<2x256xf32>
    %326 = arith.mulf %325, %325 : vector<2x256xf32>
    %cst_160 = arith.constant dense<0.000000e+00> : vector<256xf32>
    %327 = vector.multi_reduction <add>, %326, %cst_160 [0] : vector<2x256xf32> to vector<256xf32>
    %328 = vector.shape_cast %327 : vector<256xf32> to vector<1x256xf32>
    %329 = arith.addf %322, %328 : vector<1x256xf32>
    %c0_161 = arith.constant 0 : index
    %c4608_162 = arith.constant 4608 : index
    %330 = vector.load %arg5[%c0_161, %c4608_162] : memref<2x12544xf32, #tpu.memory_space<vmem>>, vector<2x256xf32>
    %331 = vector.broadcast %202 : vector<1x256xf32> to vector<2x256xf32>
    %332 = arith.subf %330, %331 : vector<2x256xf32>
    %333 = arith.mulf %332, %332 : vector<2x256xf32>
    %cst_163 = arith.constant dense<0.000000e+00> : vector<256xf32>
    %334 = vector.multi_reduction <add>, %333, %cst_163 [0] : vector<2x256xf32> to vector<256xf32>
    %335 = vector.shape_cast %334 : vector<256xf32> to vector<1x256xf32>
    %336 = arith.addf %329, %335 : vector<1x256xf32>
    %c0_164 = arith.constant 0 : index
    %c4864_165 = arith.constant 4864 : index
    %337 = vector.load %arg5[%c0_164, %c4864_165] : memref<2x12544xf32, #tpu.memory_space<vmem>>, vector<2x256xf32>
    %338 = vector.broadcast %202 : vector<1x256xf32> to vector<2x256xf32>
    %339 = arith.subf %337, %338 : vector<2x256xf32>
    %340 = arith.mulf %339, %339 : vector<2x256xf32>
    %cst_166 = arith.constant dense<0.000000e+00> : vector<256xf32>
    %341 = vector.multi_reduction <add>, %340, %cst_166 [0] : vector<2x256xf32> to vector<256xf32>
    %342 = vector.shape_cast %341 : vector<256xf32> to vector<1x256xf32>
    %343 = arith.addf %336, %342 : vector<1x256xf32>
    %c0_167 = arith.constant 0 : index
    %c5120_168 = arith.constant 5120 : index
    %344 = vector.load %arg5[%c0_167, %c5120_168] : memref<2x12544xf32, #tpu.memory_space<vmem>>, vector<2x256xf32>
    %345 = vector.broadcast %202 : vector<1x256xf32> to vector<2x256xf32>
    %346 = arith.subf %344, %345 : vector<2x256xf32>
    %347 = arith.mulf %346, %346 : vector<2x256xf32>
    %cst_169 = arith.constant dense<0.000000e+00> : vector<256xf32>
    %348 = vector.multi_reduction <add>, %347, %cst_169 [0] : vector<2x256xf32> to vector<256xf32>
    %349 = vector.shape_cast %348 : vector<256xf32> to vector<1x256xf32>
    %350 = arith.addf %343, %349 : vector<1x256xf32>
    %c0_170 = arith.constant 0 : index
    %c5376_171 = arith.constant 5376 : index
    %351 = vector.load %arg5[%c0_170, %c5376_171] : memref<2x12544xf32, #tpu.memory_space<vmem>>, vector<2x256xf32>
    %352 = vector.broadcast %202 : vector<1x256xf32> to vector<2x256xf32>
    %353 = arith.subf %351, %352 : vector<2x256xf32>
    %354 = arith.mulf %353, %353 : vector<2x256xf32>
    %cst_172 = arith.constant dense<0.000000e+00> : vector<256xf32>
    %355 = vector.multi_reduction <add>, %354, %cst_172 [0] : vector<2x256xf32> to vector<256xf32>
    %356 = vector.shape_cast %355 : vector<256xf32> to vector<1x256xf32>
    %357 = arith.addf %350, %356 : vector<1x256xf32>
    %c0_173 = arith.constant 0 : index
    %c5632_174 = arith.constant 5632 : index
    %358 = vector.load %arg5[%c0_173, %c5632_174] : memref<2x12544xf32, #tpu.memory_space<vmem>>, vector<2x256xf32>
    %359 = vector.broadcast %202 : vector<1x256xf32> to vector<2x256xf32>
    %360 = arith.subf %358, %359 : vector<2x256xf32>
    %361 = arith.mulf %360, %360 : vector<2x256xf32>
    %cst_175 = arith.constant dense<0.000000e+00> : vector<256xf32>
    %362 = vector.multi_reduction <add>, %361, %cst_175 [0] : vector<2x256xf32> to vector<256xf32>
    %363 = vector.shape_cast %362 : vector<256xf32> to vector<1x256xf32>
    %364 = arith.addf %357, %363 : vector<1x256xf32>
    %c0_176 = arith.constant 0 : index
    %c5888_177 = arith.constant 5888 : index
    %365 = vector.load %arg5[%c0_176, %c5888_177] : memref<2x12544xf32, #tpu.memory_space<vmem>>, vector<2x256xf32>
    %366 = vector.broadcast %202 : vector<1x256xf32> to vector<2x256xf32>
    %367 = arith.subf %365, %366 : vector<2x256xf32>
    %368 = arith.mulf %367, %367 : vector<2x256xf32>
    %cst_178 = arith.constant dense<0.000000e+00> : vector<256xf32>
    %369 = vector.multi_reduction <add>, %368, %cst_178 [0] : vector<2x256xf32> to vector<256xf32>
    %370 = vector.shape_cast %369 : vector<256xf32> to vector<1x256xf32>
    %371 = arith.addf %364, %370 : vector<1x256xf32>
    %c0_179 = arith.constant 0 : index
    %c6144_180 = arith.constant 6144 : index
    %372 = vector.load %arg5[%c0_179, %c6144_180] : memref<2x12544xf32, #tpu.memory_space<vmem>>, vector<2x256xf32>
    %373 = vector.broadcast %202 : vector<1x256xf32> to vector<2x256xf32>
    %374 = arith.subf %372, %373 : vector<2x256xf32>
    %375 = arith.mulf %374, %374 : vector<2x256xf32>
    %cst_181 = arith.constant dense<0.000000e+00> : vector<256xf32>
    %376 = vector.multi_reduction <add>, %375, %cst_181 [0] : vector<2x256xf32> to vector<256xf32>
    %377 = vector.shape_cast %376 : vector<256xf32> to vector<1x256xf32>
    %378 = arith.addf %371, %377 : vector<1x256xf32>
    %c0_182 = arith.constant 0 : index
    %c6400_183 = arith.constant 6400 : index
    %379 = vector.load %arg5[%c0_182, %c6400_183] : memref<2x12544xf32, #tpu.memory_space<vmem>>, vector<2x256xf32>
    %380 = vector.broadcast %202 : vector<1x256xf32> to vector<2x256xf32>
    %381 = arith.subf %379, %380 : vector<2x256xf32>
    %382 = arith.mulf %381, %381 : vector<2x256xf32>
    %cst_184 = arith.constant dense<0.000000e+00> : vector<256xf32>
    %383 = vector.multi_reduction <add>, %382, %cst_184 [0] : vector<2x256xf32> to vector<256xf32>
    %384 = vector.shape_cast %383 : vector<256xf32> to vector<1x256xf32>
    %385 = arith.addf %378, %384 : vector<1x256xf32>
    %c0_185 = arith.constant 0 : index
    %c6656_186 = arith.constant 6656 : index
    %386 = vector.load %arg5[%c0_185, %c6656_186] : memref<2x12544xf32, #tpu.memory_space<vmem>>, vector<2x256xf32>
    %387 = vector.broadcast %202 : vector<1x256xf32> to vector<2x256xf32>
    %388 = arith.subf %386, %387 : vector<2x256xf32>
    %389 = arith.mulf %388, %388 : vector<2x256xf32>
    %cst_187 = arith.constant dense<0.000000e+00> : vector<256xf32>
    %390 = vector.multi_reduction <add>, %389, %cst_187 [0] : vector<2x256xf32> to vector<256xf32>
    %391 = vector.shape_cast %390 : vector<256xf32> to vector<1x256xf32>
    %392 = arith.addf %385, %391 : vector<1x256xf32>
    %c0_188 = arith.constant 0 : index
    %c6912_189 = arith.constant 6912 : index
    %393 = vector.load %arg5[%c0_188, %c6912_189] : memref<2x12544xf32, #tpu.memory_space<vmem>>, vector<2x256xf32>
    %394 = vector.broadcast %202 : vector<1x256xf32> to vector<2x256xf32>
    %395 = arith.subf %393, %394 : vector<2x256xf32>
    %396 = arith.mulf %395, %395 : vector<2x256xf32>
    %cst_190 = arith.constant dense<0.000000e+00> : vector<256xf32>
    %397 = vector.multi_reduction <add>, %396, %cst_190 [0] : vector<2x256xf32> to vector<256xf32>
    %398 = vector.shape_cast %397 : vector<256xf32> to vector<1x256xf32>
    %399 = arith.addf %392, %398 : vector<1x256xf32>
    %c0_191 = arith.constant 0 : index
    %c7168_192 = arith.constant 7168 : index
    %400 = vector.load %arg5[%c0_191, %c7168_192] : memref<2x12544xf32, #tpu.memory_space<vmem>>, vector<2x256xf32>
    %401 = vector.broadcast %202 : vector<1x256xf32> to vector<2x256xf32>
    %402 = arith.subf %400, %401 : vector<2x256xf32>
    %403 = arith.mulf %402, %402 : vector<2x256xf32>
    %cst_193 = arith.constant dense<0.000000e+00> : vector<256xf32>
    %404 = vector.multi_reduction <add>, %403, %cst_193 [0] : vector<2x256xf32> to vector<256xf32>
    %405 = vector.shape_cast %404 : vector<256xf32> to vector<1x256xf32>
    %406 = arith.addf %399, %405 : vector<1x256xf32>
    %c0_194 = arith.constant 0 : index
    %c7424_195 = arith.constant 7424 : index
    %407 = vector.load %arg5[%c0_194, %c7424_195] : memref<2x12544xf32, #tpu.memory_space<vmem>>, vector<2x256xf32>
    %408 = vector.broadcast %202 : vector<1x256xf32> to vector<2x256xf32>
    %409 = arith.subf %407, %408 : vector<2x256xf32>
    %410 = arith.mulf %409, %409 : vector<2x256xf32>
    %cst_196 = arith.constant dense<0.000000e+00> : vector<256xf32>
    %411 = vector.multi_reduction <add>, %410, %cst_196 [0] : vector<2x256xf32> to vector<256xf32>
    %412 = vector.shape_cast %411 : vector<256xf32> to vector<1x256xf32>
    %413 = arith.addf %406, %412 : vector<1x256xf32>
    %c0_197 = arith.constant 0 : index
    %c7680_198 = arith.constant 7680 : index
    %414 = vector.load %arg5[%c0_197, %c7680_198] : memref<2x12544xf32, #tpu.memory_space<vmem>>, vector<2x256xf32>
    %415 = vector.broadcast %202 : vector<1x256xf32> to vector<2x256xf32>
    %416 = arith.subf %414, %415 : vector<2x256xf32>
    %417 = arith.mulf %416, %416 : vector<2x256xf32>
    %cst_199 = arith.constant dense<0.000000e+00> : vector<256xf32>
    %418 = vector.multi_reduction <add>, %417, %cst_199 [0] : vector<2x256xf32> to vector<256xf32>
    %419 = vector.shape_cast %418 : vector<256xf32> to vector<1x256xf32>
    %420 = arith.addf %413, %419 : vector<1x256xf32>
    %c0_200 = arith.constant 0 : index
    %c7936_201 = arith.constant 7936 : index
    %421 = vector.load %arg5[%c0_200, %c7936_201] : memref<2x12544xf32, #tpu.memory_space<vmem>>, vector<2x256xf32>
    %422 = vector.broadcast %202 : vector<1x256xf32> to vector<2x256xf32>
    %423 = arith.subf %421, %422 : vector<2x256xf32>
    %424 = arith.mulf %423, %423 : vector<2x256xf32>
    %cst_202 = arith.constant dense<0.000000e+00> : vector<256xf32>
    %425 = vector.multi_reduction <add>, %424, %cst_202 [0] : vector<2x256xf32> to vector<256xf32>
    %426 = vector.shape_cast %425 : vector<256xf32> to vector<1x256xf32>
    %427 = arith.addf %420, %426 : vector<1x256xf32>
    %c0_203 = arith.constant 0 : index
    %c8192_204 = arith.constant 8192 : index
    %428 = vector.load %arg5[%c0_203, %c8192_204] : memref<2x12544xf32, #tpu.memory_space<vmem>>, vector<2x256xf32>
    %429 = vector.broadcast %202 : vector<1x256xf32> to vector<2x256xf32>
    %430 = arith.subf %428, %429 : vector<2x256xf32>
    %431 = arith.mulf %430, %430 : vector<2x256xf32>
    %cst_205 = arith.constant dense<0.000000e+00> : vector<256xf32>
    %432 = vector.multi_reduction <add>, %431, %cst_205 [0] : vector<2x256xf32> to vector<256xf32>
    %433 = vector.shape_cast %432 : vector<256xf32> to vector<1x256xf32>
    %434 = arith.addf %427, %433 : vector<1x256xf32>
    %c0_206 = arith.constant 0 : index
    %c8448_207 = arith.constant 8448 : index
    %435 = vector.load %arg5[%c0_206, %c8448_207] : memref<2x12544xf32, #tpu.memory_space<vmem>>, vector<2x256xf32>
    %436 = vector.broadcast %202 : vector<1x256xf32> to vector<2x256xf32>
    %437 = arith.subf %435, %436 : vector<2x256xf32>
    %438 = arith.mulf %437, %437 : vector<2x256xf32>
    %cst_208 = arith.constant dense<0.000000e+00> : vector<256xf32>
    %439 = vector.multi_reduction <add>, %438, %cst_208 [0] : vector<2x256xf32> to vector<256xf32>
    %440 = vector.shape_cast %439 : vector<256xf32> to vector<1x256xf32>
    %441 = arith.addf %434, %440 : vector<1x256xf32>
    %c0_209 = arith.constant 0 : index
    %c8704_210 = arith.constant 8704 : index
    %442 = vector.load %arg5[%c0_209, %c8704_210] : memref<2x12544xf32, #tpu.memory_space<vmem>>, vector<2x256xf32>
    %443 = vector.broadcast %202 : vector<1x256xf32> to vector<2x256xf32>
    %444 = arith.subf %442, %443 : vector<2x256xf32>
    %445 = arith.mulf %444, %444 : vector<2x256xf32>
    %cst_211 = arith.constant dense<0.000000e+00> : vector<256xf32>
    %446 = vector.multi_reduction <add>, %445, %cst_211 [0] : vector<2x256xf32> to vector<256xf32>
    %447 = vector.shape_cast %446 : vector<256xf32> to vector<1x256xf32>
    %448 = arith.addf %441, %447 : vector<1x256xf32>
    %c0_212 = arith.constant 0 : index
    %c8960_213 = arith.constant 8960 : index
    %449 = vector.load %arg5[%c0_212, %c8960_213] : memref<2x12544xf32, #tpu.memory_space<vmem>>, vector<2x256xf32>
    %450 = vector.broadcast %202 : vector<1x256xf32> to vector<2x256xf32>
    %451 = arith.subf %449, %450 : vector<2x256xf32>
    %452 = arith.mulf %451, %451 : vector<2x256xf32>
    %cst_214 = arith.constant dense<0.000000e+00> : vector<256xf32>
    %453 = vector.multi_reduction <add>, %452, %cst_214 [0] : vector<2x256xf32> to vector<256xf32>
    %454 = vector.shape_cast %453 : vector<256xf32> to vector<1x256xf32>
    %455 = arith.addf %448, %454 : vector<1x256xf32>
    %c0_215 = arith.constant 0 : index
    %c9216_216 = arith.constant 9216 : index
    %456 = vector.load %arg5[%c0_215, %c9216_216] : memref<2x12544xf32, #tpu.memory_space<vmem>>, vector<2x256xf32>
    %457 = vector.broadcast %202 : vector<1x256xf32> to vector<2x256xf32>
    %458 = arith.subf %456, %457 : vector<2x256xf32>
    %459 = arith.mulf %458, %458 : vector<2x256xf32>
    %cst_217 = arith.constant dense<0.000000e+00> : vector<256xf32>
    %460 = vector.multi_reduction <add>, %459, %cst_217 [0] : vector<2x256xf32> to vector<256xf32>
    %461 = vector.shape_cast %460 : vector<256xf32> to vector<1x256xf32>
    %462 = arith.addf %455, %461 : vector<1x256xf32>
    %c0_218 = arith.constant 0 : index
    %c9472_219 = arith.constant 9472 : index
    %463 = vector.load %arg5[%c0_218, %c9472_219] : memref<2x12544xf32, #tpu.memory_space<vmem>>, vector<2x256xf32>
    %464 = vector.broadcast %202 : vector<1x256xf32> to vector<2x256xf32>
    %465 = arith.subf %463, %464 : vector<2x256xf32>
    %466 = arith.mulf %465, %465 : vector<2x256xf32>
    %cst_220 = arith.constant dense<0.000000e+00> : vector<256xf32>
    %467 = vector.multi_reduction <add>, %466, %cst_220 [0] : vector<2x256xf32> to vector<256xf32>
    %468 = vector.shape_cast %467 : vector<256xf32> to vector<1x256xf32>
    %469 = arith.addf %462, %468 : vector<1x256xf32>
    %c0_221 = arith.constant 0 : index
    %c9728_222 = arith.constant 9728 : index
    %470 = vector.load %arg5[%c0_221, %c9728_222] : memref<2x12544xf32, #tpu.memory_space<vmem>>, vector<2x256xf32>
    %471 = vector.broadcast %202 : vector<1x256xf32> to vector<2x256xf32>
    %472 = arith.subf %470, %471 : vector<2x256xf32>
    %473 = arith.mulf %472, %472 : vector<2x256xf32>
    %cst_223 = arith.constant dense<0.000000e+00> : vector<256xf32>
    %474 = vector.multi_reduction <add>, %473, %cst_223 [0] : vector<2x256xf32> to vector<256xf32>
    %475 = vector.shape_cast %474 : vector<256xf32> to vector<1x256xf32>
    %476 = arith.addf %469, %475 : vector<1x256xf32>
    %c0_224 = arith.constant 0 : index
    %c9984_225 = arith.constant 9984 : index
    %477 = vector.load %arg5[%c0_224, %c9984_225] : memref<2x12544xf32, #tpu.memory_space<vmem>>, vector<2x256xf32>
    %478 = vector.broadcast %202 : vector<1x256xf32> to vector<2x256xf32>
    %479 = arith.subf %477, %478 : vector<2x256xf32>
    %480 = arith.mulf %479, %479 : vector<2x256xf32>
    %cst_226 = arith.constant dense<0.000000e+00> : vector<256xf32>
    %481 = vector.multi_reduction <add>, %480, %cst_226 [0] : vector<2x256xf32> to vector<256xf32>
    %482 = vector.shape_cast %481 : vector<256xf32> to vector<1x256xf32>
    %483 = arith.addf %476, %482 : vector<1x256xf32>
    %c0_227 = arith.constant 0 : index
    %c10240_228 = arith.constant 10240 : index
    %484 = vector.load %arg5[%c0_227, %c10240_228] : memref<2x12544xf32, #tpu.memory_space<vmem>>, vector<2x256xf32>
    %485 = vector.broadcast %202 : vector<1x256xf32> to vector<2x256xf32>
    %486 = arith.subf %484, %485 : vector<2x256xf32>
    %487 = arith.mulf %486, %486 : vector<2x256xf32>
    %cst_229 = arith.constant dense<0.000000e+00> : vector<256xf32>
    %488 = vector.multi_reduction <add>, %487, %cst_229 [0] : vector<2x256xf32> to vector<256xf32>
    %489 = vector.shape_cast %488 : vector<256xf32> to vector<1x256xf32>
    %490 = arith.addf %483, %489 : vector<1x256xf32>
    %c0_230 = arith.constant 0 : index
    %c10496_231 = arith.constant 10496 : index
    %491 = vector.load %arg5[%c0_230, %c10496_231] : memref<2x12544xf32, #tpu.memory_space<vmem>>, vector<2x256xf32>
    %492 = vector.broadcast %202 : vector<1x256xf32> to vector<2x256xf32>
    %493 = arith.subf %491, %492 : vector<2x256xf32>
    %494 = arith.mulf %493, %493 : vector<2x256xf32>
    %cst_232 = arith.constant dense<0.000000e+00> : vector<256xf32>
    %495 = vector.multi_reduction <add>, %494, %cst_232 [0] : vector<2x256xf32> to vector<256xf32>
    %496 = vector.shape_cast %495 : vector<256xf32> to vector<1x256xf32>
    %497 = arith.addf %490, %496 : vector<1x256xf32>
    %c0_233 = arith.constant 0 : index
    %c10752_234 = arith.constant 10752 : index
    %498 = vector.load %arg5[%c0_233, %c10752_234] : memref<2x12544xf32, #tpu.memory_space<vmem>>, vector<2x256xf32>
    %499 = vector.broadcast %202 : vector<1x256xf32> to vector<2x256xf32>
    %500 = arith.subf %498, %499 : vector<2x256xf32>
    %501 = arith.mulf %500, %500 : vector<2x256xf32>
    %cst_235 = arith.constant dense<0.000000e+00> : vector<256xf32>
    %502 = vector.multi_reduction <add>, %501, %cst_235 [0] : vector<2x256xf32> to vector<256xf32>
    %503 = vector.shape_cast %502 : vector<256xf32> to vector<1x256xf32>
    %504 = arith.addf %497, %503 : vector<1x256xf32>
    %c0_236 = arith.constant 0 : index
    %c11008_237 = arith.constant 11008 : index
    %505 = vector.load %arg5[%c0_236, %c11008_237] : memref<2x12544xf32, #tpu.memory_space<vmem>>, vector<2x256xf32>
    %506 = vector.broadcast %202 : vector<1x256xf32> to vector<2x256xf32>
    %507 = arith.subf %505, %506 : vector<2x256xf32>
    %508 = arith.mulf %507, %507 : vector<2x256xf32>
    %cst_238 = arith.constant dense<0.000000e+00> : vector<256xf32>
    %509 = vector.multi_reduction <add>, %508, %cst_238 [0] : vector<2x256xf32> to vector<256xf32>
    %510 = vector.shape_cast %509 : vector<256xf32> to vector<1x256xf32>
    %511 = arith.addf %504, %510 : vector<1x256xf32>
    %c0_239 = arith.constant 0 : index
    %c11264_240 = arith.constant 11264 : index
    %512 = vector.load %arg5[%c0_239, %c11264_240] : memref<2x12544xf32, #tpu.memory_space<vmem>>, vector<2x256xf32>
    %513 = vector.broadcast %202 : vector<1x256xf32> to vector<2x256xf32>
    %514 = arith.subf %512, %513 : vector<2x256xf32>
    %515 = arith.mulf %514, %514 : vector<2x256xf32>
    %cst_241 = arith.constant dense<0.000000e+00> : vector<256xf32>
    %516 = vector.multi_reduction <add>, %515, %cst_241 [0] : vector<2x256xf32> to vector<256xf32>
    %517 = vector.shape_cast %516 : vector<256xf32> to vector<1x256xf32>
    %518 = arith.addf %511, %517 : vector<1x256xf32>
    %c0_242 = arith.constant 0 : index
    %c11520_243 = arith.constant 11520 : index
    %519 = vector.load %arg5[%c0_242, %c11520_243] : memref<2x12544xf32, #tpu.memory_space<vmem>>, vector<2x256xf32>
    %520 = vector.broadcast %202 : vector<1x256xf32> to vector<2x256xf32>
    %521 = arith.subf %519, %520 : vector<2x256xf32>
    %522 = arith.mulf %521, %521 : vector<2x256xf32>
    %cst_244 = arith.constant dense<0.000000e+00> : vector<256xf32>
    %523 = vector.multi_reduction <add>, %522, %cst_244 [0] : vector<2x256xf32> to vector<256xf32>
    %524 = vector.shape_cast %523 : vector<256xf32> to vector<1x256xf32>
    %525 = arith.addf %518, %524 : vector<1x256xf32>
    %c0_245 = arith.constant 0 : index
    %c11776_246 = arith.constant 11776 : index
    %526 = vector.load %arg5[%c0_245, %c11776_246] : memref<2x12544xf32, #tpu.memory_space<vmem>>, vector<2x256xf32>
    %527 = vector.broadcast %202 : vector<1x256xf32> to vector<2x256xf32>
    %528 = arith.subf %526, %527 : vector<2x256xf32>
    %529 = arith.mulf %528, %528 : vector<2x256xf32>
    %cst_247 = arith.constant dense<0.000000e+00> : vector<256xf32>
    %530 = vector.multi_reduction <add>, %529, %cst_247 [0] : vector<2x256xf32> to vector<256xf32>
    %531 = vector.shape_cast %530 : vector<256xf32> to vector<1x256xf32>
    %532 = arith.addf %525, %531 : vector<1x256xf32>
    %c0_248 = arith.constant 0 : index
    %c12032_249 = arith.constant 12032 : index
    %533 = vector.load %arg5[%c0_248, %c12032_249] : memref<2x12544xf32, #tpu.memory_space<vmem>>, vector<2x256xf32>
    %534 = vector.broadcast %202 : vector<1x256xf32> to vector<2x256xf32>
    %535 = arith.subf %533, %534 : vector<2x256xf32>
    %536 = arith.mulf %535, %535 : vector<2x256xf32>
    %cst_250 = arith.constant dense<0.000000e+00> : vector<256xf32>
    %537 = vector.multi_reduction <add>, %536, %cst_250 [0] : vector<2x256xf32> to vector<256xf32>
    %538 = vector.shape_cast %537 : vector<256xf32> to vector<1x256xf32>
    %539 = arith.addf %532, %538 : vector<1x256xf32>
    %c0_251 = arith.constant 0 : index
    %c12288_252 = arith.constant 12288 : index
    %540 = vector.load %arg5[%c0_251, %c12288_252] : memref<2x12544xf32, #tpu.memory_space<vmem>>, vector<2x256xf32>
    %541 = vector.broadcast %202 : vector<1x256xf32> to vector<2x256xf32>
    %542 = arith.subf %540, %541 : vector<2x256xf32>
    %543 = arith.mulf %542, %542 : vector<2x256xf32>
    %cst_253 = arith.constant dense<0.000000e+00> : vector<256xf32>
    %544 = vector.multi_reduction <add>, %543, %cst_253 [0] : vector<2x256xf32> to vector<256xf32>
    %545 = vector.shape_cast %544 : vector<256xf32> to vector<1x256xf32>
    %546 = arith.addf %539, %545 : vector<1x256xf32>
    %cst_254 = arith.constant 9.800000e+01 : f32
    %547 = vector.broadcast %cst_254 : f32 to vector<1x256xf32>
    %548 = arith.divf %546, %547 : vector<1x256xf32>
    %c0_255 = arith.constant 0 : index
    %c0_256 = arith.constant 0 : index
    %549 = vector.load %arg3[%c0_255, %c0_256] : memref<1x256xf32, #tpu.memory_space<vmem>>, vector<1x256xf32>
    %cst_257 = arith.constant 9.99999974E-6 : f32
    %550 = vector.broadcast %cst_257 : f32 to vector<1x256xf32>
    %551 = arith.addf %548, %550 : vector<1x256xf32>
    %552 = math.rsqrt %551 : vector<1x256xf32>
    %553 = arith.mulf %549, %552 : vector<1x256xf32>
    %c0_258 = arith.constant 0 : index
    %c0_259 = arith.constant 0 : index
    %554 = vector.load %arg4[%c0_258, %c0_259] : memref<1x256xf32, #tpu.memory_space<vmem>>, vector<1x256xf32>
    %555 = arith.mulf %202, %553 : vector<1x256xf32>
    %556 = arith.subf %554, %555 : vector<1x256xf32>
    %c0_260 = arith.constant 0 : index
    %c0_261 = arith.constant 0 : index
    %557 = vector.load %arg5[%c0_260, %c0_261] : memref<2x12544xf32, #tpu.memory_space<vmem>>, vector<2x256xf32>
    %558 = vector.broadcast %553 : vector<1x256xf32> to vector<2x256xf32>
    %559 = arith.mulf %557, %558 : vector<2x256xf32>
    %560 = vector.broadcast %556 : vector<1x256xf32> to vector<2x256xf32>
    %561 = arith.addf %559, %560 : vector<2x256xf32>
    %cst_262 = arith.constant 0.000000e+00 : f32
    %562 = vector.broadcast %cst_262 : f32 to vector<2x256xf32>
    %563 = arith.maximumf %561, %562 : vector<2x256xf32>
    %c0_263 = arith.constant 0 : index
    %c0_264 = arith.constant 0 : index
    %564 = vector.load %arg5[%c0_263, %c0_264] : memref<2x12544xf32, #tpu.memory_space<vmem>>, vector<2x256xf32>
    tpu.vector_store %arg5[%c0_263, %c0_264], %563 {strides = array<i32>} : memref<2x12544xf32, #tpu.memory_space<vmem>>, vector<2x256xf32>,
    %c0_265 = arith.constant 0 : index
    %c256_266 = arith.constant 256 : index
    %565 = vector.load %arg5[%c0_265, %c256_266] : memref<2x12544xf32, #tpu.memory_space<vmem>>, vector<2x256xf32>
    %566 = vector.broadcast %553 : vector<1x256xf32> to vector<2x256xf32>
    %567 = arith.mulf %565, %566 : vector<2x256xf32>
    %568 = vector.broadcast %556 : vector<1x256xf32> to vector<2x256xf32>
    %569 = arith.addf %567, %568 : vector<2x256xf32>
    %cst_267 = arith.constant 0.000000e+00 : f32
    %570 = vector.broadcast %cst_267 : f32 to vector<2x256xf32>
    %571 = arith.maximumf %569, %570 : vector<2x256xf32>
    %c0_268 = arith.constant 0 : index
    %c256_269 = arith.constant 256 : index
    %572 = vector.load %arg5[%c0_268, %c256_269] : memref<2x12544xf32, #tpu.memory_space<vmem>>, vector<2x256xf32>
    tpu.vector_store %arg5[%c0_268, %c256_269], %571 {strides = array<i32>} : memref<2x12544xf32, #tpu.memory_space<vmem>>, vector<2x256xf32>,
    %c0_270 = arith.constant 0 : index
    %c512_271 = arith.constant 512 : index
    %573 = vector.load %arg5[%c0_270, %c512_271] : memref<2x12544xf32, #tpu.memory_space<vmem>>, vector<2x256xf32>
    %574 = vector.broadcast %553 : vector<1x256xf32> to vector<2x256xf32>
    %575 = arith.mulf %573, %574 : vector<2x256xf32>
    %576 = vector.broadcast %556 : vector<1x256xf32> to vector<2x256xf32>
    %577 = arith.addf %575, %576 : vector<2x256xf32>
    %cst_272 = arith.constant 0.000000e+00 : f32
    %578 = vector.broadcast %cst_272 : f32 to vector<2x256xf32>
    %579 = arith.maximumf %577, %578 : vector<2x256xf32>
    %c0_273 = arith.constant 0 : index
    %c512_274 = arith.constant 512 : index
    %580 = vector.load %arg5[%c0_273, %c512_274] : memref<2x12544xf32, #tpu.memory_space<vmem>>, vector<2x256xf32>
    tpu.vector_store %arg5[%c0_273, %c512_274], %579 {strides = array<i32>} : memref<2x12544xf32, #tpu.memory_space<vmem>>, vector<2x256xf32>,
    %c0_275 = arith.constant 0 : index
    %c768_276 = arith.constant 768 : index
    %581 = vector.load %arg5[%c0_275, %c768_276] : memref<2x12544xf32, #tpu.memory_space<vmem>>, vector<2x256xf32>
    %582 = vector.broadcast %553 : vector<1x256xf32> to vector<2x256xf32>
    %583 = arith.mulf %581, %582 : vector<2x256xf32>
    %584 = vector.broadcast %556 : vector<1x256xf32> to vector<2x256xf32>
    %585 = arith.addf %583, %584 : vector<2x256xf32>
    %cst_277 = arith.constant 0.000000e+00 : f32
    %586 = vector.broadcast %cst_277 : f32 to vector<2x256xf32>
    %587 = arith.maximumf %585, %586 : vector<2x256xf32>
    %c0_278 = arith.constant 0 : index
    %c768_279 = arith.constant 768 : index
    %588 = vector.load %arg5[%c0_278, %c768_279] : memref<2x12544xf32, #tpu.memory_space<vmem>>, vector<2x256xf32>
    tpu.vector_store %arg5[%c0_278, %c768_279], %587 {strides = array<i32>} : memref<2x12544xf32, #tpu.memory_space<vmem>>, vector<2x256xf32>,
    %c0_280 = arith.constant 0 : index
    %c1024_281 = arith.constant 1024 : index
    %589 = vector.load %arg5[%c0_280, %c1024_281] : memref<2x12544xf32, #tpu.memory_space<vmem>>, vector<2x256xf32>
    %590 = vector.broadcast %553 : vector<1x256xf32> to vector<2x256xf32>
    %591 = arith.mulf %589, %590 : vector<2x256xf32>
    %592 = vector.broadcast %556 : vector<1x256xf32> to vector<2x256xf32>
    %593 = arith.addf %591, %592 : vector<2x256xf32>
    %cst_282 = arith.constant 0.000000e+00 : f32
    %594 = vector.broadcast %cst_282 : f32 to vector<2x256xf32>
    %595 = arith.maximumf %593, %594 : vector<2x256xf32>
    %c0_283 = arith.constant 0 : index
    %c1024_284 = arith.constant 1024 : index
    %596 = vector.load %arg5[%c0_283, %c1024_284] : memref<2x12544xf32, #tpu.memory_space<vmem>>, vector<2x256xf32>
    tpu.vector_store %arg5[%c0_283, %c1024_284], %595 {strides = array<i32>} : memref<2x12544xf32, #tpu.memory_space<vmem>>, vector<2x256xf32>,
    %c0_285 = arith.constant 0 : index
    %c1280_286 = arith.constant 1280 : index
    %597 = vector.load %arg5[%c0_285, %c1280_286] : memref<2x12544xf32, #tpu.memory_space<vmem>>, vector<2x256xf32>
    %598 = vector.broadcast %553 : vector<1x256xf32> to vector<2x256xf32>
    %599 = arith.mulf %597, %598 : vector<2x256xf32>
    %600 = vector.broadcast %556 : vector<1x256xf32> to vector<2x256xf32>
    %601 = arith.addf %599, %600 : vector<2x256xf32>
    %cst_287 = arith.constant 0.000000e+00 : f32
    %602 = vector.broadcast %cst_287 : f32 to vector<2x256xf32>
    %603 = arith.maximumf %601, %602 : vector<2x256xf32>
    %c0_288 = arith.constant 0 : index
    %c1280_289 = arith.constant 1280 : index
    %604 = vector.load %arg5[%c0_288, %c1280_289] : memref<2x12544xf32, #tpu.memory_space<vmem>>, vector<2x256xf32>
    tpu.vector_store %arg5[%c0_288, %c1280_289], %603 {strides = array<i32>} : memref<2x12544xf32, #tpu.memory_space<vmem>>, vector<2x256xf32>,
    %c0_290 = arith.constant 0 : index
    %c1536_291 = arith.constant 1536 : index
    %605 = vector.load %arg5[%c0_290, %c1536_291] : memref<2x12544xf32, #tpu.memory_space<vmem>>, vector<2x256xf32>
    %606 = vector.broadcast %553 : vector<1x256xf32> to vector<2x256xf32>
    %607 = arith.mulf %605, %606 : vector<2x256xf32>
    %608 = vector.broadcast %556 : vector<1x256xf32> to vector<2x256xf32>
    %609 = arith.addf %607, %608 : vector<2x256xf32>
    %cst_292 = arith.constant 0.000000e+00 : f32
    %610 = vector.broadcast %cst_292 : f32 to vector<2x256xf32>
    %611 = arith.maximumf %609, %610 : vector<2x256xf32>
    %c0_293 = arith.constant 0 : index
    %c1536_294 = arith.constant 1536 : index
    %612 = vector.load %arg5[%c0_293, %c1536_294] : memref<2x12544xf32, #tpu.memory_space<vmem>>, vector<2x256xf32>
    tpu.vector_store %arg5[%c0_293, %c1536_294], %611 {strides = array<i32>} : memref<2x12544xf32, #tpu.memory_space<vmem>>, vector<2x256xf32>,
    %c0_295 = arith.constant 0 : index
    %c1792_296 = arith.constant 1792 : index
    %613 = vector.load %arg5[%c0_295, %c1792_296] : memref<2x12544xf32, #tpu.memory_space<vmem>>, vector<2x256xf32>
    %614 = vector.broadcast %553 : vector<1x256xf32> to vector<2x256xf32>
    %615 = arith.mulf %613, %614 : vector<2x256xf32>
    %616 = vector.broadcast %556 : vector<1x256xf32> to vector<2x256xf32>
    %617 = arith.addf %615, %616 : vector<2x256xf32>
    %cst_297 = arith.constant 0.000000e+00 : f32
    %618 = vector.broadcast %cst_297 : f32 to vector<2x256xf32>
    %619 = arith.maximumf %617, %618 : vector<2x256xf32>
    %c0_298 = arith.constant 0 : index
    %c1792_299 = arith.constant 1792 : index
    %620 = vector.load %arg5[%c0_298, %c1792_299] : memref<2x12544xf32, #tpu.memory_space<vmem>>, vector<2x256xf32>
    tpu.vector_store %arg5[%c0_298, %c1792_299], %619 {strides = array<i32>} : memref<2x12544xf32, #tpu.memory_space<vmem>>, vector<2x256xf32>,
    %c0_300 = arith.constant 0 : index
    %c2048_301 = arith.constant 2048 : index
    %621 = vector.load %arg5[%c0_300, %c2048_301] : memref<2x12544xf32, #tpu.memory_space<vmem>>, vector<2x256xf32>
    %622 = vector.broadcast %553 : vector<1x256xf32> to vector<2x256xf32>
    %623 = arith.mulf %621, %622 : vector<2x256xf32>
    %624 = vector.broadcast %556 : vector<1x256xf32> to vector<2x256xf32>
    %625 = arith.addf %623, %624 : vector<2x256xf32>
    %cst_302 = arith.constant 0.000000e+00 : f32
    %626 = vector.broadcast %cst_302 : f32 to vector<2x256xf32>
    %627 = arith.maximumf %625, %626 : vector<2x256xf32>
    %c0_303 = arith.constant 0 : index
    %c2048_304 = arith.constant 2048 : index
    %628 = vector.load %arg5[%c0_303, %c2048_304] : memref<2x12544xf32, #tpu.memory_space<vmem>>, vector<2x256xf32>
    tpu.vector_store %arg5[%c0_303, %c2048_304], %627 {strides = array<i32>} : memref<2x12544xf32, #tpu.memory_space<vmem>>, vector<2x256xf32>,
    %c0_305 = arith.constant 0 : index
    %c2304_306 = arith.constant 2304 : index
    %629 = vector.load %arg5[%c0_305, %c2304_306] : memref<2x12544xf32, #tpu.memory_space<vmem>>, vector<2x256xf32>
    %630 = vector.broadcast %553 : vector<1x256xf32> to vector<2x256xf32>
    %631 = arith.mulf %629, %630 : vector<2x256xf32>
    %632 = vector.broadcast %556 : vector<1x256xf32> to vector<2x256xf32>
    %633 = arith.addf %631, %632 : vector<2x256xf32>
    %cst_307 = arith.constant 0.000000e+00 : f32
    %634 = vector.broadcast %cst_307 : f32 to vector<2x256xf32>
    %635 = arith.maximumf %633, %634 : vector<2x256xf32>
    %c0_308 = arith.constant 0 : index
    %c2304_309 = arith.constant 2304 : index
    %636 = vector.load %arg5[%c0_308, %c2304_309] : memref<2x12544xf32, #tpu.memory_space<vmem>>, vector<2x256xf32>
    tpu.vector_store %arg5[%c0_308, %c2304_309], %635 {strides = array<i32>} : memref<2x12544xf32, #tpu.memory_space<vmem>>, vector<2x256xf32>,
    %c0_310 = arith.constant 0 : index
    %c2560_311 = arith.constant 2560 : index
    %637 = vector.load %arg5[%c0_310, %c2560_311] : memref<2x12544xf32, #tpu.memory_space<vmem>>, vector<2x256xf32>
    %638 = vector.broadcast %553 : vector<1x256xf32> to vector<2x256xf32>
    %639 = arith.mulf %637, %638 : vector<2x256xf32>
    %640 = vector.broadcast %556 : vector<1x256xf32> to vector<2x256xf32>
    %641 = arith.addf %639, %640 : vector<2x256xf32>
    %cst_312 = arith.constant 0.000000e+00 : f32
    %642 = vector.broadcast %cst_312 : f32 to vector<2x256xf32>
    %643 = arith.maximumf %641, %642 : vector<2x256xf32>
    %c0_313 = arith.constant 0 : index
    %c2560_314 = arith.constant 2560 : index
    %644 = vector.load %arg5[%c0_313, %c2560_314] : memref<2x12544xf32, #tpu.memory_space<vmem>>, vector<2x256xf32>
    tpu.vector_store %arg5[%c0_313, %c2560_314], %643 {strides = array<i32>} : memref<2x12544xf32, #tpu.memory_space<vmem>>, vector<2x256xf32>,
    %c0_315 = arith.constant 0 : index
    %c2816_316 = arith.constant 2816 : index
    %645 = vector.load %arg5[%c0_315, %c2816_316] : memref<2x12544xf32, #tpu.memory_space<vmem>>, vector<2x256xf32>
    %646 = vector.broadcast %553 : vector<1x256xf32> to vector<2x256xf32>
    %647 = arith.mulf %645, %646 : vector<2x256xf32>
    %648 = vector.broadcast %556 : vector<1x256xf32> to vector<2x256xf32>
    %649 = arith.addf %647, %648 : vector<2x256xf32>
    %cst_317 = arith.constant 0.000000e+00 : f32
    %650 = vector.broadcast %cst_317 : f32 to vector<2x256xf32>
    %651 = arith.maximumf %649, %650 : vector<2x256xf32>
    %c0_318 = arith.constant 0 : index
    %c2816_319 = arith.constant 2816 : index
    %652 = vector.load %arg5[%c0_318, %c2816_319] : memref<2x12544xf32, #tpu.memory_space<vmem>>, vector<2x256xf32>
    tpu.vector_store %arg5[%c0_318, %c2816_319], %651 {strides = array<i32>} : memref<2x12544xf32, #tpu.memory_space<vmem>>, vector<2x256xf32>,
    %c0_320 = arith.constant 0 : index
    %c3072_321 = arith.constant 3072 : index
    %653 = vector.load %arg5[%c0_320, %c3072_321] : memref<2x12544xf32, #tpu.memory_space<vmem>>, vector<2x256xf32>
    %654 = vector.broadcast %553 : vector<1x256xf32> to vector<2x256xf32>
    %655 = arith.mulf %653, %654 : vector<2x256xf32>
    %656 = vector.broadcast %556 : vector<1x256xf32> to vector<2x256xf32>
    %657 = arith.addf %655, %656 : vector<2x256xf32>
    %cst_322 = arith.constant 0.000000e+00 : f32
    %658 = vector.broadcast %cst_322 : f32 to vector<2x256xf32>
    %659 = arith.maximumf %657, %658 : vector<2x256xf32>
    %c0_323 = arith.constant 0 : index
    %c3072_324 = arith.constant 3072 : index
    %660 = vector.load %arg5[%c0_323, %c3072_324] : memref<2x12544xf32, #tpu.memory_space<vmem>>, vector<2x256xf32>
    tpu.vector_store %arg5[%c0_323, %c3072_324], %659 {strides = array<i32>} : memref<2x12544xf32, #tpu.memory_space<vmem>>, vector<2x256xf32>,
    %c0_325 = arith.constant 0 : index
    %c3328_326 = arith.constant 3328 : index
    %661 = vector.load %arg5[%c0_325, %c3328_326] : memref<2x12544xf32, #tpu.memory_space<vmem>>, vector<2x256xf32>
    %662 = vector.broadcast %553 : vector<1x256xf32> to vector<2x256xf32>
    %663 = arith.mulf %661, %662 : vector<2x256xf32>
    %664 = vector.broadcast %556 : vector<1x256xf32> to vector<2x256xf32>
    %665 = arith.addf %663, %664 : vector<2x256xf32>
    %cst_327 = arith.constant 0.000000e+00 : f32
    %666 = vector.broadcast %cst_327 : f32 to vector<2x256xf32>
    %667 = arith.maximumf %665, %666 : vector<2x256xf32>
    %c0_328 = arith.constant 0 : index
    %c3328_329 = arith.constant 3328 : index
    %668 = vector.load %arg5[%c0_328, %c3328_329] : memref<2x12544xf32, #tpu.memory_space<vmem>>, vector<2x256xf32>
    tpu.vector_store %arg5[%c0_328, %c3328_329], %667 {strides = array<i32>} : memref<2x12544xf32, #tpu.memory_space<vmem>>, vector<2x256xf32>,
    %c0_330 = arith.constant 0 : index
    %c3584_331 = arith.constant 3584 : index
    %669 = vector.load %arg5[%c0_330, %c3584_331] : memref<2x12544xf32, #tpu.memory_space<vmem>>, vector<2x256xf32>
    %670 = vector.broadcast %553 : vector<1x256xf32> to vector<2x256xf32>
    %671 = arith.mulf %669, %670 : vector<2x256xf32>
    %672 = vector.broadcast %556 : vector<1x256xf32> to vector<2x256xf32>
    %673 = arith.addf %671, %672 : vector<2x256xf32>
    %cst_332 = arith.constant 0.000000e+00 : f32
    %674 = vector.broadcast %cst_332 : f32 to vector<2x256xf32>
    %675 = arith.maximumf %673, %674 : vector<2x256xf32>
    %c0_333 = arith.constant 0 : index
    %c3584_334 = arith.constant 3584 : index
    %676 = vector.load %arg5[%c0_333, %c3584_334] : memref<2x12544xf32, #tpu.memory_space<vmem>>, vector<2x256xf32>
    tpu.vector_store %arg5[%c0_333, %c3584_334], %675 {strides = array<i32>} : memref<2x12544xf32, #tpu.memory_space<vmem>>, vector<2x256xf32>,
    %c0_335 = arith.constant 0 : index
    %c3840_336 = arith.constant 3840 : index
    %677 = vector.load %arg5[%c0_335, %c3840_336] : memref<2x12544xf32, #tpu.memory_space<vmem>>, vector<2x256xf32>
    %678 = vector.broadcast %553 : vector<1x256xf32> to vector<2x256xf32>
    %679 = arith.mulf %677, %678 : vector<2x256xf32>
    %680 = vector.broadcast %556 : vector<1x256xf32> to vector<2x256xf32>
    %681 = arith.addf %679, %680 : vector<2x256xf32>
    %cst_337 = arith.constant 0.000000e+00 : f32
    %682 = vector.broadcast %cst_337 : f32 to vector<2x256xf32>
    %683 = arith.maximumf %681, %682 : vector<2x256xf32>
    %c0_338 = arith.constant 0 : index
    %c3840_339 = arith.constant 3840 : index
    %684 = vector.load %arg5[%c0_338, %c3840_339] : memref<2x12544xf32, #tpu.memory_space<vmem>>, vector<2x256xf32>
    tpu.vector_store %arg5[%c0_338, %c3840_339], %683 {strides = array<i32>} : memref<2x12544xf32, #tpu.memory_space<vmem>>, vector<2x256xf32>,
    %c0_340 = arith.constant 0 : index
    %c4096_341 = arith.constant 4096 : index
    %685 = vector.load %arg5[%c0_340, %c4096_341] : memref<2x12544xf32, #tpu.memory_space<vmem>>, vector<2x256xf32>
    %686 = vector.broadcast %553 : vector<1x256xf32> to vector<2x256xf32>
    %687 = arith.mulf %685, %686 : vector<2x256xf32>
    %688 = vector.broadcast %556 : vector<1x256xf32> to vector<2x256xf32>
    %689 = arith.addf %687, %688 : vector<2x256xf32>
    %cst_342 = arith.constant 0.000000e+00 : f32
    %690 = vector.broadcast %cst_342 : f32 to vector<2x256xf32>
    %691 = arith.maximumf %689, %690 : vector<2x256xf32>
    %c0_343 = arith.constant 0 : index
    %c4096_344 = arith.constant 4096 : index
    %692 = vector.load %arg5[%c0_343, %c4096_344] : memref<2x12544xf32, #tpu.memory_space<vmem>>, vector<2x256xf32>
    tpu.vector_store %arg5[%c0_343, %c4096_344], %691 {strides = array<i32>} : memref<2x12544xf32, #tpu.memory_space<vmem>>, vector<2x256xf32>,
    %c0_345 = arith.constant 0 : index
    %c4352_346 = arith.constant 4352 : index
    %693 = vector.load %arg5[%c0_345, %c4352_346] : memref<2x12544xf32, #tpu.memory_space<vmem>>, vector<2x256xf32>
    %694 = vector.broadcast %553 : vector<1x256xf32> to vector<2x256xf32>
    %695 = arith.mulf %693, %694 : vector<2x256xf32>
    %696 = vector.broadcast %556 : vector<1x256xf32> to vector<2x256xf32>
    %697 = arith.addf %695, %696 : vector<2x256xf32>
    %cst_347 = arith.constant 0.000000e+00 : f32
    %698 = vector.broadcast %cst_347 : f32 to vector<2x256xf32>
    %699 = arith.maximumf %697, %698 : vector<2x256xf32>
    %c0_348 = arith.constant 0 : index
    %c4352_349 = arith.constant 4352 : index
    %700 = vector.load %arg5[%c0_348, %c4352_349] : memref<2x12544xf32, #tpu.memory_space<vmem>>, vector<2x256xf32>
    tpu.vector_store %arg5[%c0_348, %c4352_349], %699 {strides = array<i32>} : memref<2x12544xf32, #tpu.memory_space<vmem>>, vector<2x256xf32>,
    %c0_350 = arith.constant 0 : index
    %c4608_351 = arith.constant 4608 : index
    %701 = vector.load %arg5[%c0_350, %c4608_351] : memref<2x12544xf32, #tpu.memory_space<vmem>>, vector<2x256xf32>
    %702 = vector.broadcast %553 : vector<1x256xf32> to vector<2x256xf32>
    %703 = arith.mulf %701, %702 : vector<2x256xf32>
    %704 = vector.broadcast %556 : vector<1x256xf32> to vector<2x256xf32>
    %705 = arith.addf %703, %704 : vector<2x256xf32>
    %cst_352 = arith.constant 0.000000e+00 : f32
    %706 = vector.broadcast %cst_352 : f32 to vector<2x256xf32>
    %707 = arith.maximumf %705, %706 : vector<2x256xf32>
    %c0_353 = arith.constant 0 : index
    %c4608_354 = arith.constant 4608 : index
    %708 = vector.load %arg5[%c0_353, %c4608_354] : memref<2x12544xf32, #tpu.memory_space<vmem>>, vector<2x256xf32>
    tpu.vector_store %arg5[%c0_353, %c4608_354], %707 {strides = array<i32>} : memref<2x12544xf32, #tpu.memory_space<vmem>>, vector<2x256xf32>,
    %c0_355 = arith.constant 0 : index
    %c4864_356 = arith.constant 4864 : index
    %709 = vector.load %arg5[%c0_355, %c4864_356] : memref<2x12544xf32, #tpu.memory_space<vmem>>, vector<2x256xf32>
    %710 = vector.broadcast %553 : vector<1x256xf32> to vector<2x256xf32>
    %711 = arith.mulf %709, %710 : vector<2x256xf32>
    %712 = vector.broadcast %556 : vector<1x256xf32> to vector<2x256xf32>
    %713 = arith.addf %711, %712 : vector<2x256xf32>
    %cst_357 = arith.constant 0.000000e+00 : f32
    %714 = vector.broadcast %cst_357 : f32 to vector<2x256xf32>
    %715 = arith.maximumf %713, %714 : vector<2x256xf32>
    %c0_358 = arith.constant 0 : index
    %c4864_359 = arith.constant 4864 : index
    %716 = vector.load %arg5[%c0_358, %c4864_359] : memref<2x12544xf32, #tpu.memory_space<vmem>>, vector<2x256xf32>
    tpu.vector_store %arg5[%c0_358, %c4864_359], %715 {strides = array<i32>} : memref<2x12544xf32, #tpu.memory_space<vmem>>, vector<2x256xf32>,
    %c0_360 = arith.constant 0 : index
    %c5120_361 = arith.constant 5120 : index
    %717 = vector.load %arg5[%c0_360, %c5120_361] : memref<2x12544xf32, #tpu.memory_space<vmem>>, vector<2x256xf32>
    %718 = vector.broadcast %553 : vector<1x256xf32> to vector<2x256xf32>
    %719 = arith.mulf %717, %718 : vector<2x256xf32>
    %720 = vector.broadcast %556 : vector<1x256xf32> to vector<2x256xf32>
    %721 = arith.addf %719, %720 : vector<2x256xf32>
    %cst_362 = arith.constant 0.000000e+00 : f32
    %722 = vector.broadcast %cst_362 : f32 to vector<2x256xf32>
    %723 = arith.maximumf %721, %722 : vector<2x256xf32>
    %c0_363 = arith.constant 0 : index
    %c5120_364 = arith.constant 5120 : index
    %724 = vector.load %arg5[%c0_363, %c5120_364] : memref<2x12544xf32, #tpu.memory_space<vmem>>, vector<2x256xf32>
    tpu.vector_store %arg5[%c0_363, %c5120_364], %723 {strides = array<i32>} : memref<2x12544xf32, #tpu.memory_space<vmem>>, vector<2x256xf32>,
    %c0_365 = arith.constant 0 : index
    %c5376_366 = arith.constant 5376 : index
    %725 = vector.load %arg5[%c0_365, %c5376_366] : memref<2x12544xf32, #tpu.memory_space<vmem>>, vector<2x256xf32>
    %726 = vector.broadcast %553 : vector<1x256xf32> to vector<2x256xf32>
    %727 = arith.mulf %725, %726 : vector<2x256xf32>
    %728 = vector.broadcast %556 : vector<1x256xf32> to vector<2x256xf32>
    %729 = arith.addf %727, %728 : vector<2x256xf32>
    %cst_367 = arith.constant 0.000000e+00 : f32
    %730 = vector.broadcast %cst_367 : f32 to vector<2x256xf32>
    %731 = arith.maximumf %729, %730 : vector<2x256xf32>
    %c0_368 = arith.constant 0 : index
    %c5376_369 = arith.constant 5376 : index
    %732 = vector.load %arg5[%c0_368, %c5376_369] : memref<2x12544xf32, #tpu.memory_space<vmem>>, vector<2x256xf32>
    tpu.vector_store %arg5[%c0_368, %c5376_369], %731 {strides = array<i32>} : memref<2x12544xf32, #tpu.memory_space<vmem>>, vector<2x256xf32>,
    %c0_370 = arith.constant 0 : index
    %c5632_371 = arith.constant 5632 : index
    %733 = vector.load %arg5[%c0_370, %c5632_371] : memref<2x12544xf32, #tpu.memory_space<vmem>>, vector<2x256xf32>
    %734 = vector.broadcast %553 : vector<1x256xf32> to vector<2x256xf32>
    %735 = arith.mulf %733, %734 : vector<2x256xf32>
    %736 = vector.broadcast %556 : vector<1x256xf32> to vector<2x256xf32>
    %737 = arith.addf %735, %736 : vector<2x256xf32>
    %cst_372 = arith.constant 0.000000e+00 : f32
    %738 = vector.broadcast %cst_372 : f32 to vector<2x256xf32>
    %739 = arith.maximumf %737, %738 : vector<2x256xf32>
    %c0_373 = arith.constant 0 : index
    %c5632_374 = arith.constant 5632 : index
    %740 = vector.load %arg5[%c0_373, %c5632_374] : memref<2x12544xf32, #tpu.memory_space<vmem>>, vector<2x256xf32>
    tpu.vector_store %arg5[%c0_373, %c5632_374], %739 {strides = array<i32>} : memref<2x12544xf32, #tpu.memory_space<vmem>>, vector<2x256xf32>,
    %c0_375 = arith.constant 0 : index
    %c5888_376 = arith.constant 5888 : index
    %741 = vector.load %arg5[%c0_375, %c5888_376] : memref<2x12544xf32, #tpu.memory_space<vmem>>, vector<2x256xf32>
    %742 = vector.broadcast %553 : vector<1x256xf32> to vector<2x256xf32>
    %743 = arith.mulf %741, %742 : vector<2x256xf32>
    %744 = vector.broadcast %556 : vector<1x256xf32> to vector<2x256xf32>
    %745 = arith.addf %743, %744 : vector<2x256xf32>
    %cst_377 = arith.constant 0.000000e+00 : f32
    %746 = vector.broadcast %cst_377 : f32 to vector<2x256xf32>
    %747 = arith.maximumf %745, %746 : vector<2x256xf32>
    %c0_378 = arith.constant 0 : index
    %c5888_379 = arith.constant 5888 : index
    %748 = vector.load %arg5[%c0_378, %c5888_379] : memref<2x12544xf32, #tpu.memory_space<vmem>>, vector<2x256xf32>
    tpu.vector_store %arg5[%c0_378, %c5888_379], %747 {strides = array<i32>} : memref<2x12544xf32, #tpu.memory_space<vmem>>, vector<2x256xf32>,
    %c0_380 = arith.constant 0 : index
    %c6144_381 = arith.constant 6144 : index
    %749 = vector.load %arg5[%c0_380, %c6144_381] : memref<2x12544xf32, #tpu.memory_space<vmem>>, vector<2x256xf32>
    %750 = vector.broadcast %553 : vector<1x256xf32> to vector<2x256xf32>
    %751 = arith.mulf %749, %750 : vector<2x256xf32>
    %752 = vector.broadcast %556 : vector<1x256xf32> to vector<2x256xf32>
    %753 = arith.addf %751, %752 : vector<2x256xf32>
    %cst_382 = arith.constant 0.000000e+00 : f32
    %754 = vector.broadcast %cst_382 : f32 to vector<2x256xf32>
    %755 = arith.maximumf %753, %754 : vector<2x256xf32>
    %c0_383 = arith.constant 0 : index
    %c6144_384 = arith.constant 6144 : index
    %756 = vector.load %arg5[%c0_383, %c6144_384] : memref<2x12544xf32, #tpu.memory_space<vmem>>, vector<2x256xf32>
    tpu.vector_store %arg5[%c0_383, %c6144_384], %755 {strides = array<i32>} : memref<2x12544xf32, #tpu.memory_space<vmem>>, vector<2x256xf32>,
    %c0_385 = arith.constant 0 : index
    %c6400_386 = arith.constant 6400 : index
    %757 = vector.load %arg5[%c0_385, %c6400_386] : memref<2x12544xf32, #tpu.memory_space<vmem>>, vector<2x256xf32>
    %758 = vector.broadcast %553 : vector<1x256xf32> to vector<2x256xf32>
    %759 = arith.mulf %757, %758 : vector<2x256xf32>
    %760 = vector.broadcast %556 : vector<1x256xf32> to vector<2x256xf32>
    %761 = arith.addf %759, %760 : vector<2x256xf32>
    %cst_387 = arith.constant 0.000000e+00 : f32
    %762 = vector.broadcast %cst_387 : f32 to vector<2x256xf32>
    %763 = arith.maximumf %761, %762 : vector<2x256xf32>
    %c0_388 = arith.constant 0 : index
    %c6400_389 = arith.constant 6400 : index
    %764 = vector.load %arg5[%c0_388, %c6400_389] : memref<2x12544xf32, #tpu.memory_space<vmem>>, vector<2x256xf32>
    tpu.vector_store %arg5[%c0_388, %c6400_389], %763 {strides = array<i32>} : memref<2x12544xf32, #tpu.memory_space<vmem>>, vector<2x256xf32>,
    %c0_390 = arith.constant 0 : index
    %c6656_391 = arith.constant 6656 : index
    %765 = vector.load %arg5[%c0_390, %c6656_391] : memref<2x12544xf32, #tpu.memory_space<vmem>>, vector<2x256xf32>
    %766 = vector.broadcast %553 : vector<1x256xf32> to vector<2x256xf32>
    %767 = arith.mulf %765, %766 : vector<2x256xf32>
    %768 = vector.broadcast %556 : vector<1x256xf32> to vector<2x256xf32>
    %769 = arith.addf %767, %768 : vector<2x256xf32>
    %cst_392 = arith.constant 0.000000e+00 : f32
    %770 = vector.broadcast %cst_392 : f32 to vector<2x256xf32>
    %771 = arith.maximumf %769, %770 : vector<2x256xf32>
    %c0_393 = arith.constant 0 : index
    %c6656_394 = arith.constant 6656 : index
    %772 = vector.load %arg5[%c0_393, %c6656_394] : memref<2x12544xf32, #tpu.memory_space<vmem>>, vector<2x256xf32>
    tpu.vector_store %arg5[%c0_393, %c6656_394], %771 {strides = array<i32>} : memref<2x12544xf32, #tpu.memory_space<vmem>>, vector<2x256xf32>,
    %c0_395 = arith.constant 0 : index
    %c6912_396 = arith.constant 6912 : index
    %773 = vector.load %arg5[%c0_395, %c6912_396] : memref<2x12544xf32, #tpu.memory_space<vmem>>, vector<2x256xf32>
    %774 = vector.broadcast %553 : vector<1x256xf32> to vector<2x256xf32>
    %775 = arith.mulf %773, %774 : vector<2x256xf32>
    %776 = vector.broadcast %556 : vector<1x256xf32> to vector<2x256xf32>
    %777 = arith.addf %775, %776 : vector<2x256xf32>
    %cst_397 = arith.constant 0.000000e+00 : f32
    %778 = vector.broadcast %cst_397 : f32 to vector<2x256xf32>
    %779 = arith.maximumf %777, %778 : vector<2x256xf32>
    %c0_398 = arith.constant 0 : index
    %c6912_399 = arith.constant 6912 : index
    %780 = vector.load %arg5[%c0_398, %c6912_399] : memref<2x12544xf32, #tpu.memory_space<vmem>>, vector<2x256xf32>
    tpu.vector_store %arg5[%c0_398, %c6912_399], %779 {strides = array<i32>} : memref<2x12544xf32, #tpu.memory_space<vmem>>, vector<2x256xf32>,
    %c0_400 = arith.constant 0 : index
    %c7168_401 = arith.constant 7168 : index
    %781 = vector.load %arg5[%c0_400, %c7168_401] : memref<2x12544xf32, #tpu.memory_space<vmem>>, vector<2x256xf32>
    %782 = vector.broadcast %553 : vector<1x256xf32> to vector<2x256xf32>
    %783 = arith.mulf %781, %782 : vector<2x256xf32>
    %784 = vector.broadcast %556 : vector<1x256xf32> to vector<2x256xf32>
    %785 = arith.addf %783, %784 : vector<2x256xf32>
    %cst_402 = arith.constant 0.000000e+00 : f32
    %786 = vector.broadcast %cst_402 : f32 to vector<2x256xf32>
    %787 = arith.maximumf %785, %786 : vector<2x256xf32>
    %c0_403 = arith.constant 0 : index
    %c7168_404 = arith.constant 7168 : index
    %788 = vector.load %arg5[%c0_403, %c7168_404] : memref<2x12544xf32, #tpu.memory_space<vmem>>, vector<2x256xf32>
    tpu.vector_store %arg5[%c0_403, %c7168_404], %787 {strides = array<i32>} : memref<2x12544xf32, #tpu.memory_space<vmem>>, vector<2x256xf32>,
    %c0_405 = arith.constant 0 : index
    %c7424_406 = arith.constant 7424 : index
    %789 = vector.load %arg5[%c0_405, %c7424_406] : memref<2x12544xf32, #tpu.memory_space<vmem>>, vector<2x256xf32>
    %790 = vector.broadcast %553 : vector<1x256xf32> to vector<2x256xf32>
    %791 = arith.mulf %789, %790 : vector<2x256xf32>
    %792 = vector.broadcast %556 : vector<1x256xf32> to vector<2x256xf32>
    %793 = arith.addf %791, %792 : vector<2x256xf32>
    %cst_407 = arith.constant 0.000000e+00 : f32
    %794 = vector.broadcast %cst_407 : f32 to vector<2x256xf32>
    %795 = arith.maximumf %793, %794 : vector<2x256xf32>
    %c0_408 = arith.constant 0 : index
    %c7424_409 = arith.constant 7424 : index
    %796 = vector.load %arg5[%c0_408, %c7424_409] : memref<2x12544xf32, #tpu.memory_space<vmem>>, vector<2x256xf32>
    tpu.vector_store %arg5[%c0_408, %c7424_409], %795 {strides = array<i32>} : memref<2x12544xf32, #tpu.memory_space<vmem>>, vector<2x256xf32>,
    %c0_410 = arith.constant 0 : index
    %c7680_411 = arith.constant 7680 : index
    %797 = vector.load %arg5[%c0_410, %c7680_411] : memref<2x12544xf32, #tpu.memory_space<vmem>>, vector<2x256xf32>
    %798 = vector.broadcast %553 : vector<1x256xf32> to vector<2x256xf32>
    %799 = arith.mulf %797, %798 : vector<2x256xf32>
    %800 = vector.broadcast %556 : vector<1x256xf32> to vector<2x256xf32>
    %801 = arith.addf %799, %800 : vector<2x256xf32>
    %cst_412 = arith.constant 0.000000e+00 : f32
    %802 = vector.broadcast %cst_412 : f32 to vector<2x256xf32>
    %803 = arith.maximumf %801, %802 : vector<2x256xf32>
    %c0_413 = arith.constant 0 : index
    %c7680_414 = arith.constant 7680 : index
    %804 = vector.load %arg5[%c0_413, %c7680_414] : memref<2x12544xf32, #tpu.memory_space<vmem>>, vector<2x256xf32>
    tpu.vector_store %arg5[%c0_413, %c7680_414], %803 {strides = array<i32>} : memref<2x12544xf32, #tpu.memory_space<vmem>>, vector<2x256xf32>,
    %c0_415 = arith.constant 0 : index
    %c7936_416 = arith.constant 7936 : index
    %805 = vector.load %arg5[%c0_415, %c7936_416] : memref<2x12544xf32, #tpu.memory_space<vmem>>, vector<2x256xf32>
    %806 = vector.broadcast %553 : vector<1x256xf32> to vector<2x256xf32>
    %807 = arith.mulf %805, %806 : vector<2x256xf32>
    %808 = vector.broadcast %556 : vector<1x256xf32> to vector<2x256xf32>
    %809 = arith.addf %807, %808 : vector<2x256xf32>
    %cst_417 = arith.constant 0.000000e+00 : f32
    %810 = vector.broadcast %cst_417 : f32 to vector<2x256xf32>
    %811 = arith.maximumf %809, %810 : vector<2x256xf32>
    %c0_418 = arith.constant 0 : index
    %c7936_419 = arith.constant 7936 : index
    %812 = vector.load %arg5[%c0_418, %c7936_419] : memref<2x12544xf32, #tpu.memory_space<vmem>>, vector<2x256xf32>
    tpu.vector_store %arg5[%c0_418, %c7936_419], %811 {strides = array<i32>} : memref<2x12544xf32, #tpu.memory_space<vmem>>, vector<2x256xf32>,
    %c0_420 = arith.constant 0 : index
    %c8192_421 = arith.constant 8192 : index
    %813 = vector.load %arg5[%c0_420, %c8192_421] : memref<2x12544xf32, #tpu.memory_space<vmem>>, vector<2x256xf32>
    %814 = vector.broadcast %553 : vector<1x256xf32> to vector<2x256xf32>
    %815 = arith.mulf %813, %814 : vector<2x256xf32>
    %816 = vector.broadcast %556 : vector<1x256xf32> to vector<2x256xf32>
    %817 = arith.addf %815, %816 : vector<2x256xf32>
    %cst_422 = arith.constant 0.000000e+00 : f32
    %818 = vector.broadcast %cst_422 : f32 to vector<2x256xf32>
    %819 = arith.maximumf %817, %818 : vector<2x256xf32>
    %c0_423 = arith.constant 0 : index
    %c8192_424 = arith.constant 8192 : index
    %820 = vector.load %arg5[%c0_423, %c8192_424] : memref<2x12544xf32, #tpu.memory_space<vmem>>, vector<2x256xf32>
    tpu.vector_store %arg5[%c0_423, %c8192_424], %819 {strides = array<i32>} : memref<2x12544xf32, #tpu.memory_space<vmem>>, vector<2x256xf32>,
    %c0_425 = arith.constant 0 : index
    %c8448_426 = arith.constant 8448 : index
    %821 = vector.load %arg5[%c0_425, %c8448_426] : memref<2x12544xf32, #tpu.memory_space<vmem>>, vector<2x256xf32>
    %822 = vector.broadcast %553 : vector<1x256xf32> to vector<2x256xf32>
    %823 = arith.mulf %821, %822 : vector<2x256xf32>
    %824 = vector.broadcast %556 : vector<1x256xf32> to vector<2x256xf32>
    %825 = arith.addf %823, %824 : vector<2x256xf32>
    %cst_427 = arith.constant 0.000000e+00 : f32
    %826 = vector.broadcast %cst_427 : f32 to vector<2x256xf32>
    %827 = arith.maximumf %825, %826 : vector<2x256xf32>
    %c0_428 = arith.constant 0 : index
    %c8448_429 = arith.constant 8448 : index
    %828 = vector.load %arg5[%c0_428, %c8448_429] : memref<2x12544xf32, #tpu.memory_space<vmem>>, vector<2x256xf32>
    tpu.vector_store %arg5[%c0_428, %c8448_429], %827 {strides = array<i32>} : memref<2x12544xf32, #tpu.memory_space<vmem>>, vector<2x256xf32>,
    %c0_430 = arith.constant 0 : index
    %c8704_431 = arith.constant 8704 : index
    %829 = vector.load %arg5[%c0_430, %c8704_431] : memref<2x12544xf32, #tpu.memory_space<vmem>>, vector<2x256xf32>
    %830 = vector.broadcast %553 : vector<1x256xf32> to vector<2x256xf32>
    %831 = arith.mulf %829, %830 : vector<2x256xf32>
    %832 = vector.broadcast %556 : vector<1x256xf32> to vector<2x256xf32>
    %833 = arith.addf %831, %832 : vector<2x256xf32>
    %cst_432 = arith.constant 0.000000e+00 : f32
    %834 = vector.broadcast %cst_432 : f32 to vector<2x256xf32>
    %835 = arith.maximumf %833, %834 : vector<2x256xf32>
    %c0_433 = arith.constant 0 : index
    %c8704_434 = arith.constant 8704 : index
    %836 = vector.load %arg5[%c0_433, %c8704_434] : memref<2x12544xf32, #tpu.memory_space<vmem>>, vector<2x256xf32>
    tpu.vector_store %arg5[%c0_433, %c8704_434], %835 {strides = array<i32>} : memref<2x12544xf32, #tpu.memory_space<vmem>>, vector<2x256xf32>,
    %c0_435 = arith.constant 0 : index
    %c8960_436 = arith.constant 8960 : index
    %837 = vector.load %arg5[%c0_435, %c8960_436] : memref<2x12544xf32, #tpu.memory_space<vmem>>, vector<2x256xf32>
    %838 = vector.broadcast %553 : vector<1x256xf32> to vector<2x256xf32>
    %839 = arith.mulf %837, %838 : vector<2x256xf32>
    %840 = vector.broadcast %556 : vector<1x256xf32> to vector<2x256xf32>
    %841 = arith.addf %839, %840 : vector<2x256xf32>
    %cst_437 = arith.constant 0.000000e+00 : f32
    %842 = vector.broadcast %cst_437 : f32 to vector<2x256xf32>
    %843 = arith.maximumf %841, %842 : vector<2x256xf32>
    %c0_438 = arith.constant 0 : index
    %c8960_439 = arith.constant 8960 : index
    %844 = vector.load %arg5[%c0_438, %c8960_439] : memref<2x12544xf32, #tpu.memory_space<vmem>>, vector<2x256xf32>
    tpu.vector_store %arg5[%c0_438, %c8960_439], %843 {strides = array<i32>} : memref<2x12544xf32, #tpu.memory_space<vmem>>, vector<2x256xf32>,
    %c0_440 = arith.constant 0 : index
    %c9216_441 = arith.constant 9216 : index
    %845 = vector.load %arg5[%c0_440, %c9216_441] : memref<2x12544xf32, #tpu.memory_space<vmem>>, vector<2x256xf32>
    %846 = vector.broadcast %553 : vector<1x256xf32> to vector<2x256xf32>
    %847 = arith.mulf %845, %846 : vector<2x256xf32>
    %848 = vector.broadcast %556 : vector<1x256xf32> to vector<2x256xf32>
    %849 = arith.addf %847, %848 : vector<2x256xf32>
    %cst_442 = arith.constant 0.000000e+00 : f32
    %850 = vector.broadcast %cst_442 : f32 to vector<2x256xf32>
    %851 = arith.maximumf %849, %850 : vector<2x256xf32>
    %c0_443 = arith.constant 0 : index
    %c9216_444 = arith.constant 9216 : index
    %852 = vector.load %arg5[%c0_443, %c9216_444] : memref<2x12544xf32, #tpu.memory_space<vmem>>, vector<2x256xf32>
    tpu.vector_store %arg5[%c0_443, %c9216_444], %851 {strides = array<i32>} : memref<2x12544xf32, #tpu.memory_space<vmem>>, vector<2x256xf32>,
    %c0_445 = arith.constant 0 : index
    %c9472_446 = arith.constant 9472 : index
    %853 = vector.load %arg5[%c0_445, %c9472_446] : memref<2x12544xf32, #tpu.memory_space<vmem>>, vector<2x256xf32>
    %854 = vector.broadcast %553 : vector<1x256xf32> to vector<2x256xf32>
    %855 = arith.mulf %853, %854 : vector<2x256xf32>
    %856 = vector.broadcast %556 : vector<1x256xf32> to vector<2x256xf32>
    %857 = arith.addf %855, %856 : vector<2x256xf32>
    %cst_447 = arith.constant 0.000000e+00 : f32
    %858 = vector.broadcast %cst_447 : f32 to vector<2x256xf32>
    %859 = arith.maximumf %857, %858 : vector<2x256xf32>
    %c0_448 = arith.constant 0 : index
    %c9472_449 = arith.constant 9472 : index
    %860 = vector.load %arg5[%c0_448, %c9472_449] : memref<2x12544xf32, #tpu.memory_space<vmem>>, vector<2x256xf32>
    tpu.vector_store %arg5[%c0_448, %c9472_449], %859 {strides = array<i32>} : memref<2x12544xf32, #tpu.memory_space<vmem>>, vector<2x256xf32>,
    %c0_450 = arith.constant 0 : index
    %c9728_451 = arith.constant 9728 : index
    %861 = vector.load %arg5[%c0_450, %c9728_451] : memref<2x12544xf32, #tpu.memory_space<vmem>>, vector<2x256xf32>
    %862 = vector.broadcast %553 : vector<1x256xf32> to vector<2x256xf32>
    %863 = arith.mulf %861, %862 : vector<2x256xf32>
    %864 = vector.broadcast %556 : vector<1x256xf32> to vector<2x256xf32>
    %865 = arith.addf %863, %864 : vector<2x256xf32>
    %cst_452 = arith.constant 0.000000e+00 : f32
    %866 = vector.broadcast %cst_452 : f32 to vector<2x256xf32>
    %867 = arith.maximumf %865, %866 : vector<2x256xf32>
    %c0_453 = arith.constant 0 : index
    %c9728_454 = arith.constant 9728 : index
    %868 = vector.load %arg5[%c0_453, %c9728_454] : memref<2x12544xf32, #tpu.memory_space<vmem>>, vector<2x256xf32>
    tpu.vector_store %arg5[%c0_453, %c9728_454], %867 {strides = array<i32>} : memref<2x12544xf32, #tpu.memory_space<vmem>>, vector<2x256xf32>,
    %c0_455 = arith.constant 0 : index
    %c9984_456 = arith.constant 9984 : index
    %869 = vector.load %arg5[%c0_455, %c9984_456] : memref<2x12544xf32, #tpu.memory_space<vmem>>, vector<2x256xf32>
    %870 = vector.broadcast %553 : vector<1x256xf32> to vector<2x256xf32>
    %871 = arith.mulf %869, %870 : vector<2x256xf32>
    %872 = vector.broadcast %556 : vector<1x256xf32> to vector<2x256xf32>
    %873 = arith.addf %871, %872 : vector<2x256xf32>
    %cst_457 = arith.constant 0.000000e+00 : f32
    %874 = vector.broadcast %cst_457 : f32 to vector<2x256xf32>
    %875 = arith.maximumf %873, %874 : vector<2x256xf32>
    %c0_458 = arith.constant 0 : index
    %c9984_459 = arith.constant 9984 : index
    %876 = vector.load %arg5[%c0_458, %c9984_459] : memref<2x12544xf32, #tpu.memory_space<vmem>>, vector<2x256xf32>
    tpu.vector_store %arg5[%c0_458, %c9984_459], %875 {strides = array<i32>} : memref<2x12544xf32, #tpu.memory_space<vmem>>, vector<2x256xf32>,
    %c0_460 = arith.constant 0 : index
    %c10240_461 = arith.constant 10240 : index
    %877 = vector.load %arg5[%c0_460, %c10240_461] : memref<2x12544xf32, #tpu.memory_space<vmem>>, vector<2x256xf32>
    %878 = vector.broadcast %553 : vector<1x256xf32> to vector<2x256xf32>
    %879 = arith.mulf %877, %878 : vector<2x256xf32>
    %880 = vector.broadcast %556 : vector<1x256xf32> to vector<2x256xf32>
    %881 = arith.addf %879, %880 : vector<2x256xf32>
    %cst_462 = arith.constant 0.000000e+00 : f32
    %882 = vector.broadcast %cst_462 : f32 to vector<2x256xf32>
    %883 = arith.maximumf %881, %882 : vector<2x256xf32>
    %c0_463 = arith.constant 0 : index
    %c10240_464 = arith.constant 10240 : index
    %884 = vector.load %arg5[%c0_463, %c10240_464] : memref<2x12544xf32, #tpu.memory_space<vmem>>, vector<2x256xf32>
    tpu.vector_store %arg5[%c0_463, %c10240_464], %883 {strides = array<i32>} : memref<2x12544xf32, #tpu.memory_space<vmem>>, vector<2x256xf32>,
    %c0_465 = arith.constant 0 : index
    %c10496_466 = arith.constant 10496 : index
    %885 = vector.load %arg5[%c0_465, %c10496_466] : memref<2x12544xf32, #tpu.memory_space<vmem>>, vector<2x256xf32>
    %886 = vector.broadcast %553 : vector<1x256xf32> to vector<2x256xf32>
    %887 = arith.mulf %885, %886 : vector<2x256xf32>
    %888 = vector.broadcast %556 : vector<1x256xf32> to vector<2x256xf32>
    %889 = arith.addf %887, %888 : vector<2x256xf32>
    %cst_467 = arith.constant 0.000000e+00 : f32
    %890 = vector.broadcast %cst_467 : f32 to vector<2x256xf32>
    %891 = arith.maximumf %889, %890 : vector<2x256xf32>
    %c0_468 = arith.constant 0 : index
    %c10496_469 = arith.constant 10496 : index
    %892 = vector.load %arg5[%c0_468, %c10496_469] : memref<2x12544xf32, #tpu.memory_space<vmem>>, vector<2x256xf32>
    tpu.vector_store %arg5[%c0_468, %c10496_469], %891 {strides = array<i32>} : memref<2x12544xf32, #tpu.memory_space<vmem>>, vector<2x256xf32>,
    %c0_470 = arith.constant 0 : index
    %c10752_471 = arith.constant 10752 : index
    %893 = vector.load %arg5[%c0_470, %c10752_471] : memref<2x12544xf32, #tpu.memory_space<vmem>>, vector<2x256xf32>
    %894 = vector.broadcast %553 : vector<1x256xf32> to vector<2x256xf32>
    %895 = arith.mulf %893, %894 : vector<2x256xf32>
    %896 = vector.broadcast %556 : vector<1x256xf32> to vector<2x256xf32>
    %897 = arith.addf %895, %896 : vector<2x256xf32>
    %cst_472 = arith.constant 0.000000e+00 : f32
    %898 = vector.broadcast %cst_472 : f32 to vector<2x256xf32>
    %899 = arith.maximumf %897, %898 : vector<2x256xf32>
    %c0_473 = arith.constant 0 : index
    %c10752_474 = arith.constant 10752 : index
    %900 = vector.load %arg5[%c0_473, %c10752_474] : memref<2x12544xf32, #tpu.memory_space<vmem>>, vector<2x256xf32>
    tpu.vector_store %arg5[%c0_473, %c10752_474], %899 {strides = array<i32>} : memref<2x12544xf32, #tpu.memory_space<vmem>>, vector<2x256xf32>,
    %c0_475 = arith.constant 0 : index
    %c11008_476 = arith.constant 11008 : index
    %901 = vector.load %arg5[%c0_475, %c11008_476] : memref<2x12544xf32, #tpu.memory_space<vmem>>, vector<2x256xf32>
    %902 = vector.broadcast %553 : vector<1x256xf32> to vector<2x256xf32>
    %903 = arith.mulf %901, %902 : vector<2x256xf32>
    %904 = vector.broadcast %556 : vector<1x256xf32> to vector<2x256xf32>
    %905 = arith.addf %903, %904 : vector<2x256xf32>
    %cst_477 = arith.constant 0.000000e+00 : f32
    %906 = vector.broadcast %cst_477 : f32 to vector<2x256xf32>
    %907 = arith.maximumf %905, %906 : vector<2x256xf32>
    %c0_478 = arith.constant 0 : index
    %c11008_479 = arith.constant 11008 : index
    %908 = vector.load %arg5[%c0_478, %c11008_479] : memref<2x12544xf32, #tpu.memory_space<vmem>>, vector<2x256xf32>
    tpu.vector_store %arg5[%c0_478, %c11008_479], %907 {strides = array<i32>} : memref<2x12544xf32, #tpu.memory_space<vmem>>, vector<2x256xf32>,
    %c0_480 = arith.constant 0 : index
    %c11264_481 = arith.constant 11264 : index
    %909 = vector.load %arg5[%c0_480, %c11264_481] : memref<2x12544xf32, #tpu.memory_space<vmem>>, vector<2x256xf32>
    %910 = vector.broadcast %553 : vector<1x256xf32> to vector<2x256xf32>
    %911 = arith.mulf %909, %910 : vector<2x256xf32>
    %912 = vector.broadcast %556 : vector<1x256xf32> to vector<2x256xf32>
    %913 = arith.addf %911, %912 : vector<2x256xf32>
    %cst_482 = arith.constant 0.000000e+00 : f32
    %914 = vector.broadcast %cst_482 : f32 to vector<2x256xf32>
    %915 = arith.maximumf %913, %914 : vector<2x256xf32>
    %c0_483 = arith.constant 0 : index
    %c11264_484 = arith.constant 11264 : index
    %916 = vector.load %arg5[%c0_483, %c11264_484] : memref<2x12544xf32, #tpu.memory_space<vmem>>, vector<2x256xf32>
    tpu.vector_store %arg5[%c0_483, %c11264_484], %915 {strides = array<i32>} : memref<2x12544xf32, #tpu.memory_space<vmem>>, vector<2x256xf32>,
    %c0_485 = arith.constant 0 : index
    %c11520_486 = arith.constant 11520 : index
    %917 = vector.load %arg5[%c0_485, %c11520_486] : memref<2x12544xf32, #tpu.memory_space<vmem>>, vector<2x256xf32>
    %918 = vector.broadcast %553 : vector<1x256xf32> to vector<2x256xf32>
    %919 = arith.mulf %917, %918 : vector<2x256xf32>
    %920 = vector.broadcast %556 : vector<1x256xf32> to vector<2x256xf32>
    %921 = arith.addf %919, %920 : vector<2x256xf32>
    %cst_487 = arith.constant 0.000000e+00 : f32
    %922 = vector.broadcast %cst_487 : f32 to vector<2x256xf32>
    %923 = arith.maximumf %921, %922 : vector<2x256xf32>
    %c0_488 = arith.constant 0 : index
    %c11520_489 = arith.constant 11520 : index
    %924 = vector.load %arg5[%c0_488, %c11520_489] : memref<2x12544xf32, #tpu.memory_space<vmem>>, vector<2x256xf32>
    tpu.vector_store %arg5[%c0_488, %c11520_489], %923 {strides = array<i32>} : memref<2x12544xf32, #tpu.memory_space<vmem>>, vector<2x256xf32>,
    %c0_490 = arith.constant 0 : index
    %c11776_491 = arith.constant 11776 : index
    %925 = vector.load %arg5[%c0_490, %c11776_491] : memref<2x12544xf32, #tpu.memory_space<vmem>>, vector<2x256xf32>
    %926 = vector.broadcast %553 : vector<1x256xf32> to vector<2x256xf32>
    %927 = arith.mulf %925, %926 : vector<2x256xf32>
    %928 = vector.broadcast %556 : vector<1x256xf32> to vector<2x256xf32>
    %929 = arith.addf %927, %928 : vector<2x256xf32>
    %cst_492 = arith.constant 0.000000e+00 : f32
    %930 = vector.broadcast %cst_492 : f32 to vector<2x256xf32>
    %931 = arith.maximumf %929, %930 : vector<2x256xf32>
    %c0_493 = arith.constant 0 : index
    %c11776_494 = arith.constant 11776 : index
    %932 = vector.load %arg5[%c0_493, %c11776_494] : memref<2x12544xf32, #tpu.memory_space<vmem>>, vector<2x256xf32>
    tpu.vector_store %arg5[%c0_493, %c11776_494], %931 {strides = array<i32>} : memref<2x12544xf32, #tpu.memory_space<vmem>>, vector<2x256xf32>,
    %c0_495 = arith.constant 0 : index
    %c12032_496 = arith.constant 12032 : index
    %933 = vector.load %arg5[%c0_495, %c12032_496] : memref<2x12544xf32, #tpu.memory_space<vmem>>, vector<2x256xf32>
    %934 = vector.broadcast %553 : vector<1x256xf32> to vector<2x256xf32>
    %935 = arith.mulf %933, %934 : vector<2x256xf32>
    %936 = vector.broadcast %556 : vector<1x256xf32> to vector<2x256xf32>
    %937 = arith.addf %935, %936 : vector<2x256xf32>
    %cst_497 = arith.constant 0.000000e+00 : f32
    %938 = vector.broadcast %cst_497 : f32 to vector<2x256xf32>
    %939 = arith.maximumf %937, %938 : vector<2x256xf32>
    %c0_498 = arith.constant 0 : index
    %c12032_499 = arith.constant 12032 : index
    %940 = vector.load %arg5[%c0_498, %c12032_499] : memref<2x12544xf32, #tpu.memory_space<vmem>>, vector<2x256xf32>
    tpu.vector_store %arg5[%c0_498, %c12032_499], %939 {strides = array<i32>} : memref<2x12544xf32, #tpu.memory_space<vmem>>, vector<2x256xf32>,
    %c0_500 = arith.constant 0 : index
    %c12288_501 = arith.constant 12288 : index
    %941 = vector.load %arg5[%c0_500, %c12288_501] : memref<2x12544xf32, #tpu.memory_space<vmem>>, vector<2x256xf32>
    %942 = vector.broadcast %553 : vector<1x256xf32> to vector<2x256xf32>
    %943 = arith.mulf %941, %942 : vector<2x256xf32>
    %944 = vector.broadcast %556 : vector<1x256xf32> to vector<2x256xf32>
    %945 = arith.addf %943, %944 : vector<2x256xf32>
    %cst_502 = arith.constant 0.000000e+00 : f32
    %946 = vector.broadcast %cst_502 : f32 to vector<2x256xf32>
    %947 = arith.maximumf %945, %946 : vector<2x256xf32>
    %c0_503 = arith.constant 0 : index
    %c12288_504 = arith.constant 12288 : index
    %948 = vector.load %arg5[%c0_503, %c12288_504] : memref<2x12544xf32, #tpu.memory_space<vmem>>, vector<2x256xf32>
    tpu.vector_store %arg5[%c0_503, %c12288_504], %947 {strides = array<i32>} : memref<2x12544xf32, #tpu.memory_space<vmem>>, vector<2x256xf32>,
    return
  }
  func.func @transform_0(%arg0: i32) -> (i32, i32) {
    %c0_i32 = arith.constant 0 : i32
    %c0_i32_0 = arith.constant 0 : i32
    %c0_i32_1 = arith.constant 0 : i32
    return %c0_i32, %c0_i32_0 : i32, i32
  }
  func.func @transform_1(%arg0: i32) -> (i32, i32) {
    %c0_i32 = arith.constant 0 : i32
    %c0_i32_0 = arith.constant 0 : i32
    %c0_i32_1 = arith.constant 0 : i32
    return %c0_i32, %c0_i32_0 : i32, i32
  }
  func.func @transform_2(%arg0: i32) -> (i32, i32) {
    %c0_i32 = arith.constant 0 : i32
    %c0_i32_0 = arith.constant 0 : i32
    %c0_i32_1 = arith.constant 0 : i32
    return %c0_i32, %c0_i32_0 : i32, i32
  }
  func.func @transform_3(%arg0: i32) -> (i32, i32) {
    %c0_i32 = arith.constant 0 : i32
    %c0_i32_0 = arith.constant 0 : i32
    %c0_i32_1 = arith.constant 0 : i32
    return %c0_i32, %c0_i32_0 : i32, i32
  }
  func.func @transform_4(%arg0: i32) -> (i32, i32) {
    %c0_i32 = arith.constant 0 : i32
    %c0_i32_0 = arith.constant 0 : i32
    %c0_i32_1 = arith.constant 0 : i32
    return %c0_i32, %c0_i32_0 : i32, i32
  }
}

module attributes {stable_mosaic.version = 11 : i64} {
  func.func @_convt_bn_relu_kernel(%arg0: i32, %arg1: memref<1x98x1024xbf16, #tpu.memory_space<vmem>>, %arg2: memref<1x1024x128xbf16, #tpu.memory_space<vmem>>, %arg3: memref<1x128xf32, #tpu.memory_space<vmem>>, %arg4: memref<1x128xf32, #tpu.memory_space<vmem>>, %arg5: memref<4x98x128xf32, #tpu.memory_space<vmem>>) attributes {dimension_semantics = [#tpu.dimension_semantics<arbitrary>], iteration_bounds = array<i64: 4>, scalar_prefetch = 0 : i64, scratch_operands = 0 : i64, tpu.core_type = #tpu.core_type<tc>, window_params = [{transform_indices = @transform_0, window_bounds = array<i64: 1, 98, 1024>}, {transform_indices = @transform_1, window_bounds = array<i64: 1, 1024, 128>}, {pipeline_mode = #tpu.pipeline_mode<synchronous>, transform_indices = @transform_2, window_bounds = array<i64: 1, 128>}, {pipeline_mode = #tpu.pipeline_mode<synchronous>, transform_indices = @transform_3, window_bounds = array<i64: 1, 128>}, {pipeline_mode = #tpu.pipeline_mode<synchronous>, transform_indices = @transform_4, window_bounds = array<i64: 4, 98, 128>}]} {
    %c0 = arith.constant 0 : index
    %c0_0 = arith.constant 0 : index
    %c0_1 = arith.constant 0 : index
    %0 = vector.load %arg1[%c0, %c0_0, %c0_1] : memref<1x98x1024xbf16, #tpu.memory_space<vmem>>, vector<1x98x1024xbf16>
    %1 = vector.shape_cast %0 : vector<1x98x1024xbf16> to vector<98x1024xbf16>
    %c0_2 = arith.constant 0 : index
    %c0_3 = arith.constant 0 : index
    %c0_4 = arith.constant 0 : index
    %2 = vector.load %arg2[%c0_2, %c0_3, %c0_4] : memref<1x1024x128xbf16, #tpu.memory_space<vmem>>, vector<1x1024x128xbf16>
    %3 = vector.shape_cast %2 : vector<1x1024x128xbf16> to vector<1024x128xbf16>
    %cst = arith.constant dense<0.000000e+00> : vector<98x128xf32>
    %4 = tpu.matmul %1, %3, %cst {dimension_numbers = #tpu.dot_dimension_numbers<[1], [0], [0], [1], [0, 0, 1, 1], [], []>} : vector<98x1024xbf16>, vector<1024x128xbf16>, vector<98x128xf32> -> vector<98x128xf32>
    %5 = arith.index_cast %arg0 : i32 to index
    %c0_5 = arith.constant 0 : index
    %c0_6 = arith.constant 0 : index
    %6 = vector.load %arg5[%5, %c0_5, %c0_6] : memref<4x98x128xf32, #tpu.memory_space<vmem>>, vector<1x98x128xf32>
    %7 = vector.shape_cast %6 : vector<1x98x128xf32> to vector<98x128xf32>
    %8 = vector.shape_cast %4 : vector<98x128xf32> to vector<1x98x128xf32>
    tpu.vector_store %arg5[%5, %c0_5, %c0_6], %8 {strides = array<i32>} : memref<4x98x128xf32, #tpu.memory_space<vmem>>, vector<1x98x128xf32>,
    %c3_i32 = arith.constant 3 : i32
    %9 = arith.cmpi eq, %arg0, %c3_i32 : i32
    %10 = arith.extui %9 : i1 to i32
    %c0_i32 = arith.constant 0 : i32
    %11 = arith.cmpi ne, %10, %c0_i32 : i32
    scf.if %11 {
      %cst_7 = arith.constant 0.000000e+00 : f32
      %12 = vector.broadcast %cst_7 : f32 to vector<1x128xf32>
      %c0_8 = arith.constant 0 : index
      %c0_9 = arith.constant 0 : index
      %c0_10 = arith.constant 0 : index
      %13 = vector.load %arg5[%c0_8, %c0_9, %c0_10] : memref<4x98x128xf32, #tpu.memory_space<vmem>>, vector<1x98x128xf32>
      %14 = vector.shape_cast %13 : vector<1x98x128xf32> to vector<98x128xf32>
      %cst_11 = arith.constant dense<0.000000e+00> : vector<128xf32>
      %15 = vector.multi_reduction <add>, %14, %cst_11 [0] : vector<98x128xf32> to vector<128xf32>
      %16 = vector.shape_cast %15 : vector<128xf32> to vector<1x128xf32>
      %17 = arith.addf %12, %16 : vector<1x128xf32>
      %c1 = arith.constant 1 : index
      %c0_12 = arith.constant 0 : index
      %c0_13 = arith.constant 0 : index
      %18 = vector.load %arg5[%c1, %c0_12, %c0_13] : memref<4x98x128xf32, #tpu.memory_space<vmem>>, vector<1x98x128xf32>
      %19 = vector.shape_cast %18 : vector<1x98x128xf32> to vector<98x128xf32>
      %cst_14 = arith.constant dense<0.000000e+00> : vector<128xf32>
      %20 = vector.multi_reduction <add>, %19, %cst_14 [0] : vector<98x128xf32> to vector<128xf32>
      %21 = vector.shape_cast %20 : vector<128xf32> to vector<1x128xf32>
      %22 = arith.addf %17, %21 : vector<1x128xf32>
      %c2 = arith.constant 2 : index
      %c0_15 = arith.constant 0 : index
      %c0_16 = arith.constant 0 : index
      %23 = vector.load %arg5[%c2, %c0_15, %c0_16] : memref<4x98x128xf32, #tpu.memory_space<vmem>>, vector<1x98x128xf32>
      %24 = vector.shape_cast %23 : vector<1x98x128xf32> to vector<98x128xf32>
      %cst_17 = arith.constant dense<0.000000e+00> : vector<128xf32>
      %25 = vector.multi_reduction <add>, %24, %cst_17 [0] : vector<98x128xf32> to vector<128xf32>
      %26 = vector.shape_cast %25 : vector<128xf32> to vector<1x128xf32>
      %27 = arith.addf %22, %26 : vector<1x128xf32>
      %c3 = arith.constant 3 : index
      %c0_18 = arith.constant 0 : index
      %c0_19 = arith.constant 0 : index
      %28 = vector.load %arg5[%c3, %c0_18, %c0_19] : memref<4x98x128xf32, #tpu.memory_space<vmem>>, vector<1x98x128xf32>
      %29 = vector.shape_cast %28 : vector<1x98x128xf32> to vector<98x128xf32>
      %cst_20 = arith.constant dense<0.000000e+00> : vector<128xf32>
      %30 = vector.multi_reduction <add>, %29, %cst_20 [0] : vector<98x128xf32> to vector<128xf32>
      %31 = vector.shape_cast %30 : vector<128xf32> to vector<1x128xf32>
      %32 = arith.addf %27, %31 : vector<1x128xf32>
      %cst_21 = arith.constant 3.920000e+02 : f32
      %33 = vector.broadcast %cst_21 : f32 to vector<1x128xf32>
      %34 = arith.divf %32, %33 : vector<1x128xf32>
      %cst_22 = arith.constant 0.000000e+00 : f32
      %35 = vector.broadcast %cst_22 : f32 to vector<1x128xf32>
      %c0_23 = arith.constant 0 : index
      %c0_24 = arith.constant 0 : index
      %c0_25 = arith.constant 0 : index
      %36 = vector.load %arg5[%c0_23, %c0_24, %c0_25] : memref<4x98x128xf32, #tpu.memory_space<vmem>>, vector<1x98x128xf32>
      %37 = vector.shape_cast %36 : vector<1x98x128xf32> to vector<98x128xf32>
      %38 = vector.broadcast %34 : vector<1x128xf32> to vector<98x128xf32>
      %39 = arith.subf %37, %38 : vector<98x128xf32>
      %40 = arith.mulf %39, %39 : vector<98x128xf32>
      %cst_26 = arith.constant dense<0.000000e+00> : vector<128xf32>
      %41 = vector.multi_reduction <add>, %40, %cst_26 [0] : vector<98x128xf32> to vector<128xf32>
      %42 = vector.shape_cast %41 : vector<128xf32> to vector<1x128xf32>
      %43 = arith.addf %35, %42 : vector<1x128xf32>
      %c1_27 = arith.constant 1 : index
      %c0_28 = arith.constant 0 : index
      %c0_29 = arith.constant 0 : index
      %44 = vector.load %arg5[%c1_27, %c0_28, %c0_29] : memref<4x98x128xf32, #tpu.memory_space<vmem>>, vector<1x98x128xf32>
      %45 = vector.shape_cast %44 : vector<1x98x128xf32> to vector<98x128xf32>
      %46 = vector.broadcast %34 : vector<1x128xf32> to vector<98x128xf32>
      %47 = arith.subf %45, %46 : vector<98x128xf32>
      %48 = arith.mulf %47, %47 : vector<98x128xf32>
      %cst_30 = arith.constant dense<0.000000e+00> : vector<128xf32>
      %49 = vector.multi_reduction <add>, %48, %cst_30 [0] : vector<98x128xf32> to vector<128xf32>
      %50 = vector.shape_cast %49 : vector<128xf32> to vector<1x128xf32>
      %51 = arith.addf %43, %50 : vector<1x128xf32>
      %c2_31 = arith.constant 2 : index
      %c0_32 = arith.constant 0 : index
      %c0_33 = arith.constant 0 : index
      %52 = vector.load %arg5[%c2_31, %c0_32, %c0_33] : memref<4x98x128xf32, #tpu.memory_space<vmem>>, vector<1x98x128xf32>
      %53 = vector.shape_cast %52 : vector<1x98x128xf32> to vector<98x128xf32>
      %54 = vector.broadcast %34 : vector<1x128xf32> to vector<98x128xf32>
      %55 = arith.subf %53, %54 : vector<98x128xf32>
      %56 = arith.mulf %55, %55 : vector<98x128xf32>
      %cst_34 = arith.constant dense<0.000000e+00> : vector<128xf32>
      %57 = vector.multi_reduction <add>, %56, %cst_34 [0] : vector<98x128xf32> to vector<128xf32>
      %58 = vector.shape_cast %57 : vector<128xf32> to vector<1x128xf32>
      %59 = arith.addf %51, %58 : vector<1x128xf32>
      %c3_35 = arith.constant 3 : index
      %c0_36 = arith.constant 0 : index
      %c0_37 = arith.constant 0 : index
      %60 = vector.load %arg5[%c3_35, %c0_36, %c0_37] : memref<4x98x128xf32, #tpu.memory_space<vmem>>, vector<1x98x128xf32>
      %61 = vector.shape_cast %60 : vector<1x98x128xf32> to vector<98x128xf32>
      %62 = vector.broadcast %34 : vector<1x128xf32> to vector<98x128xf32>
      %63 = arith.subf %61, %62 : vector<98x128xf32>
      %64 = arith.mulf %63, %63 : vector<98x128xf32>
      %cst_38 = arith.constant dense<0.000000e+00> : vector<128xf32>
      %65 = vector.multi_reduction <add>, %64, %cst_38 [0] : vector<98x128xf32> to vector<128xf32>
      %66 = vector.shape_cast %65 : vector<128xf32> to vector<1x128xf32>
      %67 = arith.addf %59, %66 : vector<1x128xf32>
      %cst_39 = arith.constant 3.920000e+02 : f32
      %68 = vector.broadcast %cst_39 : f32 to vector<1x128xf32>
      %69 = arith.divf %67, %68 : vector<1x128xf32>
      %c0_40 = arith.constant 0 : index
      %c0_41 = arith.constant 0 : index
      %70 = vector.load %arg3[%c0_40, %c0_41] : memref<1x128xf32, #tpu.memory_space<vmem>>, vector<1x128xf32>
      %cst_42 = arith.constant 9.99999974E-6 : f32
      %71 = vector.broadcast %cst_42 : f32 to vector<1x128xf32>
      %72 = arith.addf %69, %71 : vector<1x128xf32>
      %73 = math.rsqrt %72 : vector<1x128xf32>
      %74 = arith.mulf %70, %73 : vector<1x128xf32>
      %c0_43 = arith.constant 0 : index
      %c0_44 = arith.constant 0 : index
      %75 = vector.load %arg4[%c0_43, %c0_44] : memref<1x128xf32, #tpu.memory_space<vmem>>, vector<1x128xf32>
      %76 = arith.mulf %34, %74 : vector<1x128xf32>
      %77 = arith.subf %75, %76 : vector<1x128xf32>
      %c0_45 = arith.constant 0 : index
      %c0_46 = arith.constant 0 : index
      %c0_47 = arith.constant 0 : index
      %78 = vector.load %arg5[%c0_45, %c0_46, %c0_47] : memref<4x98x128xf32, #tpu.memory_space<vmem>>, vector<1x98x128xf32>
      %79 = vector.shape_cast %78 : vector<1x98x128xf32> to vector<98x128xf32>
      %80 = vector.broadcast %74 : vector<1x128xf32> to vector<98x128xf32>
      %81 = arith.mulf %79, %80 : vector<98x128xf32>
      %82 = vector.broadcast %77 : vector<1x128xf32> to vector<98x128xf32>
      %83 = arith.addf %81, %82 : vector<98x128xf32>
      %cst_48 = arith.constant 0.000000e+00 : f32
      %84 = vector.broadcast %cst_48 : f32 to vector<98x128xf32>
      %85 = arith.maximumf %83, %84 : vector<98x128xf32>
      %c0_49 = arith.constant 0 : index
      %c0_50 = arith.constant 0 : index
      %c0_51 = arith.constant 0 : index
      %86 = vector.load %arg5[%c0_49, %c0_50, %c0_51] : memref<4x98x128xf32, #tpu.memory_space<vmem>>, vector<1x98x128xf32>
      %87 = vector.shape_cast %86 : vector<1x98x128xf32> to vector<98x128xf32>
      %88 = vector.shape_cast %85 : vector<98x128xf32> to vector<1x98x128xf32>
      tpu.vector_store %arg5[%c0_49, %c0_50, %c0_51], %88 {strides = array<i32>} : memref<4x98x128xf32, #tpu.memory_space<vmem>>, vector<1x98x128xf32>,
      %c1_52 = arith.constant 1 : index
      %c0_53 = arith.constant 0 : index
      %c0_54 = arith.constant 0 : index
      %89 = vector.load %arg5[%c1_52, %c0_53, %c0_54] : memref<4x98x128xf32, #tpu.memory_space<vmem>>, vector<1x98x128xf32>
      %90 = vector.shape_cast %89 : vector<1x98x128xf32> to vector<98x128xf32>
      %91 = vector.broadcast %74 : vector<1x128xf32> to vector<98x128xf32>
      %92 = arith.mulf %90, %91 : vector<98x128xf32>
      %93 = vector.broadcast %77 : vector<1x128xf32> to vector<98x128xf32>
      %94 = arith.addf %92, %93 : vector<98x128xf32>
      %cst_55 = arith.constant 0.000000e+00 : f32
      %95 = vector.broadcast %cst_55 : f32 to vector<98x128xf32>
      %96 = arith.maximumf %94, %95 : vector<98x128xf32>
      %c1_56 = arith.constant 1 : index
      %c0_57 = arith.constant 0 : index
      %c0_58 = arith.constant 0 : index
      %97 = vector.load %arg5[%c1_56, %c0_57, %c0_58] : memref<4x98x128xf32, #tpu.memory_space<vmem>>, vector<1x98x128xf32>
      %98 = vector.shape_cast %97 : vector<1x98x128xf32> to vector<98x128xf32>
      %99 = vector.shape_cast %96 : vector<98x128xf32> to vector<1x98x128xf32>
      tpu.vector_store %arg5[%c1_56, %c0_57, %c0_58], %99 {strides = array<i32>} : memref<4x98x128xf32, #tpu.memory_space<vmem>>, vector<1x98x128xf32>,
      %c2_59 = arith.constant 2 : index
      %c0_60 = arith.constant 0 : index
      %c0_61 = arith.constant 0 : index
      %100 = vector.load %arg5[%c2_59, %c0_60, %c0_61] : memref<4x98x128xf32, #tpu.memory_space<vmem>>, vector<1x98x128xf32>
      %101 = vector.shape_cast %100 : vector<1x98x128xf32> to vector<98x128xf32>
      %102 = vector.broadcast %74 : vector<1x128xf32> to vector<98x128xf32>
      %103 = arith.mulf %101, %102 : vector<98x128xf32>
      %104 = vector.broadcast %77 : vector<1x128xf32> to vector<98x128xf32>
      %105 = arith.addf %103, %104 : vector<98x128xf32>
      %cst_62 = arith.constant 0.000000e+00 : f32
      %106 = vector.broadcast %cst_62 : f32 to vector<98x128xf32>
      %107 = arith.maximumf %105, %106 : vector<98x128xf32>
      %c2_63 = arith.constant 2 : index
      %c0_64 = arith.constant 0 : index
      %c0_65 = arith.constant 0 : index
      %108 = vector.load %arg5[%c2_63, %c0_64, %c0_65] : memref<4x98x128xf32, #tpu.memory_space<vmem>>, vector<1x98x128xf32>
      %109 = vector.shape_cast %108 : vector<1x98x128xf32> to vector<98x128xf32>
      %110 = vector.shape_cast %107 : vector<98x128xf32> to vector<1x98x128xf32>
      tpu.vector_store %arg5[%c2_63, %c0_64, %c0_65], %110 {strides = array<i32>} : memref<4x98x128xf32, #tpu.memory_space<vmem>>, vector<1x98x128xf32>,
      %c3_66 = arith.constant 3 : index
      %c0_67 = arith.constant 0 : index
      %c0_68 = arith.constant 0 : index
      %111 = vector.load %arg5[%c3_66, %c0_67, %c0_68] : memref<4x98x128xf32, #tpu.memory_space<vmem>>, vector<1x98x128xf32>
      %112 = vector.shape_cast %111 : vector<1x98x128xf32> to vector<98x128xf32>
      %113 = vector.broadcast %74 : vector<1x128xf32> to vector<98x128xf32>
      %114 = arith.mulf %112, %113 : vector<98x128xf32>
      %115 = vector.broadcast %77 : vector<1x128xf32> to vector<98x128xf32>
      %116 = arith.addf %114, %115 : vector<98x128xf32>
      %cst_69 = arith.constant 0.000000e+00 : f32
      %117 = vector.broadcast %cst_69 : f32 to vector<98x128xf32>
      %118 = arith.maximumf %116, %117 : vector<98x128xf32>
      %c3_70 = arith.constant 3 : index
      %c0_71 = arith.constant 0 : index
      %c0_72 = arith.constant 0 : index
      %119 = vector.load %arg5[%c3_70, %c0_71, %c0_72] : memref<4x98x128xf32, #tpu.memory_space<vmem>>, vector<1x98x128xf32>
      %120 = vector.shape_cast %119 : vector<1x98x128xf32> to vector<98x128xf32>
      %121 = vector.shape_cast %118 : vector<98x128xf32> to vector<1x98x128xf32>
      tpu.vector_store %arg5[%c3_70, %c0_71, %c0_72], %121 {strides = array<i32>} : memref<4x98x128xf32, #tpu.memory_space<vmem>>, vector<1x98x128xf32>,
    } else {
    }
    return
  }
  func.func @transform_0(%arg0: i32) -> (i32, i32, i32) {
    %c0_i32 = arith.constant 0 : i32
    %c0_i32_0 = arith.constant 0 : i32
    %c0_i32_1 = arith.constant 0 : i32
    return %arg0, %c0_i32, %c0_i32_0 : i32, i32, i32
  }
  func.func @transform_1(%arg0: i32) -> (i32, i32, i32) {
    %c0_i32 = arith.constant 0 : i32
    %c0_i32_0 = arith.constant 0 : i32
    %c0_i32_1 = arith.constant 0 : i32
    return %arg0, %c0_i32, %c0_i32_0 : i32, i32, i32
  }
  func.func @transform_2(%arg0: i32) -> (i32, i32) {
    %c0_i32 = arith.constant 0 : i32
    %c0_i32_0 = arith.constant 0 : i32
    %c0_i32_1 = arith.constant 0 : i32
    return %c0_i32, %c0_i32_0 : i32, i32
  }
  func.func @transform_3(%arg0: i32) -> (i32, i32) {
    %c0_i32 = arith.constant 0 : i32
    %c0_i32_0 = arith.constant 0 : i32
    %c0_i32_1 = arith.constant 0 : i32
    return %c0_i32, %c0_i32_0 : i32, i32
  }
  func.func @transform_4(%arg0: i32) -> (i32, i32, i32) {
    %c0_i32 = arith.constant 0 : i32
    %c0_i32_0 = arith.constant 0 : i32
    %c0_i32_1 = arith.constant 0 : i32
    %c0_i32_2 = arith.constant 0 : i32
    return %c0_i32, %c0_i32_0, %c0_i32_1 : i32, i32, i32
  }
}

module attributes {stable_mosaic.version = 11 : i64} {
  func.func @_convt_tanh_kernel(%arg0: i32, %arg1: memref<1x392x512xbf16, #tpu.memory_space<vmem>>, %arg2: memref<1x512x128xbf16, #tpu.memory_space<vmem>>, %arg3: memref<1x392x128xf32, #tpu.memory_space<vmem>>) attributes {dimension_semantics = [#tpu.dimension_semantics<parallel>], iteration_bounds = array<i64: 4>, scalar_prefetch = 0 : i64, scratch_operands = 0 : i64, tpu.core_type = #tpu.core_type<tc>, window_params = [{transform_indices = @transform_0, window_bounds = array<i64: 1, 392, 512>}, {transform_indices = @transform_1, window_bounds = array<i64: 1, 512, 128>}, {transform_indices = @transform_2, window_bounds = array<i64: 1, 392, 128>}]} {
    %c0 = arith.constant 0 : index
    %c0_0 = arith.constant 0 : index
    %c0_1 = arith.constant 0 : index
    %0 = vector.load %arg1[%c0, %c0_0, %c0_1] : memref<1x392x512xbf16, #tpu.memory_space<vmem>>, vector<1x392x512xbf16>
    %1 = vector.shape_cast %0 : vector<1x392x512xbf16> to vector<392x512xbf16>
    %c0_2 = arith.constant 0 : index
    %c0_3 = arith.constant 0 : index
    %c0_4 = arith.constant 0 : index
    %2 = vector.load %arg2[%c0_2, %c0_3, %c0_4] : memref<1x512x128xbf16, #tpu.memory_space<vmem>>, vector<1x512x128xbf16>
    %3 = vector.shape_cast %2 : vector<1x512x128xbf16> to vector<512x128xbf16>
    %cst = arith.constant dense<0.000000e+00> : vector<392x128xf32>
    %4 = tpu.matmul %1, %3, %cst {dimension_numbers = #tpu.dot_dimension_numbers<[1], [0], [0], [1], [0, 0, 1, 1], [], []>} : vector<392x512xbf16>, vector<512x128xbf16>, vector<392x128xf32> -> vector<392x128xf32>
    %5 = math.tanh %4 : vector<392x128xf32>
    %c0_5 = arith.constant 0 : index
    %c0_6 = arith.constant 0 : index
    %c0_7 = arith.constant 0 : index
    %6 = vector.load %arg3[%c0_5, %c0_6, %c0_7] : memref<1x392x128xf32, #tpu.memory_space<vmem>>, vector<1x392x128xf32>
    %7 = vector.shape_cast %6 : vector<1x392x128xf32> to vector<392x128xf32>
    %8 = vector.shape_cast %5 : vector<392x128xf32> to vector<1x392x128xf32>
    tpu.vector_store %arg3[%c0_5, %c0_6, %c0_7], %8 {strides = array<i32>} : memref<1x392x128xf32, #tpu.memory_space<vmem>>, vector<1x392x128xf32>,
    return
  }
  func.func @transform_0(%arg0: i32) -> (i32, i32, i32) {
    %c0_i32 = arith.constant 0 : i32
    %c0_i32_0 = arith.constant 0 : i32
    %c0_i32_1 = arith.constant 0 : i32
    return %arg0, %c0_i32, %c0_i32_0 : i32, i32, i32
  }
  func.func @transform_1(%arg0: i32) -> (i32, i32, i32) {
    %c0_i32 = arith.constant 0 : i32
    %c0_i32_0 = arith.constant 0 : i32
    %c0_i32_1 = arith.constant 0 : i32
    return %arg0, %c0_i32, %c0_i32_0 : i32, i32, i32
  }
  func.func @transform_2(%arg0: i32) -> (i32, i32, i32) {
    %c0_i32 = arith.constant 0 : i32
    %c0_i32_0 = arith.constant 0 : i32
    %c0_i32_1 = arith.constant 0 : i32
    return %arg0, %c0_i32, %c0_i32_0 : i32, i32, i32
  }
}

</mosaic_0001>

<llo_original>
// kernel: generator_forward.3
$region0: #{generator_forward.3}
  #allocation0 [shape = 'u32[]', space=smem, size = 0x4, offset = 0x4, fixed_abs, tag = 'smem constant byte address 0x4 - core index']
  #allocation1 [shape = 'u32[72,128]{1,0:T(1,128)}', space=vmem, size = 0x9000, scoped, tag = 'internal scratch']
  %s0 = inlined_call_operand.vmem [shape: bf16[2,16], index: 0, kind: input, shape index: {}]
  %s1 = inlined_call_operand.vmem [shape: bf16[16,12544], index: 1, kind: input, shape index: {}]
  %s2 = inlined_call_operand.vmem [shape: f32[1,256], index: 2, kind: input, shape index: {}]
  %s3 = inlined_call_operand.vmem [shape: f32[1,256], index: 3, kind: input, shape index: {}]
  %s4 = inlined_call_operand.vmem [shape: f32[2,12544], index: 4, kind: output, shape index: {}]
  %s5 = sld [smem:[#allocation0]]
  $region26: #{generator_forward.3} parent=0
    _
  %s7 = ssub.s32 1, %s5
  %s8 = scalar_select 0, %s7, %s5
  // Predicated region
  $region2: #{generator_forward.3} parent=0 // pred_check
    _
  $region3: #{generator_forward.3} parent=0 // pred_check_branch
    %10 = sbr.rel (0) target = $region5
  $region4: #{generator_forward.3} parent=0 // pred_region
    _
  $region5: #{generator_forward.3} parent=0 // pred_fallthru
    _
  // Predicated region
  $region6: #{generator_forward.3} parent=0 // pred_check
    _
  $region7: #{generator_forward.3} parent=0 // pred_check_branch
    %12 = sbr.rel (0) target = $region9
  $region8: #{generator_forward.3} parent=0 // pred_region
    _
  $region9: #{generator_forward.3} parent=0 // pred_fallthru
    _
  // Predicated region
  $region10: #{generator_forward.3} parent=0 // pred_check
    _
  $region11: #{generator_forward.3} parent=0 // pred_check_branch
    %14 = sbr.rel (0) target = $region13
  $region12: #{generator_forward.3} parent=0 // pred_region
    _
  $region13: #{generator_forward.3} parent=0 // pred_fallthru
    _
  // Predicated region
  $region14: #{generator_forward.3} parent=0 // pred_check
    _
  $region15: #{generator_forward.3} parent=0 // pred_check_branch
    %16 = sbr.rel (0) target = $region17
  $region16: #{generator_forward.3} parent=0 // pred_region
    _
  $region17: #{generator_forward.3} parent=0 // pred_fallthru
    _
  %v18 = vld [vmem:[%s0] sm:$0x1]
  %v19 = vld [vmem:[%s1] sm:$0xff]
  %v20 = vld [vmem:[%s1 + $0x8] sm:$0xff]
  %v21 = vld [vmem:[%s1 + $0x10] sm:$0xff]
  %v22 = vld [vmem:[%s1 + $0x18] sm:$0xff]
  %v23 = vld [vmem:[%s1 + $0x20] sm:$0xff]
  %v24 = vld [vmem:[%s1 + $0x28] sm:$0xff]
  %v25 = vld [vmem:[%s1 + $0x30] sm:$0xff]
  %v26 = vld [vmem:[%s1 + $0x38] sm:$0xff]
  %v27 = vld [vmem:[%s1 + $0x40] sm:$0xff]
  %v28 = vld [vmem:[%s1 + $0x48] sm:$0xff]
  %v29 = vld [vmem:[%s1 + $0x50] sm:$0xff]
  %v30 = vld [vmem:[%s1 + $0x58] sm:$0xff]
  %v31 = vld [vmem:[%s1 + $0x60] sm:$0xff]
  %v32 = vld [vmem:[%s1 + $0x68] sm:$0xff]
  %v33 = vld [vmem:[%s1 + $0x70] sm:$0xff]
  %v34 = vld [vmem:[%s1 + $0x78] sm:$0xff]
  %v35 = vld [vmem:[%s1 + $0x80] sm:$0xff]
  %v36 = vld [vmem:[%s1 + $0x88] sm:$0xff]
  %v37 = vld [vmem:[%s1 + $0x90] sm:$0xff]
  %v38 = vld [vmem:[%s1 + $0x98] sm:$0xff]
  %v39 = vld [vmem:[%s1 + $0xa0] sm:$0xff]
  %v40 = vld [vmem:[%s1 + $0xa8] sm:$0xff]
  %v41 = vld [vmem:[%s1 + $0xb0] sm:$0xff]
  %v42 = vld [vmem:[%s1 + $0xb8] sm:$0xff]
  %v43 = vld [vmem:[%s1 + $0xc0] sm:$0xff]
  %v44 = vld [vmem:[%s1 + $0xc8] sm:$0xff]
  %v45 = vld [vmem:[%s1 + $0xd0] sm:$0xff]
  %v46 = vld [vmem:[%s1 + $0xd8] sm:$0xff]
  %v47 = vld [vmem:[%s1 + $0xe0] sm:$0xff]
  %v48 = vld [vmem:[%s1 + $0xe8] sm:$0xff]
  %v49 = vld [vmem:[%s1 + $0xf0] sm:$0xff]
  %v50 = vld [vmem:[%s1 + $0xf8] sm:$0xff]
  %v51 = vld [vmem:[%s1 + $0x100] sm:$0xff]
  %v52 = vld [vmem:[%s1 + $0x108] sm:$0xff]
  %v53 = vld [vmem:[%s1 + $0x110] sm:$0xff]
  %v54 = vld [vmem:[%s1 + $0x118] sm:$0xff]
  %v55 = vld [vmem:[%s1 + $0x120] sm:$0xff]
  %v56 = vld [vmem:[%s1 + $0x128] sm:$0xff]
  %v57 = vld [vmem:[%s1 + $0x130] sm:$0xff]
  %v58 = vld [vmem:[%s1 + $0x138] sm:$0xff]
  %v59 = vld [vmem:[%s1 + $0x140] sm:$0xff]
  %v60 = vld [vmem:[%s1 + $0x148] sm:$0xff]
  %v61 = vld [vmem:[%s1 + $0x150] sm:$0xff]
  %v62 = vld [vmem:[%s1 + $0x158] sm:$0xff]
  %v63 = vld [vmem:[%s1 + $0x160] sm:$0xff]
  %v64 = vld [vmem:[%s1 + $0x168] sm:$0xff]
  %v65 = vld [vmem:[%s1 + $0x170] sm:$0xff]
  %v66 = vld [vmem:[%s1 + $0x178] sm:$0xff]
  %v67 = vld [vmem:[%s1 + $0x180] sm:$0xff]
  %v68 = vld [vmem:[%s1 + $0x188] sm:$0xff]
  %v69 = vld [vmem:[%s1 + $0x190] sm:$0xff]
  %v70 = vld [vmem:[%s1 + $0x198] sm:$0xff]
  %v71 = vld [vmem:[%s1 + $0x1a0] sm:$0xff]
  %v72 = vld [vmem:[%s1 + $0x1a8] sm:$0xff]
  %v73 = vld [vmem:[%s1 + $0x1b0] sm:$0xff]
  %v74 = vld [vmem:[%s1 + $0x1b8] sm:$0xff]
  %v75 = vld [vmem:[%s1 + $0x1c0] sm:$0xff]
  %v76 = vld [vmem:[%s1 + $0x1c8] sm:$0xff]
  %v77 = vld [vmem:[%s1 + $0x1d0] sm:$0xff]
  %v78 = vld [vmem:[%s1 + $0x1d8] sm:$0xff]
  %v79 = vld [vmem:[%s1 + $0x1e0] sm:$0xff]
  %v80 = vld [vmem:[%s1 + $0x1e8] sm:$0xff]
  %v81 = vld [vmem:[%s1 + $0x1f0] sm:$0xff]
  %v82 = vld [vmem:[%s1 + $0x1f8] sm:$0xff]
  %v83 = vld [vmem:[%s1 + $0x200] sm:$0xff]
  %v84 = vld [vmem:[%s1 + $0x208] sm:$0xff]
  %v85 = vld [vmem:[%s1 + $0x210] sm:$0xff]
  %v86 = vld [vmem:[%s1 + $0x218] sm:$0xff]
  %v87 = vld [vmem:[%s1 + $0x220] sm:$0xff]
  %v88 = vld [vmem:[%s1 + $0x228] sm:$0xff]
  %v89 = vld [vmem:[%s1 + $0x230] sm:$0xff]
  %v90 = vld [vmem:[%s1 + $0x238] sm:$0xff]
  %v91 = vld [vmem:[%s1 + $0x240] sm:$0xff]
  %v92 = vld [vmem:[%s1 + $0x248] sm:$0xff]
  %v93 = vld [vmem:[%s1 + $0x250] sm:$0xff]
  %v94 = vld [vmem:[%s1 + $0x258] sm:$0xff]
  %v95 = vld [vmem:[%s1 + $0x260] sm:$0xff]
  %v96 = vld [vmem:[%s1 + $0x268] sm:$0xff]
  %v97 = vld [vmem:[%s1 + $0x270] sm:$0xff]
  %v98 = vld [vmem:[%s1 + $0x278] sm:$0xff]
  %v99 = vld [vmem:[%s1 + $0x280] sm:$0xff]
  %v100 = vld [vmem:[%s1 + $0x288] sm:$0xff]
  %v101 = vld [vmem:[%s1 + $0x290] sm:$0xff]
  %v102 = vld [vmem:[%s1 + $0x298] sm:$0xff]
  %v103 = vld [vmem:[%s1 + $0x2a0] sm:$0xff]
  %v104 = vld [vmem:[%s1 + $0x2a8] sm:$0xff]
  %v105 = vld [vmem:[%s1 + $0x2b0] sm:$0xff]
  %v106 = vld [vmem:[%s1 + $0x2b8] sm:$0xff]
  %v107 = vld [vmem:[%s1 + $0x2c0] sm:$0xff]
  %v108 = vld [vmem:[%s1 + $0x2c8] sm:$0xff]
  %v109 = vld [vmem:[%s1 + $0x2d0] sm:$0xff]
  %v110 = vld [vmem:[%s1 + $0x2d8] sm:$0xff]
  %v111 = vld [vmem:[%s1 + $0x2e0] sm:$0xff]
  %v112 = vld [vmem:[%s1 + $0x2e8] sm:$0xff]
  %v113 = vld [vmem:[%s1 + $0x2f0] sm:$0xff]
  %v114 = vld [vmem:[%s1 + $0x2f8] sm:$0xff]
  %v115 = vld [vmem:[%s1 + $0x300] sm:$0xff]
  %v116 = vld [vmem:[%s1 + $0x308] sm:$0xff]
  %v215 = vunpack.c.l.b16 %v19
  %v216 = vunpack.c.h.b16 %v19
  %v217 = vunpack.c.l.b16 %v20
  %v218 = vunpack.c.h.b16 %v20
  %v219 = vunpack.c.l.b16 %v21
  %v220 = vunpack.c.h.b16 %v21
  %v221 = vunpack.c.l.b16 %v22
  %v222 = vunpack.c.h.b16 %v22
  %v223 = vunpack.c.l.b16 %v23
  %v224 = vunpack.c.h.b16 %v23
  %v225 = vunpack.c.l.b16 %v24
  %v226 = vunpack.c.h.b16 %v24
  %v227 = vunpack.c.l.b16 %v25
  %v228 = vunpack.c.h.b16 %v25
  %v229 = vunpack.c.l.b16 %v26
  %v230 = vunpack.c.h.b16 %v26
  %v231 = vunpack.c.l.b16 %v27
  %v232 = vunpack.c.h.b16 %v27
  %v233 = vunpack.c.l.b16 %v28
  %v234 = vunpack.c.h.b16 %v28
  %v235 = vunpack.c.l.b16 %v29
  %v236 = vunpack.c.h.b16 %v29
  %v237 = vunpack.c.l.b16 %v30
  %v238 = vunpack.c.h.b16 %v30
  %v239 = vunpack.c.l.b16 %v31
  %v240 = vunpack.c.h.b16 %v31
  %v241 = vunpack.c.l.b16 %v32
  %v242 = vunpack.c.h.b16 %v32
  %v243 = vunpack.c.l.b16 %v33
  %v244 = vunpack.c.h.b16 %v33
  %v245 = vunpack.c.l.b16 %v34
  %v246 = vunpack.c.h.b16 %v34
  %v247 = vunpack.c.l.b16 %v35
  %v248 = vunpack.c.h.b16 %v35
  %v249 = vunpack.c.l.b16 %v36
  %v250 = vunpack.c.h.b16 %v36
  %v251 = vunpack.c.l.b16 %v37
  %v252 = vunpack.c.h.b16 %v37
  %v253 = vunpack.c.l.b16 %v38
  %v254 = vunpack.c.h.b16 %v38
  %v255 = vunpack.c.l.b16 %v39
  %v256 = vunpack.c.h.b16 %v39
  %v257 = vunpack.c.l.b16 %v40
  %v258 = vunpack.c.h.b16 %v40
  %v259 = vunpack.c.l.b16 %v41
  %v260 = vunpack.c.h.b16 %v41
  %v261 = vunpack.c.l.b16 %v42
  %v262 = vunpack.c.h.b16 %v42
  %v263 = vunpack.c.l.b16 %v43
  %v264 = vunpack.c.h.b16 %v43
  %v265 = vunpack.c.l.b16 %v44
  %v266 = vunpack.c.h.b16 %v44
  %v267 = vunpack.c.l.b16 %v45
  %v268 = vunpack.c.h.b16 %v45
  %v269 = vunpack.c.l.b16 %v46
  %v270 = vunpack.c.h.b16 %v46
  %v271 = vunpack.c.l.b16 %v47
  %v272 = vunpack.c.h.b16 %v47
  %v273 = vunpack.c.l.b16 %v48
  %v274 = vunpack.c.h.b16 %v48
  %v275 = vunpack.c.l.b16 %v49
  %v276 = vunpack.c.h.b16 %v49
  %v277 = vunpack.c.l.b16 %v50
  %v278 = vunpack.c.h.b16 %v50
  %v279 = vunpack.c.l.b16 %v51
  %v280 = vunpack.c.h.b16 %v51
  %v281 = vunpack.c.l.b16 %v52
  %v282 = vunpack.c.h.b16 %v52
  %v283 = vunpack.c.l.b16 %v53
  %v284 = vunpack.c.h.b16 %v53
  %v285 = vunpack.c.l.b16 %v54
  %v286 = vunpack.c.h.b16 %v54
  %v287 = vunpack.c.l.b16 %v55
  %v288 = vunpack.c.h.b16 %v55
  %v289 = vunpack.c.l.b16 %v56
  %v290 = vunpack.c.h.b16 %v56
  %v291 = vunpack.c.l.b16 %v57
  %v292 = vunpack.c.h.b16 %v57
  %v293 = vunpack.c.l.b16 %v58
  %v294 = vunpack.c.h.b16 %v58
  %v295 = vunpack.c.l.b16 %v59
  %v296 = vunpack.c.h.b16 %v59
  %v297 = vunpack.c.l.b16 %v60
  %v298 = vunpack.c.h.b16 %v60
  %v299 = vunpack.c.l.b16 %v61
  %v300 = vunpack.c.h.b16 %v61
  %v301 = vunpack.c.l.b16 %v62
  %v302 = vunpack.c.h.b16 %v62
  %v303 = vunpack.c.l.b16 %v63
  %v304 = vunpack.c.h.b16 %v63
  %v305 = vunpack.c.l.b16 %v64
  %v306 = vunpack.c.h.b16 %v64
  %v307 = vunpack.c.l.b16 %v65
  %v308 = vunpack.c.h.b16 %v65
  %v309 = vunpack.c.l.b16 %v66
  %v310 = vunpack.c.h.b16 %v66
  %v311 = vunpack.c.l.b16 %v67
  %v312 = vunpack.c.h.b16 %v67
  %v313 = vunpack.c.l.b16 %v68
  %v314 = vunpack.c.h.b16 %v68
  %v315 = vunpack.c.l.b16 %v69
  %v316 = vunpack.c.h.b16 %v69
  %v317 = vunpack.c.l.b16 %v70
  %v318 = vunpack.c.h.b16 %v70
  %v319 = vunpack.c.l.b16 %v71
  %v320 = vunpack.c.h.b16 %v71
  %v321 = vunpack.c.l.b16 %v72
  %v322 = vunpack.c.h.b16 %v72
  %v323 = vunpack.c.l.b16 %v73
  %v324 = vunpack.c.h.b16 %v73
  %v325 = vunpack.c.l.b16 %v74
  %v326 = vunpack.c.h.b16 %v74
  %v327 = vunpack.c.l.b16 %v75
  %v328 = vunpack.c.h.b16 %v75
  %v329 = vunpack.c.l.b16 %v76
  %v330 = vunpack.c.h.b16 %v76
  %v331 = vunpack.c.l.b16 %v77
  %v332 = vunpack.c.h.b16 %v77
  %v333 = vunpack.c.l.b16 %v78
  %v334 = vunpack.c.h.b16 %v78
  %v335 = vunpack.c.l.b16 %v79
  %v336 = vunpack.c.h.b16 %v79
  %v337 = vunpack.c.l.b16 %v80
  %v338 = vunpack.c.h.b16 %v80
  %v339 = vunpack.c.l.b16 %v81
  %v340 = vunpack.c.h.b16 %v81
  %v341 = vunpack.c.l.b16 %v82
  %v342 = vunpack.c.h.b16 %v82
  %v343 = vunpack.c.l.b16 %v83
  %v344 = vunpack.c.h.b16 %v83
  %v345 = vunpack.c.l.b16 %v84
  %v346 = vunpack.c.h.b16 %v84
  %v347 = vunpack.c.l.b16 %v85
  %v348 = vunpack.c.h.b16 %v85
  %v349 = vunpack.c.l.b16 %v86
  %v350 = vunpack.c.h.b16 %v86
  %v351 = vunpack.c.l.b16 %v87
  %v352 = vunpack.c.h.b16 %v87
  %v353 = vunpack.c.l.b16 %v88
  %v354 = vunpack.c.h.b16 %v88
  %v355 = vunpack.c.l.b16 %v89
  %v356 = vunpack.c.h.b16 %v89
  %v357 = vunpack.c.l.b16 %v90
  %v358 = vunpack.c.h.b16 %v90
  %v359 = vunpack.c.l.b16 %v91
  %v360 = vunpack.c.h.b16 %v91
  %v361 = vunpack.c.l.b16 %v92
  %v362 = vunpack.c.h.b16 %v92
  %v363 = vunpack.c.l.b16 %v93
  %v364 = vunpack.c.h.b16 %v93
  %v365 = vunpack.c.l.b16 %v94
  %v366 = vunpack.c.h.b16 %v94
  %v367 = vunpack.c.l.b16 %v95
  %v368 = vunpack.c.h.b16 %v95
  %v369 = vunpack.c.l.b16 %v96
  %v370 = vunpack.c.h.b16 %v96
  %v371 = vunpack.c.l.b16 %v97
  %v372 = vunpack.c.h.b16 %v97
  %v373 = vunpack.c.l.b16 %v98
  %v374 = vunpack.c.h.b16 %v98
  %v375 = vunpack.c.l.b16 %v99
  %v376 = vunpack.c.h.b16 %v99
  %v377 = vunpack.c.l.b16 %v100
  %v378 = vunpack.c.h.b16 %v100
  %v379 = vunpack.c.l.b16 %v101
  %v380 = vunpack.c.h.b16 %v101
  %v381 = vunpack.c.l.b16 %v102
  %v382 = vunpack.c.h.b16 %v102
  %v383 = vunpack.c.l.b16 %v103
  %v384 = vunpack.c.h.b16 %v103
  %v385 = vunpack.c.l.b16 %v104
  %v386 = vunpack.c.h.b16 %v104
  %v387 = vunpack.c.l.b16 %v105
  %v388 = vunpack.c.h.b16 %v105
  %v389 = vunpack.c.l.b16 %v106
  %v390 = vunpack.c.h.b16 %v106
  %v391 = vunpack.c.l.b16 %v107
  %v392 = vunpack.c.h.b16 %v107
  %v393 = vunpack.c.l.b16 %v108
  %v394 = vunpack.c.h.b16 %v108
  %v395 = vunpack.c.l.b16 %v109
  %v396 = vunpack.c.h.b16 %v109
  %v397 = vunpack.c.l.b16 %v110
  %v398 = vunpack.c.h.b16 %v110
  %v399 = vunpack.c.l.b16 %v111
  %v400 = vunpack.c.h.b16 %v111
  %v401 = vunpack.c.l.b16 %v112
  %v402 = vunpack.c.h.b16 %v112
  %v403 = vunpack.c.l.b16 %v113
  %v404 = vunpack.c.h.b16 %v113
  %v405 = vunpack.c.l.b16 %v114
  %v406 = vunpack.c.h.b16 %v114
  %v407 = vunpack.c.l.b16 %v115
  %v408 = vunpack.c.h.b16 %v115
  %v409 = vunpack.c.l.b16 %v116
  %v410 = vunpack.c.h.b16 %v116
  %v411 = vpack.c.b16 %v313, %v215
  %v412 = vpack.c.b16 %v314, %v216
  %v413 = vpack.c.b16 %v315, %v217
  %v414 = vpack.c.b16 %v316, %v218
  %v415 = vpack.c.b16 %v317, %v219
  %v416 = vpack.c.b16 %v318, %v220
  %v417 = vpack.c.b16 %v319, %v221
  %v418 = vpack.c.b16 %v320, %v222
  %v419 = vpack.c.b16 %v321, %v223
  %v420 = vpack.c.b16 %v322, %v224
  %v421 = vpack.c.b16 %v323, %v225
  %v422 = vpack.c.b16 %v324, %v226
  %v423 = vpack.c.b16 %v325, %v227
  %v424 = vpack.c.b16 %v326, %v228
  %v425 = vpack.c.b16 %v327, %v229
  %v426 = vpack.c.b16 %v328, %v230
  %v427 = vpack.c.b16 %v329, %v231
  %v428 = vpack.c.b16 %v330, %v232
  %v429 = vpack.c.b16 %v331, %v233
  %v430 = vpack.c.b16 %v332, %v234
  %v431 = vpack.c.b16 %v333, %v235
  %v432 = vpack.c.b16 %v334, %v236
  %v433 = vpack.c.b16 %v335, %v237
  %v434 = vpack.c.b16 %v336, %v238
  %v435 = vpack.c.b16 %v337, %v239
  %v436 = vpack.c.b16 %v338, %v240
  %v437 = vpack.c.b16 %v339, %v241
  %v438 = vpack.c.b16 %v340, %v242
  %v439 = vpack.c.b16 %v341, %v243
  %v440 = vpack.c.b16 %v342, %v244
  %v441 = vpack.c.b16 %v343, %v245
  %v442 = vpack.c.b16 %v344, %v246
  %v443 = vpack.c.b16 %v345, %v247
  %v444 = vpack.c.b16 %v346, %v248
  %v445 = vpack.c.b16 %v347, %v249
  %v446 = vpack.c.b16 %v348, %v250
  %v447 = vpack.c.b16 %v349, %v251
  %v448 = vpack.c.b16 %v350, %v252
  %v449 = vpack.c.b16 %v351, %v253
  %v450 = vpack.c.b16 %v352, %v254
  %v451 = vpack.c.b16 %v353, %v255
  %v452 = vpack.c.b16 %v354, %v256
  %v453 = vpack.c.b16 %v355, %v257
  %v454 = vpack.c.b16 %v356, %v258
  %v455 = vpack.c.b16 %v357, %v259
  %v456 = vpack.c.b16 %v358, %v260
  %v457 = vpack.c.b16 %v359, %v261
  %v458 = vpack.c.b16 %v360, %v262
  %v459 = vpack.c.b16 %v361, %v263
  %v460 = vpack.c.b16 %v362, %v264
  %v461 = vpack.c.b16 %v363, %v265
  %v462 = vpack.c.b16 %v364, %v266
  %v463 = vpack.c.b16 %v365, %v267
  %v464 = vpack.c.b16 %v366, %v268
  %v465 = vpack.c.b16 %v367, %v269
  %v466 = vpack.c.b16 %v368, %v270
  %v467 = vpack.c.b16 %v369, %v271
  %v468 = vpack.c.b16 %v370, %v272
  %v469 = vpack.c.b16 %v371, %v273
  %v470 = vpack.c.b16 %v372, %v274
  %v471 = vpack.c.b16 %v373, %v275
  %v472 = vpack.c.b16 %v374, %v276
  %v473 = vpack.c.b16 %v375, %v277
  %v474 = vpack.c.b16 %v376, %v278
  %v475 = vpack.c.b16 %v377, %v279
  %v476 = vpack.c.b16 %v378, %v280
  %v477 = vpack.c.b16 %v379, %v281
  %v478 = vpack.c.b16 %v380, %v282
  %v479 = vpack.c.b16 %v381, %v283
  %v480 = vpack.c.b16 %v382, %v284
  %v481 = vpack.c.b16 %v383, %v285
  %v482 = vpack.c.b16 %v384, %v286
  %v483 = vpack.c.b16 %v385, %v287
  %v484 = vpack.c.b16 %v386, %v288
  %v485 = vpack.c.b16 %v387, %v289
  %v486 = vpack.c.b16 %v388, %v290
  %v487 = vpack.c.b16 %v389, %v291
  %v488 = vpack.c.b16 %v390, %v292
  %v489 = vpack.c.b16 %v391, %v293
  %v490 = vpack.c.b16 %v392, %v294
  %v491 = vpack.c.b16 %v393, %v295
  %v492 = vpack.c.b16 %v394, %v296
  %v493 = vpack.c.b16 %v395, %v297
  %v494 = vpack.c.b16 %v396, %v298
  %v495 = vpack.c.b16 %v397, %v299
  %v496 = vpack.c.b16 %v398, %v300
  %v497 = vpack.c.b16 %v399, %v301
  %v498 = vpack.c.b16 %v400, %v302
  %v499 = vpack.c.b16 %v401, %v303
  %v500 = vpack.c.b16 %v402, %v304
  %v501 = vpack.c.b16 %v403, %v305
  %v502 = vpack.c.b16 %v404, %v306
  %v503 = vpack.c.b16 %v405, %v307
  %v504 = vpack.c.b16 %v406, %v308
  %v505 = vpack.c.b16 %v407, %v309
  %v506 = vpack.c.b16 %v408, %v310
  %v507 = vpack.c.b16 %v409, %v311
  %v508 = vpack.c.b16 %v410, %v312
  %vm607 = vcmask 130048
  %v609 = vsel %vm607, %v18, 0
  %611 = vmatpush.bf16.msra.mxu0 0
  %612 = vmatpush.bf16.msra.mxu0 0
  %613 = vmatpush.bf16.msra.mxu0 0
  %614 = vmatpush.bf16.msra.mxu0 0
  %615 = vmatpush.bf16.msra.mxu0 0
  %616 = vmatpush.bf16.msra.mxu0 0
  %617 = vmatpush.bf16.msra.mxu0 0
  %618 = vmatpush.bf16.msra.mxu0 %v411
  %619 = vmatmul.bf16.gmra.mxu0 %v609
  %v620 = vpop.f32.mrf.mxu0
  %v621 = vadd.f32 0.0, %v620
  %v622 = vpop.f32.mrf.mxu0
  %623 = vdwg.mxu0
  %624 = vmatpush.bf16.msra.mxu0 0
  %625 = vmatpush.bf16.msra.mxu0 0
  %626 = vmatpush.bf16.msra.mxu0 0
  %627 = vmatpush.bf16.msra.mxu0 0
  %628 = vmatpush.bf16.msra.mxu0 0
  %629 = vmatpush.bf16.msra.mxu0 0
  %630 = vmatpush.bf16.msra.mxu0 0
  %631 = vmatpush.bf16.msra.mxu0 %v412
  %632 = vmatmul.bf16.gmra.mxu0 %v609
  %v633 = vpop.f32.mrf.mxu0
  %v634 = vadd.f32 0.0, %v633
  %v635 = vpop.f32.mrf.mxu0
  %636 = vdwg.mxu0
  %637 = vmatpush.bf16.msra.mxu0 0
  %638 = vmatpush.bf16.msra.mxu0 0
  %639 = vmatpush.bf16.msra.mxu0 0
  %640 = vmatpush.bf16.msra.mxu0 0
  %641 = vmatpush.bf16.msra.mxu0 0
  %642 = vmatpush.bf16.msra.mxu0 0
  %643 = vmatpush.bf16.msra.mxu0 0
  %644 = vmatpush.bf16.msra.mxu0 %v413
  %645 = vmatmul.bf16.gmra.mxu0 %v609
  %v646 = vpop.f32.mrf.mxu0
  %v647 = vadd.f32 0.0, %v646
  %v648 = vpop.f32.mrf.mxu0
  %649 = vdwg.mxu0
  %650 = vmatpush.bf16.msra.mxu0 0
  %651 = vmatpush.bf16.msra.mxu0 0
  %652 = vmatpush.bf16.msra.mxu0 0
  %653 = vmatpush.bf16.msra.mxu0 0
  %654 = vmatpush.bf16.msra.mxu0 0
  %655 = vmatpush.bf16.msra.mxu0 0
  %656 = vmatpush.bf16.msra.mxu0 0
  %657 = vmatpush.bf16.msra.mxu0 %v414
  %658 = vmatmul.bf16.gmra.mxu0 %v609
  %v659 = vpop.f32.mrf.mxu0
  %v660 = vadd.f32 0.0, %v659
  %v661 = vpop.f32.mrf.mxu0
  %662 = vdwg.mxu0
  %663 = vmatpush.bf16.msra.mxu0 0
  %664 = vmatpush.bf16.msra.mxu0 0
  %665 = vmatpush.bf16.msra.mxu0 0
  %666 = vmatpush.bf16.msra.mxu0 0
  %667 = vmatpush.bf16.msra.mxu0 0
  %668 = vmatpush.bf16.msra.mxu0 0
  %669 = vmatpush.bf16.msra.mxu0 0
  %670 = vmatpush.bf16.msra.mxu0 %v415
  %671 = vmatmul.bf16.gmra.mxu0 %v609
  %v672 = vpop.f32.mrf.mxu0
  %v673 = vadd.f32 0.0, %v672
  %v674 = vpop.f32.mrf.mxu0
  %675 = vdwg.mxu0
  %676 = vmatpush.bf16.msra.mxu0 0
  %677 = vmatpush.bf16.msra.mxu0 0
  %678 = vmatpush.bf16.msra.mxu0 0
  %679 = vmatpush.bf16.msra.mxu0 0
  %680 = vmatpush.bf16.msra.mxu0 0
  %681 = vmatpush.bf16.msra.mxu0 0
  %682 = vmatpush.bf16.msra.mxu0 0
  %683 = vmatpush.bf16.msra.mxu0 %v416
  %684 = vmatmul.bf16.gmra.mxu0 %v609
  %v685 = vpop.f32.mrf.mxu0
  %v686 = vadd.f32 0.0, %v685
  %v687 = vpop.f32.mrf.mxu0
  %688 = vdwg.mxu0
  %689 = vmatpush.bf16.msra.mxu0 0
  %690 = vmatpush.bf16.msra.mxu0 0
  %691 = vmatpush.bf16.msra.mxu0 0
  %692 = vmatpush.bf16.msra.mxu0 0
  %693 = vmatpush.bf16.msra.mxu0 0
  %694 = vmatpush.bf16.msra.mxu0 0
  %695 = vmatpush.bf16.msra.mxu0 0
  %696 = vmatpush.bf16.msra.mxu0 %v417
  %697 = vmatmul.bf16.gmra.mxu0 %v609
  %v698 = vpop.f32.mrf.mxu0
  %v699 = vadd.f32 0.0, %v698
  %v700 = vpop.f32.mrf.mxu0
  %701 = vdwg.mxu0
  %702 = vmatpush.bf16.msra.mxu0 0
  %703 = vmatpush.bf16.msra.mxu0 0
  %704 = vmatpush.bf16.msra.mxu0 0
  %705 = vmatpush.bf16.msra.mxu0 0
  %706 = vmatpush.bf16.msra.mxu0 0
  %707 = vmatpush.bf16.msra.mxu0 0
  %708 = vmatpush.bf16.msra.mxu0 0
  %709 = vmatpush.bf16.msra.mxu0 %v418
  %710 = vmatmul.bf16.gmra.mxu0 %v609
  %v711 = vpop.f32.mrf.mxu0
  %v712 = vadd.f32 0.0, %v711
  %v713 = vpop.f32.mrf.mxu0
  %714 = vdwg.mxu0
  %715 = vmatpush.bf16.msra.mxu0 0
  %716 = vmatpush.bf16.msra.mxu0 0
  %717 = vmatpush.bf16.msra.mxu0 0
  %718 = vmatpush.bf16.msra.mxu0 0
  %719 = vmatpush.bf16.msra.mxu0 0
  %720 = vmatpush.bf16.msra.mxu0 0
  %721 = vmatpush.bf16.msra.mxu0 0
  %722 = vmatpush.bf16.msra.mxu0 %v419
  %723 = vmatmul.bf16.gmra.mxu0 %v609
  %v724 = vpop.f32.mrf.mxu0
  %v725 = vadd.f32 0.0, %v724
  %v726 = vpop.f32.mrf.mxu0
  %727 = vdwg.mxu0
  %728 = vmatpush.bf16.msra.mxu0 0
  %729 = vmatpush.bf16.msra.mxu0 0
  %730 = vmatpush.bf16.msra.mxu0 0
  %731 = vmatpush.bf16.msra.mxu0 0
  %732 = vmatpush.bf16.msra.mxu0 0
  %733 = vmatpush.bf16.msra.mxu0 0
  %734 = vmatpush.bf16.msra.mxu0 0
  %735 = vmatpush.bf16.msra.mxu0 %v420
  %736 = vmatmul.bf16.gmra.mxu0 %v609
  %v737 = vpop.f32.mrf.mxu0
  %v738 = vadd.f32 0.0, %v737
  %v739 = vpop.f32.mrf.mxu0
  %740 = vdwg.mxu0
  %741 = vmatpush.bf16.msra.mxu0 0
  %742 = vmatpush.bf16.msra.mxu0 0
  %743 = vmatpush.bf16.msra.mxu0 0
  %744 = vmatpush.bf16.msra.mxu0 0
  %745 = vmatpush.bf16.msra.mxu0 0
  %746 = vmatpush.bf16.msra.mxu0 0
  %747 = vmatpush.bf16.msra.mxu0 0
  %748 = vmatpush.bf16.msra.mxu0 %v421
  %749 = vmatmul.bf16.gmra.mxu0 %v609
  %v750 = vpop.f32.mrf.mxu0
  %v751 = vadd.f32 0.0, %v750
  %v752 = vpop.f32.mrf.mxu0
  %753 = vdwg.mxu0
  %754 = vmatpush.bf16.msra.mxu0 0
  %755 = vmatpush.bf16.msra.mxu0 0
  %756 = vmatpush.bf16.msra.mxu0 0
  %757 = vmatpush.bf16.msra.mxu0 0
  %758 = vmatpush.bf16.msra.mxu0 0
  %759 = vmatpush.bf16.msra.mxu0 0
  %760 = vmatpush.bf16.msra.mxu0 0
  %761 = vmatpush.bf16.msra.mxu0 %v422
  %762 = vmatmul.bf16.gmra.mxu0 %v609
  %v763 = vpop.f32.mrf.mxu0
  %v764 = vadd.f32 0.0, %v763
  %v765 = vpop.f32.mrf.mxu0
  %766 = vdwg.mxu0
  %767 = vmatpush.bf16.msra.mxu0 0
  %768 = vmatpush.bf16.msra.mxu0 0
  %769 = vmatpush.bf16.msra.mxu0 0
  %770 = vmatpush.bf16.msra.mxu0 0
  %771 = vmatpush.bf16.msra.mxu0 0
  %772 = vmatpush.bf16.msra.mxu0 0
  %773 = vmatpush.bf16.msra.mxu0 0
  %774 = vmatpush.bf16.msra.mxu0 %v423
  %775 = vmatmul.bf16.gmra.mxu0 %v609
  %v776 = vpop.f32.mrf.mxu0
  %v777 = vadd.f32 0.0, %v776
  %v778 = vpop.f32.mrf.mxu0
  %779 = vdwg.mxu0
  %780 = vmatpush.bf16.msra.mxu0 0
  %781 = vmatpush.bf16.msra.mxu0 0
  %782 = vmatpush.bf16.msra.mxu0 0
  %783 = vmatpush.bf16.msra.mxu0 0
  %784 = vmatpush.bf16.msra.mxu0 0
  %785 = vmatpush.bf16.msra.mxu0 0
  %786 = vmatpush.bf16.msra.mxu0 0
  %787 = vmatpush.bf16.msra.mxu0 %v424
  %788 = vmatmul.bf16.gmra.mxu0 %v609
  %v789 = vpop.f32.mrf.mxu0
  %v790 = vadd.f32 0.0, %v789
  %v791 = vpop.f32.mrf.mxu0
  %792 = vdwg.mxu0
  %793 = vmatpush.bf16.msra.mxu0 0
  %794 = vmatpush.bf16.msra.mxu0 0
  %795 = vmatpush.bf16.msra.mxu0 0
  %796 = vmatpush.bf16.msra.mxu0 0
  %797 = vmatpush.bf16.msra.mxu0 0
  %798 = vmatpush.bf16.msra.mxu0 0
  %799 = vmatpush.bf16.msra.mxu0 0
  %800 = vmatpush.bf16.msra.mxu0 %v425
  %801 = vmatmul.bf16.gmra.mxu0 %v609
  %v802 = vpop.f32.mrf.mxu0
  %v803 = vadd.f32 0.0, %v802
  %v804 = vpop.f32.mrf.mxu0
  %805 = vdwg.mxu0
  %806 = vmatpush.bf16.msra.mxu0 0
  %807 = vmatpush.bf16.msra.mxu0 0
  %808 = vmatpush.bf16.msra.mxu0 0
  %809 = vmatpush.bf16.msra.mxu0 0
  %810 = vmatpush.bf16.msra.mxu0 0
  %811 = vmatpush.bf16.msra.mxu0 0
  %812 = vmatpush.bf16.msra.mxu0 0
  %813 = vmatpush.bf16.msra.mxu0 %v426
  %814 = vmatmul.bf16.gmra.mxu0 %v609
  %v815 = vpop.f32.mrf.mxu0
  %v816 = vadd.f32 0.0, %v815
  %v817 = vpop.f32.mrf.mxu0
  %818 = vdwg.mxu0
  %819 = vmatpush.bf16.msra.mxu0 0
  %820 = vmatpush.bf16.msra.mxu0 0
  %821 = vmatpush.bf16.msra.mxu0 0
  %822 = vmatpush.bf16.msra.mxu0 0
  %823 = vmatpush.bf16.msra.mxu0 0
  %824 = vmatpush.bf16.msra.mxu0 0
  %825 = vmatpush.bf16.msra.mxu0 0
  %826 = vmatpush.bf16.msra.mxu0 %v427
  %827 = vmatmul.bf16.gmra.mxu0 %v609
  %v828 = vpop.f32.mrf.mxu0
  %v829 = vadd.f32 0.0, %v828
  %v830 = vpop.f32.mrf.mxu0
  %831 = vdwg.mxu0
  %832 = vmatpush.bf16.msra.mxu0 0
  %833 = vmatpush.bf16.msra.mxu0 0
  %834 = vmatpush.bf16.msra.mxu0 0
  %835 = vmatpush.bf16.msra.mxu0 0
  %836 = vmatpush.bf16.msra.mxu0 0
  %837 = vmatpush.bf16.msra.mxu0 0
  %838 = vmatpush.bf16.msra.mxu0 0
  %839 = vmatpush.bf16.msra.mxu0 %v428
  %840 = vmatmul.bf16.gmra.mxu0 %v609
  %v841 = vpop.f32.mrf.mxu0
  %v842 = vadd.f32 0.0, %v841
  %v843 = vpop.f32.mrf.mxu0
  %844 = vdwg.mxu0
  %845 = vmatpush.bf16.msra.mxu0 0
  %846 = vmatpush.bf16.msra.mxu0 0
  %847 = vmatpush.bf16.msra.mxu0 0
  %848 = vmatpush.bf16.msra.mxu0 0
  %849 = vmatpush.bf16.msra.mxu0 0
  %850 = vmatpush.bf16.msra.mxu0 0
  %851 = vmatpush.bf16.msra.mxu0 0
  %852 = vmatpush.bf16.msra.mxu0 %v429
  %853 = vmatmul.bf16.gmra.mxu0 %v609
  %v854 = vpop.f32.mrf.mxu0
  %v855 = vadd.f32 0.0, %v854
  %v856 = vpop.f32.mrf.mxu0
  %857 = vdwg.mxu0
  %858 = vmatpush.bf16.msra.mxu0 0
  %859 = vmatpush.bf16.msra.mxu0 0
  %860 = vmatpush.bf16.msra.mxu0 0
  %861 = vmatpush.bf16.msra.mxu0 0
  %862 = vmatpush.bf16.msra.mxu0 0
  %863 = vmatpush.bf16.msra.mxu0 0
  %864 = vmatpush.bf16.msra.mxu0 0
  %865 = vmatpush.bf16.msra.mxu0 %v430
  %866 = vmatmul.bf16.gmra.mxu0 %v609
  %v867 = vpop.f32.mrf.mxu0
  %v868 = vadd.f32 0.0, %v867
  %v869 = vpop.f32.mrf.mxu0
  %870 = vdwg.mxu0
  %871 = vmatpush.bf16.msra.mxu0 0
  %872 = vmatpush.bf16.msra.mxu0 0
  %873 = vmatpush.bf16.msra.mxu0 0
  %874 = vmatpush.bf16.msra.mxu0 0
  %875 = vmatpush.bf16.msra.mxu0 0
  %876 = vmatpush.bf16.msra.mxu0 0
  %877 = vmatpush.bf16.msra.mxu0 0
  %878 = vmatpush.bf16.msra.mxu0 %v431
  %879 = vmatmul.bf16.gmra.mxu0 %v609
  %v880 = vpop.f32.mrf.mxu0
  %v881 = vadd.f32 0.0, %v880
  %v882 = vpop.f32.mrf.mxu0
  %883 = vdwg.mxu0
  %884 = vmatpush.bf16.msra.mxu0 0
  %885 = vmatpush.bf16.msra.mxu0 0
  %886 = vmatpush.bf16.msra.mxu0 0
  %887 = vmatpush.bf16.msra.mxu0 0
  %888 = vmatpush.bf16.msra.mxu0 0
  %889 = vmatpush.bf16.msra.mxu0 0
  %890 = vmatpush.bf16.msra.mxu0 0
  %891 = vmatpush.bf16.msra.mxu0 %v432
  %892 = vmatmul.bf16.gmra.mxu0 %v609
  %v893 = vpop.f32.mrf.mxu0
  %v894 = vadd.f32 0.0, %v893
  %v895 = vpop.f32.mrf.mxu0
  %896 = vdwg.mxu0
  %897 = vmatpush.bf16.msra.mxu0 0
  %898 = vmatpush.bf16.msra.mxu0 0
  %899 = vmatpush.bf16.msra.mxu0 0
  %900 = vmatpush.bf16.msra.mxu0 0
  %901 = vmatpush.bf16.msra.mxu0 0
  %902 = vmatpush.bf16.msra.mxu0 0
  %903 = vmatpush.bf16.msra.mxu0 0
  %904 = vmatpush.bf16.msra.mxu0 %v433
  %905 = vmatmul.bf16.gmra.mxu0 %v609
  %v906 = vpop.f32.mrf.mxu0
  %v907 = vadd.f32 0.0, %v906
  %v908 = vpop.f32.mrf.mxu0
  %909 = vdwg.mxu0
  %910 = vmatpush.bf16.msra.mxu0 0
  %911 = vmatpush.bf16.msra.mxu0 0
  %912 = vmatpush.bf16.msra.mxu0 0
  %913 = vmatpush.bf16.msra.mxu0 0
  %914 = vmatpush.bf16.msra.mxu0 0
  %915 = vmatpush.bf16.msra.mxu0 0
  %916 = vmatpush.bf16.msra.mxu0 0
  %917 = vmatpush.bf16.msra.mxu0 %v434
  %918 = vmatmul.bf16.gmra.mxu0 %v609
  %v919 = vpop.f32.mrf.mxu0
  %v920 = vadd.f32 0.0, %v919
  %v921 = vpop.f32.mrf.mxu0
  %922 = vdwg.mxu0
  %923 = vmatpush.bf16.msra.mxu0 0
  %924 = vmatpush.bf16.msra.mxu0 0
  %925 = vmatpush.bf16.msra.mxu0 0
  %926 = vmatpush.bf16.msra.mxu0 0
  %927 = vmatpush.bf16.msra.mxu0 0
  %928 = vmatpush.bf16.msra.mxu0 0
  %929 = vmatpush.bf16.msra.mxu0 0
  %930 = vmatpush.bf16.msra.mxu0 %v435
  %931 = vmatmul.bf16.gmra.mxu0 %v609
  %v932 = vpop.f32.mrf.mxu0
  %v933 = vadd.f32 0.0, %v932
  %v934 = vpop.f32.mrf.mxu0
  %935 = vdwg.mxu0
  %936 = vmatpush.bf16.msra.mxu0 0
  %937 = vmatpush.bf16.msra.mxu0 0
  %938 = vmatpush.bf16.msra.mxu0 0
  %939 = vmatpush.bf16.msra.mxu0 0
  %940 = vmatpush.bf16.msra.mxu0 0
  %941 = vmatpush.bf16.msra.mxu0 0
  %942 = vmatpush.bf16.msra.mxu0 0
  %943 = vmatpush.bf16.msra.mxu0 %v436
  %944 = vmatmul.bf16.gmra.mxu0 %v609
  %v945 = vpop.f32.mrf.mxu0
  %v946 = vadd.f32 0.0, %v945
  %v947 = vpop.f32.mrf.mxu0
  %948 = vdwg.mxu0
  %949 = vmatpush.bf16.msra.mxu0 0
  %950 = vmatpush.bf16.msra.mxu0 0
  %951 = vmatpush.bf16.msra.mxu0 0
  %952 = vmatpush.bf16.msra.mxu0 0
  %953 = vmatpush.bf16.msra.mxu0 0
  %954 = vmatpush.bf16.msra.mxu0 0
  %955 = vmatpush.bf16.msra.mxu0 0
  %956 = vmatpush.bf16.msra.mxu0 %v437
  %957 = vmatmul.bf16.gmra.mxu0 %v609
  %v958 = vpop.f32.mrf.mxu0
  %v959 = vadd.f32 0.0, %v958
  %v960 = vpop.f32.mrf.mxu0
  %961 = vdwg.mxu0
  %962 = vmatpush.bf16.msra.mxu0 0
  %963 = vmatpush.bf16.msra.mxu0 0
  %964 = vmatpush.bf16.msra.mxu0 0
  %965 = vmatpush.bf16.msra.mxu0 0
  %966 = vmatpush.bf16.msra.mxu0 0
  %967 = vmatpush.bf16.msra.mxu0 0
  %968 = vmatpush.bf16.msra.mxu0 0
  %969 = vmatpush.bf16.msra.mxu0 %v438
  %970 = vmatmul.bf16.gmra.mxu0 %v609
  %v971 = vpop.f32.mrf.mxu0
  %v972 = vadd.f32 0.0, %v971
  %v973 = vpop.f32.mrf.mxu0
  %974 = vdwg.mxu0
  %975 = vmatpush.bf16.msra.mxu0 0
  %976 = vmatpush.bf16.msra.mxu0 0
  %977 = vmatpush.bf16.msra.mxu0 0
  %978 = vmatpush.bf16.msra.mxu0 0
  %979 = vmatpush.bf16.msra.mxu0 0
  %980 = vmatpush.bf16.msra.mxu0 0
  %981 = vmatpush.bf16.msra.mxu0 0
  %982 = vmatpush.bf16.msra.mxu0 %v439
  %983 = vmatmul.bf16.gmra.mxu0 %v609
  %v984 = vpop.f32.mrf.mxu0
  %v985 = vadd.f32 0.0, %v984
  %v986 = vpop.f32.mrf.mxu0
  %987 = vdwg.mxu0
  %988 = vmatpush.bf16.msra.mxu0 0
  %989 = vmatpush.bf16.msra.mxu0 0
  %990 = vmatpush.bf16.msra.mxu0 0
  %991 = vmatpush.bf16.msra.mxu0 0
  %992 = vmatpush.bf16.msra.mxu0 0
  %993 = vmatpush.bf16.msra.mxu0 0
  %994 = vmatpush.bf16.msra.mxu0 0
  %995 = vmatpush.bf16.msra.mxu0 %v440
  %996 = vmatmul.bf16.gmra.mxu0 %v609
  %v997 = vpop.f32.mrf.mxu0
  %v998 = vadd.f32 0.0, %v997
  %v999 = vpop.f32.mrf.mxu0
  %1000 = vdwg.mxu0
  %1001 = vmatpush.bf16.msra.mxu0 0
  %1002 = vmatpush.bf16.msra.mxu0 0
  %1003 = vmatpush.bf16.msra.mxu0 0
  %1004 = vmatpush.bf16.msra.mxu0 0
  %1005 = vmatpush.bf16.msra.mxu0 0
  %1006 = vmatpush.bf16.msra.mxu0 0
  %1007 = vmatpush.bf16.msra.mxu0 0
  %1008 = vmatpush.bf16.msra.mxu0 %v441
  %1009 = vmatmul.bf16.gmra.mxu0 %v609
  %v1010 = vpop.f32.mrf.mxu0
  %v1011 = vadd.f32 0.0, %v1010
  %v1012 = vpop.f32.mrf.mxu0
  %1013 = vdwg.mxu0
  %1014 = vmatpush.bf16.msra.mxu0 0
  %1015 = vmatpush.bf16.msra.mxu0 0
  %1016 = vmatpush.bf16.msra.mxu0 0
  %1017 = vmatpush.bf16.msra.mxu0 0
  %1018 = vmatpush.bf16.msra.mxu0 0
  %1019 = vmatpush.bf16.msra.mxu0 0
  %1020 = vmatpush.bf16.msra.mxu0 0
  %1021 = vmatpush.bf16.msra.mxu0 %v442
  %1022 = vmatmul.bf16.gmra.mxu0 %v609
  %v1023 = vpop.f32.mrf.mxu0
  %v1024 = vadd.f32 0.0, %v1023
  %v1025 = vpop.f32.mrf.mxu0
  %1026 = vdwg.mxu0
  %1027 = vmatpush.bf16.msra.mxu0 0
  %1028 = vmatpush.bf16.msra.mxu0 0
  %1029 = vmatpush.bf16.msra.mxu0 0
  %1030 = vmatpush.bf16.msra.mxu0 0
  %1031 = vmatpush.bf16.msra.mxu0 0
  %1032 = vmatpush.bf16.msra.mxu0 0
  %1033 = vmatpush.bf16.msra.mxu0 0
  %1034 = vmatpush.bf16.msra.mxu0 %v443
  %1035 = vmatmul.bf16.gmra.mxu0 %v609
  %v1036 = vpop.f32.mrf.mxu0
  %v1037 = vadd.f32 0.0, %v1036
  %v1038 = vpop.f32.mrf.mxu0
  %1039 = vdwg.mxu0
  %1040 = vmatpush.bf16.msra.mxu0 0
  %1041 = vmatpush.bf16.msra.mxu0 0
  %1042 = vmatpush.bf16.msra.mxu0 0
  %1043 = vmatpush.bf16.msra.mxu0 0
  %1044 = vmatpush.bf16.msra.mxu0 0
  %1045 = vmatpush.bf16.msra.mxu0 0
  %1046 = vmatpush.bf16.msra.mxu0 0
  %1047 = vmatpush.bf16.msra.mxu0 %v444
  %1048 = vmatmul.bf16.gmra.mxu0 %v609
  %v1049 = vpop.f32.mrf.mxu0
  %v1050 = vadd.f32 0.0, %v1049
  %v1051 = vpop.f32.mrf.mxu0
  %1052 = vdwg.mxu0
  %1053 = vmatpush.bf16.msra.mxu0 0
  %1054 = vmatpush.bf16.msra.mxu0 0
  %1055 = vmatpush.bf16.msra.mxu0 0
  %1056 = vmatpush.bf16.msra.mxu0 0
  %1057 = vmatpush.bf16.msra.mxu0 0
  %1058 = vmatpush.bf16.msra.mxu0 0
  %1059 = vmatpush.bf16.msra.mxu0 0
  %1060 = vmatpush.bf16.msra.mxu0 %v445
  %1061 = vmatmul.bf16.gmra.mxu0 %v609
  %v1062 = vpop.f32.mrf.mxu0
  %v1063 = vadd.f32 0.0, %v1062
  %v1064 = vpop.f32.mrf.mxu0
  %1065 = vdwg.mxu0
  %1066 = vmatpush.bf16.msra.mxu0 0
  %1067 = vmatpush.bf16.msra.mxu0 0
  %1068 = vmatpush.bf16.msra.mxu0 0
  %1069 = vmatpush.bf16.msra.mxu0 0
  %1070 = vmatpush.bf16.msra.mxu0 0
  %1071 = vmatpush.bf16.msra.mxu0 0
  %1072 = vmatpush.bf16.msra.mxu0 0
  %1073 = vmatpush.bf16.msra.mxu0 %v446
  %1074 = vmatmul.bf16.gmra.mxu0 %v609
  %v1075 = vpop.f32.mrf.mxu0
  %v1076 = vadd.f32 0.0, %v1075
  %v1077 = vpop.f32.mrf.mxu0
  %1078 = vdwg.mxu0
  %1079 = vmatpush.bf16.msra.mxu0 0
  %1080 = vmatpush.bf16.msra.mxu0 0
  %1081 = vmatpush.bf16.msra.mxu0 0
  %1082 = vmatpush.bf16.msra.mxu0 0
  %1083 = vmatpush.bf16.msra.mxu0 0
  %1084 = vmatpush.bf16.msra.mxu0 0
  %1085 = vmatpush.bf16.msra.mxu0 0
  %1086 = vmatpush.bf16.msra.mxu0 %v447
  %1087 = vmatmul.bf16.gmra.mxu0 %v609
  %v1088 = vpop.f32.mrf.mxu0
  %v1089 = vadd.f32 0.0, %v1088
  %v1090 = vpop.f32.mrf.mxu0
  %1091 = vdwg.mxu0
  %1092 = vmatpush.bf16.msra.mxu0 0
  %1093 = vmatpush.bf16.msra.mxu0 0
  %1094 = vmatpush.bf16.msra.mxu0 0
  %1095 = vmatpush.bf16.msra.mxu0 0
  %1096 = vmatpush.bf16.msra.mxu0 0
  %1097 = vmatpush.bf16.msra.mxu0 0
  %1098 = vmatpush.bf16.msra.mxu0 0
  %1099 = vmatpush.bf16.msra.mxu0 %v448
  %1100 = vmatmul.bf16.gmra.mxu0 %v609
  %v1101 = vpop.f32.mrf.mxu0
  %v1102 = vadd.f32 0.0, %v1101
  %v1103 = vpop.f32.mrf.mxu0
  %1104 = vdwg.mxu0
  %1105 = vmatpush.bf16.msra.mxu0 0
  %1106 = vmatpush.bf16.msra.mxu0 0
  %1107 = vmatpush.bf16.msra.mxu0 0
  %1108 = vmatpush.bf16.msra.mxu0 0
  %1109 = vmatpush.bf16.msra.mxu0 0
  %1110 = vmatpush.bf16.msra.mxu0 0
  %1111 = vmatpush.bf16.msra.mxu0 0
  %1112 = vmatpush.bf16.msra.mxu0 %v449
  %1113 = vmatmul.bf16.gmra.mxu0 %v609
  %v1114 = vpop.f32.mrf.mxu0
  %v1115 = vadd.f32 0.0, %v1114
  %v1116 = vpop.f32.mrf.mxu0
  %1117 = vdwg.mxu0
  %1118 = vmatpush.bf16.msra.mxu0 0
  %1119 = vmatpush.bf16.msra.mxu0 0
  %1120 = vmatpush.bf16.msra.mxu0 0
  %1121 = vmatpush.bf16.msra.mxu0 0
  %1122 = vmatpush.bf16.msra.mxu0 0
  %1123 = vmatpush.bf16.msra.mxu0 0
  %1124 = vmatpush.bf16.msra.mxu0 0
  %1125 = vmatpush.bf16.msra.mxu0 %v450
  %1126 = vmatmul.bf16.gmra.mxu0 %v609
  %v1127 = vpop.f32.mrf.mxu0
  %v1128 = vadd.f32 0.0, %v1127
  %v1129 = vpop.f32.mrf.mxu0
  %1130 = vdwg.mxu0
  %1131 = vmatpush.bf16.msra.mxu0 0
  %1132 = vmatpush.bf16.msra.mxu0 0
  %1133 = vmatpush.bf16.msra.mxu0 0
  %1134 = vmatpush.bf16.msra.mxu0 0
  %1135 = vmatpush.bf16.msra.mxu0 0
  %1136 = vmatpush.bf16.msra.mxu0 0
  %1137 = vmatpush.bf16.msra.mxu0 0
  %1138 = vmatpush.bf16.msra.mxu0 %v451
  %1139 = vmatmul.bf16.gmra.mxu0 %v609
  %v1140 = vpop.f32.mrf.mxu0
  %v1141 = vadd.f32 0.0, %v1140
  %v1142 = vpop.f32.mrf.mxu0
  %1143 = vdwg.mxu0
  %1144 = vmatpush.bf16.msra.mxu0 0
  %1145 = vmatpush.bf16.msra.mxu0 0
  %1146 = vmatpush.bf16.msra.mxu0 0
  %1147 = vmatpush.bf16.msra.mxu0 0
  %1148 = vmatpush.bf16.msra.mxu0 0
  %1149 = vmatpush.bf16.msra.mxu0 0
  %1150 = vmatpush.bf16.msra.mxu0 0
  %1151 = vmatpush.bf16.msra.mxu0 %v452
  %1152 = vmatmul.bf16.gmra.mxu0 %v609
  %v1153 = vpop.f32.mrf.mxu0
  %v1154 = vadd.f32 0.0, %v1153
  %v1155 = vpop.f32.mrf.mxu0
  %1156 = vdwg.mxu0
  %1157 = vmatpush.bf16.msra.mxu0 0
  %1158 = vmatpush.bf16.msra.mxu0 0
  %1159 = vmatpush.bf16.msra.mxu0 0
  %1160 = vmatpush.bf16.msra.mxu0 0
  %1161 = vmatpush.bf16.msra.mxu0 0
  %1162 = vmatpush.bf16.msra.mxu0 0
  %1163 = vmatpush.bf16.msra.mxu0 0
  %1164 = vmatpush.bf16.msra.mxu0 %v453
  %1165 = vmatmul.bf16.gmra.mxu0 %v609
  %v1166 = vpop.f32.mrf.mxu0
  %v1167 = vadd.f32 0.0, %v1166
  %v1168 = vpop.f32.mrf.mxu0
  %1169 = vdwg.mxu0
  %1170 = vmatpush.bf16.msra.mxu0 0
  %1171 = vmatpush.bf16.msra.mxu0 0
  %1172 = vmatpush.bf16.msra.mxu0 0
  %1173 = vmatpush.bf16.msra.mxu0 0
  %1174 = vmatpush.bf16.msra.mxu0 0
  %1175 = vmatpush.bf16.msra.mxu0 0
  %1176 = vmatpush.bf16.msra.mxu0 0
  %1177 = vmatpush.bf16.msra.mxu0 %v454
  %1178 = vmatmul.bf16.gmra.mxu0 %v609
  %v1179 = vpop.f32.mrf.mxu0
  %v1180 = vadd.f32 0.0, %v1179
  %v1181 = vpop.f32.mrf.mxu0
  %1182 = vdwg.mxu0
  %1183 = vmatpush.bf16.msra.mxu0 0
  %1184 = vmatpush.bf16.msra.mxu0 0
  %1185 = vmatpush.bf16.msra.mxu0 0
  %1186 = vmatpush.bf16.msra.mxu0 0
  %1187 = vmatpush.bf16.msra.mxu0 0
  %1188 = vmatpush.bf16.msra.mxu0 0
  %1189 = vmatpush.bf16.msra.mxu0 0
  %1190 = vmatpush.bf16.msra.mxu0 %v455
  %1191 = vmatmul.bf16.gmra.mxu0 %v609
  %v1192 = vpop.f32.mrf.mxu0
  %v1193 = vadd.f32 0.0, %v1192
  %v1194 = vpop.f32.mrf.mxu0
  %1195 = vdwg.mxu0
  %1196 = vmatpush.bf16.msra.mxu0 0
  %1197 = vmatpush.bf16.msra.mxu0 0
  %1198 = vmatpush.bf16.msra.mxu0 0
  %1199 = vmatpush.bf16.msra.mxu0 0
  %1200 = vmatpush.bf16.msra.mxu0 0
  %1201 = vmatpush.bf16.msra.mxu0 0
  %1202 = vmatpush.bf16.msra.mxu0 0
  %1203 = vmatpush.bf16.msra.mxu0 %v456
  %1204 = vmatmul.bf16.gmra.mxu0 %v609
  %v1205 = vpop.f32.mrf.mxu0
  %v1206 = vadd.f32 0.0, %v1205
  %v1207 = vpop.f32.mrf.mxu0
  %1208 = vdwg.mxu0
  %1209 = vmatpush.bf16.msra.mxu0 0
  %1210 = vmatpush.bf16.msra.mxu0 0
  %1211 = vmatpush.bf16.msra.mxu0 0
  %1212 = vmatpush.bf16.msra.mxu0 0
  %1213 = vmatpush.bf16.msra.mxu0 0
  %1214 = vmatpush.bf16.msra.mxu0 0
  %1215 = vmatpush.bf16.msra.mxu0 0
  %1216 = vmatpush.bf16.msra.mxu0 %v457
  %1217 = vmatmul.bf16.gmra.mxu0 %v609
  %v1218 = vpop.f32.mrf.mxu0
  %v1219 = vadd.f32 0.0, %v1218
  %v1220 = vpop.f32.mrf.mxu0
  %1221 = vdwg.mxu0
  %1222 = vmatpush.bf16.msra.mxu0 0
  %1223 = vmatpush.bf16.msra.mxu0 0
  %1224 = vmatpush.bf16.msra.mxu0 0
  %1225 = vmatpush.bf16.msra.mxu0 0
  %1226 = vmatpush.bf16.msra.mxu0 0
  %1227 = vmatpush.bf16.msra.mxu0 0
  %1228 = vmatpush.bf16.msra.mxu0 0
  %1229 = vmatpush.bf16.msra.mxu0 %v458
  %1230 = vmatmul.bf16.gmra.mxu0 %v609
  %v1231 = vpop.f32.mrf.mxu0
  %v1232 = vadd.f32 0.0, %v1231
  %v1233 = vpop.f32.mrf.mxu0
  %1234 = vdwg.mxu0
  %1235 = vmatpush.bf16.msra.mxu0 0
  %1236 = vmatpush.bf16.msra.mxu0 0
  %1237 = vmatpush.bf16.msra.mxu0 0
  %1238 = vmatpush.bf16.msra.mxu0 0
  %1239 = vmatpush.bf16.msra.mxu0 0
  %1240 = vmatpush.bf16.msra.mxu0 0
  %1241 = vmatpush.bf16.msra.mxu0 0
  %1242 = vmatpush.bf16.msra.mxu0 %v459
  %1243 = vmatmul.bf16.gmra.mxu0 %v609
  %v1244 = vpop.f32.mrf.mxu0
  %v1245 = vadd.f32 0.0, %v1244
  %v1246 = vpop.f32.mrf.mxu0
  %1247 = vdwg.mxu0
  %1248 = vmatpush.bf16.msra.mxu0 0
  %1249 = vmatpush.bf16.msra.mxu0 0
  %1250 = vmatpush.bf16.msra.mxu0 0
  %1251 = vmatpush.bf16.msra.mxu0 0
  %1252 = vmatpush.bf16.msra.mxu0 0
  %1253 = vmatpush.bf16.msra.mxu0 0
  %1254 = vmatpush.bf16.msra.mxu0 0
  %1255 = vmatpush.bf16.msra.mxu0 %v460
  %1256 = vmatmul.bf16.gmra.mxu0 %v609
  %v1257 = vpop.f32.mrf.mxu0
  %v1258 = vadd.f32 0.0, %v1257
  %v1259 = vpop.f32.mrf.mxu0
  %1260 = vdwg.mxu0
  %1261 = vmatpush.bf16.msra.mxu0 0
  %1262 = vmatpush.bf16.msra.mxu0 0
  %1263 = vmatpush.bf16.msra.mxu0 0
  %1264 = vmatpush.bf16.msra.mxu0 0
  %1265 = vmatpush.bf16.msra.mxu0 0
  %1266 = vmatpush.bf16.msra.mxu0 0
  %1267 = vmatpush.bf16.msra.mxu0 0
  %1268 = vmatpush.bf16.msra.mxu0 %v461
  %1269 = vmatmul.bf16.gmra.mxu0 %v609
  %v1270 = vpop.f32.mrf.mxu0
  %v1271 = vadd.f32 0.0, %v1270
  %v1272 = vpop.f32.mrf.mxu0
  %1273 = vdwg.mxu0
  %1274 = vmatpush.bf16.msra.mxu0 0
  %1275 = vmatpush.bf16.msra.mxu0 0
  %1276 = vmatpush.bf16.msra.mxu0 0
  %1277 = vmatpush.bf16.msra.mxu0 0
  %1278 = vmatpush.bf16.msra.mxu0 0
  %1279 = vmatpush.bf16.msra.mxu0 0
  %1280 = vmatpush.bf16.msra.mxu0 0
  %1281 = vmatpush.bf16.msra.mxu0 %v462
  %1282 = vmatmul.bf16.gmra.mxu0 %v609
  %v1283 = vpop.f32.mrf.mxu0
  %v1284 = vadd.f32 0.0, %v1283
  %v1285 = vpop.f32.mrf.mxu0
  %1286 = vdwg.mxu0
  %1287 = vmatpush.bf16.msra.mxu0 0
  %1288 = vmatpush.bf16.msra.mxu0 0
  %1289 = vmatpush.bf16.msra.mxu0 0
  %1290 = vmatpush.bf16.msra.mxu0 0
  %1291 = vmatpush.bf16.msra.mxu0 0
  %1292 = vmatpush.bf16.msra.mxu0 0
  %1293 = vmatpush.bf16.msra.mxu0 0
  %1294 = vmatpush.bf16.msra.mxu0 %v463
  %1295 = vmatmul.bf16.gmra.mxu0 %v609
  %v1296 = vpop.f32.mrf.mxu0
  %v1297 = vadd.f32 0.0, %v1296
  %v1298 = vpop.f32.mrf.mxu0
  %1299 = vdwg.mxu0
  %1300 = vmatpush.bf16.msra.mxu0 0
  %1301 = vmatpush.bf16.msra.mxu0 0
  %1302 = vmatpush.bf16.msra.mxu0 0
  %1303 = vmatpush.bf16.msra.mxu0 0
  %1304 = vmatpush.bf16.msra.mxu0 0
  %1305 = vmatpush.bf16.msra.mxu0 0
  %1306 = vmatpush.bf16.msra.mxu0 0
  %1307 = vmatpush.bf16.msra.mxu0 %v464
  %1308 = vmatmul.bf16.gmra.mxu0 %v609
  %v1309 = vpop.f32.mrf.mxu0
  %v1310 = vadd.f32 0.0, %v1309
  %v1311 = vpop.f32.mrf.mxu0
  %1312 = vdwg.mxu0
  %1313 = vmatpush.bf16.msra.mxu0 0
  %1314 = vmatpush.bf16.msra.mxu0 0
  %1315 = vmatpush.bf16.msra.mxu0 0
  %1316 = vmatpush.bf16.msra.mxu0 0
  %1317 = vmatpush.bf16.msra.mxu0 0
  %1318 = vmatpush.bf16.msra.mxu0 0
  %1319 = vmatpush.bf16.msra.mxu0 0
  %1320 = vmatpush.bf16.msra.mxu0 %v465
  %1321 = vmatmul.bf16.gmra.mxu0 %v609
  %v1322 = vpop.f32.mrf.mxu0
  %v1323 = vadd.f32 0.0, %v1322
  %v1324 = vpop.f32.mrf.mxu0
  %1325 = vdwg.mxu0
  %1326 = vmatpush.bf16.msra.mxu0 0
  %1327 = vmatpush.bf16.msra.mxu0 0
  %1328 = vmatpush.bf16.msra.mxu0 0
  %1329 = vmatpush.bf16.msra.mxu0 0
  %1330 = vmatpush.bf16.msra.mxu0 0
  %1331 = vmatpush.bf16.msra.mxu0 0
  %1332 = vmatpush.bf16.msra.mxu0 0
  %1333 = vmatpush.bf16.msra.mxu0 %v466
  %1334 = vmatmul.bf16.gmra.mxu0 %v609
  %v1335 = vpop.f32.mrf.mxu0
  %v1336 = vadd.f32 0.0, %v1335
  %v1337 = vpop.f32.mrf.mxu0
  %1338 = vdwg.mxu0
  %1339 = vmatpush.bf16.msra.mxu0 0
  %1340 = vmatpush.bf16.msra.mxu0 0
  %1341 = vmatpush.bf16.msra.mxu0 0
  %1342 = vmatpush.bf16.msra.mxu0 0
  %1343 = vmatpush.bf16.msra.mxu0 0
  %1344 = vmatpush.bf16.msra.mxu0 0
  %1345 = vmatpush.bf16.msra.mxu0 0
  %1346 = vmatpush.bf16.msra.mxu0 %v467
  %1347 = vmatmul.bf16.gmra.mxu0 %v609
  %v1348 = vpop.f32.mrf.mxu0
  %v1349 = vadd.f32 0.0, %v1348
  %v1350 = vpop.f32.mrf.mxu0
  %1351 = vdwg.mxu0
  %1352 = vmatpush.bf16.msra.mxu0 0
  %1353 = vmatpush.bf16.msra.mxu0 0
  %1354 = vmatpush.bf16.msra.mxu0 0
  %1355 = vmatpush.bf16.msra.mxu0 0
  %1356 = vmatpush.bf16.msra.mxu0 0
  %1357 = vmatpush.bf16.msra.mxu0 0
  %1358 = vmatpush.bf16.msra.mxu0 0
  %1359 = vmatpush.bf16.msra.mxu0 %v468
  %1360 = vmatmul.bf16.gmra.mxu0 %v609
  %v1361 = vpop.f32.mrf.mxu0
  %v1362 = vadd.f32 0.0, %v1361
  %v1363 = vpop.f32.mrf.mxu0
  %1364 = vdwg.mxu0
  %1365 = vmatpush.bf16.msra.mxu0 0
  %1366 = vmatpush.bf16.msra.mxu0 0
  %1367 = vmatpush.bf16.msra.mxu0 0
  %1368 = vmatpush.bf16.msra.mxu0 0
  %1369 = vmatpush.bf16.msra.mxu0 0
  %1370 = vmatpush.bf16.msra.mxu0 0
  %1371 = vmatpush.bf16.msra.mxu0 0
  %1372 = vmatpush.bf16.msra.mxu0 %v469
  %1373 = vmatmul.bf16.gmra.mxu0 %v609
  %v1374 = vpop.f32.mrf.mxu0
  %v1375 = vadd.f32 0.0, %v1374
  %v1376 = vpop.f32.mrf.mxu0
  %1377 = vdwg.mxu0
  %1378 = vmatpush.bf16.msra.mxu0 0
  %1379 = vmatpush.bf16.msra.mxu0 0
  %1380 = vmatpush.bf16.msra.mxu0 0
  %1381 = vmatpush.bf16.msra.mxu0 0
  %1382 = vmatpush.bf16.msra.mxu0 0
  %1383 = vmatpush.bf16.msra.mxu0 0
  %1384 = vmatpush.bf16.msra.mxu0 0
  %1385 = vmatpush.bf16.msra.mxu0 %v470
  %1386 = vmatmul.bf16.gmra.mxu0 %v609
  %v1387 = vpop.f32.mrf.mxu0
  %v1388 = vadd.f32 0.0, %v1387
  %v1389 = vpop.f32.mrf.mxu0
  %1390 = vdwg.mxu0
  %1391 = vmatpush.bf16.msra.mxu0 0
  %1392 = vmatpush.bf16.msra.mxu0 0
  %1393 = vmatpush.bf16.msra.mxu0 0
  %1394 = vmatpush.bf16.msra.mxu0 0
  %1395 = vmatpush.bf16.msra.mxu0 0
  %1396 = vmatpush.bf16.msra.mxu0 0
  %1397 = vmatpush.bf16.msra.mxu0 0
  %1398 = vmatpush.bf16.msra.mxu0 %v471
  %1399 = vmatmul.bf16.gmra.mxu0 %v609
  %v1400 = vpop.f32.mrf.mxu0
  %v1401 = vadd.f32 0.0, %v1400
  %v1402 = vpop.f32.mrf.mxu0
  %1403 = vdwg.mxu0
  %1404 = vmatpush.bf16.msra.mxu0 0
  %1405 = vmatpush.bf16.msra.mxu0 0
  %1406 = vmatpush.bf16.msra.mxu0 0
  %1407 = vmatpush.bf16.msra.mxu0 0
  %1408 = vmatpush.bf16.msra.mxu0 0
  %1409 = vmatpush.bf16.msra.mxu0 0
  %1410 = vmatpush.bf16.msra.mxu0 0
  %1411 = vmatpush.bf16.msra.mxu0 %v472
  %1412 = vmatmul.bf16.gmra.mxu0 %v609
  %v1413 = vpop.f32.mrf.mxu0
  %v1414 = vadd.f32 0.0, %v1413
  %v1415 = vpop.f32.mrf.mxu0
  %1416 = vdwg.mxu0
  %1417 = vmatpush.bf16.msra.mxu0 0
  %1418 = vmatpush.bf16.msra.mxu0 0
  %1419 = vmatpush.bf16.msra.mxu0 0
  %1420 = vmatpush.bf16.msra.mxu0 0
  %1421 = vmatpush.bf16.msra.mxu0 0
  %1422 = vmatpush.bf16.msra.mxu0 0
  %1423 = vmatpush.bf16.msra.mxu0 0
  %1424 = vmatpush.bf16.msra.mxu0 %v473
  %1425 = vmatmul.bf16.gmra.mxu0 %v609
  %v1426 = vpop.f32.mrf.mxu0
  %v1427 = vadd.f32 0.0, %v1426
  %v1428 = vpop.f32.mrf.mxu0
  %1429 = vdwg.mxu0
  %1430 = vmatpush.bf16.msra.mxu0 0
  %1431 = vmatpush.bf16.msra.mxu0 0
  %1432 = vmatpush.bf16.msra.mxu0 0
  %1433 = vmatpush.bf16.msra.mxu0 0
  %1434 = vmatpush.bf16.msra.mxu0 0
  %1435 = vmatpush.bf16.msra.mxu0 0
  %1436 = vmatpush.bf16.msra.mxu0 0
  %1437 = vmatpush.bf16.msra.mxu0 %v474
  %1438 = vmatmul.bf16.gmra.mxu0 %v609
  %v1439 = vpop.f32.mrf.mxu0
  %v1440 = vadd.f32 0.0, %v1439
  %v1441 = vpop.f32.mrf.mxu0
  %1442 = vdwg.mxu0
  %1443 = vmatpush.bf16.msra.mxu0 0
  %1444 = vmatpush.bf16.msra.mxu0 0
  %1445 = vmatpush.bf16.msra.mxu0 0
  %1446 = vmatpush.bf16.msra.mxu0 0
  %1447 = vmatpush.bf16.msra.mxu0 0
  %1448 = vmatpush.bf16.msra.mxu0 0
  %1449 = vmatpush.bf16.msra.mxu0 0
  %1450 = vmatpush.bf16.msra.mxu0 %v475
  %1451 = vmatmul.bf16.gmra.mxu0 %v609
  %v1452 = vpop.f32.mrf.mxu0
  %v1453 = vadd.f32 0.0, %v1452
  %v1454 = vpop.f32.mrf.mxu0
  %1455 = vdwg.mxu0
  %1456 = vmatpush.bf16.msra.mxu0 0
  %1457 = vmatpush.bf16.msra.mxu0 0
  %1458 = vmatpush.bf16.msra.mxu0 0
  %1459 = vmatpush.bf16.msra.mxu0 0
  %1460 = vmatpush.bf16.msra.mxu0 0
  %1461 = vmatpush.bf16.msra.mxu0 0
  %1462 = vmatpush.bf16.msra.mxu0 0
  %1463 = vmatpush.bf16.msra.mxu0 %v476
  %1464 = vmatmul.bf16.gmra.mxu0 %v609
  %v1465 = vpop.f32.mrf.mxu0
  %v1466 = vadd.f32 0.0, %v1465
  %v1467 = vpop.f32.mrf.mxu0
  %1468 = vdwg.mxu0
  %1469 = vmatpush.bf16.msra.mxu0 0
  %1470 = vmatpush.bf16.msra.mxu0 0
  %1471 = vmatpush.bf16.msra.mxu0 0
  %1472 = vmatpush.bf16.msra.mxu0 0
  %1473 = vmatpush.bf16.msra.mxu0 0
  %1474 = vmatpush.bf16.msra.mxu0 0
  %1475 = vmatpush.bf16.msra.mxu0 0
  %1476 = vmatpush.bf16.msra.mxu0 %v477
  %1477 = vmatmul.bf16.gmra.mxu0 %v609
  %v1478 = vpop.f32.mrf.mxu0
  %v1479 = vadd.f32 0.0, %v1478
  %v1480 = vpop.f32.mrf.mxu0
  %1481 = vdwg.mxu0
  %1482 = vmatpush.bf16.msra.mxu0 0
  %1483 = vmatpush.bf16.msra.mxu0 0
  %1484 = vmatpush.bf16.msra.mxu0 0
  %1485 = vmatpush.bf16.msra.mxu0 0
  %1486 = vmatpush.bf16.msra.mxu0 0
  %1487 = vmatpush.bf16.msra.mxu0 0
  %1488 = vmatpush.bf16.msra.mxu0 0
  %1489 = vmatpush.bf16.msra.mxu0 %v478
  %1490 = vmatmul.bf16.gmra.mxu0 %v609
  %v1491 = vpop.f32.mrf.mxu0
  %v1492 = vadd.f32 0.0, %v1491
  %v1493 = vpop.f32.mrf.mxu0
  %1494 = vdwg.mxu0
  %1495 = vmatpush.bf16.msra.mxu0 0
  %1496 = vmatpush.bf16.msra.mxu0 0
  %1497 = vmatpush.bf16.msra.mxu0 0
  %1498 = vmatpush.bf16.msra.mxu0 0
  %1499 = vmatpush.bf16.msra.mxu0 0
  %1500 = vmatpush.bf16.msra.mxu0 0
  %1501 = vmatpush.bf16.msra.mxu0 0
  %1502 = vmatpush.bf16.msra.mxu0 %v479
  %1503 = vmatmul.bf16.gmra.mxu0 %v609
  %v1504 = vpop.f32.mrf.mxu0
  %v1505 = vadd.f32 0.0, %v1504
  %v1506 = vpop.f32.mrf.mxu0
  %1507 = vdwg.mxu0
  %1508 = vmatpush.bf16.msra.mxu0 0
  %1509 = vmatpush.bf16.msra.mxu0 0
  %1510 = vmatpush.bf16.msra.mxu0 0
  %1511 = vmatpush.bf16.msra.mxu0 0
  %1512 = vmatpush.bf16.msra.mxu0 0
  %1513 = vmatpush.bf16.msra.mxu0 0
  %1514 = vmatpush.bf16.msra.mxu0 0
  %1515 = vmatpush.bf16.msra.mxu0 %v480
  %1516 = vmatmul.bf16.gmra.mxu0 %v609
  %v1517 = vpop.f32.mrf.mxu0
  %v1518 = vadd.f32 0.0, %v1517
  %v1519 = vpop.f32.mrf.mxu0
  %1520 = vdwg.mxu0
  %1521 = vmatpush.bf16.msra.mxu0 0
  %1522 = vmatpush.bf16.msra.mxu0 0
  %1523 = vmatpush.bf16.msra.mxu0 0
  %1524 = vmatpush.bf16.msra.mxu0 0
  %1525 = vmatpush.bf16.msra.mxu0 0
  %1526 = vmatpush.bf16.msra.mxu0 0
  %1527 = vmatpush.bf16.msra.mxu0 0
  %1528 = vmatpush.bf16.msra.mxu0 %v481
  %1529 = vmatmul.bf16.gmra.mxu0 %v609
  %v1530 = vpop.f32.mrf.mxu0
  %v1531 = vadd.f32 0.0, %v1530
  %v1532 = vpop.f32.mrf.mxu0
  %1533 = vdwg.mxu0
  %1534 = vmatpush.bf16.msra.mxu0 0
  %1535 = vmatpush.bf16.msra.mxu0 0
  %1536 = vmatpush.bf16.msra.mxu0 0
  %1537 = vmatpush.bf16.msra.mxu0 0
  %1538 = vmatpush.bf16.msra.mxu0 0
  %1539 = vmatpush.bf16.msra.mxu0 0
  %1540 = vmatpush.bf16.msra.mxu0 0
  %1541 = vmatpush.bf16.msra.mxu0 %v482
  %1542 = vmatmul.bf16.gmra.mxu0 %v609
  %v1543 = vpop.f32.mrf.mxu0
  %v1544 = vadd.f32 0.0, %v1543
  %v1545 = vpop.f32.mrf.mxu0
  %1546 = vdwg.mxu0
  %1547 = vmatpush.bf16.msra.mxu0 0
  %1548 = vmatpush.bf16.msra.mxu0 0
  %1549 = vmatpush.bf16.msra.mxu0 0
  %1550 = vmatpush.bf16.msra.mxu0 0
  %1551 = vmatpush.bf16.msra.mxu0 0
  %1552 = vmatpush.bf16.msra.mxu0 0
  %1553 = vmatpush.bf16.msra.mxu0 0
  %1554 = vmatpush.bf16.msra.mxu0 %v483
  %1555 = vmatmul.bf16.gmra.mxu0 %v609
  %v1556 = vpop.f32.mrf.mxu0
  %v1557 = vadd.f32 0.0, %v1556
  %v1558 = vpop.f32.mrf.mxu0
  %1559 = vdwg.mxu0
  %1560 = vmatpush.bf16.msra.mxu0 0
  %1561 = vmatpush.bf16.msra.mxu0 0
  %1562 = vmatpush.bf16.msra.mxu0 0
  %1563 = vmatpush.bf16.msra.mxu0 0
  %1564 = vmatpush.bf16.msra.mxu0 0
  %1565 = vmatpush.bf16.msra.mxu0 0
  %1566 = vmatpush.bf16.msra.mxu0 0
  %1567 = vmatpush.bf16.msra.mxu0 %v484
  %1568 = vmatmul.bf16.gmra.mxu0 %v609
  %v1569 = vpop.f32.mrf.mxu0
  %v1570 = vadd.f32 0.0, %v1569
  %v1571 = vpop.f32.mrf.mxu0
  %1572 = vdwg.mxu0
  %1573 = vmatpush.bf16.msra.mxu0 0
  %1574 = vmatpush.bf16.msra.mxu0 0
  %1575 = vmatpush.bf16.msra.mxu0 0
  %1576 = vmatpush.bf16.msra.mxu0 0
  %1577 = vmatpush.bf16.msra.mxu0 0
  %1578 = vmatpush.bf16.msra.mxu0 0
  %1579 = vmatpush.bf16.msra.mxu0 0
  %1580 = vmatpush.bf16.msra.mxu0 %v485
  %1581 = vmatmul.bf16.gmra.mxu0 %v609
  %v1582 = vpop.f32.mrf.mxu0
  %v1583 = vadd.f32 0.0, %v1582
  %v1584 = vpop.f32.mrf.mxu0
  %1585 = vdwg.mxu0
  %1586 = vmatpush.bf16.msra.mxu0 0
  %1587 = vmatpush.bf16.msra.mxu0 0
  %1588 = vmatpush.bf16.msra.mxu0 0
  %1589 = vmatpush.bf16.msra.mxu0 0
  %1590 = vmatpush.bf16.msra.mxu0 0
  %1591 = vmatpush.bf16.msra.mxu0 0
  %1592 = vmatpush.bf16.msra.mxu0 0
  %1593 = vmatpush.bf16.msra.mxu0 %v486
  %1594 = vmatmul.bf16.gmra.mxu0 %v609
  %v1595 = vpop.f32.mrf.mxu0
  %v1596 = vadd.f32 0.0, %v1595
  %v1597 = vpop.f32.mrf.mxu0
  %1598 = vdwg.mxu0
  %1599 = vmatpush.bf16.msra.mxu0 0
  %1600 = vmatpush.bf16.msra.mxu0 0
  %1601 = vmatpush.bf16.msra.mxu0 0
  %1602 = vmatpush.bf16.msra.mxu0 0
  %1603 = vmatpush.bf16.msra.mxu0 0
  %1604 = vmatpush.bf16.msra.mxu0 0
  %1605 = vmatpush.bf16.msra.mxu0 0
  %1606 = vmatpush.bf16.msra.mxu0 %v487
  %1607 = vmatmul.bf16.gmra.mxu0 %v609
  %v1608 = vpop.f32.mrf.mxu0
  %v1609 = vadd.f32 0.0, %v1608
  %v1610 = vpop.f32.mrf.mxu0
  %1611 = vdwg.mxu0
  %1612 = vmatpush.bf16.msra.mxu0 0
  %1613 = vmatpush.bf16.msra.mxu0 0
  %1614 = vmatpush.bf16.msra.mxu0 0
  %1615 = vmatpush.bf16.msra.mxu0 0
  %1616 = vmatpush.bf16.msra.mxu0 0
  %1617 = vmatpush.bf16.msra.mxu0 0
  %1618 = vmatpush.bf16.msra.mxu0 0
  %1619 = vmatpush.bf16.msra.mxu0 %v488
  %1620 = vmatmul.bf16.gmra.mxu0 %v609
  %v1621 = vpop.f32.mrf.mxu0
  %v1622 = vadd.f32 0.0, %v1621
  %v1623 = vpop.f32.mrf.mxu0
  %1624 = vdwg.mxu0
  %1625 = vmatpush.bf16.msra.mxu0 0
  %1626 = vmatpush.bf16.msra.mxu0 0
  %1627 = vmatpush.bf16.msra.mxu0 0
  %1628 = vmatpush.bf16.msra.mxu0 0
  %1629 = vmatpush.bf16.msra.mxu0 0
  %1630 = vmatpush.bf16.msra.mxu0 0
  %1631 = vmatpush.bf16.msra.mxu0 0
  %1632 = vmatpush.bf16.msra.mxu0 %v489
  %1633 = vmatmul.bf16.gmra.mxu0 %v609
  %v1634 = vpop.f32.mrf.mxu0
  %v1635 = vadd.f32 0.0, %v1634
  %v1636 = vpop.f32.mrf.mxu0
  %1637 = vdwg.mxu0
  %1638 = vmatpush.bf16.msra.mxu0 0
  %1639 = vmatpush.bf16.msra.mxu0 0
  %1640 = vmatpush.bf16.msra.mxu0 0
  %1641 = vmatpush.bf16.msra.mxu0 0
  %1642 = vmatpush.bf16.msra.mxu0 0
  %1643 = vmatpush.bf16.msra.mxu0 0
  %1644 = vmatpush.bf16.msra.mxu0 0
  %1645 = vmatpush.bf16.msra.mxu0 %v490
  %1646 = vmatmul.bf16.gmra.mxu0 %v609
  %v1647 = vpop.f32.mrf.mxu0
  %v1648 = vadd.f32 0.0, %v1647
  %v1649 = vpop.f32.mrf.mxu0
  %1650 = vdwg.mxu0
  %1651 = vmatpush.bf16.msra.mxu0 0
  %1652 = vmatpush.bf16.msra.mxu0 0
  %1653 = vmatpush.bf16.msra.mxu0 0
  %1654 = vmatpush.bf16.msra.mxu0 0
  %1655 = vmatpush.bf16.msra.mxu0 0
  %1656 = vmatpush.bf16.msra.mxu0 0
  %1657 = vmatpush.bf16.msra.mxu0 0
  %1658 = vmatpush.bf16.msra.mxu0 %v491
  %1659 = vmatmul.bf16.gmra.mxu0 %v609
  %v1660 = vpop.f32.mrf.mxu0
  %v1661 = vadd.f32 0.0, %v1660
  %v1662 = vpop.f32.mrf.mxu0
  %1663 = vdwg.mxu0
  %1664 = vmatpush.bf16.msra.mxu0 0
  %1665 = vmatpush.bf16.msra.mxu0 0
  %1666 = vmatpush.bf16.msra.mxu0 0
  %1667 = vmatpush.bf16.msra.mxu0 0
  %1668 = vmatpush.bf16.msra.mxu0 0
  %1669 = vmatpush.bf16.msra.mxu0 0
  %1670 = vmatpush.bf16.msra.mxu0 0
  %1671 = vmatpush.bf16.msra.mxu0 %v492
  %1672 = vmatmul.bf16.gmra.mxu0 %v609
  %v1673 = vpop.f32.mrf.mxu0
  %v1674 = vadd.f32 0.0, %v1673
  %v1675 = vpop.f32.mrf.mxu0
  %1676 = vdwg.mxu0
  %1677 = vmatpush.bf16.msra.mxu0 0
  %1678 = vmatpush.bf16.msra.mxu0 0
  %1679 = vmatpush.bf16.msra.mxu0 0
  %1680 = vmatpush.bf16.msra.mxu0 0
  %1681 = vmatpush.bf16.msra.mxu0 0
  %1682 = vmatpush.bf16.msra.mxu0 0
  %1683 = vmatpush.bf16.msra.mxu0 0
  %1684 = vmatpush.bf16.msra.mxu0 %v493
  %1685 = vmatmul.bf16.gmra.mxu0 %v609
  %v1686 = vpop.f32.mrf.mxu0
  %v1687 = vadd.f32 0.0, %v1686
  %v1688 = vpop.f32.mrf.mxu0
  %1689 = vdwg.mxu0
  %1690 = vmatpush.bf16.msra.mxu0 0
  %1691 = vmatpush.bf16.msra.mxu0 0
  %1692 = vmatpush.bf16.msra.mxu0 0
  %1693 = vmatpush.bf16.msra.mxu0 0
  %1694 = vmatpush.bf16.msra.mxu0 0
  %1695 = vmatpush.bf16.msra.mxu0 0
  %1696 = vmatpush.bf16.msra.mxu0 0
  %1697 = vmatpush.bf16.msra.mxu0 %v494
  %1698 = vmatmul.bf16.gmra.mxu0 %v609
  %v1699 = vpop.f32.mrf.mxu0
  %v1700 = vadd.f32 0.0, %v1699
  %v1701 = vpop.f32.mrf.mxu0
  %1702 = vdwg.mxu0
  %1703 = vmatpush.bf16.msra.mxu0 0
  %1704 = vmatpush.bf16.msra.mxu0 0
  %1705 = vmatpush.bf16.msra.mxu0 0
  %1706 = vmatpush.bf16.msra.mxu0 0
  %1707 = vmatpush.bf16.msra.mxu0 0
  %1708 = vmatpush.bf16.msra.mxu0 0
  %1709 = vmatpush.bf16.msra.mxu0 0
  %1710 = vmatpush.bf16.msra.mxu0 %v495
  %1711 = vmatmul.bf16.gmra.mxu0 %v609
  %v1712 = vpop.f32.mrf.mxu0
  %v1713 = vadd.f32 0.0, %v1712
  %v1714 = vpop.f32.mrf.mxu0
  %1715 = vdwg.mxu0
  %1716 = vmatpush.bf16.msra.mxu0 0
  %1717 = vmatpush.bf16.msra.mxu0 0
  %1718 = vmatpush.bf16.msra.mxu0 0
  %1719 = vmatpush.bf16.msra.mxu0 0
  %1720 = vmatpush.bf16.msra.mxu0 0
  %1721 = vmatpush.bf16.msra.mxu0 0
  %1722 = vmatpush.bf16.msra.mxu0 0
  %1723 = vmatpush.bf16.msra.mxu0 %v496
  %1724 = vmatmul.bf16.gmra.mxu0 %v609
  %v1725 = vpop.f32.mrf.mxu0
  %v1726 = vadd.f32 0.0, %v1725
  %v1727 = vpop.f32.mrf.mxu0
  %1728 = vdwg.mxu0
  %1729 = vmatpush.bf16.msra.mxu0 0
  %1730 = vmatpush.bf16.msra.mxu0 0
  %1731 = vmatpush.bf16.msra.mxu0 0
  %1732 = vmatpush.bf16.msra.mxu0 0
  %1733 = vmatpush.bf16.msra.mxu0 0
  %1734 = vmatpush.bf16.msra.mxu0 0
  %1735 = vmatpush.bf16.msra.mxu0 0
  %1736 = vmatpush.bf16.msra.mxu0 %v497
  %1737 = vmatmul.bf16.gmra.mxu0 %v609
  %v1738 = vpop.f32.mrf.mxu0
  %v1739 = vadd.f32 0.0, %v1738
  %v1740 = vpop.f32.mrf.mxu0
  %1741 = vdwg.mxu0
  %1742 = vmatpush.bf16.msra.mxu0 0
  %1743 = vmatpush.bf16.msra.mxu0 0
  %1744 = vmatpush.bf16.msra.mxu0 0
  %1745 = vmatpush.bf16.msra.mxu0 0
  %1746 = vmatpush.bf16.msra.mxu0 0
  %1747 = vmatpush.bf16.msra.mxu0 0
  %1748 = vmatpush.bf16.msra.mxu0 0
  %1749 = vmatpush.bf16.msra.mxu0 %v498
  %1750 = vmatmul.bf16.gmra.mxu0 %v609
  %v1751 = vpop.f32.mrf.mxu0
  %v1752 = vadd.f32 0.0, %v1751
  %v1753 = vpop.f32.mrf.mxu0
  %1754 = vdwg.mxu0
  %1755 = vmatpush.bf16.msra.mxu0 0
  %1756 = vmatpush.bf16.msra.mxu0 0
  %1757 = vmatpush.bf16.msra.mxu0 0
  %1758 = vmatpush.bf16.msra.mxu0 0
  %1759 = vmatpush.bf16.msra.mxu0 0
  %1760 = vmatpush.bf16.msra.mxu0 0
  %1761 = vmatpush.bf16.msra.mxu0 0
  %1762 = vmatpush.bf16.msra.mxu0 %v499
  %1763 = vmatmul.bf16.gmra.mxu0 %v609
  %v1764 = vpop.f32.mrf.mxu0
  %v1765 = vadd.f32 0.0, %v1764
  %v1766 = vpop.f32.mrf.mxu0
  %1767 = vdwg.mxu0
  %1768 = vmatpush.bf16.msra.mxu0 0
  %1769 = vmatpush.bf16.msra.mxu0 0
  %1770 = vmatpush.bf16.msra.mxu0 0
  %1771 = vmatpush.bf16.msra.mxu0 0
  %1772 = vmatpush.bf16.msra.mxu0 0
  %1773 = vmatpush.bf16.msra.mxu0 0
  %1774 = vmatpush.bf16.msra.mxu0 0
  %1775 = vmatpush.bf16.msra.mxu0 %v500
  %1776 = vmatmul.bf16.gmra.mxu0 %v609
  %v1777 = vpop.f32.mrf.mxu0
  %v1778 = vadd.f32 0.0, %v1777
  %v1779 = vpop.f32.mrf.mxu0
  %1780 = vdwg.mxu0
  %1781 = vmatpush.bf16.msra.mxu0 0
  %1782 = vmatpush.bf16.msra.mxu0 0
  %1783 = vmatpush.bf16.msra.mxu0 0
  %1784 = vmatpush.bf16.msra.mxu0 0
  %1785 = vmatpush.bf16.msra.mxu0 0
  %1786 = vmatpush.bf16.msra.mxu0 0
  %1787 = vmatpush.bf16.msra.mxu0 0
  %1788 = vmatpush.bf16.msra.mxu0 %v501
  %1789 = vmatmul.bf16.gmra.mxu0 %v609
  %v1790 = vpop.f32.mrf.mxu0
  %v1791 = vadd.f32 0.0, %v1790
  %v1792 = vpop.f32.mrf.mxu0
  %1793 = vdwg.mxu0
  %1794 = vmatpush.bf16.msra.mxu0 0
  %1795 = vmatpush.bf16.msra.mxu0 0
  %1796 = vmatpush.bf16.msra.mxu0 0
  %1797 = vmatpush.bf16.msra.mxu0 0
  %1798 = vmatpush.bf16.msra.mxu0 0
  %1799 = vmatpush.bf16.msra.mxu0 0
  %1800 = vmatpush.bf16.msra.mxu0 0
  %1801 = vmatpush.bf16.msra.mxu0 %v502
  %1802 = vmatmul.bf16.gmra.mxu0 %v609
  %v1803 = vpop.f32.mrf.mxu0
  %v1804 = vadd.f32 0.0, %v1803
  %v1805 = vpop.f32.mrf.mxu0
  %1806 = vdwg.mxu0
  %1807 = vmatpush.bf16.msra.mxu0 0
  %1808 = vmatpush.bf16.msra.mxu0 0
  %1809 = vmatpush.bf16.msra.mxu0 0
  %1810 = vmatpush.bf16.msra.mxu0 0
  %1811 = vmatpush.bf16.msra.mxu0 0
  %1812 = vmatpush.bf16.msra.mxu0 0
  %1813 = vmatpush.bf16.msra.mxu0 0
  %1814 = vmatpush.bf16.msra.mxu0 %v503
  %1815 = vmatmul.bf16.gmra.mxu0 %v609
  %v1816 = vpop.f32.mrf.mxu0
  %v1817 = vadd.f32 0.0, %v1816
  %v1818 = vpop.f32.mrf.mxu0
  %1819 = vdwg.mxu0
  %1820 = vmatpush.bf16.msra.mxu0 0
  %1821 = vmatpush.bf16.msra.mxu0 0
  %1822 = vmatpush.bf16.msra.mxu0 0
  %1823 = vmatpush.bf16.msra.mxu0 0
  %1824 = vmatpush.bf16.msra.mxu0 0
  %1825 = vmatpush.bf16.msra.mxu0 0
  %1826 = vmatpush.bf16.msra.mxu0 0
  %1827 = vmatpush.bf16.msra.mxu0 %v504
  %1828 = vmatmul.bf16.gmra.mxu0 %v609
  %v1829 = vpop.f32.mrf.mxu0
  %v1830 = vadd.f32 0.0, %v1829
  %v1831 = vpop.f32.mrf.mxu0
  %1832 = vdwg.mxu0
  %1833 = vmatpush.bf16.msra.mxu0 0
  %1834 = vmatpush.bf16.msra.mxu0 0
  %1835 = vmatpush.bf16.msra.mxu0 0
  %1836 = vmatpush.bf16.msra.mxu0 0
  %1837 = vmatpush.bf16.msra.mxu0 0
  %1838 = vmatpush.bf16.msra.mxu0 0
  %1839 = vmatpush.bf16.msra.mxu0 0
  %1840 = vmatpush.bf16.msra.mxu0 %v505
  %1841 = vmatmul.bf16.gmra.mxu0 %v609
  %v1842 = vpop.f32.mrf.mxu0
  %v1843 = vadd.f32 0.0, %v1842
  %v1844 = vpop.f32.mrf.mxu0
  %1845 = vdwg.mxu0
  %1846 = vmatpush.bf16.msra.mxu0 0
  %1847 = vmatpush.bf16.msra.mxu0 0
  %1848 = vmatpush.bf16.msra.mxu0 0
  %1849 = vmatpush.bf16.msra.mxu0 0
  %1850 = vmatpush.bf16.msra.mxu0 0
  %1851 = vmatpush.bf16.msra.mxu0 0
  %1852 = vmatpush.bf16.msra.mxu0 0
  %1853 = vmatpush.bf16.msra.mxu0 %v506
  %1854 = vmatmul.bf16.gmra.mxu0 %v609
  %v1855 = vpop.f32.mrf.mxu0
  %v1856 = vadd.f32 0.0, %v1855
  %v1857 = vpop.f32.mrf.mxu0
  %1858 = vdwg.mxu0
  %1859 = vmatpush.bf16.msra.mxu0 0
  %1860 = vmatpush.bf16.msra.mxu0 0
  %1861 = vmatpush.bf16.msra.mxu0 0
  %1862 = vmatpush.bf16.msra.mxu0 0
  %1863 = vmatpush.bf16.msra.mxu0 0
  %1864 = vmatpush.bf16.msra.mxu0 0
  %1865 = vmatpush.bf16.msra.mxu0 0
  %1866 = vmatpush.bf16.msra.mxu0 %v507
  %1867 = vmatmul.bf16.gmra.mxu0 %v609
  %v1868 = vpop.f32.mrf.mxu0
  %v1869 = vadd.f32 0.0, %v1868
  %v1870 = vpop.f32.mrf.mxu0
  %1871 = vdwg.mxu0
  %1872 = vmatpush.bf16.msra.mxu0 0
  %1873 = vmatpush.bf16.msra.mxu0 0
  %1874 = vmatpush.bf16.msra.mxu0 0
  %1875 = vmatpush.bf16.msra.mxu0 0
  %1876 = vmatpush.bf16.msra.mxu0 0
  %1877 = vmatpush.bf16.msra.mxu0 0
  %1878 = vmatpush.bf16.msra.mxu0 0
  %1879 = vmatpush.bf16.msra.mxu0 %v508
  %1880 = vmatmul.bf16.gmra.mxu0 %v609
  %v1881 = vpop.f32.mrf.mxu0
  %v1882 = vadd.f32 0.0, %v1881
  %v1883 = vpop.f32.mrf.mxu0
  %1884 = vdwg.mxu0
  %v1983 = vrot.slane %v634, 6
  %v1984 = vrot.slane %v647, 4
  %v1985 = vrot.slane %v660, 2
  %v1986 = vrot.slane %v686, 6
  %v1987 = vrot.slane %v699, 4
  %v1988 = vrot.slane %v712, 2
  %v1989 = vrot.slane %v738, 6
  %v1990 = vrot.slane %v751, 4
  %v1991 = vrot.slane %v764, 2
  %v1992 = vrot.slane %v790, 6
  %v1993 = vrot.slane %v803, 4
  %v1994 = vrot.slane %v816, 2
  %v1995 = vrot.slane %v842, 6
  %v1996 = vrot.slane %v855, 4
  %v1997 = vrot.slane %v868, 2
  %v1998 = vrot.slane %v894, 6
  %v1999 = vrot.slane %v907, 4
  %v2000 = vrot.slane %v920, 2
  %v2001 = vrot.slane %v946, 6
  %v2002 = vrot.slane %v959, 4
  %v2003 = vrot.slane %v972, 2
  %v2004 = vrot.slane %v998, 6
  %v2005 = vrot.slane %v1011, 4
  %v2006 = vrot.slane %v1024, 2
  %v2007 = vrot.slane %v1050, 6
  %v2008 = vrot.slane %v1063, 4
  %v2009 = vrot.slane %v1076, 2
  %v2010 = vrot.slane %v1102, 6
  %v2011 = vrot.slane %v1115, 4
  %v2012 = vrot.slane %v1128, 2
  %v2013 = vrot.slane %v1154, 6
  %v2014 = vrot.slane %v1167, 4
  %v2015 = vrot.slane %v1180, 2
  %v2016 = vrot.slane %v1206, 6
  %v2017 = vrot.slane %v1219, 4
  %v2018 = vrot.slane %v1232, 2
  %v2019 = vrot.slane %v1258, 6
  %v2020 = vrot.slane %v1271, 4
  %v2021 = vrot.slane %v1284, 2
  %v2022 = vrot.slane %v1310, 6
  %v2023 = vrot.slane %v1323, 4
  %v2024 = vrot.slane %v1336, 2
  %v2025 = vrot.slane %v1362, 6
  %v2026 = vrot.slane %v1375, 4
  %v2027 = vrot.slane %v1388, 2
  %v2028 = vrot.slane %v1414, 6
  %v2029 = vrot.slane %v1427, 4
  %v2030 = vrot.slane %v1440, 2
  %v2031 = vrot.slane %v1466, 6
  %v2032 = vrot.slane %v1479, 4
  %v2033 = vrot.slane %v1492, 2
  %v2034 = vrot.slane %v1518, 6
  %v2035 = vrot.slane %v1531, 4
  %v2036 = vrot.slane %v1544, 2
  %v2037 = vrot.slane %v1570, 6
  %v2038 = vrot.slane %v1583, 4
  %v2039 = vrot.slane %v1596, 2
  %v2040 = vrot.slane %v1622, 6
  %v2041 = vrot.slane %v1635, 4
  %v2042 = vrot.slane %v1648, 2
  %v2043 = vrot.slane %v1674, 6
  %v2044 = vrot.slane %v1687, 4
  %v2045 = vrot.slane %v1700, 2
  %v2046 = vrot.slane %v1726, 6
  %v2047 = vrot.slane %v1739, 4
  %v2048 = vrot.slane %v1752, 2
  %v2049 = vrot.slane %v1778, 6
  %v2050 = vrot.slane %v1791, 4
  %v2051 = vrot.slane %v1804, 2
  %v2052 = vrot.slane %v1830, 6
  %v2053 = vrot.slane %v1843, 4
  %v2054 = vrot.slane %v1856, 2
  %v2055 = vrot.slane %v1882, 6
  %vm2056 = vcmask 1041408
  %v2057 = vsel %vm2056, %v621, %v1983
  %vm2058 = vcmask 1045508
  %v2059 = vsel %vm2058, %v1984, %v1985
  %vm2060 = vcmask 1043456
  %v2061 = vsel %vm2060, %v2057, %v2059
  %v2062 = vsel %vm2056, %v673, %v1986
  %v2063 = vsel %vm2058, %v1987, %v1988
  %v2064 = vsel %vm2060, %v2062, %v2063
  %v2065 = vsel %vm2056, %v725, %v1989
  %v2066 = vsel %vm2058, %v1990, %v1991
  %v2067 = vsel %vm2060, %v2065, %v2066
  %v2068 = vsel %vm2056, %v777, %v1992
  %v2069 = vsel %vm2058, %v1993, %v1994
  %v2070 = vsel %vm2060, %v2068, %v2069
  %v2071 = vsel %vm2056, %v829, %v1995
  %v2072 = vsel %vm2058, %v1996, %v1997
  %v2073 = vsel %vm2060, %v2071, %v2072
  %v2074 = vsel %vm2056, %v881, %v1998
  %v2075 = vsel %vm2058, %v1999, %v2000
  %v2076 = vsel %vm2060, %v2074, %v2075
  %v2077 = vsel %vm2056, %v933, %v2001
  %v2078 = vsel %vm2058, %v2002, %v2003
  %v2079 = vsel %vm2060, %v2077, %v2078
  %v2080 = vsel %vm2056, %v985, %v2004
  %v2081 = vsel %vm2058, %v2005, %v2006
  %v2082 = vsel %vm2060, %v2080, %v2081
  %v2083 = vsel %vm2056, %v1037, %v2007
  %v2084 = vsel %vm2058, %v2008, %v2009
  %v2085 = vsel %vm2060, %v2083, %v2084
  %v2086 = vsel %vm2056, %v1089, %v2010
  %v2087 = vsel %vm2058, %v2011, %v2012
  %v2088 = vsel %vm2060, %v2086, %v2087
  %v2089 = vsel %vm2056, %v1141, %v2013
  %v2090 = vsel %vm2058, %v2014, %v2015
  %v2091 = vsel %vm2060, %v2089, %v2090
  %v2092 = vsel %vm2056, %v1193, %v2016
  %v2093 = vsel %vm2058, %v2017, %v2018
  %v2094 = vsel %vm2060, %v2092, %v2093
  %v2095 = vsel %vm2056, %v1245, %v2019
  %v2096 = vsel %vm2058, %v2020, %v2021
  %v2097 = vsel %vm2060, %v2095, %v2096
  %v2098 = vsel %vm2056, %v1297, %v2022
  %v2099 = vsel %vm2058, %v2023, %v2024
  %v2100 = vsel %vm2060, %v2098, %v2099
  %v2101 = vsel %vm2056, %v1349, %v2025
  %v2102 = vsel %vm2058, %v2026, %v2027
  %v2103 = vsel %vm2060, %v2101, %v2102
  %v2104 = vsel %vm2056, %v1401, %v2028
  %v2105 = vsel %vm2058, %v2029, %v2030
  %v2106 = vsel %vm2060, %v2104, %v2105
  %v2107 = vsel %vm2056, %v1453, %v2031
  %v2108 = vsel %vm2058, %v2032, %v2033
  %v2109 = vsel %vm2060, %v2107, %v2108
  %v2110 = vsel %vm2056, %v1505, %v2034
  %v2111 = vsel %vm2058, %v2035, %v2036
  %v2112 = vsel %vm2060, %v2110, %v2111
  %v2113 = vsel %vm2056, %v1557, %v2037
  %v2114 = vsel %vm2058, %v2038, %v2039
  %v2115 = vsel %vm2060, %v2113, %v2114
  %v2116 = vsel %vm2056, %v1609, %v2040
  %v2117 = vsel %vm2058, %v2041, %v2042
  %v2118 = vsel %vm2060, %v2116, %v2117
  %v2119 = vsel %vm2056, %v1661, %v2043
  %v2120 = vsel %vm2058, %v2044, %v2045
  %v2121 = vsel %vm2060, %v2119, %v2120
  %v2122 = vsel %vm2056, %v1713, %v2046
  %v2123 = vsel %vm2058, %v2047, %v2048
  %v2124 = vsel %vm2060, %v2122, %v2123
  %v2125 = vsel %vm2056, %v1765, %v2049
  %v2126 = vsel %vm2058, %v2050, %v2051
  %v2127 = vsel %vm2060, %v2125, %v2126
  %v2128 = vsel %vm2056, %v1817, %v2052
  %v2129 = vsel %vm2058, %v2053, %v2054
  %v2130 = vsel %vm2060, %v2128, %v2129
  %v2131 = vsel %vm2056, %v1869, %v2055
  %2157 = vst [vmem:[%s4] sm:$0xff] %v2061
  %2158 = vst [vmem:[%s4 + $0x8] sm:$0xff] %v2064
  %2159 = vst [vmem:[%s4 + $0x10] sm:$0xff] %v2067
  %2160 = vst [vmem:[%s4 + $0x18] sm:$0xff] %v2070
  %2161 = vst [vmem:[%s4 + $0x20] sm:$0xff] %v2073
  %2162 = vst [vmem:[%s4 + $0x28] sm:$0xff] %v2076
  %2163 = vst [vmem:[%s4 + $0x30] sm:$0xff] %v2079
  %2164 = vst [vmem:[%s4 + $0x38] sm:$0xff] %v2082
  %2165 = vst [vmem:[%s4 + $0x40] sm:$0xff] %v2085
  %2166 = vst [vmem:[%s4 + $0x48] sm:$0xff] %v2088
  %2167 = vst [vmem:[%s4 + $0x50] sm:$0xff] %v2091
  %2168 = vst [vmem:[%s4 + $0x58] sm:$0xff] %v2094
  %2169 = vst [vmem:[%s4 + $0x60] sm:$0xff] %v2097
  %2170 = vst [vmem:[%s4 + $0x68] sm:$0xff] %v2100
  %2171 = vst [vmem:[%s4 + $0x70] sm:$0xff] %v2103
  %2172 = vst [vmem:[%s4 + $0x78] sm:$0xff] %v2106
  %2173 = vst [vmem:[%s4 + $0x80] sm:$0xff] %v2109
  %2174 = vst [vmem:[%s4 + $0x88] sm:$0xff] %v2112
  %2175 = vst [vmem:[%s4 + $0x90] sm:$0xff] %v2115
  %2176 = vst [vmem:[%s4 + $0x98] sm:$0xff] %v2118
  %2177 = vst [vmem:[%s4 + $0xa0] sm:$0xff] %v2121
  %2178 = vst [vmem:[%s4 + $0xa8] sm:$0xff] %v2124
  %2179 = vst [vmem:[%s4 + $0xb0] sm:$0xff] %v2127
  %2180 = vst [vmem:[%s4 + $0xb8] sm:$0xff] %v2130
  %2181 = vst [vmem:[%s4 + $0xc0] sm:$0xf] %v2131
  %v2182 = vld [vmem:[%s4] sm:$0xf]
  %2184 = vst [vmem:[#allocation1] ss:$4 sm:$0xff] %v2182
  %v2185 = vld.sshfl [vmem:[#allocation1] sm:$0xff pattern:$0x73625140]
  %v2186 = vld.sshfl [vmem:[#allocation1 + $0x8] sm:$0xff pattern:$0x73625140]
  %v2189 = vsel %vm2056, %v2185, 0.0
  %v2190 = vrot.slane %v2189, 4
  %v2191 = vadd.f32 %v2189, %v2190
  %v2192 = vrot.slane %v2191, 2
  %v2193 = vadd.f32 %v2191, %v2192
  %v2194 = vrot.slane %v2193, 1
  %v2195 = vadd.f32 %v2193, %v2194
  %v2196 = vsel %vm2056, %v2186, 0.0
  %v2197 = vrot.slane %v2196, 4
  %v2198 = vadd.f32 %v2196, %v2197
  %v2199 = vrot.slane %v2198, 2
  %v2200 = vadd.f32 %v2198, %v2199
  %v2201 = vrot.slane %v2200, 1
  %v2202 = vadd.f32 %v2200, %v2201
  %v2203 = vadd.f32 %v2195, 0.0
  %v2204 = vadd.f32 %v2202, 0.0
  %v2205 = vld [vmem:[%s4 + $0x4] sm:$0xf]
  %2207 = vst [vmem:[#allocation1] ss:$4 sm:$0xff] %v2205
  %v2208 = vld.sshfl [vmem:[#allocation1] sm:$0xff pattern:$0x73625140]
  %v2209 = vld.sshfl [vmem:[#allocation1 + $0x8] sm:$0xff pattern:$0x73625140]
  %v2212 = vsel %vm2056, %v2208, 0.0
  %v2213 = vrot.slane %v2212, 4
  %v2214 = vadd.f32 %v2212, %v2213
  %v2215 = vrot.slane %v2214, 2
  %v2216 = vadd.f32 %v2214, %v2215
  %v2217 = vrot.slane %v2216, 1
  %v2218 = vadd.f32 %v2216, %v2217
  %v2219 = vsel %vm2056, %v2209, 0.0
  %v2220 = vrot.slane %v2219, 4
  %v2221 = vadd.f32 %v2219, %v2220
  %v2222 = vrot.slane %v2221, 2
  %v2223 = vadd.f32 %v2221, %v2222
  %v2224 = vrot.slane %v2223, 1
  %v2225 = vadd.f32 %v2223, %v2224
  %v2226 = vadd.f32 %v2203, %v2218
  %v2227 = vadd.f32 %v2204, %v2225
  %v2228 = vld [vmem:[%s4 + $0x8] sm:$0xf]
  %2230 = vst [vmem:[#allocation1] ss:$4 sm:$0xff] %v2228
  %v2231 = vld.sshfl [vmem:[#allocation1] sm:$0xff pattern:$0x73625140]
  %v2232 = vld.sshfl [vmem:[#allocation1 + $0x8] sm:$0xff pattern:$0x73625140]
  %v2235 = vsel %vm2056, %v2231, 0.0
  %v2236 = vrot.slane %v2235, 4
  %v2237 = vadd.f32 %v2235, %v2236
  %v2238 = vrot.slane %v2237, 2
  %v2239 = vadd.f32 %v2237, %v2238
  %v2240 = vrot.slane %v2239, 1
  %v2241 = vadd.f32 %v2239, %v2240
  %v2242 = vsel %vm2056, %v2232, 0.0
  %v2243 = vrot.slane %v2242, 4
  %v2244 = vadd.f32 %v2242, %v2243
  %v2245 = vrot.slane %v2244, 2
  %v2246 = vadd.f32 %v2244, %v2245
  %v2247 = vrot.slane %v2246, 1
  %v2248 = vadd.f32 %v2246, %v2247
  %v2249 = vadd.f32 %v2226, %v2241
  %v2250 = vadd.f32 %v2227, %v2248
  %v2251 = vld [vmem:[%s4 + $0xc] sm:$0xf]
  %2253 = vst [vmem:[#allocation1] ss:$4 sm:$0xff] %v2251
  %v2254 = vld.sshfl [vmem:[#allocation1] sm:$0xff pattern:$0x73625140]
  %v2255 = vld.sshfl [vmem:[#allocation1 + $0x8] sm:$0xff pattern:$0x73625140]
  %v2258 = vsel %vm2056, %v2254, 0.0
  %v2259 = vrot.slane %v2258, 4
  %v2260 = vadd.f32 %v2258, %v2259
  %v2261 = vrot.slane %v2260, 2
  %v2262 = vadd.f32 %v2260, %v2261
  %v2263 = vrot.slane %v2262, 1
  %v2264 = vadd.f32 %v2262, %v2263
  %v2265 = vsel %vm2056, %v2255, 0.0
  %v2266 = vrot.slane %v2265, 4
  %v2267 = vadd.f32 %v2265, %v2266
  %v2268 = vrot.slane %v2267, 2
  %v2269 = vadd.f32 %v2267, %v2268
  %v2270 = vrot.slane %v2269, 1
  %v2271 = vadd.f32 %v2269, %v2270
  %v2272 = vadd.f32 %v2249, %v2264
  %v2273 = vadd.f32 %v2250, %v2271
  %v2274 = vld [vmem:[%s4 + $0x10] sm:$0xf]
  %2276 = vst [vmem:[#allocation1] ss:$4 sm:$0xff] %v2274
  %v2277 = vld.sshfl [vmem:[#allocation1] sm:$0xff pattern:$0x73625140]
  %v2278 = vld.sshfl [vmem:[#allocation1 + $0x8] sm:$0xff pattern:$0x73625140]
  %v2281 = vsel %vm2056, %v2277, 0.0
  %v2282 = vrot.slane %v2281, 4
  %v2283 = vadd.f32 %v2281, %v2282
  %v2284 = vrot.slane %v2283, 2
  %v2285 = vadd.f32 %v2283, %v2284
  %v2286 = vrot.slane %v2285, 1
  %v2287 = vadd.f32 %v2285, %v2286
  %v2288 = vsel %vm2056, %v2278, 0.0
  %v2289 = vrot.slane %v2288, 4
  %v2290 = vadd.f32 %v2288, %v2289
  %v2291 = vrot.slane %v2290, 2
  %v2292 = vadd.f32 %v2290, %v2291
  %v2293 = vrot.slane %v2292, 1
  %v2294 = vadd.f32 %v2292, %v2293
  %v2295 = vadd.f32 %v2272, %v2287
  %v2296 = vadd.f32 %v2273, %v2294
  %v2297 = vld [vmem:[%s4 + $0x14] sm:$0xf]
  %2299 = vst [vmem:[#allocation1] ss:$4 sm:$0xff] %v2297
  %v2300 = vld.sshfl [vmem:[#allocation1] sm:$0xff pattern:$0x73625140]
  %v2301 = vld.sshfl [vmem:[#allocation1 + $0x8] sm:$0xff pattern:$0x73625140]
  %v2304 = vsel %vm2056, %v2300, 0.0
  %v2305 = vrot.slane %v2304, 4
  %v2306 = vadd.f32 %v2304, %v2305
  %v2307 = vrot.slane %v2306, 2
  %v2308 = vadd.f32 %v2306, %v2307
  %v2309 = vrot.slane %v2308, 1
  %v2310 = vadd.f32 %v2308, %v2309
  %v2311 = vsel %vm2056, %v2301, 0.0
  %v2312 = vrot.slane %v2311, 4
  %v2313 = vadd.f32 %v2311, %v2312
  %v2314 = vrot.slane %v2313, 2
  %v2315 = vadd.f32 %v2313, %v2314
  %v2316 = vrot.slane %v2315, 1
  %v2317 = vadd.f32 %v2315, %v2316
  %v2318 = vadd.f32 %v2295, %v2310
  %v2319 = vadd.f32 %v2296, %v2317
  %v2320 = vld [vmem:[%s4 + $0x18] sm:$0xf]
  %2322 = vst [vmem:[#allocation1] ss:$4 sm:$0xff] %v2320
  %v2323 = vld.sshfl [vmem:[#allocation1] sm:$0xff pattern:$0x73625140]
  %v2324 = vld.sshfl [vmem:[#allocation1 + $0x8] sm:$0xff pattern:$0x73625140]
  %v2327 = vsel %vm2056, %v2323, 0.0
  %v2328 = vrot.slane %v2327, 4
  %v2329 = vadd.f32 %v2327, %v2328
  %v2330 = vrot.slane %v2329, 2
  %v2331 = vadd.f32 %v2329, %v2330
  %v2332 = vrot.slane %v2331, 1
  %v2333 = vadd.f32 %v2331, %v2332
  %v2334 = vsel %vm2056, %v2324, 0.0
  %v2335 = vrot.slane %v2334, 4
  %v2336 = vadd.f32 %v2334, %v2335
  %v2337 = vrot.slane %v2336, 2
  %v2338 = vadd.f32 %v2336, %v2337
  %v2339 = vrot.slane %v2338, 1
  %v2340 = vadd.f32 %v2338, %v2339
  %v2341 = vadd.f32 %v2318, %v2333
  %v2342 = vadd.f32 %v2319, %v2340
  %v2343 = vld [vmem:[%s4 + $0x1c] sm:$0xf]
  %2345 = vst [vmem:[#allocation1] ss:$4 sm:$0xff] %v2343
  %v2346 = vld.sshfl [vmem:[#allocation1] sm:$0xff pattern:$0x73625140]
  %v2347 = vld.sshfl [vmem:[#allocation1 + $0x8] sm:$0xff pattern:$0x73625140]
  %v2350 = vsel %vm2056, %v2346, 0.0
  %v2351 = vrot.slane %v2350, 4
  %v2352 = vadd.f32 %v2350, %v2351
  %v2353 = vrot.slane %v2352, 2
  %v2354 = vadd.f32 %v2352, %v2353
  %v2355 = vrot.slane %v2354, 1
  %v2356 = vadd.f32 %v2354, %v2355
  %v2357 = vsel %vm2056, %v2347, 0.0
  %v2358 = vrot.slane %v2357, 4
  %v2359 = vadd.f32 %v2357, %v2358
  %v2360 = vrot.slane %v2359, 2
  %v2361 = vadd.f32 %v2359, %v2360
  %v2362 = vrot.slane %v2361, 1
  %v2363 = vadd.f32 %v2361, %v2362
  %v2364 = vadd.f32 %v2341, %v2356
  %v2365 = vadd.f32 %v2342, %v2363
  %v2366 = vld [vmem:[%s4 + $0x20] sm:$0xf]
  %2368 = vst [vmem:[#allocation1] ss:$4 sm:$0xff] %v2366
  %v2369 = vld.sshfl [vmem:[#allocation1] sm:$0xff pattern:$0x73625140]
  %v2370 = vld.sshfl [vmem:[#allocation1 + $0x8] sm:$0xff pattern:$0x73625140]
  %v2373 = vsel %vm2056, %v2369, 0.0
  %v2374 = vrot.slane %v2373, 4
  %v2375 = vadd.f32 %v2373, %v2374
  %v2376 = vrot.slane %v2375, 2
  %v2377 = vadd.f32 %v2375, %v2376
  %v2378 = vrot.slane %v2377, 1
  %v2379 = vadd.f32 %v2377, %v2378
  %v2380 = vsel %vm2056, %v2370, 0.0
  %v2381 = vrot.slane %v2380, 4
  %v2382 = vadd.f32 %v2380, %v2381
  %v2383 = vrot.slane %v2382, 2
  %v2384 = vadd.f32 %v2382, %v2383
  %v2385 = vrot.slane %v2384, 1
  %v2386 = vadd.f32 %v2384, %v2385
  %v2387 = vadd.f32 %v2364, %v2379
  %v2388 = vadd.f32 %v2365, %v2386
  %v2389 = vld [vmem:[%s4 + $0x24] sm:$0xf]
  %2391 = vst [vmem:[#allocation1] ss:$4 sm:$0xff] %v2389
  %v2392 = vld.sshfl [vmem:[#allocation1] sm:$0xff pattern:$0x73625140]
  %v2393 = vld.sshfl [vmem:[#allocation1 + $0x8] sm:$0xff pattern:$0x73625140]
  %v2396 = vsel %vm2056, %v2392, 0.0
  %v2397 = vrot.slane %v2396, 4
  %v2398 = vadd.f32 %v2396, %v2397
  %v2399 = vrot.slane %v2398, 2
  %v2400 = vadd.f32 %v2398, %v2399
  %v2401 = vrot.slane %v2400, 1
  %v2402 = vadd.f32 %v2400, %v2401
  %v2403 = vsel %vm2056, %v2393, 0.0
  %v2404 = vrot.slane %v2403, 4
  %v2405 = vadd.f32 %v2403, %v2404
  %v2406 = vrot.slane %v2405, 2
  %v2407 = vadd.f32 %v2405, %v2406
  %v2408 = vrot.slane %v2407, 1
  %v2409 = vadd.f32 %v2407, %v2408
  %v2410 = vadd.f32 %v2387, %v2402
  %v2411 = vadd.f32 %v2388, %v2409
  %v2412 = vld [vmem:[%s4 + $0x28] sm:$0xf]
  %2414 = vst [vmem:[#allocation1] ss:$4 sm:$0xff] %v2412
  %v2415 = vld.sshfl [vmem:[#allocation1] sm:$0xff pattern:$0x73625140]
  %v2416 = vld.sshfl [vmem:[#allocation1 + $0x8] sm:$0xff pattern:$0x73625140]
  %v2419 = vsel %vm2056, %v2415, 0.0
  %v2420 = vrot.slane %v2419, 4
  %v2421 = vadd.f32 %v2419, %v2420
  %v2422 = vrot.slane %v2421, 2
  %v2423 = vadd.f32 %v2421, %v2422
  %v2424 = vrot.slane %v2423, 1
  %v2425 = vadd.f32 %v2423, %v2424
  %v2426 = vsel %vm2056, %v2416, 0.0
  %v2427 = vrot.slane %v2426, 4
  %v2428 = vadd.f32 %v2426, %v2427
  %v2429 = vrot.slane %v2428, 2
  %v2430 = vadd.f32 %v2428, %v2429
  %v2431 = vrot.slane %v2430, 1
  %v2432 = vadd.f32 %v2430, %v2431
  %v2433 = vadd.f32 %v2410, %v2425
  %v2434 = vadd.f32 %v2411, %v2432
  %v2435 = vld [vmem:[%s4 + $0x2c] sm:$0xf]
  %2437 = vst [vmem:[#allocation1] ss:$4 sm:$0xff] %v2435
  %v2438 = vld.sshfl [vmem:[#allocation1] sm:$0xff pattern:$0x73625140]
  %v2439 = vld.sshfl [vmem:[#allocation1 + $0x8] sm:$0xff pattern:$0x73625140]
  %v2442 = vsel %vm2056, %v2438, 0.0
  %v2443 = vrot.slane %v2442, 4
  %v2444 = vadd.f32 %v2442, %v2443
  %v2445 = vrot.slane %v2444, 2
  %v2446 = vadd.f32 %v2444, %v2445
  %v2447 = vrot.slane %v2446, 1
  %v2448 = vadd.f32 %v2446, %v2447
  %v2449 = vsel %vm2056, %v2439, 0.0
  %v2450 = vrot.slane %v2449, 4
  %v2451 = vadd.f32 %v2449, %v2450
  %v2452 = vrot.slane %v2451, 2
  %v2453 = vadd.f32 %v2451, %v2452
  %v2454 = vrot.slane %v2453, 1
  %v2455 = vadd.f32 %v2453, %v2454
  %v2456 = vadd.f32 %v2433, %v2448
  %v2457 = vadd.f32 %v2434, %v2455
  %v2458 = vld [vmem:[%s4 + $0x30] sm:$0xf]
  %2460 = vst [vmem:[#allocation1] ss:$4 sm:$0xff] %v2458
  %v2461 = vld.sshfl [vmem:[#allocation1] sm:$0xff pattern:$0x73625140]
  %v2462 = vld.sshfl [vmem:[#allocation1 + $0x8] sm:$0xff pattern:$0x73625140]
  %v2465 = vsel %vm2056, %v2461, 0.0
  %v2466 = vrot.slane %v2465, 4
  %v2467 = vadd.f32 %v2465, %v2466
  %v2468 = vrot.slane %v2467, 2
  %v2469 = vadd.f32 %v2467, %v2468
  %v2470 = vrot.slane %v2469, 1
  %v2471 = vadd.f32 %v2469, %v2470
  %v2472 = vsel %vm2056, %v2462, 0.0
  %v2473 = vrot.slane %v2472, 4
  %v2474 = vadd.f32 %v2472, %v2473
  %v2475 = vrot.slane %v2474, 2
  %v2476 = vadd.f32 %v2474, %v2475
  %v2477 = vrot.slane %v2476, 1
  %v2478 = vadd.f32 %v2476, %v2477
  %v2479 = vadd.f32 %v2456, %v2471
  %v2480 = vadd.f32 %v2457, %v2478
  %v2481 = vld [vmem:[%s4 + $0x34] sm:$0xf]
  %2483 = vst [vmem:[#allocation1] ss:$4 sm:$0xff] %v2481
  %v2484 = vld.sshfl [vmem:[#allocation1] sm:$0xff pattern:$0x73625140]
  %v2485 = vld.sshfl [vmem:[#allocation1 + $0x8] sm:$0xff pattern:$0x73625140]
  %v2488 = vsel %vm2056, %v2484, 0.0
  %v2489 = vrot.slane %v2488, 4
  %v2490 = vadd.f32 %v2488, %v2489
  %v2491 = vrot.slane %v2490, 2
  %v2492 = vadd.f32 %v2490, %v2491
  %v2493 = vrot.slane %v2492, 1
  %v2494 = vadd.f32 %v2492, %v2493
  %v2495 = vsel %vm2056, %v2485, 0.0
  %v2496 = vrot.slane %v2495, 4
  %v2497 = vadd.f32 %v2495, %v2496
  %v2498 = vrot.slane %v2497, 2
  %v2499 = vadd.f32 %v2497, %v2498
  %v2500 = vrot.slane %v2499, 1
  %v2501 = vadd.f32 %v2499, %v2500
  %v2502 = vadd.f32 %v2479, %v2494
  %v2503 = vadd.f32 %v2480, %v2501
  %v2504 = vld [vmem:[%s4 + $0x38] sm:$0xf]
  %2506 = vst [vmem:[#allocation1] ss:$4 sm:$0xff] %v2504
  %v2507 = vld.sshfl [vmem:[#allocation1] sm:$0xff pattern:$0x73625140]
  %v2508 = vld.sshfl [vmem:[#allocation1 + $0x8] sm:$0xff pattern:$0x73625140]
  %v2511 = vsel %vm2056, %v2507, 0.0
  %v2512 = vrot.slane %v2511, 4
  %v2513 = vadd.f32 %v2511, %v2512
  %v2514 = vrot.slane %v2513, 2
  %v2515 = vadd.f32 %v2513, %v2514
  %v2516 = vrot.slane %v2515, 1
  %v2517 = vadd.f32 %v2515, %v2516
  %v2518 = vsel %vm2056, %v2508, 0.0
  %v2519 = vrot.slane %v2518, 4
  %v2520 = vadd.f32 %v2518, %v2519
  %v2521 = vrot.slane %v2520, 2
  %v2522 = vadd.f32 %v2520, %v2521
  %v2523 = vrot.slane %v2522, 1
  %v2524 = vadd.f32 %v2522, %v2523
  %v2525 = vadd.f32 %v2502, %v2517
  %v2526 = vadd.f32 %v2503, %v2524
  %v2527 = vld [vmem:[%s4 + $0x3c] sm:$0xf]
  %2529 = vst [vmem:[#allocation1] ss:$4 sm:$0xff] %v2527
  %v2530 = vld.sshfl [vmem:[#allocation1] sm:$0xff pattern:$0x73625140]
  %v2531 = vld.sshfl [vmem:[#allocation1 + $0x8] sm:$0xff pattern:$0x73625140]
  %v2534 = vsel %vm2056, %v2530, 0.0
  %v2535 = vrot.slane %v2534, 4
  %v2536 = vadd.f32 %v2534, %v2535
  %v2537 = vrot.slane %v2536, 2
  %v2538 = vadd.f32 %v2536, %v2537
  %v2539 = vrot.slane %v2538, 1
  %v2540 = vadd.f32 %v2538, %v2539
  %v2541 = vsel %vm2056, %v2531, 0.0
  %v2542 = vrot.slane %v2541, 4
  %v2543 = vadd.f32 %v2541, %v2542
  %v2544 = vrot.slane %v2543, 2
  %v2545 = vadd.f32 %v2543, %v2544
  %v2546 = vrot.slane %v2545, 1
  %v2547 = vadd.f32 %v2545, %v2546
  %v2548 = vadd.f32 %v2525, %v2540
  %v2549 = vadd.f32 %v2526, %v2547
  %v2550 = vld [vmem:[%s4 + $0x40] sm:$0xf]
  %2552 = vst [vmem:[#allocation1] ss:$4 sm:$0xff] %v2550
  %v2553 = vld.sshfl [vmem:[#allocation1] sm:$0xff pattern:$0x73625140]
  %v2554 = vld.sshfl [vmem:[#allocation1 + $0x8] sm:$0xff pattern:$0x73625140]
  %v2557 = vsel %vm2056, %v2553, 0.0
  %v2558 = vrot.slane %v2557, 4
  %v2559 = vadd.f32 %v2557, %v2558
  %v2560 = vrot.slane %v2559, 2
  %v2561 = vadd.f32 %v2559, %v2560
  %v2562 = vrot.slane %v2561, 1
  %v2563 = vadd.f32 %v2561, %v2562
  %v2564 = vsel %vm2056, %v2554, 0.0
  %v2565 = vrot.slane %v2564, 4
  %v2566 = vadd.f32 %v2564, %v2565
  %v2567 = vrot.slane %v2566, 2
  %v2568 = vadd.f32 %v2566, %v2567
  %v2569 = vrot.slane %v2568, 1
  %v2570 = vadd.f32 %v2568, %v2569
  %v2571 = vadd.f32 %v2548, %v2563
  %v2572 = vadd.f32 %v2549, %v2570
  %v2573 = vld [vmem:[%s4 + $0x44] sm:$0xf]
  %2575 = vst [vmem:[#allocation1] ss:$4 sm:$0xff] %v2573
  %v2576 = vld.sshfl [vmem:[#allocation1] sm:$0xff pattern:$0x73625140]
  %v2577 = vld.sshfl [vmem:[#allocation1 + $0x8] sm:$0xff pattern:$0x73625140]
  %v2580 = vsel %vm2056, %v2576, 0.0
  %v2581 = vrot.slane %v2580, 4
  %v2582 = vadd.f32 %v2580, %v2581
  %v2583 = vrot.slane %v2582, 2
  %v2584 = vadd.f32 %v2582, %v2583
  %v2585 = vrot.slane %v2584, 1
  %v2586 = vadd.f32 %v2584, %v2585
  %v2587 = vsel %vm2056, %v2577, 0.0
  %v2588 = vrot.slane %v2587, 4
  %v2589 = vadd.f32 %v2587, %v2588
  %v2590 = vrot.slane %v2589, 2
  %v2591 = vadd.f32 %v2589, %v2590
  %v2592 = vrot.slane %v2591, 1
  %v2593 = vadd.f32 %v2591, %v2592
  %v2594 = vadd.f32 %v2571, %v2586
  %v2595 = vadd.f32 %v2572, %v2593
  %v2596 = vld [vmem:[%s4 + $0x48] sm:$0xf]
  %2598 = vst [vmem:[#allocation1] ss:$4 sm:$0xff] %v2596
  %v2599 = vld.sshfl [vmem:[#allocation1] sm:$0xff pattern:$0x73625140]
  %v2600 = vld.sshfl [vmem:[#allocation1 + $0x8] sm:$0xff pattern:$0x73625140]
  %v2603 = vsel %vm2056, %v2599, 0.0
  %v2604 = vrot.slane %v2603, 4
  %v2605 = vadd.f32 %v2603, %v2604
  %v2606 = vrot.slane %v2605, 2
  %v2607 = vadd.f32 %v2605, %v2606
  %v2608 = vrot.slane %v2607, 1
  %v2609 = vadd.f32 %v2607, %v2608
  %v2610 = vsel %vm2056, %v2600, 0.0
  %v2611 = vrot.slane %v2610, 4
  %v2612 = vadd.f32 %v2610, %v2611
  %v2613 = vrot.slane %v2612, 2
  %v2614 = vadd.f32 %v2612, %v2613
  %v2615 = vrot.slane %v2614, 1
  %v2616 = vadd.f32 %v2614, %v2615
  %v2617 = vadd.f32 %v2594, %v2609
  %v2618 = vadd.f32 %v2595, %v2616
  %v2619 = vld [vmem:[%s4 + $0x4c] sm:$0xf]
  %2621 = vst [vmem:[#allocation1] ss:$4 sm:$0xff] %v2619
  %v2622 = vld.sshfl [vmem:[#allocation1] sm:$0xff pattern:$0x73625140]
  %v2623 = vld.sshfl [vmem:[#allocation1 + $0x8] sm:$0xff pattern:$0x73625140]
  %v2626 = vsel %vm2056, %v2622, 0.0
  %v2627 = vrot.slane %v2626, 4
  %v2628 = vadd.f32 %v2626, %v2627
  %v2629 = vrot.slane %v2628, 2
  %v2630 = vadd.f32 %v2628, %v2629
  %v2631 = vrot.slane %v2630, 1
  %v2632 = vadd.f32 %v2630, %v2631
  %v2633 = vsel %vm2056, %v2623, 0.0
  %v2634 = vrot.slane %v2633, 4
  %v2635 = vadd.f32 %v2633, %v2634
  %v2636 = vrot.slane %v2635, 2
  %v2637 = vadd.f32 %v2635, %v2636
  %v2638 = vrot.slane %v2637, 1
  %v2639 = vadd.f32 %v2637, %v2638
  %v2640 = vadd.f32 %v2617, %v2632
  %v2641 = vadd.f32 %v2618, %v2639
  %v2642 = vld [vmem:[%s4 + $0x50] sm:$0xf]
  %2644 = vst [vmem:[#allocation1] ss:$4 sm:$0xff] %v2642
  %v2645 = vld.sshfl [vmem:[#allocation1] sm:$0xff pattern:$0x73625140]
  %v2646 = vld.sshfl [vmem:[#allocation1 + $0x8] sm:$0xff pattern:$0x73625140]
  %v2649 = vsel %vm2056, %v2645, 0.0
  %v2650 = vrot.slane %v2649, 4
  %v2651 = vadd.f32 %v2649, %v2650
  %v2652 = vrot.slane %v2651, 2
  %v2653 = vadd.f32 %v2651, %v2652
  %v2654 = vrot.slane %v2653, 1
  %v2655 = vadd.f32 %v2653, %v2654
  %v2656 = vsel %vm2056, %v2646, 0.0
  %v2657 = vrot.slane %v2656, 4
  %v2658 = vadd.f32 %v2656, %v2657
  %v2659 = vrot.slane %v2658, 2
  %v2660 = vadd.f32 %v2658, %v2659
  %v2661 = vrot.slane %v2660, 1
  %v2662 = vadd.f32 %v2660, %v2661
  %v2663 = vadd.f32 %v2640, %v2655
  %v2664 = vadd.f32 %v2641, %v2662
  %v2665 = vld [vmem:[%s4 + $0x54] sm:$0xf]
  %2667 = vst [vmem:[#allocation1] ss:$4 sm:$0xff] %v2665
  %v2668 = vld.sshfl [vmem:[#allocation1] sm:$0xff pattern:$0x73625140]
  %v2669 = vld.sshfl [vmem:[#allocation1 + $0x8] sm:$0xff pattern:$0x73625140]
  %v2672 = vsel %vm2056, %v2668, 0.0
  %v2673 = vrot.slane %v2672, 4
  %v2674 = vadd.f32 %v2672, %v2673
  %v2675 = vrot.slane %v2674, 2
  %v2676 = vadd.f32 %v2674, %v2675
  %v2677 = vrot.slane %v2676, 1
  %v2678 = vadd.f32 %v2676, %v2677
  %v2679 = vsel %vm2056, %v2669, 0.0
  %v2680 = vrot.slane %v2679, 4
  %v2681 = vadd.f32 %v2679, %v2680
  %v2682 = vrot.slane %v2681, 2
  %v2683 = vadd.f32 %v2681, %v2682
  %v2684 = vrot.slane %v2683, 1
  %v2685 = vadd.f32 %v2683, %v2684
  %v2686 = vadd.f32 %v2663, %v2678
  %v2687 = vadd.f32 %v2664, %v2685
  %v2688 = vld [vmem:[%s4 + $0x58] sm:$0xf]
  %2690 = vst [vmem:[#allocation1] ss:$4 sm:$0xff] %v2688
  %v2691 = vld.sshfl [vmem:[#allocation1] sm:$0xff pattern:$0x73625140]
  %v2692 = vld.sshfl [vmem:[#allocation1 + $0x8] sm:$0xff pattern:$0x73625140]
  %v2695 = vsel %vm2056, %v2691, 0.0
  %v2696 = vrot.slane %v2695, 4
  %v2697 = vadd.f32 %v2695, %v2696
  %v2698 = vrot.slane %v2697, 2
  %v2699 = vadd.f32 %v2697, %v2698
  %v2700 = vrot.slane %v2699, 1
  %v2701 = vadd.f32 %v2699, %v2700
  %v2702 = vsel %vm2056, %v2692, 0.0
  %v2703 = vrot.slane %v2702, 4
  %v2704 = vadd.f32 %v2702, %v2703
  %v2705 = vrot.slane %v2704, 2
  %v2706 = vadd.f32 %v2704, %v2705
  %v2707 = vrot.slane %v2706, 1
  %v2708 = vadd.f32 %v2706, %v2707
  %v2709 = vadd.f32 %v2686, %v2701
  %v2710 = vadd.f32 %v2687, %v2708
  %v2711 = vld [vmem:[%s4 + $0x5c] sm:$0xf]
  %2713 = vst [vmem:[#allocation1] ss:$4 sm:$0xff] %v2711
  %v2714 = vld.sshfl [vmem:[#allocation1] sm:$0xff pattern:$0x73625140]
  %v2715 = vld.sshfl [vmem:[#allocation1 + $0x8] sm:$0xff pattern:$0x73625140]
  %v2718 = vsel %vm2056, %v2714, 0.0
  %v2719 = vrot.slane %v2718, 4
  %v2720 = vadd.f32 %v2718, %v2719
  %v2721 = vrot.slane %v2720, 2
  %v2722 = vadd.f32 %v2720, %v2721
  %v2723 = vrot.slane %v2722, 1
  %v2724 = vadd.f32 %v2722, %v2723
  %v2725 = vsel %vm2056, %v2715, 0.0
  %v2726 = vrot.slane %v2725, 4
  %v2727 = vadd.f32 %v2725, %v2726
  %v2728 = vrot.slane %v2727, 2
  %v2729 = vadd.f32 %v2727, %v2728
  %v2730 = vrot.slane %v2729, 1
  %v2731 = vadd.f32 %v2729, %v2730
  %v2732 = vadd.f32 %v2709, %v2724
  %v2733 = vadd.f32 %v2710, %v2731
  %v2734 = vld [vmem:[%s4 + $0x60] sm:$0xf]
  %2736 = vst [vmem:[#allocation1] ss:$4 sm:$0xff] %v2734
  %v2737 = vld.sshfl [vmem:[#allocation1] sm:$0xff pattern:$0x73625140]
  %v2738 = vld.sshfl [vmem:[#allocation1 + $0x8] sm:$0xff pattern:$0x73625140]
  %v2741 = vsel %vm2056, %v2737, 0.0
  %v2742 = vrot.slane %v2741, 4
  %v2743 = vadd.f32 %v2741, %v2742
  %v2744 = vrot.slane %v2743, 2
  %v2745 = vadd.f32 %v2743, %v2744
  %v2746 = vrot.slane %v2745, 1
  %v2747 = vadd.f32 %v2745, %v2746
  %v2748 = vsel %vm2056, %v2738, 0.0
  %v2749 = vrot.slane %v2748, 4
  %v2750 = vadd.f32 %v2748, %v2749
  %v2751 = vrot.slane %v2750, 2
  %v2752 = vadd.f32 %v2750, %v2751
  %v2753 = vrot.slane %v2752, 1
  %v2754 = vadd.f32 %v2752, %v2753
  %v2755 = vadd.f32 %v2732, %v2747
  %v2756 = vadd.f32 %v2733, %v2754
  %v2757 = vld [vmem:[%s4 + $0x64] sm:$0xf]
  %2759 = vst [vmem:[#allocation1] ss:$4 sm:$0xff] %v2757
  %v2760 = vld.sshfl [vmem:[#allocation1] sm:$0xff pattern:$0x73625140]
  %v2761 = vld.sshfl [vmem:[#allocation1 + $0x8] sm:$0xff pattern:$0x73625140]
  %v2764 = vsel %vm2056, %v2760, 0.0
  %v2765 = vrot.slane %v2764, 4
  %v2766 = vadd.f32 %v2764, %v2765
  %v2767 = vrot.slane %v2766, 2
  %v2768 = vadd.f32 %v2766, %v2767
  %v2769 = vrot.slane %v2768, 1
  %v2770 = vadd.f32 %v2768, %v2769
  %v2771 = vsel %vm2056, %v2761, 0.0
  %v2772 = vrot.slane %v2771, 4
  %v2773 = vadd.f32 %v2771, %v2772
  %v2774 = vrot.slane %v2773, 2
  %v2775 = vadd.f32 %v2773, %v2774
  %v2776 = vrot.slane %v2775, 1
  %v2777 = vadd.f32 %v2775, %v2776
  %v2778 = vadd.f32 %v2755, %v2770
  %v2779 = vadd.f32 %v2756, %v2777
  %v2780 = vld [vmem:[%s4 + $0x68] sm:$0xf]
  %2782 = vst [vmem:[#allocation1] ss:$4 sm:$0xff] %v2780
  %v2783 = vld.sshfl [vmem:[#allocation1] sm:$0xff pattern:$0x73625140]
  %v2784 = vld.sshfl [vmem:[#allocation1 + $0x8] sm:$0xff pattern:$0x73625140]
  %v2787 = vsel %vm2056, %v2783, 0.0
  %v2788 = vrot.slane %v2787, 4
  %v2789 = vadd.f32 %v2787, %v2788
  %v2790 = vrot.slane %v2789, 2
  %v2791 = vadd.f32 %v2789, %v2790
  %v2792 = vrot.slane %v2791, 1
  %v2793 = vadd.f32 %v2791, %v2792
  %v2794 = vsel %vm2056, %v2784, 0.0
  %v2795 = vrot.slane %v2794, 4
  %v2796 = vadd.f32 %v2794, %v2795
  %v2797 = vrot.slane %v2796, 2
  %v2798 = vadd.f32 %v2796, %v2797
  %v2799 = vrot.slane %v2798, 1
  %v2800 = vadd.f32 %v2798, %v2799
  %v2801 = vadd.f32 %v2778, %v2793
  %v2802 = vadd.f32 %v2779, %v2800
  %v2803 = vld [vmem:[%s4 + $0x6c] sm:$0xf]
  %2805 = vst [vmem:[#allocation1] ss:$4 sm:$0xff] %v2803
  %v2806 = vld.sshfl [vmem:[#allocation1] sm:$0xff pattern:$0x73625140]
  %v2807 = vld.sshfl [vmem:[#allocation1 + $0x8] sm:$0xff pattern:$0x73625140]
  %v2810 = vsel %vm2056, %v2806, 0.0
  %v2811 = vrot.slane %v2810, 4
  %v2812 = vadd.f32 %v2810, %v2811
  %v2813 = vrot.slane %v2812, 2
  %v2814 = vadd.f32 %v2812, %v2813
  %v2815 = vrot.slane %v2814, 1
  %v2816 = vadd.f32 %v2814, %v2815
  %v2817 = vsel %vm2056, %v2807, 0.0
  %v2818 = vrot.slane %v2817, 4
  %v2819 = vadd.f32 %v2817, %v2818
  %v2820 = vrot.slane %v2819, 2
  %v2821 = vadd.f32 %v2819, %v2820
  %v2822 = vrot.slane %v2821, 1
  %v2823 = vadd.f32 %v2821, %v2822
  %v2824 = vadd.f32 %v2801, %v2816
  %v2825 = vadd.f32 %v2802, %v2823
  %v2826 = vld [vmem:[%s4 + $0x70] sm:$0xf]
  %2828 = vst [vmem:[#allocation1] ss:$4 sm:$0xff] %v2826
  %v2829 = vld.sshfl [vmem:[#allocation1] sm:$0xff pattern:$0x73625140]
  %v2830 = vld.sshfl [vmem:[#allocation1 + $0x8] sm:$0xff pattern:$0x73625140]
  %v2833 = vsel %vm2056, %v2829, 0.0
  %v2834 = vrot.slane %v2833, 4
  %v2835 = vadd.f32 %v2833, %v2834
  %v2836 = vrot.slane %v2835, 2
  %v2837 = vadd.f32 %v2835, %v2836
  %v2838 = vrot.slane %v2837, 1
  %v2839 = vadd.f32 %v2837, %v2838
  %v2840 = vsel %vm2056, %v2830, 0.0
  %v2841 = vrot.slane %v2840, 4
  %v2842 = vadd.f32 %v2840, %v2841
  %v2843 = vrot.slane %v2842, 2
  %v2844 = vadd.f32 %v2842, %v2843
  %v2845 = vrot.slane %v2844, 1
  %v2846 = vadd.f32 %v2844, %v2845
  %v2847 = vadd.f32 %v2824, %v2839
  %v2848 = vadd.f32 %v2825, %v2846
  %v2849 = vld [vmem:[%s4 + $0x74] sm:$0xf]
  %2851 = vst [vmem:[#allocation1] ss:$4 sm:$0xff] %v2849
  %v2852 = vld.sshfl [vmem:[#allocation1] sm:$0xff pattern:$0x73625140]
  %v2853 = vld.sshfl [vmem:[#allocation1 + $0x8] sm:$0xff pattern:$0x73625140]
  %v2856 = vsel %vm2056, %v2852, 0.0
  %v2857 = vrot.slane %v2856, 4
  %v2858 = vadd.f32 %v2856, %v2857
  %v2859 = vrot.slane %v2858, 2
  %v2860 = vadd.f32 %v2858, %v2859
  %v2861 = vrot.slane %v2860, 1
  %v2862 = vadd.f32 %v2860, %v2861
  %v2863 = vsel %vm2056, %v2853, 0.0
  %v2864 = vrot.slane %v2863, 4
  %v2865 = vadd.f32 %v2863, %v2864
  %v2866 = vrot.slane %v2865, 2
  %v2867 = vadd.f32 %v2865, %v2866
  %v2868 = vrot.slane %v2867, 1
  %v2869 = vadd.f32 %v2867, %v2868
  %v2870 = vadd.f32 %v2847, %v2862
  %v2871 = vadd.f32 %v2848, %v2869
  %v2872 = vld [vmem:[%s4 + $0x78] sm:$0xf]
  %2874 = vst [vmem:[#allocation1] ss:$4 sm:$0xff] %v2872
  %v2875 = vld.sshfl [vmem:[#allocation1] sm:$0xff pattern:$0x73625140]
  %v2876 = vld.sshfl [vmem:[#allocation1 + $0x8] sm:$0xff pattern:$0x73625140]
  %v2879 = vsel %vm2056, %v2875, 0.0
  %v2880 = vrot.slane %v2879, 4
  %v2881 = vadd.f32 %v2879, %v2880
  %v2882 = vrot.slane %v2881, 2
  %v2883 = vadd.f32 %v2881, %v2882
  %v2884 = vrot.slane %v2883, 1
  %v2885 = vadd.f32 %v2883, %v2884
  %v2886 = vsel %vm2056, %v2876, 0.0
  %v2887 = vrot.slane %v2886, 4
  %v2888 = vadd.f32 %v2886, %v2887
  %v2889 = vrot.slane %v2888, 2
  %v2890 = vadd.f32 %v2888, %v2889
  %v2891 = vrot.slane %v2890, 1
  %v2892 = vadd.f32 %v2890, %v2891
  %v2893 = vadd.f32 %v2870, %v2885
  %v2894 = vadd.f32 %v2871, %v2892
  %v2895 = vld [vmem:[%s4 + $0x7c] sm:$0xf]
  %2897 = vst [vmem:[#allocation1] ss:$4 sm:$0xff] %v2895
  %v2898 = vld.sshfl [vmem:[#allocation1] sm:$0xff pattern:$0x73625140]
  %v2899 = vld.sshfl [vmem:[#allocation1 + $0x8] sm:$0xff pattern:$0x73625140]
  %v2902 = vsel %vm2056, %v2898, 0.0
  %v2903 = vrot.slane %v2902, 4
  %v2904 = vadd.f32 %v2902, %v2903
  %v2905 = vrot.slane %v2904, 2
  %v2906 = vadd.f32 %v2904, %v2905
  %v2907 = vrot.slane %v2906, 1
  %v2908 = vadd.f32 %v2906, %v2907
  %v2909 = vsel %vm2056, %v2899, 0.0
  %v2910 = vrot.slane %v2909, 4
  %v2911 = vadd.f32 %v2909, %v2910
  %v2912 = vrot.slane %v2911, 2
  %v2913 = vadd.f32 %v2911, %v2912
  %v2914 = vrot.slane %v2913, 1
  %v2915 = vadd.f32 %v2913, %v2914
  %v2916 = vadd.f32 %v2893, %v2908
  %v2917 = vadd.f32 %v2894, %v2915
  %v2918 = vld [vmem:[%s4 + $0x80] sm:$0xf]
  %2920 = vst [vmem:[#allocation1] ss:$4 sm:$0xff] %v2918
  %v2921 = vld.sshfl [vmem:[#allocation1] sm:$0xff pattern:$0x73625140]
  %v2922 = vld.sshfl [vmem:[#allocation1 + $0x8] sm:$0xff pattern:$0x73625140]
  %v2925 = vsel %vm2056, %v2921, 0.0
  %v2926 = vrot.slane %v2925, 4
  %v2927 = vadd.f32 %v2925, %v2926
  %v2928 = vrot.slane %v2927, 2
  %v2929 = vadd.f32 %v2927, %v2928
  %v2930 = vrot.slane %v2929, 1
  %v2931 = vadd.f32 %v2929, %v2930
  %v2932 = vsel %vm2056, %v2922, 0.0
  %v2933 = vrot.slane %v2932, 4
  %v2934 = vadd.f32 %v2932, %v2933
  %v2935 = vrot.slane %v2934, 2
  %v2936 = vadd.f32 %v2934, %v2935
  %v2937 = vrot.slane %v2936, 1
  %v2938 = vadd.f32 %v2936, %v2937
  %v2939 = vadd.f32 %v2916, %v2931
  %v2940 = vadd.f32 %v2917, %v2938
  %v2941 = vld [vmem:[%s4 + $0x84] sm:$0xf]
  %2943 = vst [vmem:[#allocation1] ss:$4 sm:$0xff] %v2941
  %v2944 = vld.sshfl [vmem:[#allocation1] sm:$0xff pattern:$0x73625140]
  %v2945 = vld.sshfl [vmem:[#allocation1 + $0x8] sm:$0xff pattern:$0x73625140]
  %v2948 = vsel %vm2056, %v2944, 0.0
  %v2949 = vrot.slane %v2948, 4
  %v2950 = vadd.f32 %v2948, %v2949
  %v2951 = vrot.slane %v2950, 2
  %v2952 = vadd.f32 %v2950, %v2951
  %v2953 = vrot.slane %v2952, 1
  %v2954 = vadd.f32 %v2952, %v2953
  %v2955 = vsel %vm2056, %v2945, 0.0
  %v2956 = vrot.slane %v2955, 4
  %v2957 = vadd.f32 %v2955, %v2956
  %v2958 = vrot.slane %v2957, 2
  %v2959 = vadd.f32 %v2957, %v2958
  %v2960 = vrot.slane %v2959, 1
  %v2961 = vadd.f32 %v2959, %v2960
  %v2962 = vadd.f32 %v2939, %v2954
  %v2963 = vadd.f32 %v2940, %v2961
  %v2964 = vld [vmem:[%s4 + $0x88] sm:$0xf]
  %2966 = vst [vmem:[#allocation1] ss:$4 sm:$0xff] %v2964
  %v2967 = vld.sshfl [vmem:[#allocation1] sm:$0xff pattern:$0x73625140]
  %v2968 = vld.sshfl [vmem:[#allocation1 + $0x8] sm:$0xff pattern:$0x73625140]
  %v2971 = vsel %vm2056, %v2967, 0.0
  %v2972 = vrot.slane %v2971, 4
  %v2973 = vadd.f32 %v2971, %v2972
  %v2974 = vrot.slane %v2973, 2
  %v2975 = vadd.f32 %v2973, %v2974
  %v2976 = vrot.slane %v2975, 1
  %v2977 = vadd.f32 %v2975, %v2976
  %v2978 = vsel %vm2056, %v2968, 0.0
  %v2979 = vrot.slane %v2978, 4
  %v2980 = vadd.f32 %v2978, %v2979
  %v2981 = vrot.slane %v2980, 2
  %v2982 = vadd.f32 %v2980, %v2981
  %v2983 = vrot.slane %v2982, 1
  %v2984 = vadd.f32 %v2982, %v2983
  %v2985 = vadd.f32 %v2962, %v2977
  %v2986 = vadd.f32 %v2963, %v2984
  %v2987 = vld [vmem:[%s4 + $0x8c] sm:$0xf]
  %2989 = vst [vmem:[#allocation1] ss:$4 sm:$0xff] %v2987
  %v2990 = vld.sshfl [vmem:[#allocation1] sm:$0xff pattern:$0x73625140]
  %v2991 = vld.sshfl [vmem:[#allocation1 + $0x8] sm:$0xff pattern:$0x73625140]
  %v2994 = vsel %vm2056, %v2990, 0.0
  %v2995 = vrot.slane %v2994, 4
  %v2996 = vadd.f32 %v2994, %v2995
  %v2997 = vrot.slane %v2996, 2
  %v2998 = vadd.f32 %v2996, %v2997
  %v2999 = vrot.slane %v2998, 1
  %v3000 = vadd.f32 %v2998, %v2999
  %v3001 = vsel %vm2056, %v2991, 0.0
  %v3002 = vrot.slane %v3001, 4
  %v3003 = vadd.f32 %v3001, %v3002
  %v3004 = vrot.slane %v3003, 2
  %v3005 = vadd.f32 %v3003, %v3004
  %v3006 = vrot.slane %v3005, 1
  %v3007 = vadd.f32 %v3005, %v3006
  %v3008 = vadd.f32 %v2985, %v3000
  %v3009 = vadd.f32 %v2986, %v3007
  %v3010 = vld [vmem:[%s4 + $0x90] sm:$0xf]
  %3012 = vst [vmem:[#allocation1] ss:$4 sm:$0xff] %v3010
  %v3013 = vld.sshfl [vmem:[#allocation1] sm:$0xff pattern:$0x73625140]
  %v3014 = vld.sshfl [vmem:[#allocation1 + $0x8] sm:$0xff pattern:$0x73625140]
  %v3017 = vsel %vm2056, %v3013, 0.0
  %v3018 = vrot.slane %v3017, 4
  %v3019 = vadd.f32 %v3017, %v3018
  %v3020 = vrot.slane %v3019, 2
  %v3021 = vadd.f32 %v3019, %v3020
  %v3022 = vrot.slane %v3021, 1
  %v3023 = vadd.f32 %v3021, %v3022
  %v3024 = vsel %vm2056, %v3014, 0.0
  %v3025 = vrot.slane %v3024, 4
  %v3026 = vadd.f32 %v3024, %v3025
  %v3027 = vrot.slane %v3026, 2
  %v3028 = vadd.f32 %v3026, %v3027
  %v3029 = vrot.slane %v3028, 1
  %v3030 = vadd.f32 %v3028, %v3029
  %v3031 = vadd.f32 %v3008, %v3023
  %v3032 = vadd.f32 %v3009, %v3030
  %v3033 = vld [vmem:[%s4 + $0x94] sm:$0xf]
  %3035 = vst [vmem:[#allocation1] ss:$4 sm:$0xff] %v3033
  %v3036 = vld.sshfl [vmem:[#allocation1] sm:$0xff pattern:$0x73625140]
  %v3037 = vld.sshfl [vmem:[#allocation1 + $0x8] sm:$0xff pattern:$0x73625140]
  %v3040 = vsel %vm2056, %v3036, 0.0
  %v3041 = vrot.slane %v3040, 4
  %v3042 = vadd.f32 %v3040, %v3041
  %v3043 = vrot.slane %v3042, 2
  %v3044 = vadd.f32 %v3042, %v3043
  %v3045 = vrot.slane %v3044, 1
  %v3046 = vadd.f32 %v3044, %v3045
  %v3047 = vsel %vm2056, %v3037, 0.0
  %v3048 = vrot.slane %v3047, 4
  %v3049 = vadd.f32 %v3047, %v3048
  %v3050 = vrot.slane %v3049, 2
  %v3051 = vadd.f32 %v3049, %v3050
  %v3052 = vrot.slane %v3051, 1
  %v3053 = vadd.f32 %v3051, %v3052
  %v3054 = vadd.f32 %v3031, %v3046
  %v3055 = vadd.f32 %v3032, %v3053
  %v3056 = vld [vmem:[%s4 + $0x98] sm:$0xf]
  %3058 = vst [vmem:[#allocation1] ss:$4 sm:$0xff] %v3056
  %v3059 = vld.sshfl [vmem:[#allocation1] sm:$0xff pattern:$0x73625140]
  %v3060 = vld.sshfl [vmem:[#allocation1 + $0x8] sm:$0xff pattern:$0x73625140]
  %v3063 = vsel %vm2056, %v3059, 0.0
  %v3064 = vrot.slane %v3063, 4
  %v3065 = vadd.f32 %v3063, %v3064
  %v3066 = vrot.slane %v3065, 2
  %v3067 = vadd.f32 %v3065, %v3066
  %v3068 = vrot.slane %v3067, 1
  %v3069 = vadd.f32 %v3067, %v3068
  %v3070 = vsel %vm2056, %v3060, 0.0
  %v3071 = vrot.slane %v3070, 4
  %v3072 = vadd.f32 %v3070, %v3071
  %v3073 = vrot.slane %v3072, 2
  %v3074 = vadd.f32 %v3072, %v3073
  %v3075 = vrot.slane %v3074, 1
  %v3076 = vadd.f32 %v3074, %v3075
  %v3077 = vadd.f32 %v3054, %v3069
  %v3078 = vadd.f32 %v3055, %v3076
  %v3079 = vld [vmem:[%s4 + $0x9c] sm:$0xf]
  %3081 = vst [vmem:[#allocation1] ss:$4 sm:$0xff] %v3079
  %v3082 = vld.sshfl [vmem:[#allocation1] sm:$0xff pattern:$0x73625140]
  %v3083 = vld.sshfl [vmem:[#allocation1 + $0x8] sm:$0xff pattern:$0x73625140]
  %v3086 = vsel %vm2056, %v3082, 0.0
  %v3087 = vrot.slane %v3086, 4
  %v3088 = vadd.f32 %v3086, %v3087
  %v3089 = vrot.slane %v3088, 2
  %v3090 = vadd.f32 %v3088, %v3089
  %v3091 = vrot.slane %v3090, 1
  %v3092 = vadd.f32 %v3090, %v3091
  %v3093 = vsel %vm2056, %v3083, 0.0
  %v3094 = vrot.slane %v3093, 4
  %v3095 = vadd.f32 %v3093, %v3094
  %v3096 = vrot.slane %v3095, 2
  %v3097 = vadd.f32 %v3095, %v3096
  %v3098 = vrot.slane %v3097, 1
  %v3099 = vadd.f32 %v3097, %v3098
  %v3100 = vadd.f32 %v3077, %v3092
  %v3101 = vadd.f32 %v3078, %v3099
  %v3102 = vld [vmem:[%s4 + $0xa0] sm:$0xf]
  %3104 = vst [vmem:[#allocation1] ss:$4 sm:$0xff] %v3102
  %v3105 = vld.sshfl [vmem:[#allocation1] sm:$0xff pattern:$0x73625140]
  %v3106 = vld.sshfl [vmem:[#allocation1 + $0x8] sm:$0xff pattern:$0x73625140]
  %v3109 = vsel %vm2056, %v3105, 0.0
  %v3110 = vrot.slane %v3109, 4
  %v3111 = vadd.f32 %v3109, %v3110
  %v3112 = vrot.slane %v3111, 2
  %v3113 = vadd.f32 %v3111, %v3112
  %v3114 = vrot.slane %v3113, 1
  %v3115 = vadd.f32 %v3113, %v3114
  %v3116 = vsel %vm2056, %v3106, 0.0
  %v3117 = vrot.slane %v3116, 4
  %v3118 = vadd.f32 %v3116, %v3117
  %v3119 = vrot.slane %v3118, 2
  %v3120 = vadd.f32 %v3118, %v3119
  %v3121 = vrot.slane %v3120, 1
  %v3122 = vadd.f32 %v3120, %v3121
  %v3123 = vadd.f32 %v3100, %v3115
  %v3124 = vadd.f32 %v3101, %v3122
  %v3125 = vld [vmem:[%s4 + $0xa4] sm:$0xf]
  %3127 = vst [vmem:[#allocation1] ss:$4 sm:$0xff] %v3125
  %v3128 = vld.sshfl [vmem:[#allocation1] sm:$0xff pattern:$0x73625140]
  %v3129 = vld.sshfl [vmem:[#allocation1 + $0x8] sm:$0xff pattern:$0x73625140]
  %v3132 = vsel %vm2056, %v3128, 0.0
  %v3133 = vrot.slane %v3132, 4
  %v3134 = vadd.f32 %v3132, %v3133
  %v3135 = vrot.slane %v3134, 2
  %v3136 = vadd.f32 %v3134, %v3135
  %v3137 = vrot.slane %v3136, 1
  %v3138 = vadd.f32 %v3136, %v3137
  %v3139 = vsel %vm2056, %v3129, 0.0
  %v3140 = vrot.slane %v3139, 4
  %v3141 = vadd.f32 %v3139, %v3140
  %v3142 = vrot.slane %v3141, 2
  %v3143 = vadd.f32 %v3141, %v3142
  %v3144 = vrot.slane %v3143, 1
  %v3145 = vadd.f32 %v3143, %v3144
  %v3146 = vadd.f32 %v3123, %v3138
  %v3147 = vadd.f32 %v3124, %v3145
  %v3148 = vld [vmem:[%s4 + $0xa8] sm:$0xf]
  %3150 = vst [vmem:[#allocation1] ss:$4 sm:$0xff] %v3148
  %v3151 = vld.sshfl [vmem:[#allocation1] sm:$0xff pattern:$0x73625140]
  %v3152 = vld.sshfl [vmem:[#allocation1 + $0x8] sm:$0xff pattern:$0x73625140]
  %v3155 = vsel %vm2056, %v3151, 0.0
  %v3156 = vrot.slane %v3155, 4
  %v3157 = vadd.f32 %v3155, %v3156
  %v3158 = vrot.slane %v3157, 2
  %v3159 = vadd.f32 %v3157, %v3158
  %v3160 = vrot.slane %v3159, 1
  %v3161 = vadd.f32 %v3159, %v3160
  %v3162 = vsel %vm2056, %v3152, 0.0
  %v3163 = vrot.slane %v3162, 4
  %v3164 = vadd.f32 %v3162, %v3163
  %v3165 = vrot.slane %v3164, 2
  %v3166 = vadd.f32 %v3164, %v3165
  %v3167 = vrot.slane %v3166, 1
  %v3168 = vadd.f32 %v3166, %v3167
  %v3169 = vadd.f32 %v3146, %v3161
  %v3170 = vadd.f32 %v3147, %v3168
  %v3171 = vld [vmem:[%s4 + $0xac] sm:$0xf]
  %3173 = vst [vmem:[#allocation1] ss:$4 sm:$0xff] %v3171
  %v3174 = vld.sshfl [vmem:[#allocation1] sm:$0xff pattern:$0x73625140]
  %v3175 = vld.sshfl [vmem:[#allocation1 + $0x8] sm:$0xff pattern:$0x73625140]
  %v3178 = vsel %vm2056, %v3174, 0.0
  %v3179 = vrot.slane %v3178, 4
  %v3180 = vadd.f32 %v3178, %v3179
  %v3181 = vrot.slane %v3180, 2
  %v3182 = vadd.f32 %v3180, %v3181
  %v3183 = vrot.slane %v3182, 1
  %v3184 = vadd.f32 %v3182, %v3183
  %v3185 = vsel %vm2056, %v3175, 0.0
  %v3186 = vrot.slane %v3185, 4
  %v3187 = vadd.f32 %v3185, %v3186
  %v3188 = vrot.slane %v3187, 2
  %v3189 = vadd.f32 %v3187, %v3188
  %v3190 = vrot.slane %v3189, 1
  %v3191 = vadd.f32 %v3189, %v3190
  %v3192 = vadd.f32 %v3169, %v3184
  %v3193 = vadd.f32 %v3170, %v3191
  %v3194 = vld [vmem:[%s4 + $0xb0] sm:$0xf]
  %3196 = vst [vmem:[#allocation1] ss:$4 sm:$0xff] %v3194
  %v3197 = vld.sshfl [vmem:[#allocation1] sm:$0xff pattern:$0x73625140]
  %v3198 = vld.sshfl [vmem:[#allocation1 + $0x8] sm:$0xff pattern:$0x73625140]
  %v3201 = vsel %vm2056, %v3197, 0.0
  %v3202 = vrot.slane %v3201, 4
  %v3203 = vadd.f32 %v3201, %v3202
  %v3204 = vrot.slane %v3203, 2
  %v3205 = vadd.f32 %v3203, %v3204
  %v3206 = vrot.slane %v3205, 1
  %v3207 = vadd.f32 %v3205, %v3206
  %v3208 = vsel %vm2056, %v3198, 0.0
  %v3209 = vrot.slane %v3208, 4
  %v3210 = vadd.f32 %v3208, %v3209
  %v3211 = vrot.slane %v3210, 2
  %v3212 = vadd.f32 %v3210, %v3211
  %v3213 = vrot.slane %v3212, 1
  %v3214 = vadd.f32 %v3212, %v3213
  %v3215 = vadd.f32 %v3192, %v3207
  %v3216 = vadd.f32 %v3193, %v3214
  %v3217 = vld [vmem:[%s4 + $0xb4] sm:$0xf]
  %3219 = vst [vmem:[#allocation1] ss:$4 sm:$0xff] %v3217
  %v3220 = vld.sshfl [vmem:[#allocation1] sm:$0xff pattern:$0x73625140]
  %v3221 = vld.sshfl [vmem:[#allocation1 + $0x8] sm:$0xff pattern:$0x73625140]
  %v3224 = vsel %vm2056, %v3220, 0.0
  %v3225 = vrot.slane %v3224, 4
  %v3226 = vadd.f32 %v3224, %v3225
  %v3227 = vrot.slane %v3226, 2
  %v3228 = vadd.f32 %v3226, %v3227
  %v3229 = vrot.slane %v3228, 1
  %v3230 = vadd.f32 %v3228, %v3229
  %v3231 = vsel %vm2056, %v3221, 0.0
  %v3232 = vrot.slane %v3231, 4
  %v3233 = vadd.f32 %v3231, %v3232
  %v3234 = vrot.slane %v3233, 2
  %v3235 = vadd.f32 %v3233, %v3234
  %v3236 = vrot.slane %v3235, 1
  %v3237 = vadd.f32 %v3235, %v3236
  %v3238 = vadd.f32 %v3215, %v3230
  %v3239 = vadd.f32 %v3216, %v3237
  %v3240 = vld [vmem:[%s4 + $0xb8] sm:$0xf]
  %3242 = vst [vmem:[#allocation1] ss:$4 sm:$0xff] %v3240
  %v3243 = vld.sshfl [vmem:[#allocation1] sm:$0xff pattern:$0x73625140]
  %v3244 = vld.sshfl [vmem:[#allocation1 + $0x8] sm:$0xff pattern:$0x73625140]
  %v3247 = vsel %vm2056, %v3243, 0.0
  %v3248 = vrot.slane %v3247, 4
  %v3249 = vadd.f32 %v3247, %v3248
  %v3250 = vrot.slane %v3249, 2
  %v3251 = vadd.f32 %v3249, %v3250
  %v3252 = vrot.slane %v3251, 1
  %v3253 = vadd.f32 %v3251, %v3252
  %v3254 = vsel %vm2056, %v3244, 0.0
  %v3255 = vrot.slane %v3254, 4
  %v3256 = vadd.f32 %v3254, %v3255
  %v3257 = vrot.slane %v3256, 2
  %v3258 = vadd.f32 %v3256, %v3257
  %v3259 = vrot.slane %v3258, 1
  %v3260 = vadd.f32 %v3258, %v3259
  %v3261 = vadd.f32 %v3238, %v3253
  %v3262 = vadd.f32 %v3239, %v3260
  %v3263 = vld [vmem:[%s4 + $0xbc] sm:$0xf]
  %3265 = vst [vmem:[#allocation1] ss:$4 sm:$0xff] %v3263
  %v3266 = vld.sshfl [vmem:[#allocation1] sm:$0xff pattern:$0x73625140]
  %v3267 = vld.sshfl [vmem:[#allocation1 + $0x8] sm:$0xff pattern:$0x73625140]
  %v3270 = vsel %vm2056, %v3266, 0.0
  %v3271 = vrot.slane %v3270, 4
  %v3272 = vadd.f32 %v3270, %v3271
  %v3273 = vrot.slane %v3272, 2
  %v3274 = vadd.f32 %v3272, %v3273
  %v3275 = vrot.slane %v3274, 1
  %v3276 = vadd.f32 %v3274, %v3275
  %v3277 = vsel %vm2056, %v3267, 0.0
  %v3278 = vrot.slane %v3277, 4
  %v3279 = vadd.f32 %v3277, %v3278
  %v3280 = vrot.slane %v3279, 2
  %v3281 = vadd.f32 %v3279, %v3280
  %v3282 = vrot.slane %v3281, 1
  %v3283 = vadd.f32 %v3281, %v3282
  %v3284 = vadd.f32 %v3261, %v3276
  %v3285 = vadd.f32 %v3262, %v3283
  %v3286 = vld [vmem:[%s4 + $0xc0] sm:$0xf]
  %3288 = vst [vmem:[#allocation1] ss:$4 sm:$0xff] %v3286
  %v3289 = vld.sshfl [vmem:[#allocation1] sm:$0xff pattern:$0x73625140]
  %v3290 = vld.sshfl [vmem:[#allocation1 + $0x8] sm:$0xff pattern:$0x73625140]
  %v3293 = vsel %vm2056, %v3289, 0.0
  %v3294 = vrot.slane %v3293, 4
  %v3295 = vadd.f32 %v3293, %v3294
  %v3296 = vrot.slane %v3295, 2
  %v3297 = vadd.f32 %v3295, %v3296
  %v3298 = vrot.slane %v3297, 1
  %v3299 = vadd.f32 %v3297, %v3298
  %v3300 = vsel %vm2056, %v3290, 0.0
  %v3301 = vrot.slane %v3300, 4
  %v3302 = vadd.f32 %v3300, %v3301
  %v3303 = vrot.slane %v3302, 2
  %v3304 = vadd.f32 %v3302, %v3303
  %v3305 = vrot.slane %v3304, 1
  %v3306 = vadd.f32 %v3304, %v3305
  %v3307 = vadd.f32 %v3284, %v3299
  %v3308 = vadd.f32 %v3285, %v3306
  %v3309 = vrcp.pop 98.0
  %v3310 = vmul.f32 98.0, %v3309
  %v3311 = vsub.f32 1.0, %v3310
  %v3312 = vmul.f32 %v3309, %v3311
  %v3313 = vadd.f32 %v3309, %v3312
  %vm3314 = vweird.f32 %v3309
  %v3315 = vsel %vm3314, %v3309, %v3313
  %v3316 = vmul.f32 %v3307, %v3315
  %v3317 = vmul.f32 %v3308, %v3315
  %v3320 = vrot.slane %v3317, 6
  %v3321 = vsel %vm2056, %v3316, %v3320
  %v3323 = vsub.f32 %v2182, %v3321
  %v3324 = vmul.f32 %v3323, %v3323
  %3326 = vst [vmem:[#allocation1] ss:$4 sm:$0xff] %v3324
  %v3327 = vld.sshfl [vmem:[#allocation1] sm:$0xff pattern:$0x73625140]
  %v3328 = vld.sshfl [vmem:[#allocation1 + $0x8] sm:$0xff pattern:$0x73625140]
  %v3331 = vsel %vm2056, %v3327, 0.0
  %v3332 = vrot.slane %v3331, 4
  %v3333 = vadd.f32 %v3331, %v3332
  %v3334 = vrot.slane %v3333, 2
  %v3335 = vadd.f32 %v3333, %v3334
  %v3336 = vrot.slane %v3335, 1
  %v3337 = vadd.f32 %v3335, %v3336
  %v3338 = vsel %vm2056, %v3328, 0.0
  %v3339 = vrot.slane %v3338, 4
  %v3340 = vadd.f32 %v3338, %v3339
  %v3341 = vrot.slane %v3340, 2
  %v3342 = vadd.f32 %v3340, %v3341
  %v3343 = vrot.slane %v3342, 1
  %v3344 = vadd.f32 %v3342, %v3343
  %v3345 = vadd.f32 %v3337, 0.0
  %v3346 = vadd.f32 %v3344, 0.0
  %v3347 = vsub.f32 %v2205, %v3321
  %v3348 = vmul.f32 %v3347, %v3347
  %3350 = vst [vmem:[#allocation1] ss:$4 sm:$0xff] %v3348
  %v3351 = vld.sshfl [vmem:[#allocation1] sm:$0xff pattern:$0x73625140]
  %v3352 = vld.sshfl [vmem:[#allocation1 + $0x8] sm:$0xff pattern:$0x73625140]
  %v3355 = vsel %vm2056, %v3351, 0.0
  %v3356 = vrot.slane %v3355, 4
  %v3357 = vadd.f32 %v3355, %v3356
  %v3358 = vrot.slane %v3357, 2
  %v3359 = vadd.f32 %v3357, %v3358
  %v3360 = vrot.slane %v3359, 1
  %v3361 = vadd.f32 %v3359, %v3360
  %v3362 = vsel %vm2056, %v3352, 0.0
  %v3363 = vrot.slane %v3362, 4
  %v3364 = vadd.f32 %v3362, %v3363
  %v3365 = vrot.slane %v3364, 2
  %v3366 = vadd.f32 %v3364, %v3365
  %v3367 = vrot.slane %v3366, 1
  %v3368 = vadd.f32 %v3366, %v3367
  %v3369 = vadd.f32 %v3345, %v3361
  %v3370 = vadd.f32 %v3346, %v3368
  %v3371 = vsub.f32 %v2228, %v3321
  %v3372 = vmul.f32 %v3371, %v3371
  %3374 = vst [vmem:[#allocation1] ss:$4 sm:$0xff] %v3372
  %v3375 = vld.sshfl [vmem:[#allocation1] sm:$0xff pattern:$0x73625140]
  %v3376 = vld.sshfl [vmem:[#allocation1 + $0x8] sm:$0xff pattern:$0x73625140]
  %v3379 = vsel %vm2056, %v3375, 0.0
  %v3380 = vrot.slane %v3379, 4
  %v3381 = vadd.f32 %v3379, %v3380
  %v3382 = vrot.slane %v3381, 2
  %v3383 = vadd.f32 %v3381, %v3382
  %v3384 = vrot.slane %v3383, 1
  %v3385 = vadd.f32 %v3383, %v3384
  %v3386 = vsel %vm2056, %v3376, 0.0
  %v3387 = vrot.slane %v3386, 4
  %v3388 = vadd.f32 %v3386, %v3387
  %v3389 = vrot.slane %v3388, 2
  %v3390 = vadd.f32 %v3388, %v3389
  %v3391 = vrot.slane %v3390, 1
  %v3392 = vadd.f32 %v3390, %v3391
  %v3393 = vadd.f32 %v3369, %v3385
  %v3394 = vadd.f32 %v3370, %v3392
  %v3395 = vsub.f32 %v2251, %v3321
  %v3396 = vmul.f32 %v3395, %v3395
  %3398 = vst [vmem:[#allocation1] ss:$4 sm:$0xff] %v3396
  %v3399 = vld.sshfl [vmem:[#allocation1] sm:$0xff pattern:$0x73625140]
  %v3400 = vld.sshfl [vmem:[#allocation1 + $0x8] sm:$0xff pattern:$0x73625140]
  %v3403 = vsel %vm2056, %v3399, 0.0
  %v3404 = vrot.slane %v3403, 4
  %v3405 = vadd.f32 %v3403, %v3404
  %v3406 = vrot.slane %v3405, 2
  %v3407 = vadd.f32 %v3405, %v3406
  %v3408 = vrot.slane %v3407, 1
  %v3409 = vadd.f32 %v3407, %v3408
  %v3410 = vsel %vm2056, %v3400, 0.0
  %v3411 = vrot.slane %v3410, 4
  %v3412 = vadd.f32 %v3410, %v3411
  %v3413 = vrot.slane %v3412, 2
  %v3414 = vadd.f32 %v3412, %v3413
  %v3415 = vrot.slane %v3414, 1
  %v3416 = vadd.f32 %v3414, %v3415
  %v3417 = vadd.f32 %v3393, %v3409
  %v3418 = vadd.f32 %v3394, %v3416
  %v3419 = vsub.f32 %v2274, %v3321
  %v3420 = vmul.f32 %v3419, %v3419
  %3422 = vst [vmem:[#allocation1] ss:$4 sm:$0xff] %v3420
  %v3423 = vld.sshfl [vmem:[#allocation1] sm:$0xff pattern:$0x73625140]
  %v3424 = vld.sshfl [vmem:[#allocation1 + $0x8] sm:$0xff pattern:$0x73625140]
  %v3427 = vsel %vm2056, %v3423, 0.0
  %v3428 = vrot.slane %v3427, 4
  %v3429 = vadd.f32 %v3427, %v3428
  %v3430 = vrot.slane %v3429, 2
  %v3431 = vadd.f32 %v3429, %v3430
  %v3432 = vrot.slane %v3431, 1
  %v3433 = vadd.f32 %v3431, %v3432
  %v3434 = vsel %vm2056, %v3424, 0.0
  %v3435 = vrot.slane %v3434, 4
  %v3436 = vadd.f32 %v3434, %v3435
  %v3437 = vrot.slane %v3436, 2
  %v3438 = vadd.f32 %v3436, %v3437
  %v3439 = vrot.slane %v3438, 1
  %v3440 = vadd.f32 %v3438, %v3439
  %v3441 = vadd.f32 %v3417, %v3433
  %v3442 = vadd.f32 %v3418, %v3440
  %v3443 = vsub.f32 %v2297, %v3321
  %v3444 = vmul.f32 %v3443, %v3443
  %3446 = vst [vmem:[#allocation1] ss:$4 sm:$0xff] %v3444
  %v3447 = vld.sshfl [vmem:[#allocation1] sm:$0xff pattern:$0x73625140]
  %v3448 = vld.sshfl [vmem:[#allocation1 + $0x8] sm:$0xff pattern:$0x73625140]
  %v3451 = vsel %vm2056, %v3447, 0.0
  %v3452 = vrot.slane %v3451, 4
  %v3453 = vadd.f32 %v3451, %v3452
  %v3454 = vrot.slane %v3453, 2
  %v3455 = vadd.f32 %v3453, %v3454
  %v3456 = vrot.slane %v3455, 1
  %v3457 = vadd.f32 %v3455, %v3456
  %v3458 = vsel %vm2056, %v3448, 0.0
  %v3459 = vrot.slane %v3458, 4
  %v3460 = vadd.f32 %v3458, %v3459
  %v3461 = vrot.slane %v3460, 2
  %v3462 = vadd.f32 %v3460, %v3461
  %v3463 = vrot.slane %v3462, 1
  %v3464 = vadd.f32 %v3462, %v3463
  %v3465 = vadd.f32 %v3441, %v3457
  %v3466 = vadd.f32 %v3442, %v3464
  %v3467 = vsub.f32 %v2320, %v3321
  %v3468 = vmul.f32 %v3467, %v3467
  %3470 = vst [vmem:[#allocation1] ss:$4 sm:$0xff] %v3468
  %v3471 = vld.sshfl [vmem:[#allocation1] sm:$0xff pattern:$0x73625140]
  %v3472 = vld.sshfl [vmem:[#allocation1 + $0x8] sm:$0xff pattern:$0x73625140]
  %v3475 = vsel %vm2056, %v3471, 0.0
  %v3476 = vrot.slane %v3475, 4
  %v3477 = vadd.f32 %v3475, %v3476
  %v3478 = vrot.slane %v3477, 2
  %v3479 = vadd.f32 %v3477, %v3478
  %v3480 = vrot.slane %v3479, 1
  %v3481 = vadd.f32 %v3479, %v3480
  %v3482 = vsel %vm2056, %v3472, 0.0
  %v3483 = vrot.slane %v3482, 4
  %v3484 = vadd.f32 %v3482, %v3483
  %v3485 = vrot.slane %v3484, 2
  %v3486 = vadd.f32 %v3484, %v3485
  %v3487 = vrot.slane %v3486, 1
  %v3488 = vadd.f32 %v3486, %v3487
  %v3489 = vadd.f32 %v3465, %v3481
  %v3490 = vadd.f32 %v3466, %v3488
  %v3491 = vsub.f32 %v2343, %v3321
  %v3492 = vmul.f32 %v3491, %v3491
  %3494 = vst [vmem:[#allocation1] ss:$4 sm:$0xff] %v3492
  %v3495 = vld.sshfl [vmem:[#allocation1] sm:$0xff pattern:$0x73625140]
  %v3496 = vld.sshfl [vmem:[#allocation1 + $0x8] sm:$0xff pattern:$0x73625140]
  %v3499 = vsel %vm2056, %v3495, 0.0
  %v3500 = vrot.slane %v3499, 4
  %v3501 = vadd.f32 %v3499, %v3500
  %v3502 = vrot.slane %v3501, 2
  %v3503 = vadd.f32 %v3501, %v3502
  %v3504 = vrot.slane %v3503, 1
  %v3505 = vadd.f32 %v3503, %v3504
  %v3506 = vsel %vm2056, %v3496, 0.0
  %v3507 = vrot.slane %v3506, 4
  %v3508 = vadd.f32 %v3506, %v3507
  %v3509 = vrot.slane %v3508, 2
  %v3510 = vadd.f32 %v3508, %v3509
  %v3511 = vrot.slane %v3510, 1
  %v3512 = vadd.f32 %v3510, %v3511
  %v3513 = vadd.f32 %v3489, %v3505
  %v3514 = vadd.f32 %v3490, %v3512
  %v3515 = vsub.f32 %v2366, %v3321
  %v3516 = vmul.f32 %v3515, %v3515
  %3518 = vst [vmem:[#allocation1] ss:$4 sm:$0xff] %v3516
  %v3519 = vld.sshfl [vmem:[#allocation1] sm:$0xff pattern:$0x73625140]
  %v3520 = vld.sshfl [vmem:[#allocation1 + $0x8] sm:$0xff pattern:$0x73625140]
  %v3523 = vsel %vm2056, %v3519, 0.0
  %v3524 = vrot.slane %v3523, 4
  %v3525 = vadd.f32 %v3523, %v3524
  %v3526 = vrot.slane %v3525, 2
  %v3527 = vadd.f32 %v3525, %v3526
  %v3528 = vrot.slane %v3527, 1
  %v3529 = vadd.f32 %v3527, %v3528
  %v3530 = vsel %vm2056, %v3520, 0.0
  %v3531 = vrot.slane %v3530, 4
  %v3532 = vadd.f32 %v3530, %v3531
  %v3533 = vrot.slane %v3532, 2
  %v3534 = vadd.f32 %v3532, %v3533
  %v3535 = vrot.slane %v3534, 1
  %v3536 = vadd.f32 %v3534, %v3535
  %v3537 = vadd.f32 %v3513, %v3529
  %v3538 = vadd.f32 %v3514, %v3536
  %v3539 = vsub.f32 %v2389, %v3321
  %v3540 = vmul.f32 %v3539, %v3539
  %3542 = vst [vmem:[#allocation1] ss:$4 sm:$0xff] %v3540
  %v3543 = vld.sshfl [vmem:[#allocation1] sm:$0xff pattern:$0x73625140]
  %v3544 = vld.sshfl [vmem:[#allocation1 + $0x8] sm:$0xff pattern:$0x73625140]
  %v3547 = vsel %vm2056, %v3543, 0.0
  %v3548 = vrot.slane %v3547, 4
  %v3549 = vadd.f32 %v3547, %v3548
  %v3550 = vrot.slane %v3549, 2
  %v3551 = vadd.f32 %v3549, %v3550
  %v3552 = vrot.slane %v3551, 1
  %v3553 = vadd.f32 %v3551, %v3552
  %v3554 = vsel %vm2056, %v3544, 0.0
  %v3555 = vrot.slane %v3554, 4
  %v3556 = vadd.f32 %v3554, %v3555
  %v3557 = vrot.slane %v3556, 2
  %v3558 = vadd.f32 %v3556, %v3557
  %v3559 = vrot.slane %v3558, 1
  %v3560 = vadd.f32 %v3558, %v3559
  %v3561 = vadd.f32 %v3537, %v3553
  %v3562 = vadd.f32 %v3538, %v3560
  %v3563 = vsub.f32 %v2412, %v3321
  %v3564 = vmul.f32 %v3563, %v3563
  %3566 = vst [vmem:[#allocation1] ss:$4 sm:$0xff] %v3564
  %v3567 = vld.sshfl [vmem:[#allocation1] sm:$0xff pattern:$0x73625140]
  %v3568 = vld.sshfl [vmem:[#allocation1 + $0x8] sm:$0xff pattern:$0x73625140]
  %v3571 = vsel %vm2056, %v3567, 0.0
  %v3572 = vrot.slane %v3571, 4
  %v3573 = vadd.f32 %v3571, %v3572
  %v3574 = vrot.slane %v3573, 2
  %v3575 = vadd.f32 %v3573, %v3574
  %v3576 = vrot.slane %v3575, 1
  %v3577 = vadd.f32 %v3575, %v3576
  %v3578 = vsel %vm2056, %v3568, 0.0
  %v3579 = vrot.slane %v3578, 4
  %v3580 = vadd.f32 %v3578, %v3579
  %v3581 = vrot.slane %v3580, 2
  %v3582 = vadd.f32 %v3580, %v3581
  %v3583 = vrot.slane %v3582, 1
  %v3584 = vadd.f32 %v3582, %v3583
  %v3585 = vadd.f32 %v3561, %v3577
  %v3586 = vadd.f32 %v3562, %v3584
  %v3587 = vsub.f32 %v2435, %v3321
  %v3588 = vmul.f32 %v3587, %v3587
  %3590 = vst [vmem:[#allocation1] ss:$4 sm:$0xff] %v3588
  %v3591 = vld.sshfl [vmem:[#allocation1] sm:$0xff pattern:$0x73625140]
  %v3592 = vld.sshfl [vmem:[#allocation1 + $0x8] sm:$0xff pattern:$0x73625140]
  %v3595 = vsel %vm2056, %v3591, 0.0
  %v3596 = vrot.slane %v3595, 4
  %v3597 = vadd.f32 %v3595, %v3596
  %v3598 = vrot.slane %v3597, 2
  %v3599 = vadd.f32 %v3597, %v3598
  %v3600 = vrot.slane %v3599, 1
  %v3601 = vadd.f32 %v3599, %v3600
  %v3602 = vsel %vm2056, %v3592, 0.0
  %v3603 = vrot.slane %v3602, 4
  %v3604 = vadd.f32 %v3602, %v3603
  %v3605 = vrot.slane %v3604, 2
  %v3606 = vadd.f32 %v3604, %v3605
  %v3607 = vrot.slane %v3606, 1
  %v3608 = vadd.f32 %v3606, %v3607
  %v3609 = vadd.f32 %v3585, %v3601
  %v3610 = vadd.f32 %v3586, %v3608
  %v3611 = vsub.f32 %v2458, %v3321
  %v3612 = vmul.f32 %v3611, %v3611
  %3614 = vst [vmem:[#allocation1] ss:$4 sm:$0xff] %v3612
  %v3615 = vld.sshfl [vmem:[#allocation1] sm:$0xff pattern:$0x73625140]
  %v3616 = vld.sshfl [vmem:[#allocation1 + $0x8] sm:$0xff pattern:$0x73625140]
  %v3619 = vsel %vm2056, %v3615, 0.0
  %v3620 = vrot.slane %v3619, 4
  %v3621 = vadd.f32 %v3619, %v3620
  %v3622 = vrot.slane %v3621, 2
  %v3623 = vadd.f32 %v3621, %v3622
  %v3624 = vrot.slane %v3623, 1
  %v3625 = vadd.f32 %v3623, %v3624
  %v3626 = vsel %vm2056, %v3616, 0.0
  %v3627 = vrot.slane %v3626, 4
  %v3628 = vadd.f32 %v3626, %v3627
  %v3629 = vrot.slane %v3628, 2
  %v3630 = vadd.f32 %v3628, %v3629
  %v3631 = vrot.slane %v3630, 1
  %v3632 = vadd.f32 %v3630, %v3631
  %v3633 = vadd.f32 %v3609, %v3625
  %v3634 = vadd.f32 %v3610, %v3632
  %v3635 = vsub.f32 %v2481, %v3321
  %v3636 = vmul.f32 %v3635, %v3635
  %3638 = vst [vmem:[#allocation1] ss:$4 sm:$0xff] %v3636
  %v3639 = vld.sshfl [vmem:[#allocation1] sm:$0xff pattern:$0x73625140]
  %v3640 = vld.sshfl [vmem:[#allocation1 + $0x8] sm:$0xff pattern:$0x73625140]
  %v3643 = vsel %vm2056, %v3639, 0.0
  %v3644 = vrot.slane %v3643, 4
  %v3645 = vadd.f32 %v3643, %v3644
  %v3646 = vrot.slane %v3645, 2
  %v3647 = vadd.f32 %v3645, %v3646
  %v3648 = vrot.slane %v3647, 1
  %v3649 = vadd.f32 %v3647, %v3648
  %v3650 = vsel %vm2056, %v3640, 0.0
  %v3651 = vrot.slane %v3650, 4
  %v3652 = vadd.f32 %v3650, %v3651
  %v3653 = vrot.slane %v3652, 2
  %v3654 = vadd.f32 %v3652, %v3653
  %v3655 = vrot.slane %v3654, 1
  %v3656 = vadd.f32 %v3654, %v3655
  %v3657 = vadd.f32 %v3633, %v3649
  %v3658 = vadd.f32 %v3634, %v3656
  %v3659 = vsub.f32 %v2504, %v3321
  %v3660 = vmul.f32 %v3659, %v3659
  %3662 = vst [vmem:[#allocation1] ss:$4 sm:$0xff] %v3660
  %v3663 = vld.sshfl [vmem:[#allocation1] sm:$0xff pattern:$0x73625140]
  %v3664 = vld.sshfl [vmem:[#allocation1 + $0x8] sm:$0xff pattern:$0x73625140]
  %v3667 = vsel %vm2056, %v3663, 0.0
  %v3668 = vrot.slane %v3667, 4
  %v3669 = vadd.f32 %v3667, %v3668
  %v3670 = vrot.slane %v3669, 2
  %v3671 = vadd.f32 %v3669, %v3670
  %v3672 = vrot.slane %v3671, 1
  %v3673 = vadd.f32 %v3671, %v3672
  %v3674 = vsel %vm2056, %v3664, 0.0
  %v3675 = vrot.slane %v3674, 4
  %v3676 = vadd.f32 %v3674, %v3675
  %v3677 = vrot.slane %v3676, 2
  %v3678 = vadd.f32 %v3676, %v3677
  %v3679 = vrot.slane %v3678, 1
  %v3680 = vadd.f32 %v3678, %v3679
  %v3681 = vadd.f32 %v3657, %v3673
  %v3682 = vadd.f32 %v3658, %v3680
  %v3683 = vsub.f32 %v2527, %v3321
  %v3684 = vmul.f32 %v3683, %v3683
  %3686 = vst [vmem:[#allocation1] ss:$4 sm:$0xff] %v3684
  %v3687 = vld.sshfl [vmem:[#allocation1] sm:$0xff pattern:$0x73625140]
  %v3688 = vld.sshfl [vmem:[#allocation1 + $0x8] sm:$0xff pattern:$0x73625140]
  %v3691 = vsel %vm2056, %v3687, 0.0
  %v3692 = vrot.slane %v3691, 4
  %v3693 = vadd.f32 %v3691, %v3692
  %v3694 = vrot.slane %v3693, 2
  %v3695 = vadd.f32 %v3693, %v3694
  %v3696 = vrot.slane %v3695, 1
  %v3697 = vadd.f32 %v3695, %v3696
  %v3698 = vsel %vm2056, %v3688, 0.0
  %v3699 = vrot.slane %v3698, 4
  %v3700 = vadd.f32 %v3698, %v3699
  %v3701 = vrot.slane %v3700, 2
  %v3702 = vadd.f32 %v3700, %v3701
  %v3703 = vrot.slane %v3702, 1
  %v3704 = vadd.f32 %v3702, %v3703
  %v3705 = vadd.f32 %v3681, %v3697
  %v3706 = vadd.f32 %v3682, %v3704
  %v3707 = vsub.f32 %v2550, %v3321
  %v3708 = vmul.f32 %v3707, %v3707
  %3710 = vst [vmem:[#allocation1] ss:$4 sm:$0xff] %v3708
  %v3711 = vld.sshfl [vmem:[#allocation1] sm:$0xff pattern:$0x73625140]
  %v3712 = vld.sshfl [vmem:[#allocation1 + $0x8] sm:$0xff pattern:$0x73625140]
  %v3715 = vsel %vm2056, %v3711, 0.0
  %v3716 = vrot.slane %v3715, 4
  %v3717 = vadd.f32 %v3715, %v3716
  %v3718 = vrot.slane %v3717, 2
  %v3719 = vadd.f32 %v3717, %v3718
  %v3720 = vrot.slane %v3719, 1
  %v3721 = vadd.f32 %v3719, %v3720
  %v3722 = vsel %vm2056, %v3712, 0.0
  %v3723 = vrot.slane %v3722, 4
  %v3724 = vadd.f32 %v3722, %v3723
  %v3725 = vrot.slane %v3724, 2
  %v3726 = vadd.f32 %v3724, %v3725
  %v3727 = vrot.slane %v3726, 1
  %v3728 = vadd.f32 %v3726, %v3727
  %v3729 = vadd.f32 %v3705, %v3721
  %v3730 = vadd.f32 %v3706, %v3728
  %v3731 = vsub.f32 %v2573, %v3321
  %v3732 = vmul.f32 %v3731, %v3731
  %3734 = vst [vmem:[#allocation1] ss:$4 sm:$0xff] %v3732
  %v3735 = vld.sshfl [vmem:[#allocation1] sm:$0xff pattern:$0x73625140]
  %v3736 = vld.sshfl [vmem:[#allocation1 + $0x8] sm:$0xff pattern:$0x73625140]
  %v3739 = vsel %vm2056, %v3735, 0.0
  %v3740 = vrot.slane %v3739, 4
  %v3741 = vadd.f32 %v3739, %v3740
  %v3742 = vrot.slane %v3741, 2
  %v3743 = vadd.f32 %v3741, %v3742
  %v3744 = vrot.slane %v3743, 1
  %v3745 = vadd.f32 %v3743, %v3744
  %v3746 = vsel %vm2056, %v3736, 0.0
  %v3747 = vrot.slane %v3746, 4
  %v3748 = vadd.f32 %v3746, %v3747
  %v3749 = vrot.slane %v3748, 2
  %v3750 = vadd.f32 %v3748, %v3749
  %v3751 = vrot.slane %v3750, 1
  %v3752 = vadd.f32 %v3750, %v3751
  %v3753 = vadd.f32 %v3729, %v3745
  %v3754 = vadd.f32 %v3730, %v3752
  %v3755 = vsub.f32 %v2596, %v3321
  %v3756 = vmul.f32 %v3755, %v3755
  %3758 = vst [vmem:[#allocation1] ss:$4 sm:$0xff] %v3756
  %v3759 = vld.sshfl [vmem:[#allocation1] sm:$0xff pattern:$0x73625140]
  %v3760 = vld.sshfl [vmem:[#allocation1 + $0x8] sm:$0xff pattern:$0x73625140]
  %v3763 = vsel %vm2056, %v3759, 0.0
  %v3764 = vrot.slane %v3763, 4
  %v3765 = vadd.f32 %v3763, %v3764
  %v3766 = vrot.slane %v3765, 2
  %v3767 = vadd.f32 %v3765, %v3766
  %v3768 = vrot.slane %v3767, 1
  %v3769 = vadd.f32 %v3767, %v3768
  %v3770 = vsel %vm2056, %v3760, 0.0
  %v3771 = vrot.slane %v3770, 4
  %v3772 = vadd.f32 %v3770, %v3771
  %v3773 = vrot.slane %v3772, 2
  %v3774 = vadd.f32 %v3772, %v3773
  %v3775 = vrot.slane %v3774, 1
  %v3776 = vadd.f32 %v3774, %v3775
  %v3777 = vadd.f32 %v3753, %v3769
  %v3778 = vadd.f32 %v3754, %v3776
  %v3779 = vsub.f32 %v2619, %v3321
  %v3780 = vmul.f32 %v3779, %v3779
  %3782 = vst [vmem:[#allocation1] ss:$4 sm:$0xff] %v3780
  %v3783 = vld.sshfl [vmem:[#allocation1] sm:$0xff pattern:$0x73625140]
  %v3784 = vld.sshfl [vmem:[#allocation1 + $0x8] sm:$0xff pattern:$0x73625140]
  %v3787 = vsel %vm2056, %v3783, 0.0
  %v3788 = vrot.slane %v3787, 4
  %v3789 = vadd.f32 %v3787, %v3788
  %v3790 = vrot.slane %v3789, 2
  %v3791 = vadd.f32 %v3789, %v3790
  %v3792 = vrot.slane %v3791, 1
  %v3793 = vadd.f32 %v3791, %v3792
  %v3794 = vsel %vm2056, %v3784, 0.0
  %v3795 = vrot.slane %v3794, 4
  %v3796 = vadd.f32 %v3794, %v3795
  %v3797 = vrot.slane %v3796, 2
  %v3798 = vadd.f32 %v3796, %v3797
  %v3799 = vrot.slane %v3798, 1
  %v3800 = vadd.f32 %v3798, %v3799
  %v3801 = vadd.f32 %v3777, %v3793
  %v3802 = vadd.f32 %v3778, %v3800
  %v3803 = vsub.f32 %v2642, %v3321
  %v3804 = vmul.f32 %v3803, %v3803
  %3806 = vst [vmem:[#allocation1] ss:$4 sm:$0xff] %v3804
  %v3807 = vld.sshfl [vmem:[#allocation1] sm:$0xff pattern:$0x73625140]
  %v3808 = vld.sshfl [vmem:[#allocation1 + $0x8] sm:$0xff pattern:$0x73625140]
  %v3811 = vsel %vm2056, %v3807, 0.0
  %v3812 = vrot.slane %v3811, 4
  %v3813 = vadd.f32 %v3811, %v3812
  %v3814 = vrot.slane %v3813, 2
  %v3815 = vadd.f32 %v3813, %v3814
  %v3816 = vrot.slane %v3815, 1
  %v3817 = vadd.f32 %v3815, %v3816
  %v3818 = vsel %vm2056, %v3808, 0.0
  %v3819 = vrot.slane %v3818, 4
  %v3820 = vadd.f32 %v3818, %v3819
  %v3821 = vrot.slane %v3820, 2
  %v3822 = vadd.f32 %v3820, %v3821
  %v3823 = vrot.slane %v3822, 1
  %v3824 = vadd.f32 %v3822, %v3823
  %v3825 = vadd.f32 %v3801, %v3817
  %v3826 = vadd.f32 %v3802, %v3824
  %v3827 = vsub.f32 %v2665, %v3321
  %v3828 = vmul.f32 %v3827, %v3827
  %3830 = vst [vmem:[#allocation1] ss:$4 sm:$0xff] %v3828
  %v3831 = vld.sshfl [vmem:[#allocation1] sm:$0xff pattern:$0x73625140]
  %v3832 = vld.sshfl [vmem:[#allocation1 + $0x8] sm:$0xff pattern:$0x73625140]
  %v3835 = vsel %vm2056, %v3831, 0.0
  %v3836 = vrot.slane %v3835, 4
  %v3837 = vadd.f32 %v3835, %v3836
  %v3838 = vrot.slane %v3837, 2
  %v3839 = vadd.f32 %v3837, %v3838
  %v3840 = vrot.slane %v3839, 1
  %v3841 = vadd.f32 %v3839, %v3840
  %v3842 = vsel %vm2056, %v3832, 0.0
  %v3843 = vrot.slane %v3842, 4
  %v3844 = vadd.f32 %v3842, %v3843
  %v3845 = vrot.slane %v3844, 2
  %v3846 = vadd.f32 %v3844, %v3845
  %v3847 = vrot.slane %v3846, 1
  %v3848 = vadd.f32 %v3846, %v3847
  %v3849 = vadd.f32 %v3825, %v3841
  %v3850 = vadd.f32 %v3826, %v3848
  %v3851 = vsub.f32 %v2688, %v3321
  %v3852 = vmul.f32 %v3851, %v3851
  %3854 = vst [vmem:[#allocation1] ss:$4 sm:$0xff] %v3852
  %v3855 = vld.sshfl [vmem:[#allocation1] sm:$0xff pattern:$0x73625140]
  %v3856 = vld.sshfl [vmem:[#allocation1 + $0x8] sm:$0xff pattern:$0x73625140]
  %v3859 = vsel %vm2056, %v3855, 0.0
  %v3860 = vrot.slane %v3859, 4
  %v3861 = vadd.f32 %v3859, %v3860
  %v3862 = vrot.slane %v3861, 2
  %v3863 = vadd.f32 %v3861, %v3862
  %v3864 = vrot.slane %v3863, 1
  %v3865 = vadd.f32 %v3863, %v3864
  %v3866 = vsel %vm2056, %v3856, 0.0
  %v3867 = vrot.slane %v3866, 4
  %v3868 = vadd.f32 %v3866, %v3867
  %v3869 = vrot.slane %v3868, 2
  %v3870 = vadd.f32 %v3868, %v3869
  %v3871 = vrot.slane %v3870, 1
  %v3872 = vadd.f32 %v3870, %v3871
  %v3873 = vadd.f32 %v3849, %v3865
  %v3874 = vadd.f32 %v3850, %v3872
  %v3875 = vsub.f32 %v2711, %v3321
  %v3876 = vmul.f32 %v3875, %v3875
  %3878 = vst [vmem:[#allocation1] ss:$4 sm:$0xff] %v3876
  %v3879 = vld.sshfl [vmem:[#allocation1] sm:$0xff pattern:$0x73625140]
  %v3880 = vld.sshfl [vmem:[#allocation1 + $0x8] sm:$0xff pattern:$0x73625140]
  %v3883 = vsel %vm2056, %v3879, 0.0
  %v3884 = vrot.slane %v3883, 4
  %v3885 = vadd.f32 %v3883, %v3884
  %v3886 = vrot.slane %v3885, 2
  %v3887 = vadd.f32 %v3885, %v3886
  %v3888 = vrot.slane %v3887, 1
  %v3889 = vadd.f32 %v3887, %v3888
  %v3890 = vsel %vm2056, %v3880, 0.0
  %v3891 = vrot.slane %v3890, 4
  %v3892 = vadd.f32 %v3890, %v3891
  %v3893 = vrot.slane %v3892, 2
  %v3894 = vadd.f32 %v3892, %v3893
  %v3895 = vrot.slane %v3894, 1
  %v3896 = vadd.f32 %v3894, %v3895
  %v3897 = vadd.f32 %v3873, %v3889
  %v3898 = vadd.f32 %v3874, %v3896
  %v3899 = vsub.f32 %v2734, %v3321
  %v3900 = vmul.f32 %v3899, %v3899
  %3902 = vst [vmem:[#allocation1] ss:$4 sm:$0xff] %v3900
  %v3903 = vld.sshfl [vmem:[#allocation1] sm:$0xff pattern:$0x73625140]
  %v3904 = vld.sshfl [vmem:[#allocation1 + $0x8] sm:$0xff pattern:$0x73625140]
  %v3907 = vsel %vm2056, %v3903, 0.0
  %v3908 = vrot.slane %v3907, 4
  %v3909 = vadd.f32 %v3907, %v3908
  %v3910 = vrot.slane %v3909, 2
  %v3911 = vadd.f32 %v3909, %v3910
  %v3912 = vrot.slane %v3911, 1
  %v3913 = vadd.f32 %v3911, %v3912
  %v3914 = vsel %vm2056, %v3904, 0.0
  %v3915 = vrot.slane %v3914, 4
  %v3916 = vadd.f32 %v3914, %v3915
  %v3917 = vrot.slane %v3916, 2
  %v3918 = vadd.f32 %v3916, %v3917
  %v3919 = vrot.slane %v3918, 1
  %v3920 = vadd.f32 %v3918, %v3919
  %v3921 = vadd.f32 %v3897, %v3913
  %v3922 = vadd.f32 %v3898, %v3920
  %v3923 = vsub.f32 %v2757, %v3321
  %v3924 = vmul.f32 %v3923, %v3923
  %3926 = vst [vmem:[#allocation1] ss:$4 sm:$0xff] %v3924
  %v3927 = vld.sshfl [vmem:[#allocation1] sm:$0xff pattern:$0x73625140]
  %v3928 = vld.sshfl [vmem:[#allocation1 + $0x8] sm:$0xff pattern:$0x73625140]
  %v3931 = vsel %vm2056, %v3927, 0.0
  %v3932 = vrot.slane %v3931, 4
  %v3933 = vadd.f32 %v3931, %v3932
  %v3934 = vrot.slane %v3933, 2
  %v3935 = vadd.f32 %v3933, %v3934
  %v3936 = vrot.slane %v3935, 1
  %v3937 = vadd.f32 %v3935, %v3936
  %v3938 = vsel %vm2056, %v3928, 0.0
  %v3939 = vrot.slane %v3938, 4
  %v3940 = vadd.f32 %v3938, %v3939
  %v3941 = vrot.slane %v3940, 2
  %v3942 = vadd.f32 %v3940, %v3941
  %v3943 = vrot.slane %v3942, 1
  %v3944 = vadd.f32 %v3942, %v3943
  %v3945 = vadd.f32 %v3921, %v3937
  %v3946 = vadd.f32 %v3922, %v3944
  %v3947 = vsub.f32 %v2780, %v3321
  %v3948 = vmul.f32 %v3947, %v3947
  %3950 = vst [vmem:[#allocation1] ss:$4 sm:$0xff] %v3948
  %v3951 = vld.sshfl [vmem:[#allocation1] sm:$0xff pattern:$0x73625140]
  %v3952 = vld.sshfl [vmem:[#allocation1 + $0x8] sm:$0xff pattern:$0x73625140]
  %v3955 = vsel %vm2056, %v3951, 0.0
  %v3956 = vrot.slane %v3955, 4
  %v3957 = vadd.f32 %v3955, %v3956
  %v3958 = vrot.slane %v3957, 2
  %v3959 = vadd.f32 %v3957, %v3958
  %v3960 = vrot.slane %v3959, 1
  %v3961 = vadd.f32 %v3959, %v3960
  %v3962 = vsel %vm2056, %v3952, 0.0
  %v3963 = vrot.slane %v3962, 4
  %v3964 = vadd.f32 %v3962, %v3963
  %v3965 = vrot.slane %v3964, 2
  %v3966 = vadd.f32 %v3964, %v3965
  %v3967 = vrot.slane %v3966, 1
  %v3968 = vadd.f32 %v3966, %v3967
  %v3969 = vadd.f32 %v3945, %v3961
  %v3970 = vadd.f32 %v3946, %v3968
  %v3971 = vsub.f32 %v2803, %v3321
  %v3972 = vmul.f32 %v3971, %v3971
  %3974 = vst [vmem:[#allocation1] ss:$4 sm:$0xff] %v3972
  %v3975 = vld.sshfl [vmem:[#allocation1] sm:$0xff pattern:$0x73625140]
  %v3976 = vld.sshfl [vmem:[#allocation1 + $0x8] sm:$0xff pattern:$0x73625140]
  %v3979 = vsel %vm2056, %v3975, 0.0
  %v3980 = vrot.slane %v3979, 4
  %v3981 = vadd.f32 %v3979, %v3980
  %v3982 = vrot.slane %v3981, 2
  %v3983 = vadd.f32 %v3981, %v3982
  %v3984 = vrot.slane %v3983, 1
  %v3985 = vadd.f32 %v3983, %v3984
  %v3986 = vsel %vm2056, %v3976, 0.0
  %v3987 = vrot.slane %v3986, 4
  %v3988 = vadd.f32 %v3986, %v3987
  %v3989 = vrot.slane %v3988, 2
  %v3990 = vadd.f32 %v3988, %v3989
  %v3991 = vrot.slane %v3990, 1
  %v3992 = vadd.f32 %v3990, %v3991
  %v3993 = vadd.f32 %v3969, %v3985
  %v3994 = vadd.f32 %v3970, %v3992
  %v3995 = vsub.f32 %v2826, %v3321
  %v3996 = vmul.f32 %v3995, %v3995
  %3998 = vst [vmem:[#allocation1] ss:$4 sm:$0xff] %v3996
  %v3999 = vld.sshfl [vmem:[#allocation1] sm:$0xff pattern:$0x73625140]
  %v4000 = vld.sshfl [vmem:[#allocation1 + $0x8] sm:$0xff pattern:$0x73625140]
  %v4003 = vsel %vm2056, %v3999, 0.0
  %v4004 = vrot.slane %v4003, 4
  %v4005 = vadd.f32 %v4003, %v4004
  %v4006 = vrot.slane %v4005, 2
  %v4007 = vadd.f32 %v4005, %v4006
  %v4008 = vrot.slane %v4007, 1
  %v4009 = vadd.f32 %v4007, %v4008
  %v4010 = vsel %vm2056, %v4000, 0.0
  %v4011 = vrot.slane %v4010, 4
  %v4012 = vadd.f32 %v4010, %v4011
  %v4013 = vrot.slane %v4012, 2
  %v4014 = vadd.f32 %v4012, %v4013
  %v4015 = vrot.slane %v4014, 1
  %v4016 = vadd.f32 %v4014, %v4015
  %v4017 = vadd.f32 %v3993, %v4009
  %v4018 = vadd.f32 %v3994, %v4016
  %v4019 = vsub.f32 %v2849, %v3321
  %v4020 = vmul.f32 %v4019, %v4019
  %4022 = vst [vmem:[#allocation1] ss:$4 sm:$0xff] %v4020
  %v4023 = vld.sshfl [vmem:[#allocation1] sm:$0xff pattern:$0x73625140]
  %v4024 = vld.sshfl [vmem:[#allocation1 + $0x8] sm:$0xff pattern:$0x73625140]
  %v4027 = vsel %vm2056, %v4023, 0.0
  %v4028 = vrot.slane %v4027, 4
  %v4029 = vadd.f32 %v4027, %v4028
  %v4030 = vrot.slane %v4029, 2
  %v4031 = vadd.f32 %v4029, %v4030
  %v4032 = vrot.slane %v4031, 1
  %v4033 = vadd.f32 %v4031, %v4032
  %v4034 = vsel %vm2056, %v4024, 0.0
  %v4035 = vrot.slane %v4034, 4
  %v4036 = vadd.f32 %v4034, %v4035
  %v4037 = vrot.slane %v4036, 2
  %v4038 = vadd.f32 %v4036, %v4037
  %v4039 = vrot.slane %v4038, 1
  %v4040 = vadd.f32 %v4038, %v4039
  %v4041 = vadd.f32 %v4017, %v4033
  %v4042 = vadd.f32 %v4018, %v4040
  %v4043 = vsub.f32 %v2872, %v3321
  %v4044 = vmul.f32 %v4043, %v4043
  %4046 = vst [vmem:[#allocation1] ss:$4 sm:$0xff] %v4044
  %v4047 = vld.sshfl [vmem:[#allocation1] sm:$0xff pattern:$0x73625140]
  %v4048 = vld.sshfl [vmem:[#allocation1 + $0x8] sm:$0xff pattern:$0x73625140]
  %v4051 = vsel %vm2056, %v4047, 0.0
  %v4052 = vrot.slane %v4051, 4
  %v4053 = vadd.f32 %v4051, %v4052
  %v4054 = vrot.slane %v4053, 2
  %v4055 = vadd.f32 %v4053, %v4054
  %v4056 = vrot.slane %v4055, 1
  %v4057 = vadd.f32 %v4055, %v4056
  %v4058 = vsel %vm2056, %v4048, 0.0
  %v4059 = vrot.slane %v4058, 4
  %v4060 = vadd.f32 %v4058, %v4059
  %v4061 = vrot.slane %v4060, 2
  %v4062 = vadd.f32 %v4060, %v4061
  %v4063 = vrot.slane %v4062, 1
  %v4064 = vadd.f32 %v4062, %v4063
  %v4065 = vadd.f32 %v4041, %v4057
  %v4066 = vadd.f32 %v4042, %v4064
  %v4067 = vsub.f32 %v2895, %v3321
  %v4068 = vmul.f32 %v4067, %v4067
  %4070 = vst [vmem:[#allocation1] ss:$4 sm:$0xff] %v4068
  %v4071 = vld.sshfl [vmem:[#allocation1] sm:$0xff pattern:$0x73625140]
  %v4072 = vld.sshfl [vmem:[#allocation1 + $0x8] sm:$0xff pattern:$0x73625140]
  %v4075 = vsel %vm2056, %v4071, 0.0
  %v4076 = vrot.slane %v4075, 4
  %v4077 = vadd.f32 %v4075, %v4076
  %v4078 = vrot.slane %v4077, 2
  %v4079 = vadd.f32 %v4077, %v4078
  %v4080 = vrot.slane %v4079, 1
  %v4081 = vadd.f32 %v4079, %v4080
  %v4082 = vsel %vm2056, %v4072, 0.0
  %v4083 = vrot.slane %v4082, 4
  %v4084 = vadd.f32 %v4082, %v4083
  %v4085 = vrot.slane %v4084, 2
  %v4086 = vadd.f32 %v4084, %v4085
  %v4087 = vrot.slane %v4086, 1
  %v4088 = vadd.f32 %v4086, %v4087
  %v4089 = vadd.f32 %v4065, %v4081
  %v4090 = vadd.f32 %v4066, %v4088
  %v4091 = vsub.f32 %v2918, %v3321
  %v4092 = vmul.f32 %v4091, %v4091
  %4094 = vst [vmem:[#allocation1] ss:$4 sm:$0xff] %v4092
  %v4095 = vld.sshfl [vmem:[#allocation1] sm:$0xff pattern:$0x73625140]
  %v4096 = vld.sshfl [vmem:[#allocation1 + $0x8] sm:$0xff pattern:$0x73625140]
  %v4099 = vsel %vm2056, %v4095, 0.0
  %v4100 = vrot.slane %v4099, 4
  %v4101 = vadd.f32 %v4099, %v4100
  %v4102 = vrot.slane %v4101, 2
  %v4103 = vadd.f32 %v4101, %v4102
  %v4104 = vrot.slane %v4103, 1
  %v4105 = vadd.f32 %v4103, %v4104
  %v4106 = vsel %vm2056, %v4096, 0.0
  %v4107 = vrot.slane %v4106, 4
  %v4108 = vadd.f32 %v4106, %v4107
  %v4109 = vrot.slane %v4108, 2
  %v4110 = vadd.f32 %v4108, %v4109
  %v4111 = vrot.slane %v4110, 1
  %v4112 = vadd.f32 %v4110, %v4111
  %v4113 = vadd.f32 %v4089, %v4105
  %v4114 = vadd.f32 %v4090, %v4112
  %v4115 = vsub.f32 %v2941, %v3321
  %v4116 = vmul.f32 %v4115, %v4115
  %4118 = vst [vmem:[#allocation1] ss:$4 sm:$0xff] %v4116
  %v4119 = vld.sshfl [vmem:[#allocation1] sm:$0xff pattern:$0x73625140]
  %v4120 = vld.sshfl [vmem:[#allocation1 + $0x8] sm:$0xff pattern:$0x73625140]
  %v4123 = vsel %vm2056, %v4119, 0.0
  %v4124 = vrot.slane %v4123, 4
  %v4125 = vadd.f32 %v4123, %v4124
  %v4126 = vrot.slane %v4125, 2
  %v4127 = vadd.f32 %v4125, %v4126
  %v4128 = vrot.slane %v4127, 1
  %v4129 = vadd.f32 %v4127, %v4128
  %v4130 = vsel %vm2056, %v4120, 0.0
  %v4131 = vrot.slane %v4130, 4
  %v4132 = vadd.f32 %v4130, %v4131
  %v4133 = vrot.slane %v4132, 2
  %v4134 = vadd.f32 %v4132, %v4133
  %v4135 = vrot.slane %v4134, 1
  %v4136 = vadd.f32 %v4134, %v4135
  %v4137 = vadd.f32 %v4113, %v4129
  %v4138 = vadd.f32 %v4114, %v4136
  %v4139 = vsub.f32 %v2964, %v3321
  %v4140 = vmul.f32 %v4139, %v4139
  %4142 = vst [vmem:[#allocation1] ss:$4 sm:$0xff] %v4140
  %v4143 = vld.sshfl [vmem:[#allocation1] sm:$0xff pattern:$0x73625140]
  %v4144 = vld.sshfl [vmem:[#allocation1 + $0x8] sm:$0xff pattern:$0x73625140]
  %v4147 = vsel %vm2056, %v4143, 0.0
  %v4148 = vrot.slane %v4147, 4
  %v4149 = vadd.f32 %v4147, %v4148
  %v4150 = vrot.slane %v4149, 2
  %v4151 = vadd.f32 %v4149, %v4150
  %v4152 = vrot.slane %v4151, 1
  %v4153 = vadd.f32 %v4151, %v4152
  %v4154 = vsel %vm2056, %v4144, 0.0
  %v4155 = vrot.slane %v4154, 4
  %v4156 = vadd.f32 %v4154, %v4155
  %v4157 = vrot.slane %v4156, 2
  %v4158 = vadd.f32 %v4156, %v4157
  %v4159 = vrot.slane %v4158, 1
  %v4160 = vadd.f32 %v4158, %v4159
  %v4161 = vadd.f32 %v4137, %v4153
  %v4162 = vadd.f32 %v4138, %v4160
  %v4163 = vsub.f32 %v2987, %v3321
  %v4164 = vmul.f32 %v4163, %v4163
  %4166 = vst [vmem:[#allocation1] ss:$4 sm:$0xff] %v4164
  %v4167 = vld.sshfl [vmem:[#allocation1] sm:$0xff pattern:$0x73625140]
  %v4168 = vld.sshfl [vmem:[#allocation1 + $0x8] sm:$0xff pattern:$0x73625140]
  %v4171 = vsel %vm2056, %v4167, 0.0
  %v4172 = vrot.slane %v4171, 4
  %v4173 = vadd.f32 %v4171, %v4172
  %v4174 = vrot.slane %v4173, 2
  %v4175 = vadd.f32 %v4173, %v4174
  %v4176 = vrot.slane %v4175, 1
  %v4177 = vadd.f32 %v4175, %v4176
  %v4178 = vsel %vm2056, %v4168, 0.0
  %v4179 = vrot.slane %v4178, 4
  %v4180 = vadd.f32 %v4178, %v4179
  %v4181 = vrot.slane %v4180, 2
  %v4182 = vadd.f32 %v4180, %v4181
  %v4183 = vrot.slane %v4182, 1
  %v4184 = vadd.f32 %v4182, %v4183
  %v4185 = vadd.f32 %v4161, %v4177
  %v4186 = vadd.f32 %v4162, %v4184
  %v4187 = vsub.f32 %v3010, %v3321
  %v4188 = vmul.f32 %v4187, %v4187
  %4190 = vst [vmem:[#allocation1] ss:$4 sm:$0xff] %v4188
  %v4191 = vld.sshfl [vmem:[#allocation1] sm:$0xff pattern:$0x73625140]
  %v4192 = vld.sshfl [vmem:[#allocation1 + $0x8] sm:$0xff pattern:$0x73625140]
  %v4195 = vsel %vm2056, %v4191, 0.0
  %v4196 = vrot.slane %v4195, 4
  %v4197 = vadd.f32 %v4195, %v4196
  %v4198 = vrot.slane %v4197, 2
  %v4199 = vadd.f32 %v4197, %v4198
  %v4200 = vrot.slane %v4199, 1
  %v4201 = vadd.f32 %v4199, %v4200
  %v4202 = vsel %vm2056, %v4192, 0.0
  %v4203 = vrot.slane %v4202, 4
  %v4204 = vadd.f32 %v4202, %v4203
  %v4205 = vrot.slane %v4204, 2
  %v4206 = vadd.f32 %v4204, %v4205
  %v4207 = vrot.slane %v4206, 1
  %v4208 = vadd.f32 %v4206, %v4207
  %v4209 = vadd.f32 %v4185, %v4201
  %v4210 = vadd.f32 %v4186, %v4208
  %v4211 = vsub.f32 %v3033, %v3321
  %v4212 = vmul.f32 %v4211, %v4211
  %4214 = vst [vmem:[#allocation1] ss:$4 sm:$0xff] %v4212
  %v4215 = vld.sshfl [vmem:[#allocation1] sm:$0xff pattern:$0x73625140]
  %v4216 = vld.sshfl [vmem:[#allocation1 + $0x8] sm:$0xff pattern:$0x73625140]
  %v4219 = vsel %vm2056, %v4215, 0.0
  %v4220 = vrot.slane %v4219, 4
  %v4221 = vadd.f32 %v4219, %v4220
  %v4222 = vrot.slane %v4221, 2
  %v4223 = vadd.f32 %v4221, %v4222
  %v4224 = vrot.slane %v4223, 1
  %v4225 = vadd.f32 %v4223, %v4224
  %v4226 = vsel %vm2056, %v4216, 0.0
  %v4227 = vrot.slane %v4226, 4
  %v4228 = vadd.f32 %v4226, %v4227
  %v4229 = vrot.slane %v4228, 2
  %v4230 = vadd.f32 %v4228, %v4229
  %v4231 = vrot.slane %v4230, 1
  %v4232 = vadd.f32 %v4230, %v4231
  %v4233 = vadd.f32 %v4209, %v4225
  %v4234 = vadd.f32 %v4210, %v4232
  %v4235 = vsub.f32 %v3056, %v3321
  %v4236 = vmul.f32 %v4235, %v4235
  %4238 = vst [vmem:[#allocation1] ss:$4 sm:$0xff] %v4236
  %v4239 = vld.sshfl [vmem:[#allocation1] sm:$0xff pattern:$0x73625140]
  %v4240 = vld.sshfl [vmem:[#allocation1 + $0x8] sm:$0xff pattern:$0x73625140]
  %v4243 = vsel %vm2056, %v4239, 0.0
  %v4244 = vrot.slane %v4243, 4
  %v4245 = vadd.f32 %v4243, %v4244
  %v4246 = vrot.slane %v4245, 2
  %v4247 = vadd.f32 %v4245, %v4246
  %v4248 = vrot.slane %v4247, 1
  %v4249 = vadd.f32 %v4247, %v4248
  %v4250 = vsel %vm2056, %v4240, 0.0
  %v4251 = vrot.slane %v4250, 4
  %v4252 = vadd.f32 %v4250, %v4251
  %v4253 = vrot.slane %v4252, 2
  %v4254 = vadd.f32 %v4252, %v4253
  %v4255 = vrot.slane %v4254, 1
  %v4256 = vadd.f32 %v4254, %v4255
  %v4257 = vadd.f32 %v4233, %v4249
  %v4258 = vadd.f32 %v4234, %v4256
  %v4259 = vsub.f32 %v3079, %v3321
  %v4260 = vmul.f32 %v4259, %v4259
  %4262 = vst [vmem:[#allocation1] ss:$4 sm:$0xff] %v4260
  %v4263 = vld.sshfl [vmem:[#allocation1] sm:$0xff pattern:$0x73625140]
  %v4264 = vld.sshfl [vmem:[#allocation1 + $0x8] sm:$0xff pattern:$0x73625140]
  %v4267 = vsel %vm2056, %v4263, 0.0
  %v4268 = vrot.slane %v4267, 4
  %v4269 = vadd.f32 %v4267, %v4268
  %v4270 = vrot.slane %v4269, 2
  %v4271 = vadd.f32 %v4269, %v4270
  %v4272 = vrot.slane %v4271, 1
  %v4273 = vadd.f32 %v4271, %v4272
  %v4274 = vsel %vm2056, %v4264, 0.0
  %v4275 = vrot.slane %v4274, 4
  %v4276 = vadd.f32 %v4274, %v4275
  %v4277 = vrot.slane %v4276, 2
  %v4278 = vadd.f32 %v4276, %v4277
  %v4279 = vrot.slane %v4278, 1
  %v4280 = vadd.f32 %v4278, %v4279
  %v4281 = vadd.f32 %v4257, %v4273
  %v4282 = vadd.f32 %v4258, %v4280
  %v4283 = vsub.f32 %v3102, %v3321
  %v4284 = vmul.f32 %v4283, %v4283
  %4286 = vst [vmem:[#allocation1] ss:$4 sm:$0xff] %v4284
  %v4287 = vld.sshfl [vmem:[#allocation1] sm:$0xff pattern:$0x73625140]
  %v4288 = vld.sshfl [vmem:[#allocation1 + $0x8] sm:$0xff pattern:$0x73625140]
  %v4291 = vsel %vm2056, %v4287, 0.0
  %v4292 = vrot.slane %v4291, 4
  %v4293 = vadd.f32 %v4291, %v4292
  %v4294 = vrot.slane %v4293, 2
  %v4295 = vadd.f32 %v4293, %v4294
  %v4296 = vrot.slane %v4295, 1
  %v4297 = vadd.f32 %v4295, %v4296
  %v4298 = vsel %vm2056, %v4288, 0.0
  %v4299 = vrot.slane %v4298, 4
  %v4300 = vadd.f32 %v4298, %v4299
  %v4301 = vrot.slane %v4300, 2
  %v4302 = vadd.f32 %v4300, %v4301
  %v4303 = vrot.slane %v4302, 1
  %v4304 = vadd.f32 %v4302, %v4303
  %v4305 = vadd.f32 %v4281, %v4297
  %v4306 = vadd.f32 %v4282, %v4304
  %v4307 = vsub.f32 %v3125, %v3321
  %v4308 = vmul.f32 %v4307, %v4307
  %4310 = vst [vmem:[#allocation1] ss:$4 sm:$0xff] %v4308
  %v4311 = vld.sshfl [vmem:[#allocation1] sm:$0xff pattern:$0x73625140]
  %v4312 = vld.sshfl [vmem:[#allocation1 + $0x8] sm:$0xff pattern:$0x73625140]
  %v4315 = vsel %vm2056, %v4311, 0.0
  %v4316 = vrot.slane %v4315, 4
  %v4317 = vadd.f32 %v4315, %v4316
  %v4318 = vrot.slane %v4317, 2
  %v4319 = vadd.f32 %v4317, %v4318
  %v4320 = vrot.slane %v4319, 1
  %v4321 = vadd.f32 %v4319, %v4320
  %v4322 = vsel %vm2056, %v4312, 0.0
  %v4323 = vrot.slane %v4322, 4
  %v4324 = vadd.f32 %v4322, %v4323
  %v4325 = vrot.slane %v4324, 2
  %v4326 = vadd.f32 %v4324, %v4325
  %v4327 = vrot.slane %v4326, 1
  %v4328 = vadd.f32 %v4326, %v4327
  %v4329 = vadd.f32 %v4305, %v4321
  %v4330 = vadd.f32 %v4306, %v4328
  %v4331 = vsub.f32 %v3148, %v3321
  %v4332 = vmul.f32 %v4331, %v4331
  %4334 = vst [vmem:[#allocation1] ss:$4 sm:$0xff] %v4332
  %v4335 = vld.sshfl [vmem:[#allocation1] sm:$0xff pattern:$0x73625140]
  %v4336 = vld.sshfl [vmem:[#allocation1 + $0x8] sm:$0xff pattern:$0x73625140]
  %v4339 = vsel %vm2056, %v4335, 0.0
  %v4340 = vrot.slane %v4339, 4
  %v4341 = vadd.f32 %v4339, %v4340
  %v4342 = vrot.slane %v4341, 2
  %v4343 = vadd.f32 %v4341, %v4342
  %v4344 = vrot.slane %v4343, 1
  %v4345 = vadd.f32 %v4343, %v4344
  %v4346 = vsel %vm2056, %v4336, 0.0
  %v4347 = vrot.slane %v4346, 4
  %v4348 = vadd.f32 %v4346, %v4347
  %v4349 = vrot.slane %v4348, 2
  %v4350 = vadd.f32 %v4348, %v4349
  %v4351 = vrot.slane %v4350, 1
  %v4352 = vadd.f32 %v4350, %v4351
  %v4353 = vadd.f32 %v4329, %v4345
  %v4354 = vadd.f32 %v4330, %v4352
  %v4355 = vsub.f32 %v3171, %v3321
  %v4356 = vmul.f32 %v4355, %v4355
  %4358 = vst [vmem:[#allocation1] ss:$4 sm:$0xff] %v4356
  %v4359 = vld.sshfl [vmem:[#allocation1] sm:$0xff pattern:$0x73625140]
  %v4360 = vld.sshfl [vmem:[#allocation1 + $0x8] sm:$0xff pattern:$0x73625140]
  %v4363 = vsel %vm2056, %v4359, 0.0
  %v4364 = vrot.slane %v4363, 4
  %v4365 = vadd.f32 %v4363, %v4364
  %v4366 = vrot.slane %v4365, 2
  %v4367 = vadd.f32 %v4365, %v4366
  %v4368 = vrot.slane %v4367, 1
  %v4369 = vadd.f32 %v4367, %v4368
  %v4370 = vsel %vm2056, %v4360, 0.0
  %v4371 = vrot.slane %v4370, 4
  %v4372 = vadd.f32 %v4370, %v4371
  %v4373 = vrot.slane %v4372, 2
  %v4374 = vadd.f32 %v4372, %v4373
  %v4375 = vrot.slane %v4374, 1
  %v4376 = vadd.f32 %v4374, %v4375
  %v4377 = vadd.f32 %v4353, %v4369
  %v4378 = vadd.f32 %v4354, %v4376
  %v4379 = vsub.f32 %v3194, %v3321
  %v4380 = vmul.f32 %v4379, %v4379
  %4382 = vst [vmem:[#allocation1] ss:$4 sm:$0xff] %v4380
  %v4383 = vld.sshfl [vmem:[#allocation1] sm:$0xff pattern:$0x73625140]
  %v4384 = vld.sshfl [vmem:[#allocation1 + $0x8] sm:$0xff pattern:$0x73625140]
  %v4387 = vsel %vm2056, %v4383, 0.0
  %v4388 = vrot.slane %v4387, 4
  %v4389 = vadd.f32 %v4387, %v4388
  %v4390 = vrot.slane %v4389, 2
  %v4391 = vadd.f32 %v4389, %v4390
  %v4392 = vrot.slane %v4391, 1
  %v4393 = vadd.f32 %v4391, %v4392
  %v4394 = vsel %vm2056, %v4384, 0.0
  %v4395 = vrot.slane %v4394, 4
  %v4396 = vadd.f32 %v4394, %v4395
  %v4397 = vrot.slane %v4396, 2
  %v4398 = vadd.f32 %v4396, %v4397
  %v4399 = vrot.slane %v4398, 1
  %v4400 = vadd.f32 %v4398, %v4399
  %v4401 = vadd.f32 %v4377, %v4393
  %v4402 = vadd.f32 %v4378, %v4400
  %v4403 = vsub.f32 %v3217, %v3321
  %v4404 = vmul.f32 %v4403, %v4403
  %4406 = vst [vmem:[#allocation1] ss:$4 sm:$0xff] %v4404
  %v4407 = vld.sshfl [vmem:[#allocation1] sm:$0xff pattern:$0x73625140]
  %v4408 = vld.sshfl [vmem:[#allocation1 + $0x8] sm:$0xff pattern:$0x73625140]
  %v4411 = vsel %vm2056, %v4407, 0.0
  %v4412 = vrot.slane %v4411, 4
  %v4413 = vadd.f32 %v4411, %v4412
  %v4414 = vrot.slane %v4413, 2
  %v4415 = vadd.f32 %v4413, %v4414
  %v4416 = vrot.slane %v4415, 1
  %v4417 = vadd.f32 %v4415, %v4416
  %v4418 = vsel %vm2056, %v4408, 0.0
  %v4419 = vrot.slane %v4418, 4
  %v4420 = vadd.f32 %v4418, %v4419
  %v4421 = vrot.slane %v4420, 2
  %v4422 = vadd.f32 %v4420, %v4421
  %v4423 = vrot.slane %v4422, 1
  %v4424 = vadd.f32 %v4422, %v4423
  %v4425 = vadd.f32 %v4401, %v4417
  %v4426 = vadd.f32 %v4402, %v4424
  %v4427 = vsub.f32 %v3240, %v3321
  %v4428 = vmul.f32 %v4427, %v4427
  %4430 = vst [vmem:[#allocation1] ss:$4 sm:$0xff] %v4428
  %v4431 = vld.sshfl [vmem:[#allocation1] sm:$0xff pattern:$0x73625140]
  %v4432 = vld.sshfl [vmem:[#allocation1 + $0x8] sm:$0xff pattern:$0x73625140]
  %v4435 = vsel %vm2056, %v4431, 0.0
  %v4436 = vrot.slane %v4435, 4
  %v4437 = vadd.f32 %v4435, %v4436
  %v4438 = vrot.slane %v4437, 2
  %v4439 = vadd.f32 %v4437, %v4438
  %v4440 = vrot.slane %v4439, 1
  %v4441 = vadd.f32 %v4439, %v4440
  %v4442 = vsel %vm2056, %v4432, 0.0
  %v4443 = vrot.slane %v4442, 4
  %v4444 = vadd.f32 %v4442, %v4443
  %v4445 = vrot.slane %v4444, 2
  %v4446 = vadd.f32 %v4444, %v4445
  %v4447 = vrot.slane %v4446, 1
  %v4448 = vadd.f32 %v4446, %v4447
  %v4449 = vadd.f32 %v4425, %v4441
  %v4450 = vadd.f32 %v4426, %v4448
  %v4451 = vsub.f32 %v3263, %v3321
  %v4452 = vmul.f32 %v4451, %v4451
  %4454 = vst [vmem:[#allocation1] ss:$4 sm:$0xff] %v4452
  %v4455 = vld.sshfl [vmem:[#allocation1] sm:$0xff pattern:$0x73625140]
  %v4456 = vld.sshfl [vmem:[#allocation1 + $0x8] sm:$0xff pattern:$0x73625140]
  %v4459 = vsel %vm2056, %v4455, 0.0
  %v4460 = vrot.slane %v4459, 4
  %v4461 = vadd.f32 %v4459, %v4460
  %v4462 = vrot.slane %v4461, 2
  %v4463 = vadd.f32 %v4461, %v4462
  %v4464 = vrot.slane %v4463, 1
  %v4465 = vadd.f32 %v4463, %v4464
  %v4466 = vsel %vm2056, %v4456, 0.0
  %v4467 = vrot.slane %v4466, 4
  %v4468 = vadd.f32 %v4466, %v4467
  %v4469 = vrot.slane %v4468, 2
  %v4470 = vadd.f32 %v4468, %v4469
  %v4471 = vrot.slane %v4470, 1
  %v4472 = vadd.f32 %v4470, %v4471
  %v4473 = vadd.f32 %v4449, %v4465
  %v4474 = vadd.f32 %v4450, %v4472
  %v4475 = vsub.f32 %v3286, %v3321
  %v4476 = vmul.f32 %v4475, %v4475
  %4478 = vst [vmem:[#allocation1] ss:$4 sm:$0xff] %v4476
  %v4479 = vld.sshfl [vmem:[#allocation1] sm:$0xff pattern:$0x73625140]
  %v4480 = vld.sshfl [vmem:[#allocation1 + $0x8] sm:$0xff pattern:$0x73625140]
  %v4483 = vsel %vm2056, %v4479, 0.0
  %v4484 = vrot.slane %v4483, 4
  %v4485 = vadd.f32 %v4483, %v4484
  %v4486 = vrot.slane %v4485, 2
  %v4487 = vadd.f32 %v4485, %v4486
  %v4488 = vrot.slane %v4487, 1
  %v4489 = vadd.f32 %v4487, %v4488
  %v4490 = vsel %vm2056, %v4480, 0.0
  %v4491 = vrot.slane %v4490, 4
  %v4492 = vadd.f32 %v4490, %v4491
  %v4493 = vrot.slane %v4492, 2
  %v4494 = vadd.f32 %v4492, %v4493
  %v4495 = vrot.slane %v4494, 1
  %v4496 = vadd.f32 %v4494, %v4495
  %v4497 = vadd.f32 %v4473, %v4489
  %v4498 = vadd.f32 %v4474, %v4496
  %v4499 = vmul.f32 %v4497, %v3315
  %v4500 = vmul.f32 %v4498, %v3315
  %v4501 = vld [vmem:[%s2] sm:$0x3]
  %v4502 = vadd.f32 %v4499, 1e-05
  %v4503 = vadd.f32 %v4500, 1e-05
  %v4504 = vrsqrt.pop %v4502
  %v4505 = vmul.f32 %v4504, %v4502
  %v4506 = vmul.f32 %v4505, %v4504
  %v4507 = vmul.f32 0.5, %v4506
  %v4508 = vsub.f32 1.5, %v4507
  %v4509 = vmul.f32 %v4504, %v4508
  %vm4510 = vweird.f32 %v4502
  %vm4511 = vweird.f32 %v4504
  %vm4512 = vmor %vm4510, %vm4511
  %v4513 = vsel %vm4512, %v4504, %v4509
  %v4514 = vrsqrt.pop %v4503
  %v4515 = vmul.f32 %v4514, %v4503
  %v4516 = vmul.f32 %v4515, %v4514
  %v4517 = vmul.f32 0.5, %v4516
  %v4518 = vsub.f32 1.5, %v4517
  %v4519 = vmul.f32 %v4514, %v4518
  %vm4520 = vweird.f32 %v4503
  %vm4521 = vweird.f32 %v4514
  %vm4522 = vmor %vm4520, %vm4521
  %v4523 = vsel %vm4522, %v4514, %v4519
  %v4526 = vrot.slane %v4523, 7
  %vm4527 = vcmask 1040384
  %v4528 = vsel %vm4527, %v4513, %v4526
  %v4530 = vmul.f32 %v4501, %v4528
  %v4531 = vld [vmem:[%s3] sm:$0x3]
  %v4533 = vperm.slane %v4530, 0
  %v4534 = vperm.slane %v4530, 1
  %v4537 = vmul.f32 %v3316, %v4533
  %v4538 = vmul.f32 %v3317, %v4534
  %v4541 = vrot.slane %v4538, 7
  %v4542 = vsel %vm4527, %v4537, %v4541
  %v4544 = vsub.f32 %v4531, %v4542
  %v4545 = vrot.slane %v4534, 6
  %v4546 = vsel %vm2056, %v4533, %v4545
  %v4548 = vmul.f32 %v2182, %v4546
  %v4550 = vperm.slane %v4544, 0
  %v4551 = vperm.slane %v4544, 1
  %v4552 = vrot.slane %v4551, 6
  %v4553 = vsel %vm2056, %v4550, %v4552
  %v4555 = vadd.f32 %v4548, %v4553
  %v4556 = vmax.f32 %v4555, 0.0
  %4557 = vst [vmem:[%s4] sm:$0xf] %v4556
  %v4558 = vld [vmem:[%s4 + $0x4] sm:$0xf]
  %v4559 = vmul.f32 %v4558, %v4546
  %v4560 = vadd.f32 %v4559, %v4553
  %v4561 = vmax.f32 %v4560, 0.0
  %4562 = vst [vmem:[%s4 + $0x4] sm:$0xf] %v4561
  %v4563 = vld [vmem:[%s4 + $0x8] sm:$0xf]
  %v4564 = vmul.f32 %v4563, %v4546
  %v4565 = vadd.f32 %v4564, %v4553
  %v4566 = vmax.f32 %v4565, 0.0
  %4567 = vst [vmem:[%s4 + $0x8] sm:$0xf] %v4566
  %v4568 = vld [vmem:[%s4 + $0xc] sm:$0xf]
  %v4569 = vmul.f32 %v4568, %v4546
  %v4570 = vadd.f32 %v4569, %v4553
  %v4571 = vmax.f32 %v4570, 0.0
  %4572 = vst [vmem:[%s4 + $0xc] sm:$0xf] %v4571
  %v4573 = vld [vmem:[%s4 + $0x10] sm:$0xf]
  %v4574 = vmul.f32 %v4573, %v4546
  %v4575 = vadd.f32 %v4574, %v4553
  %v4576 = vmax.f32 %v4575, 0.0
  %4577 = vst [vmem:[%s4 + $0x10] sm:$0xf] %v4576
  %v4578 = vld [vmem:[%s4 + $0x14] sm:$0xf]
  %v4579 = vmul.f32 %v4578, %v4546
  %v4580 = vadd.f32 %v4579, %v4553
  %v4581 = vmax.f32 %v4580, 0.0
  %4582 = vst [vmem:[%s4 + $0x14] sm:$0xf] %v4581
  %v4583 = vld [vmem:[%s4 + $0x18] sm:$0xf]
  %v4584 = vmul.f32 %v4583, %v4546
  %v4585 = vadd.f32 %v4584, %v4553
  %v4586 = vmax.f32 %v4585, 0.0
  %4587 = vst [vmem:[%s4 + $0x18] sm:$0xf] %v4586
  %v4588 = vld [vmem:[%s4 + $0x1c] sm:$0xf]
  %v4589 = vmul.f32 %v4588, %v4546
  %v4590 = vadd.f32 %v4589, %v4553
  %v4591 = vmax.f32 %v4590, 0.0
  %4592 = vst [vmem:[%s4 + $0x1c] sm:$0xf] %v4591
  %v4593 = vld [vmem:[%s4 + $0x20] sm:$0xf]
  %v4594 = vmul.f32 %v4593, %v4546
  %v4595 = vadd.f32 %v4594, %v4553
  %v4596 = vmax.f32 %v4595, 0.0
  %4597 = vst [vmem:[%s4 + $0x20] sm:$0xf] %v4596
  %v4598 = vld [vmem:[%s4 + $0x24] sm:$0xf]
  %v4599 = vmul.f32 %v4598, %v4546
  %v4600 = vadd.f32 %v4599, %v4553
  %v4601 = vmax.f32 %v4600, 0.0
  %4602 = vst [vmem:[%s4 + $0x24] sm:$0xf] %v4601
  %v4603 = vld [vmem:[%s4 + $0x28] sm:$0xf]
  %v4604 = vmul.f32 %v4603, %v4546
  %v4605 = vadd.f32 %v4604, %v4553
  %v4606 = vmax.f32 %v4605, 0.0
  %4607 = vst [vmem:[%s4 + $0x28] sm:$0xf] %v4606
  %v4608 = vld [vmem:[%s4 + $0x2c] sm:$0xf]
  %v4609 = vmul.f32 %v4608, %v4546
  %v4610 = vadd.f32 %v4609, %v4553
  %v4611 = vmax.f32 %v4610, 0.0
  %4612 = vst [vmem:[%s4 + $0x2c] sm:$0xf] %v4611
  %v4613 = vld [vmem:[%s4 + $0x30] sm:$0xf]
  %v4614 = vmul.f32 %v4613, %v4546
  %v4615 = vadd.f32 %v4614, %v4553
  %v4616 = vmax.f32 %v4615, 0.0
  %4617 = vst [vmem:[%s4 + $0x30] sm:$0xf] %v4616
  %v4618 = vld [vmem:[%s4 + $0x34] sm:$0xf]
  %v4619 = vmul.f32 %v4618, %v4546
  %v4620 = vadd.f32 %v4619, %v4553
  %v4621 = vmax.f32 %v4620, 0.0
  %4622 = vst [vmem:[%s4 + $0x34] sm:$0xf] %v4621
  %v4623 = vld [vmem:[%s4 + $0x38] sm:$0xf]
  %v4624 = vmul.f32 %v4623, %v4546
  %v4625 = vadd.f32 %v4624, %v4553
  %v4626 = vmax.f32 %v4625, 0.0
  %4627 = vst [vmem:[%s4 + $0x38] sm:$0xf] %v4626
  %v4628 = vld [vmem:[%s4 + $0x3c] sm:$0xf]
  %v4629 = vmul.f32 %v4628, %v4546
  %v4630 = vadd.f32 %v4629, %v4553
  %v4631 = vmax.f32 %v4630, 0.0
  %4632 = vst [vmem:[%s4 + $0x3c] sm:$0xf] %v4631
  %v4633 = vld [vmem:[%s4 + $0x40] sm:$0xf]
  %v4634 = vmul.f32 %v4633, %v4546
  %v4635 = vadd.f32 %v4634, %v4553
  %v4636 = vmax.f32 %v4635, 0.0
  %4637 = vst [vmem:[%s4 + $0x40] sm:$0xf] %v4636
  %v4638 = vld [vmem:[%s4 + $0x44] sm:$0xf]
  %v4639 = vmul.f32 %v4638, %v4546
  %v4640 = vadd.f32 %v4639, %v4553
  %v4641 = vmax.f32 %v4640, 0.0
  %4642 = vst [vmem:[%s4 + $0x44] sm:$0xf] %v4641
  %v4643 = vld [vmem:[%s4 + $0x48] sm:$0xf]
  %v4644 = vmul.f32 %v4643, %v4546
  %v4645 = vadd.f32 %v4644, %v4553
  %v4646 = vmax.f32 %v4645, 0.0
  %4647 = vst [vmem:[%s4 + $0x48] sm:$0xf] %v4646
  %v4648 = vld [vmem:[%s4 + $0x4c] sm:$0xf]
  %v4649 = vmul.f32 %v4648, %v4546
  %v4650 = vadd.f32 %v4649, %v4553
  %v4651 = vmax.f32 %v4650, 0.0
  %4652 = vst [vmem:[%s4 + $0x4c] sm:$0xf] %v4651
  %v4653 = vld [vmem:[%s4 + $0x50] sm:$0xf]
  %v4654 = vmul.f32 %v4653, %v4546
  %v4655 = vadd.f32 %v4654, %v4553
  %v4656 = vmax.f32 %v4655, 0.0
  %4657 = vst [vmem:[%s4 + $0x50] sm:$0xf] %v4656
  %v4658 = vld [vmem:[%s4 + $0x54] sm:$0xf]
  %v4659 = vmul.f32 %v4658, %v4546
  %v4660 = vadd.f32 %v4659, %v4553
  %v4661 = vmax.f32 %v4660, 0.0
  %4662 = vst [vmem:[%s4 + $0x54] sm:$0xf] %v4661
  %v4663 = vld [vmem:[%s4 + $0x58] sm:$0xf]
  %v4664 = vmul.f32 %v4663, %v4546
  %v4665 = vadd.f32 %v4664, %v4553
  %v4666 = vmax.f32 %v4665, 0.0
  %4667 = vst [vmem:[%s4 + $0x58] sm:$0xf] %v4666
  %v4668 = vld [vmem:[%s4 + $0x5c] sm:$0xf]
  %v4669 = vmul.f32 %v4668, %v4546
  %v4670 = vadd.f32 %v4669, %v4553
  %v4671 = vmax.f32 %v4670, 0.0
  %4672 = vst [vmem:[%s4 + $0x5c] sm:$0xf] %v4671
  %v4673 = vld [vmem:[%s4 + $0x60] sm:$0xf]
  %v4674 = vmul.f32 %v4673, %v4546
  %v4675 = vadd.f32 %v4674, %v4553
  %v4676 = vmax.f32 %v4675, 0.0
  %4677 = vst [vmem:[%s4 + $0x60] sm:$0xf] %v4676
  %v4678 = vld [vmem:[%s4 + $0x64] sm:$0xf]
  %v4679 = vmul.f32 %v4678, %v4546
  %v4680 = vadd.f32 %v4679, %v4553
  %v4681 = vmax.f32 %v4680, 0.0
  %4682 = vst [vmem:[%s4 + $0x64] sm:$0xf] %v4681
  %v4683 = vld [vmem:[%s4 + $0x68] sm:$0xf]
  %v4684 = vmul.f32 %v4683, %v4546
  %v4685 = vadd.f32 %v4684, %v4553
  %v4686 = vmax.f32 %v4685, 0.0
  %4687 = vst [vmem:[%s4 + $0x68] sm:$0xf] %v4686
  %v4688 = vld [vmem:[%s4 + $0x6c] sm:$0xf]
  %v4689 = vmul.f32 %v4688, %v4546
  %v4690 = vadd.f32 %v4689, %v4553
  %v4691 = vmax.f32 %v4690, 0.0
  %4692 = vst [vmem:[%s4 + $0x6c] sm:$0xf] %v4691
  %v4693 = vld [vmem:[%s4 + $0x70] sm:$0xf]
  %v4694 = vmul.f32 %v4693, %v4546
  %v4695 = vadd.f32 %v4694, %v4553
  %v4696 = vmax.f32 %v4695, 0.0
  %4697 = vst [vmem:[%s4 + $0x70] sm:$0xf] %v4696
  %v4698 = vld [vmem:[%s4 + $0x74] sm:$0xf]
  %v4699 = vmul.f32 %v4698, %v4546
  %v4700 = vadd.f32 %v4699, %v4553
  %v4701 = vmax.f32 %v4700, 0.0
  %4702 = vst [vmem:[%s4 + $0x74] sm:$0xf] %v4701
  %v4703 = vld [vmem:[%s4 + $0x78] sm:$0xf]
  %v4704 = vmul.f32 %v4703, %v4546
  %v4705 = vadd.f32 %v4704, %v4553
  %v4706 = vmax.f32 %v4705, 0.0
  %4707 = vst [vmem:[%s4 + $0x78] sm:$0xf] %v4706
  %v4708 = vld [vmem:[%s4 + $0x7c] sm:$0xf]
  %v4709 = vmul.f32 %v4708, %v4546
  %v4710 = vadd.f32 %v4709, %v4553
  %v4711 = vmax.f32 %v4710, 0.0
  %4712 = vst [vmem:[%s4 + $0x7c] sm:$0xf] %v4711
  %v4713 = vld [vmem:[%s4 + $0x80] sm:$0xf]
  %v4714 = vmul.f32 %v4713, %v4546
  %v4715 = vadd.f32 %v4714, %v4553
  %v4716 = vmax.f32 %v4715, 0.0
  %4717 = vst [vmem:[%s4 + $0x80] sm:$0xf] %v4716
  %v4718 = vld [vmem:[%s4 + $0x84] sm:$0xf]
  %v4719 = vmul.f32 %v4718, %v4546
  %v4720 = vadd.f32 %v4719, %v4553
  %v4721 = vmax.f32 %v4720, 0.0
  %4722 = vst [vmem:[%s4 + $0x84] sm:$0xf] %v4721
  %v4723 = vld [vmem:[%s4 + $0x88] sm:$0xf]
  %v4724 = vmul.f32 %v4723, %v4546
  %v4725 = vadd.f32 %v4724, %v4553
  %v4726 = vmax.f32 %v4725, 0.0
  %4727 = vst [vmem:[%s4 + $0x88] sm:$0xf] %v4726
  %v4728 = vld [vmem:[%s4 + $0x8c] sm:$0xf]
  %v4729 = vmul.f32 %v4728, %v4546
  %v4730 = vadd.f32 %v4729, %v4553
  %v4731 = vmax.f32 %v4730, 0.0
  %4732 = vst [vmem:[%s4 + $0x8c] sm:$0xf] %v4731
  %v4733 = vld [vmem:[%s4 + $0x90] sm:$0xf]
  %v4734 = vmul.f32 %v4733, %v4546
  %v4735 = vadd.f32 %v4734, %v4553
  %v4736 = vmax.f32 %v4735, 0.0
  %4737 = vst [vmem:[%s4 + $0x90] sm:$0xf] %v4736
  %v4738 = vld [vmem:[%s4 + $0x94] sm:$0xf]
  %v4739 = vmul.f32 %v4738, %v4546
  %v4740 = vadd.f32 %v4739, %v4553
  %v4741 = vmax.f32 %v4740, 0.0
  %4742 = vst [vmem:[%s4 + $0x94] sm:$0xf] %v4741
  %v4743 = vld [vmem:[%s4 + $0x98] sm:$0xf]
  %v4744 = vmul.f32 %v4743, %v4546
  %v4745 = vadd.f32 %v4744, %v4553
  %v4746 = vmax.f32 %v4745, 0.0
  %4747 = vst [vmem:[%s4 + $0x98] sm:$0xf] %v4746
  %v4748 = vld [vmem:[%s4 + $0x9c] sm:$0xf]
  %v4749 = vmul.f32 %v4748, %v4546
  %v4750 = vadd.f32 %v4749, %v4553
  %v4751 = vmax.f32 %v4750, 0.0
  %4752 = vst [vmem:[%s4 + $0x9c] sm:$0xf] %v4751
  %v4753 = vld [vmem:[%s4 + $0xa0] sm:$0xf]
  %v4754 = vmul.f32 %v4753, %v4546
  %v4755 = vadd.f32 %v4754, %v4553
  %v4756 = vmax.f32 %v4755, 0.0
  %4757 = vst [vmem:[%s4 + $0xa0] sm:$0xf] %v4756
  %v4758 = vld [vmem:[%s4 + $0xa4] sm:$0xf]
  %v4759 = vmul.f32 %v4758, %v4546
  %v4760 = vadd.f32 %v4759, %v4553
  %v4761 = vmax.f32 %v4760, 0.0
  %4762 = vst [vmem:[%s4 + $0xa4] sm:$0xf] %v4761
  %v4763 = vld [vmem:[%s4 + $0xa8] sm:$0xf]
  %v4764 = vmul.f32 %v4763, %v4546
  %v4765 = vadd.f32 %v4764, %v4553
  %v4766 = vmax.f32 %v4765, 0.0
  %4767 = vst [vmem:[%s4 + $0xa8] sm:$0xf] %v4766
  %v4768 = vld [vmem:[%s4 + $0xac] sm:$0xf]
  %v4769 = vmul.f32 %v4768, %v4546
  %v4770 = vadd.f32 %v4769, %v4553
  %v4771 = vmax.f32 %v4770, 0.0
  %4772 = vst [vmem:[%s4 + $0xac] sm:$0xf] %v4771
  %v4773 = vld [vmem:[%s4 + $0xb0] sm:$0xf]
  %v4774 = vmul.f32 %v4773, %v4546
  %v4775 = vadd.f32 %v4774, %v4553
  %v4776 = vmax.f32 %v4775, 0.0
  %4777 = vst [vmem:[%s4 + $0xb0] sm:$0xf] %v4776
  %v4778 = vld [vmem:[%s4 + $0xb4] sm:$0xf]
  %v4779 = vmul.f32 %v4778, %v4546
  %v4780 = vadd.f32 %v4779, %v4553
  %v4781 = vmax.f32 %v4780, 0.0
  %4782 = vst [vmem:[%s4 + $0xb4] sm:$0xf] %v4781
  %v4783 = vld [vmem:[%s4 + $0xb8] sm:$0xf]
  %v4784 = vmul.f32 %v4783, %v4546
  %v4785 = vadd.f32 %v4784, %v4553
  %v4786 = vmax.f32 %v4785, 0.0
  %4787 = vst [vmem:[%s4 + $0xb8] sm:$0xf] %v4786
  %v4788 = vld [vmem:[%s4 + $0xbc] sm:$0xf]
  %v4789 = vmul.f32 %v4788, %v4546
  %v4790 = vadd.f32 %v4789, %v4553
  %v4791 = vmax.f32 %v4790, 0.0
  %4792 = vst [vmem:[%s4 + $0xbc] sm:$0xf] %v4791
  %v4793 = vld [vmem:[%s4 + $0xc0] sm:$0xf]
  %v4794 = vmul.f32 %v4793, %v4546
  %v4795 = vadd.f32 %v4794, %v4553
  %v4796 = vmax.f32 %v4795, 0.0
  %4797 = vst [vmem:[%s4 + $0xc0] sm:$0xf] %v4796
  // Predicated region
  $region18: #{generator_forward.3} parent=0 // pred_check
    _
  $region19: #{generator_forward.3} parent=0 // pred_check_branch
    %4799 = sbr.rel (0) target = $region21
  $region20: #{generator_forward.3} parent=0 // pred_region
    _
  $region21: #{generator_forward.3} parent=0 // pred_fallthru
    _
  // Predicated region
  $region22: #{generator_forward.3} parent=0 // pred_check
    _
  $region23: #{generator_forward.3} parent=0 // pred_check_branch
    %4801 = sbr.rel (0) target = $region25
  $region24: #{generator_forward.3} parent=0 // pred_region
    _
  $region25: #{generator_forward.3} parent=0 // pred_fallthru
    _

// kernel: generator_forward.4
$region0: #{generator_forward.4}
  #allocation0 [shape = 'u32[]', space=smem, size = 0x4, offset = 0x4, fixed_abs, tag = 'smem constant byte address 0x4 - core index']
  #allocation1 [shape = 'u32[72,128]{1,0:T(1,128)}', space=vmem, size = 0x9000, scoped, tag = 'internal scratch']
  %s0 = inlined_call_operand.vmem [shape: bf16[4,98,1024], index: 0, kind: input, shape index: {}]
  %s1 = inlined_call_operand.vmem [shape: bf16[4,1024,128], index: 1, kind: input, shape index: {}]
  %s2 = inlined_call_operand.vmem [shape: f32[1,128], index: 2, kind: input, shape index: {}]
  %s3 = inlined_call_operand.vmem [shape: f32[1,128], index: 3, kind: input, shape index: {}]
  %s4 = inlined_call_operand.vmem [shape: f32[4,98,128], index: 4, kind: output, shape index: {}]
  %s5 = sld [smem:[#allocation0]]
  $region53: #{generator_forward.4} parent=0
    _
  %s7 = ssub.s32 1, %s5
  %s8 = scalar_select 0, %s7, %s5
  loop: start=0, step=1, limit=6
  $region2: #{generator_forward.4} parent=0 // loop_pre_header
    _
  $region3: #{generator_forward.4} parent=0 // loop_header
    %s10 = sphi 0, %s14
    %p11 = scmp.ge.s32.totalorder %s10, 6
    %s20 = sphi 0, %s22
    %s23 = sphi 0, %s20
    %s24 = sphi 0, %s23
    %s40 = sphi 0, %s24
    %s46 = sphi 0, %s48
    %s49 = sphi 0, %s46
    %s50 = sphi 0, %s49
    %s66 = sphi 0, %s50
    %s70 = sphi 0, %s70
    %s72 = sphi 0, %s70
    %s73 = sphi 0, %s72
    %s87 = sphi 0, %s73
    %s91 = sphi 0, %s91
    %s93 = sphi 0, %s91
    %s94 = sphi 0, %s93
    %s108 = sphi 0, %s94
    %s112 = sphi 0, %s112
    %s114 = sphi 0, %s112
    %s115 = sphi 0, %s114
    %s129 = sphi 0, %s115
  $region4: #{generator_forward.4} parent=0 // loop_header_branch
    %13 = sbr.rel (%p11) target = $region8
  $region5: #{generator_forward.4} parent=0 // loop_body
    %s15 = ssub.s32 %s10, 1
    %s16 = ssub.s32 %s10, 2
    %s17 = sadd.s32 %s10, 1
    %s18 = ssub.s32 %s10, %s17
    %p19 = scmp.eq.s32.totalorder %s18, 0
    %s21 = sadd.s32 %s20, 1
    %s22 = scalar_select %p19, %s20, %s21
    %p25 = pneg %p19
    %p26 = scmp.eq.s32.totalorder %s10, 3
    %p27 = por %p25, %p26
    %p28 = scmp.ne.s32.totalorder %s20, %s23
    %p29 = scmp.eq.s32.totalorder %s10, 0
    %p30 = por %p28, %p29
    %p31 = scmp.ne.s32.totalorder %s20, %s23
    %p32 = scmp.eq.s32.totalorder %s15, 3
    %p33 = por %p31, %p32
    %p34 = scmp.ne.s32.totalorder %s23, %s24
    %p35 = scmp.eq.s32.totalorder %s15, 0
    %p36 = por %p34, %p35
    %p37 = scmp.ne.s32.totalorder %s23, %s24
    %p38 = scmp.eq.s32.totalorder %s16, 3
    %p39 = por %p37, %p38
    %p41 = scmp.ne.s32.totalorder %s24, %s40
    %p42 = scmp.eq.s32.totalorder %s16, 0
    %p43 = por %p41, %p42
    %s44 = ssub.s32 %s10, %s17
    %p45 = scmp.eq.s32.totalorder %s44, 0
    %s47 = sadd.s32 %s46, 1
    %s48 = scalar_select %p45, %s46, %s47
    %p51 = pneg %p45
    %p52 = scmp.eq.s32.totalorder %s10, 3
    %p53 = por %p51, %p52
    %p54 = scmp.ne.s32.totalorder %s46, %s49
    %p55 = scmp.eq.s32.totalorder %s10, 0
    %p56 = por %p54, %p55
    %p57 = scmp.ne.s32.totalorder %s46, %s49
    %p58 = scmp.eq.s32.totalorder %s15, 3
    %p59 = por %p57, %p58
    %p60 = scmp.ne.s32.totalorder %s49, %s50
    %p61 = scmp.eq.s32.totalorder %s15, 0
    %p62 = por %p60, %p61
    %p63 = scmp.ne.s32.totalorder %s49, %s50
    %p64 = scmp.eq.s32.totalorder %s16, 3
    %p65 = por %p63, %p64
    %p67 = scmp.ne.s32.totalorder %s50, %s66
    %p68 = scmp.eq.s32.totalorder %s16, 0
    %p69 = por %p67, %p68
    %s71 = sadd.s32 %s70, 1
    %p74 = scmp.eq.s32.totalorder %s10, 3
    %p75 = scmp.ne.s32.totalorder %s70, %s72
    %p76 = scmp.eq.s32.totalorder %s10, 0
    %p77 = por %p75, %p76
    %p78 = scmp.ne.s32.totalorder %s70, %s72
    %p79 = scmp.eq.s32.totalorder %s15, 3
    %p80 = por %p78, %p79
    %p81 = scmp.ne.s32.totalorder %s72, %s73
    %p82 = scmp.eq.s32.totalorder %s15, 0
    %p83 = por %p81, %p82
    %p84 = scmp.ne.s32.totalorder %s72, %s73
    %p85 = scmp.eq.s32.totalorder %s16, 3
    %p86 = por %p84, %p85
    %p88 = scmp.ne.s32.totalorder %s73, %s87
    %p89 = scmp.eq.s32.totalorder %s16, 0
    %p90 = por %p88, %p89
    %s92 = sadd.s32 %s91, 1
    %p95 = scmp.eq.s32.totalorder %s10, 3
    %p96 = scmp.ne.s32.totalorder %s91, %s93
    %p97 = scmp.eq.s32.totalorder %s10, 0
    %p98 = por %p96, %p97
    %p99 = scmp.ne.s32.totalorder %s91, %s93
    %p100 = scmp.eq.s32.totalorder %s15, 3
    %p101 = por %p99, %p100
    %p102 = scmp.ne.s32.totalorder %s93, %s94
    %p103 = scmp.eq.s32.totalorder %s15, 0
    %p104 = por %p102, %p103
    %p105 = scmp.ne.s32.totalorder %s93, %s94
    %p106 = scmp.eq.s32.totalorder %s16, 3
    %p107 = por %p105, %p106
    %p109 = scmp.ne.s32.totalorder %s94, %s108
    %p110 = scmp.eq.s32.totalorder %s16, 0
    %p111 = por %p109, %p110
    %s113 = sadd.s32 %s112, 1
    %p116 = scmp.eq.s32.totalorder %s10, 3
    %p117 = scmp.ne.s32.totalorder %s112, %s114
    %p118 = scmp.eq.s32.totalorder %s10, 0
    %p119 = por %p117, %p118
    %p120 = scmp.ne.s32.totalorder %s112, %s114
    %p121 = scmp.eq.s32.totalorder %s15, 3
    %p122 = por %p120, %p121
    %p123 = scmp.ne.s32.totalorder %s114, %s115
    %p124 = scmp.eq.s32.totalorder %s15, 0
    %p125 = por %p123, %p124
    %p126 = scmp.ne.s32.totalorder %s114, %s115
    %p127 = scmp.eq.s32.totalorder %s16, 3
    %p128 = por %p126, %p127
    %p130 = scmp.ne.s32.totalorder %s115, %s129
    %p131 = scmp.eq.s32.totalorder %s16, 0
    %p132 = por %p130, %p131
    %p133 = scmp.le.s32.totalorder 1, %s10
    %p134 = scmp.lt.s32.totalorder %s10, 5
    %p135 = pnand %p133, %p134
    %p136 = pneg %p135
    // Predicated region
    $region9: #{generator_forward.4} parent=5 // pred_check
      _
    $region10: #{generator_forward.4} parent=5 // pred_check_branch
      %138 = sbr.rel (%p135) target = $region12
    $region11: #{generator_forward.4} parent=5 // pred_region
      %s139 = ssub.s32 %s10, 1
      // Predicated region
      $region13: #{generator_forward.4} parent=11 // pred_check
        %p140 = pneg %p83
      $region14: #{generator_forward.4} parent=11 // pred_check_branch
        %142 = sbr.rel (%p140) target = $region16
      $region15: #{generator_forward.4} parent=11 // pred_region
        _
      $region16: #{generator_forward.4} parent=11 // pred_fallthru
        _
      // Predicated region
      $region17: #{generator_forward.4} parent=11 // pred_check
        %p143 = pneg %p104
      $region18: #{generator_forward.4} parent=11 // pred_check_branch
        %145 = sbr.rel (%p143) target = $region20
      $region19: #{generator_forward.4} parent=11 // pred_region
        _
      $region20: #{generator_forward.4} parent=11 // pred_fallthru
        _
    $region12: #{generator_forward.4} parent=5 // pred_fallthru
      _
    %p146 = scmp.lt.s32.totalorder %s10, 4
    // Predicated region
    $region21: #{generator_forward.4} parent=5 // pred_check
      %p147 = pneg %p146
    $region22: #{generator_forward.4} parent=5 // pred_check_branch
      %149 = sbr.rel (%p147) target = $region24
    $region23: #{generator_forward.4} parent=5 // pred_region
      // Predicated region
      $region25: #{generator_forward.4} parent=23 // pred_check
        %p150 = pneg %p30
      $region26: #{generator_forward.4} parent=23 // pred_check_branch
        %152 = sbr.rel (%p150) target = $region28
      $region27: #{generator_forward.4} parent=23 // pred_region
        %p153 = scmp.lt.s32.totalorder %s10, 3
        %s154 = scalar_select %p153, %s10, 3
        %s155 = smul.addr %s154, 104
        %s156 = smul.addr %s155, 4
        %s157 = scalar_lea.vmem %s0, %s156
      $region28: #{generator_forward.4} parent=23 // pred_fallthru
        _
      // Predicated region
      $region29: #{generator_forward.4} parent=23 // pred_check
        %p158 = pneg %p56
      $region30: #{generator_forward.4} parent=23 // pred_check_branch
        %160 = sbr.rel (%p158) target = $region32
      $region31: #{generator_forward.4} parent=23 // pred_region
        %p161 = scmp.lt.s32.totalorder %s10, 3
        %s162 = scalar_select %p161, %s10, 3
        %s163 = smul.addr %s162, 128
        %s164 = smul.addr %s163, 4
        %s165 = scalar_lea.vmem %s1, %s164
      $region32: #{generator_forward.4} parent=23 // pred_fallthru
        _
    $region24: #{generator_forward.4} parent=5 // pred_fallthru
      _
    %p166 = scmp.le.s32.totalorder 1, %s10
    %p167 = scmp.lt.s32.totalorder %s10, 5
    %p168 = pnand %p166, %p167
    %p169 = pneg %p168
    // Predicated region
    $region33: #{generator_forward.4} parent=5 // pred_check
      _
    $region34: #{generator_forward.4} parent=5 // pred_check_branch
      %171 = sbr.rel (%p168) target = $region36
    $region35: #{generator_forward.4} parent=5 // pred_region
      %s172 = ssub.s32 %s10, 1
      %p173 = scmp.lt.s32.totalorder %s15, 3
      %s174 = scalar_select %p173, %s15, 3
      %s175 = smul.addr %s174, 104
      %s176 = smul.addr %s175, 4
      %s177 = scalar_lea.vmem %s0, %s176
      %p178 = pneg %p36
      %p179 = pneg %p33
      %p180 = scmp.lt.s32.totalorder %s15, 3
      %s181 = scalar_select %p180, %s15, 3
      %s182 = smul.addr %s181, 128
      %s183 = smul.addr %s182, 4
      %s184 = scalar_lea.vmem %s1, %s183
      %p185 = pneg %p62
      %p186 = pneg %p59
      %p187 = pneg %p83
      %p188 = pneg %p80
      %p189 = pneg %p104
      %p190 = pneg %p101
      %p191 = pneg %p125
      %p192 = pneg %p122
      %p193 = scmp.lt.s32.totalorder %s15, 3
      %s194 = scalar_select %p193, %s15, 3
      %s195 = smul.addr %s194, 104
      %s196 = smul.addr %s195, 4
      %s197 = scalar_lea.vmem %s0, %s196
      %p198 = scmp.lt.s32.totalorder %s15, 3
      %s199 = scalar_select %p198, %s15, 3
      %s200 = smul.addr %s199, 128
      %s201 = smul.addr %s200, 4
      %s202 = scalar_lea.vmem %s1, %s201
      %v203 = vld [vmem:[%s197] sm:$0xff]
      %v204 = vld [vmem:[%s197 + $0x8] sm:$0xff]
      %v205 = vld [vmem:[%s197 + $0x10] sm:$0xff]
      %v206 = vld [vmem:[%s197 + $0x18] sm:$0xff]
      %v207 = vld [vmem:[%s197 + $0x20] sm:$0xff]
      %v208 = vld [vmem:[%s197 + $0x28] sm:$0xff]
      %v209 = vld [vmem:[%s197 + $0x30] sm:$0xff]
      %v210 = vld [vmem:[%s197 + $0x38] sm:$0xff]
      %v211 = vld [vmem:[%s197 + $0x40] sm:$0xff]
      %v212 = vld [vmem:[%s197 + $0x48] sm:$0xff]
      %v213 = vld [vmem:[%s197 + $0x50] sm:$0xff]
      %v214 = vld [vmem:[%s197 + $0x58] sm:$0xff]
      %v215 = vld [vmem:[%s197 + $0x60] sm:$0xff]
      %v216 = vld [vmem:[%s197 + $0x68] sm:$0xff]
      %v217 = vld [vmem:[%s197 + $0x70] sm:$0xff]
      %v218 = vld [vmem:[%s197 + $0x78] sm:$0xff]
      %v219 = vld [vmem:[%s197 + $0x80] sm:$0xff]
      %v220 = vld [vmem:[%s197 + $0x88] sm:$0xff]
      %v221 = vld [vmem:[%s197 + $0x90] sm:$0xff]
      %v222 = vld [vmem:[%s197 + $0x98] sm:$0xff]
      %v223 = vld [vmem:[%s197 + $0xa0] sm:$0xff]
      %v224 = vld [vmem:[%s197 + $0xa8] sm:$0xff]
      %v225 = vld [vmem:[%s197 + $0xb0] sm:$0xff]
      %v226 = vld [vmem:[%s197 + $0xb8] sm:$0xff]
      %v227 = vld [vmem:[%s197 + $0xc0] sm:$0xff]
      %v228 = vld [vmem:[%s197 + $0xc8] sm:$0xff]
      %v229 = vld [vmem:[%s197 + $0xd0] sm:$0xff]
      %v230 = vld [vmem:[%s197 + $0xd8] sm:$0xff]
      %v231 = vld [vmem:[%s197 + $0xe0] sm:$0xff]
      %v232 = vld [vmem:[%s197 + $0xe8] sm:$0xff]
      %v233 = vld [vmem:[%s197 + $0xf0] sm:$0xff]
      %v234 = vld [vmem:[%s197 + $0xf8] sm:$0xff]
      %v235 = vld [vmem:[%s197 + $0x100] sm:$0xff]
      %v236 = vld [vmem:[%s197 + $0x108] sm:$0xff]
      %v237 = vld [vmem:[%s197 + $0x110] sm:$0xff]
      %v238 = vld [vmem:[%s197 + $0x118] sm:$0xff]
      %v239 = vld [vmem:[%s197 + $0x120] sm:$0xff]
      %v240 = vld [vmem:[%s197 + $0x128] sm:$0xff]
      %v241 = vld [vmem:[%s197 + $0x130] sm:$0xff]
      %v242 = vld [vmem:[%s197 + $0x138] sm:$0xff]
      %v243 = vld [vmem:[%s197 + $0x140] sm:$0xff]
      %v244 = vld [vmem:[%s197 + $0x148] sm:$0xff]
      %v245 = vld [vmem:[%s197 + $0x150] sm:$0xff]
      %v246 = vld [vmem:[%s197 + $0x158] sm:$0xff]
      %v247 = vld [vmem:[%s197 + $0x160] sm:$0xff]
      %v248 = vld [vmem:[%s197 + $0x168] sm:$0xff]
      %v249 = vld [vmem:[%s197 + $0x170] sm:$0xff]
      %v250 = vld [vmem:[%s197 + $0x178] sm:$0xff]
      %v251 = vld [vmem:[%s197 + $0x180] sm:$0x11]
      %v252 = vld [vmem:[%s197 + $0x188] sm:$0x11]
      %v253 = vld [vmem:[%s197 + $0x190] sm:$0x11]
      %v254 = vld [vmem:[%s197 + $0x198] sm:$0x11]
      %v255 = vld [vmem:[%s202] sm:$0xf]
      %v256 = vld [vmem:[%s202 + $0x4] sm:$0xf]
      %v257 = vld [vmem:[%s202 + $0x8] sm:$0xf]
      %v258 = vld [vmem:[%s202 + $0xc] sm:$0xf]
      %v259 = vld [vmem:[%s202 + $0x10] sm:$0xf]
      %v260 = vld [vmem:[%s202 + $0x14] sm:$0xf]
      %v261 = vld [vmem:[%s202 + $0x18] sm:$0xf]
      %v262 = vld [vmem:[%s202 + $0x1c] sm:$0xf]
      %v263 = vld [vmem:[%s202 + $0x20] sm:$0xf]
      %v264 = vld [vmem:[%s202 + $0x24] sm:$0xf]
      %v265 = vld [vmem:[%s202 + $0x28] sm:$0xf]
      %v266 = vld [vmem:[%s202 + $0x2c] sm:$0xf]
      %v267 = vld [vmem:[%s202 + $0x30] sm:$0xf]
      %v268 = vld [vmem:[%s202 + $0x34] sm:$0xf]
      %v269 = vld [vmem:[%s202 + $0x38] sm:$0xf]
      %v270 = vld [vmem:[%s202 + $0x3c] sm:$0xf]
      %v271 = vld [vmem:[%s202 + $0x40] sm:$0xf]
      %v272 = vld [vmem:[%s202 + $0x44] sm:$0xf]
      %v273 = vld [vmem:[%s202 + $0x48] sm:$0xf]
      %v274 = vld [vmem:[%s202 + $0x4c] sm:$0xf]
      %v275 = vld [vmem:[%s202 + $0x50] sm:$0xf]
      %v276 = vld [vmem:[%s202 + $0x54] sm:$0xf]
      %v277 = vld [vmem:[%s202 + $0x58] sm:$0xf]
      %v278 = vld [vmem:[%s202 + $0x5c] sm:$0xf]
      %v279 = vld [vmem:[%s202 + $0x60] sm:$0xf]
      %v280 = vld [vmem:[%s202 + $0x64] sm:$0xf]
      %v281 = vld [vmem:[%s202 + $0x68] sm:$0xf]
      %v282 = vld [vmem:[%s202 + $0x6c] sm:$0xf]
      %v283 = vld [vmem:[%s202 + $0x70] sm:$0xf]
      %v284 = vld [vmem:[%s202 + $0x74] sm:$0xf]
      %v285 = vld [vmem:[%s202 + $0x78] sm:$0xf]
      %v286 = vld [vmem:[%s202 + $0x7c] sm:$0xf]
      %v287 = vld [vmem:[%s202 + $0x80] sm:$0xf]
      %v288 = vld [vmem:[%s202 + $0x84] sm:$0xf]
      %v289 = vld [vmem:[%s202 + $0x88] sm:$0xf]
      %v290 = vld [vmem:[%s202 + $0x8c] sm:$0xf]
      %v291 = vld [vmem:[%s202 + $0x90] sm:$0xf]
      %v292 = vld [vmem:[%s202 + $0x94] sm:$0xf]
      %v293 = vld [vmem:[%s202 + $0x98] sm:$0xf]
      %v294 = vld [vmem:[%s202 + $0x9c] sm:$0xf]
      %v295 = vld [vmem:[%s202 + $0xa0] sm:$0xf]
      %v296 = vld [vmem:[%s202 + $0xa4] sm:$0xf]
      %v297 = vld [vmem:[%s202 + $0xa8] sm:$0xf]
      %v298 = vld [vmem:[%s202 + $0xac] sm:$0xf]
      %v299 = vld [vmem:[%s202 + $0xb0] sm:$0xf]
      %v300 = vld [vmem:[%s202 + $0xb4] sm:$0xf]
      %v301 = vld [vmem:[%s202 + $0xb8] sm:$0xf]
      %v302 = vld [vmem:[%s202 + $0xbc] sm:$0xf]
      %v303 = vld [vmem:[%s202 + $0xc0] sm:$0xf]
      %v304 = vld [vmem:[%s202 + $0xc4] sm:$0xf]
      %v305 = vld [vmem:[%s202 + $0xc8] sm:$0xf]
      %v306 = vld [vmem:[%s202 + $0xcc] sm:$0xf]
      %v307 = vld [vmem:[%s202 + $0xd0] sm:$0xf]
      %v308 = vld [vmem:[%s202 + $0xd4] sm:$0xf]
      %v309 = vld [vmem:[%s202 + $0xd8] sm:$0xf]
      %v310 = vld [vmem:[%s202 + $0xdc] sm:$0xf]
      %v311 = vld [vmem:[%s202 + $0xe0] sm:$0xf]
      %v312 = vld [vmem:[%s202 + $0xe4] sm:$0xf]
      %v313 = vld [vmem:[%s202 + $0xe8] sm:$0xf]
      %v314 = vld [vmem:[%s202 + $0xec] sm:$0xf]
      %v315 = vld [vmem:[%s202 + $0xf0] sm:$0xf]
      %v316 = vld [vmem:[%s202 + $0xf4] sm:$0xf]
      %v317 = vld [vmem:[%s202 + $0xf8] sm:$0xf]
      %v318 = vld [vmem:[%s202 + $0xfc] sm:$0xf]
      %v319 = vld [vmem:[%s202 + $0x100] sm:$0xf]
      %v320 = vld [vmem:[%s202 + $0x104] sm:$0xf]
      %v321 = vld [vmem:[%s202 + $0x108] sm:$0xf]
      %v322 = vld [vmem:[%s202 + $0x10c] sm:$0xf]
      %v323 = vld [vmem:[%s202 + $0x110] sm:$0xf]
      %v324 = vld [vmem:[%s202 + $0x114] sm:$0xf]
      %v325 = vld [vmem:[%s202 + $0x118] sm:$0xf]
      %v326 = vld [vmem:[%s202 + $0x11c] sm:$0xf]
      %v327 = vld [vmem:[%s202 + $0x120] sm:$0xf]
      %v328 = vld [vmem:[%s202 + $0x124] sm:$0xf]
      %v329 = vld [vmem:[%s202 + $0x128] sm:$0xf]
      %v330 = vld [vmem:[%s202 + $0x12c] sm:$0xf]
      %v331 = vld [vmem:[%s202 + $0x130] sm:$0xf]
      %v332 = vld [vmem:[%s202 + $0x134] sm:$0xf]
      %v333 = vld [vmem:[%s202 + $0x138] sm:$0xf]
      %v334 = vld [vmem:[%s202 + $0x13c] sm:$0xf]
      %v335 = vld [vmem:[%s202 + $0x140] sm:$0xf]
      %v336 = vld [vmem:[%s202 + $0x144] sm:$0xf]
      %v337 = vld [vmem:[%s202 + $0x148] sm:$0xf]
      %v338 = vld [vmem:[%s202 + $0x14c] sm:$0xf]
      %v339 = vld [vmem:[%s202 + $0x150] sm:$0xf]
      %v340 = vld [vmem:[%s202 + $0x154] sm:$0xf]
      %v341 = vld [vmem:[%s202 + $0x158] sm:$0xf]
      %v342 = vld [vmem:[%s202 + $0x15c] sm:$0xf]
      %v343 = vld [vmem:[%s202 + $0x160] sm:$0xf]
      %v344 = vld [vmem:[%s202 + $0x164] sm:$0xf]
      %v345 = vld [vmem:[%s202 + $0x168] sm:$0xf]
      %v346 = vld [vmem:[%s202 + $0x16c] sm:$0xf]
      %v347 = vld [vmem:[%s202 + $0x170] sm:$0xf]
      %v348 = vld [vmem:[%s202 + $0x174] sm:$0xf]
      %v349 = vld [vmem:[%s202 + $0x178] sm:$0xf]
      %v350 = vld [vmem:[%s202 + $0x17c] sm:$0xf]
      %v351 = vld [vmem:[%s202 + $0x180] sm:$0xf]
      %v352 = vld [vmem:[%s202 + $0x184] sm:$0xf]
      %v353 = vld [vmem:[%s202 + $0x188] sm:$0xf]
      %v354 = vld [vmem:[%s202 + $0x18c] sm:$0xf]
      %v355 = vld [vmem:[%s202 + $0x190] sm:$0xf]
      %v356 = vld [vmem:[%s202 + $0x194] sm:$0xf]
      %v357 = vld [vmem:[%s202 + $0x198] sm:$0xf]
      %v358 = vld [vmem:[%s202 + $0x19c] sm:$0xf]
      %v359 = vld [vmem:[%s202 + $0x1a0] sm:$0xf]
      %v360 = vld [vmem:[%s202 + $0x1a4] sm:$0xf]
      %v361 = vld [vmem:[%s202 + $0x1a8] sm:$0xf]
      %v362 = vld [vmem:[%s202 + $0x1ac] sm:$0xf]
      %v363 = vld [vmem:[%s202 + $0x1b0] sm:$0xf]
      %v364 = vld [vmem:[%s202 + $0x1b4] sm:$0xf]
      %v365 = vld [vmem:[%s202 + $0x1b8] sm:$0xf]
      %v366 = vld [vmem:[%s202 + $0x1bc] sm:$0xf]
      %v367 = vld [vmem:[%s202 + $0x1c0] sm:$0xf]
      %v368 = vld [vmem:[%s202 + $0x1c4] sm:$0xf]
      %v369 = vld [vmem:[%s202 + $0x1c8] sm:$0xf]
      %v370 = vld [vmem:[%s202 + $0x1cc] sm:$0xf]
      %v371 = vld [vmem:[%s202 + $0x1d0] sm:$0xf]
      %v372 = vld [vmem:[%s202 + $0x1d4] sm:$0xf]
      %v373 = vld [vmem:[%s202 + $0x1d8] sm:$0xf]
      %v374 = vld [vmem:[%s202 + $0x1dc] sm:$0xf]
      %v375 = vld [vmem:[%s202 + $0x1e0] sm:$0xf]
      %v376 = vld [vmem:[%s202 + $0x1e4] sm:$0xf]
      %v377 = vld [vmem:[%s202 + $0x1e8] sm:$0xf]
      %v378 = vld [vmem:[%s202 + $0x1ec] sm:$0xf]
      %v379 = vld [vmem:[%s202 + $0x1f0] sm:$0xf]
      %v380 = vld [vmem:[%s202 + $0x1f4] sm:$0xf]
      %v381 = vld [vmem:[%s202 + $0x1f8] sm:$0xf]
      %v382 = vld [vmem:[%s202 + $0x1fc] sm:$0xf]
      %v435 = vunpack.c.l.b16 %v203
      %v436 = vunpack.c.h.b16 %v203
      %v437 = vunpack.c.l.b16 %v204
      %v438 = vunpack.c.h.b16 %v204
      %v439 = vunpack.c.l.b16 %v205
      %v440 = vunpack.c.h.b16 %v205
      %v441 = vunpack.c.l.b16 %v206
      %v442 = vunpack.c.h.b16 %v206
      %v443 = vunpack.c.l.b16 %v207
      %v444 = vunpack.c.h.b16 %v207
      %v445 = vunpack.c.l.b16 %v208
      %v446 = vunpack.c.h.b16 %v208
      %v447 = vunpack.c.l.b16 %v209
      %v448 = vunpack.c.h.b16 %v209
      %v449 = vunpack.c.l.b16 %v210
      %v450 = vunpack.c.h.b16 %v210
      %v451 = vunpack.c.l.b16 %v211
      %v452 = vunpack.c.h.b16 %v211
      %v453 = vunpack.c.l.b16 %v212
      %v454 = vunpack.c.h.b16 %v212
      %v455 = vunpack.c.l.b16 %v213
      %v456 = vunpack.c.h.b16 %v213
      %v457 = vunpack.c.l.b16 %v214
      %v458 = vunpack.c.h.b16 %v214
      %v459 = vunpack.c.l.b16 %v215
      %v460 = vunpack.c.h.b16 %v215
      %v461 = vunpack.c.l.b16 %v216
      %v462 = vunpack.c.h.b16 %v216
      %v463 = vunpack.c.l.b16 %v217
      %v464 = vunpack.c.h.b16 %v217
      %v465 = vunpack.c.l.b16 %v218
      %v466 = vunpack.c.h.b16 %v218
      %v467 = vunpack.c.l.b16 %v219
      %v468 = vunpack.c.h.b16 %v219
      %v469 = vunpack.c.l.b16 %v220
      %v470 = vunpack.c.h.b16 %v220
      %v471 = vunpack.c.l.b16 %v221
      %v472 = vunpack.c.h.b16 %v221
      %v473 = vunpack.c.l.b16 %v222
      %v474 = vunpack.c.h.b16 %v222
      %v475 = vunpack.c.l.b16 %v223
      %v476 = vunpack.c.h.b16 %v223
      %v477 = vunpack.c.l.b16 %v224
      %v478 = vunpack.c.h.b16 %v224
      %v479 = vunpack.c.l.b16 %v225
      %v480 = vunpack.c.h.b16 %v225
      %v481 = vunpack.c.l.b16 %v226
      %v482 = vunpack.c.h.b16 %v226
      %v483 = vunpack.c.l.b16 %v227
      %v484 = vunpack.c.h.b16 %v227
      %v485 = vunpack.c.l.b16 %v228
      %v486 = vunpack.c.h.b16 %v228
      %v487 = vunpack.c.l.b16 %v229
      %v488 = vunpack.c.h.b16 %v229
      %v489 = vunpack.c.l.b16 %v230
      %v490 = vunpack.c.h.b16 %v230
      %v491 = vunpack.c.l.b16 %v231
      %v492 = vunpack.c.h.b16 %v231
      %v493 = vunpack.c.l.b16 %v232
      %v494 = vunpack.c.h.b16 %v232
      %v495 = vunpack.c.l.b16 %v233
      %v496 = vunpack.c.h.b16 %v233
      %v497 = vunpack.c.l.b16 %v234
      %v498 = vunpack.c.h.b16 %v234
      %v499 = vunpack.c.l.b16 %v235
      %v500 = vunpack.c.h.b16 %v235
      %v501 = vunpack.c.l.b16 %v236
      %v502 = vunpack.c.h.b16 %v236
      %v503 = vunpack.c.l.b16 %v237
      %v504 = vunpack.c.h.b16 %v237
      %v505 = vunpack.c.l.b16 %v238
      %v506 = vunpack.c.h.b16 %v238
      %v507 = vunpack.c.l.b16 %v239
      %v508 = vunpack.c.h.b16 %v239
      %v509 = vunpack.c.l.b16 %v240
      %v510 = vunpack.c.h.b16 %v240
      %v511 = vunpack.c.l.b16 %v241
      %v512 = vunpack.c.h.b16 %v241
      %v513 = vunpack.c.l.b16 %v242
      %v514 = vunpack.c.h.b16 %v242
      %v515 = vunpack.c.l.b16 %v243
      %v516 = vunpack.c.h.b16 %v243
      %v517 = vunpack.c.l.b16 %v244
      %v518 = vunpack.c.h.b16 %v244
      %v519 = vunpack.c.l.b16 %v245
      %v520 = vunpack.c.h.b16 %v245
      %v521 = vunpack.c.l.b16 %v246
      %v522 = vunpack.c.h.b16 %v246
      %v523 = vunpack.c.l.b16 %v247
      %v524 = vunpack.c.h.b16 %v247
      %v525 = vunpack.c.l.b16 %v248
      %v526 = vunpack.c.h.b16 %v248
      %v527 = vunpack.c.l.b16 %v249
      %v528 = vunpack.c.h.b16 %v249
      %v529 = vunpack.c.l.b16 %v250
      %v530 = vunpack.c.h.b16 %v250
      %v531 = vunpack.c.l.b16 %v251
      %v532 = vunpack.c.h.b16 %v251
      %v533 = vunpack.c.l.b16 %v252
      %v534 = vunpack.c.h.b16 %v252
      %v535 = vunpack.c.l.b16 %v253
      %v536 = vunpack.c.h.b16 %v253
      %v537 = vunpack.c.l.b16 %v254
      %v538 = vunpack.c.h.b16 %v254
      %v539 = vpack.c.b16 %v443, %v435
      %v540 = vpack.c.b16 %v444, %v436
      %v541 = vpack.c.b16 %v445, %v437
      %v542 = vpack.c.b16 %v446, %v438
      %v543 = vpack.c.b16 %v447, %v439
      %v544 = vpack.c.b16 %v448, %v440
      %v545 = vpack.c.b16 %v449, %v441
      %v546 = vpack.c.b16 %v450, %v442
      %v547 = vpack.c.b16 %v459, %v451
      %v548 = vpack.c.b16 %v460, %v452
      %v549 = vpack.c.b16 %v461, %v453
      %v550 = vpack.c.b16 %v462, %v454
      %v551 = vpack.c.b16 %v463, %v455
      %v552 = vpack.c.b16 %v464, %v456
      %v553 = vpack.c.b16 %v465, %v457
      %v554 = vpack.c.b16 %v466, %v458
      %v555 = vpack.c.b16 %v475, %v467
      %v556 = vpack.c.b16 %v476, %v468
      %v557 = vpack.c.b16 %v477, %v469
      %v558 = vpack.c.b16 %v478, %v470
      %v559 = vpack.c.b16 %v479, %v471
      %v560 = vpack.c.b16 %v480, %v472
      %v561 = vpack.c.b16 %v481, %v473
      %v562 = vpack.c.b16 %v482, %v474
      %v563 = vpack.c.b16 %v491, %v483
      %v564 = vpack.c.b16 %v492, %v484
      %v565 = vpack.c.b16 %v493, %v485
      %v566 = vpack.c.b16 %v494, %v486
      %v567 = vpack.c.b16 %v495, %v487
      %v568 = vpack.c.b16 %v496, %v488
      %v569 = vpack.c.b16 %v497, %v489
      %v570 = vpack.c.b16 %v498, %v490
      %v571 = vpack.c.b16 %v507, %v499
      %v572 = vpack.c.b16 %v508, %v500
      %v573 = vpack.c.b16 %v509, %v501
      %v574 = vpack.c.b16 %v510, %v502
      %v575 = vpack.c.b16 %v511, %v503
      %v576 = vpack.c.b16 %v512, %v504
      %v577 = vpack.c.b16 %v513, %v505
      %v578 = vpack.c.b16 %v514, %v506
      %v579 = vpack.c.b16 %v523, %v515
      %v580 = vpack.c.b16 %v524, %v516
      %v581 = vpack.c.b16 %v525, %v517
      %v582 = vpack.c.b16 %v526, %v518
      %v583 = vpack.c.b16 %v527, %v519
      %v584 = vpack.c.b16 %v528, %v520
      %v585 = vpack.c.b16 %v529, %v521
      %v586 = vpack.c.b16 %v530, %v522
      %v587 = vpack.c.b16 %v531, %v531
      %v588 = vpack.c.b16 %v532, %v532
      %v589 = vpack.c.b16 %v533, %v533
      %v590 = vpack.c.b16 %v534, %v534
      %v591 = vpack.c.b16 %v535, %v535
      %v592 = vpack.c.b16 %v536, %v536
      %v593 = vpack.c.b16 %v537, %v537
      %v594 = vpack.c.b16 %v538, %v538
      %v779 = vunpack.c.l.b16 %v255
      %v780 = vunpack.c.l.b16 %v256
      %v781 = vunpack.c.l.b16 %v257
      %v782 = vunpack.c.l.b16 %v258
      %v783 = vunpack.c.l.b16 %v259
      %v784 = vunpack.c.l.b16 %v260
      %v785 = vunpack.c.l.b16 %v261
      %v786 = vunpack.c.l.b16 %v262
      %v787 = vunpack.c.l.b16 %v263
      %v788 = vunpack.c.l.b16 %v264
      %v789 = vunpack.c.l.b16 %v265
      %v790 = vunpack.c.l.b16 %v266
      %v791 = vunpack.c.l.b16 %v267
      %v792 = vunpack.c.l.b16 %v268
      %v793 = vunpack.c.l.b16 %v269
      %v794 = vunpack.c.l.b16 %v270
      %v795 = vunpack.c.l.b16 %v271
      %v796 = vunpack.c.l.b16 %v272
      %v797 = vunpack.c.l.b16 %v273
      %v798 = vunpack.c.l.b16 %v274
      %v799 = vunpack.c.l.b16 %v275
      %v800 = vunpack.c.l.b16 %v276
      %v801 = vunpack.c.l.b16 %v277
      %v802 = vunpack.c.l.b16 %v278
      %v803 = vunpack.c.l.b16 %v279
      %v804 = vunpack.c.l.b16 %v280
      %v805 = vunpack.c.l.b16 %v281
      %v806 = vunpack.c.l.b16 %v282
      %v807 = vunpack.c.l.b16 %v283
      %v808 = vunpack.c.l.b16 %v284
      %v809 = vunpack.c.l.b16 %v285
      %v810 = vunpack.c.l.b16 %v286
      %v811 = vunpack.c.l.b16 %v287
      %v812 = vunpack.c.l.b16 %v288
      %v813 = vunpack.c.l.b16 %v289
      %v814 = vunpack.c.l.b16 %v290
      %v815 = vunpack.c.l.b16 %v291
      %v816 = vunpack.c.l.b16 %v292
      %v817 = vunpack.c.l.b16 %v293
      %v818 = vunpack.c.l.b16 %v294
      %v819 = vunpack.c.l.b16 %v295
      %v820 = vunpack.c.l.b16 %v296
      %v821 = vunpack.c.l.b16 %v297
      %v822 = vunpack.c.l.b16 %v298
      %v823 = vunpack.c.l.b16 %v299
      %v824 = vunpack.c.l.b16 %v300
      %v825 = vunpack.c.l.b16 %v301
      %v826 = vunpack.c.l.b16 %v302
      %v827 = vunpack.c.l.b16 %v303
      %v828 = vunpack.c.l.b16 %v304
      %v829 = vunpack.c.l.b16 %v305
      %v830 = vunpack.c.l.b16 %v306
      %v831 = vunpack.c.l.b16 %v307
      %v832 = vunpack.c.l.b16 %v308
      %v833 = vunpack.c.l.b16 %v309
      %v834 = vunpack.c.l.b16 %v310
      %v835 = vunpack.c.l.b16 %v311
      %v836 = vunpack.c.l.b16 %v312
      %v837 = vunpack.c.l.b16 %v313
      %v838 = vunpack.c.l.b16 %v314
      %v839 = vunpack.c.l.b16 %v315
      %v840 = vunpack.c.l.b16 %v316
      %v841 = vunpack.c.l.b16 %v317
      %v842 = vunpack.c.l.b16 %v318
      %v843 = vunpack.c.l.b16 %v319
      %v844 = vunpack.c.l.b16 %v320
      %v845 = vunpack.c.l.b16 %v321
      %v846 = vunpack.c.l.b16 %v322
      %v847 = vunpack.c.l.b16 %v323
      %v848 = vunpack.c.l.b16 %v324
      %v849 = vunpack.c.l.b16 %v325
      %v850 = vunpack.c.l.b16 %v326
      %v851 = vunpack.c.l.b16 %v327
      %v852 = vunpack.c.l.b16 %v328
      %v853 = vunpack.c.l.b16 %v329
      %v854 = vunpack.c.l.b16 %v330
      %v855 = vunpack.c.l.b16 %v331
      %v856 = vunpack.c.l.b16 %v332
      %v857 = vunpack.c.l.b16 %v333
      %v858 = vunpack.c.l.b16 %v334
      %v859 = vunpack.c.l.b16 %v335
      %v860 = vunpack.c.l.b16 %v336
      %v861 = vunpack.c.l.b16 %v337
      %v862 = vunpack.c.l.b16 %v338
      %v863 = vunpack.c.l.b16 %v339
      %v864 = vunpack.c.l.b16 %v340
      %v865 = vunpack.c.l.b16 %v341
      %v866 = vunpack.c.l.b16 %v342
      %v867 = vunpack.c.l.b16 %v343
      %v868 = vunpack.c.l.b16 %v344
      %v869 = vunpack.c.l.b16 %v345
      %v870 = vunpack.c.l.b16 %v346
      %v871 = vunpack.c.l.b16 %v347
      %v872 = vunpack.c.l.b16 %v348
      %v873 = vunpack.c.l.b16 %v349
      %v874 = vunpack.c.l.b16 %v350
      %v875 = vunpack.c.l.b16 %v351
      %v876 = vunpack.c.l.b16 %v352
      %v877 = vunpack.c.l.b16 %v353
      %v878 = vunpack.c.l.b16 %v354
      %v879 = vunpack.c.l.b16 %v355
      %v880 = vunpack.c.l.b16 %v356
      %v881 = vunpack.c.l.b16 %v357
      %v882 = vunpack.c.l.b16 %v358
      %v883 = vunpack.c.l.b16 %v359
      %v884 = vunpack.c.l.b16 %v360
      %v885 = vunpack.c.l.b16 %v361
      %v886 = vunpack.c.l.b16 %v362
      %v887 = vunpack.c.l.b16 %v363
      %v888 = vunpack.c.l.b16 %v364
      %v889 = vunpack.c.l.b16 %v365
      %v890 = vunpack.c.l.b16 %v366
      %v891 = vunpack.c.l.b16 %v367
      %v892 = vunpack.c.l.b16 %v368
      %v893 = vunpack.c.l.b16 %v369
      %v894 = vunpack.c.l.b16 %v370
      %v895 = vunpack.c.l.b16 %v371
      %v896 = vunpack.c.l.b16 %v372
      %v897 = vunpack.c.l.b16 %v373
      %v898 = vunpack.c.l.b16 %v374
      %v899 = vunpack.c.l.b16 %v375
      %v900 = vunpack.c.l.b16 %v376
      %v901 = vunpack.c.l.b16 %v377
      %v902 = vunpack.c.l.b16 %v378
      %v903 = vunpack.c.l.b16 %v379
      %v904 = vunpack.c.l.b16 %v380
      %v905 = vunpack.c.l.b16 %v381
      %v906 = vunpack.c.l.b16 %v382
      %v907 = vpack.c.b16 %v780, %v779
      %v908 = vpack.c.b16 %v782, %v781
      %v909 = vpack.c.b16 %v784, %v783
      %v910 = vpack.c.b16 %v786, %v785
      %v911 = vpack.c.b16 %v788, %v787
      %v912 = vpack.c.b16 %v790, %v789
      %v913 = vpack.c.b16 %v792, %v791
      %v914 = vpack.c.b16 %v794, %v793
      %v915 = vpack.c.b16 %v796, %v795
      %v916 = vpack.c.b16 %v798, %v797
      %v917 = vpack.c.b16 %v800, %v799
      %v918 = vpack.c.b16 %v802, %v801
      %v919 = vpack.c.b16 %v804, %v803
      %v920 = vpack.c.b16 %v806, %v805
      %v921 = vpack.c.b16 %v808, %v807
      %v922 = vpack.c.b16 %v810, %v809
      %v923 = vpack.c.b16 %v812, %v811
      %v924 = vpack.c.b16 %v814, %v813
      %v925 = vpack.c.b16 %v816, %v815
      %v926 = vpack.c.b16 %v818, %v817
      %v927 = vpack.c.b16 %v820, %v819
      %v928 = vpack.c.b16 %v822, %v821
      %v929 = vpack.c.b16 %v824, %v823
      %v930 = vpack.c.b16 %v826, %v825
      %v931 = vpack.c.b16 %v828, %v827
      %v932 = vpack.c.b16 %v830, %v829
      %v933 = vpack.c.b16 %v832, %v831
      %v934 = vpack.c.b16 %v834, %v833
      %v935 = vpack.c.b16 %v836, %v835
      %v936 = vpack.c.b16 %v838, %v837
      %v937 = vpack.c.b16 %v840, %v839
      %v938 = vpack.c.b16 %v842, %v841
      %v939 = vpack.c.b16 %v844, %v843
      %v940 = vpack.c.b16 %v846, %v845
      %v941 = vpack.c.b16 %v848, %v847
      %v942 = vpack.c.b16 %v850, %v849
      %v943 = vpack.c.b16 %v852, %v851
      %v944 = vpack.c.b16 %v854, %v853
      %v945 = vpack.c.b16 %v856, %v855
      %v946 = vpack.c.b16 %v858, %v857
      %v947 = vpack.c.b16 %v860, %v859
      %v948 = vpack.c.b16 %v862, %v861
      %v949 = vpack.c.b16 %v864, %v863
      %v950 = vpack.c.b16 %v866, %v865
      %v951 = vpack.c.b16 %v868, %v867
      %v952 = vpack.c.b16 %v870, %v869
      %v953 = vpack.c.b16 %v872, %v871
      %v954 = vpack.c.b16 %v874, %v873
      %v955 = vpack.c.b16 %v876, %v875
      %v956 = vpack.c.b16 %v878, %v877
      %v957 = vpack.c.b16 %v880, %v879
      %v958 = vpack.c.b16 %v882, %v881
      %v959 = vpack.c.b16 %v884, %v883
      %v960 = vpack.c.b16 %v886, %v885
      %v961 = vpack.c.b16 %v888, %v887
      %v962 = vpack.c.b16 %v890, %v889
      %v963 = vpack.c.b16 %v892, %v891
      %v964 = vpack.c.b16 %v894, %v893
      %v965 = vpack.c.b16 %v896, %v895
      %v966 = vpack.c.b16 %v898, %v897
      %v967 = vpack.c.b16 %v900, %v899
      %v968 = vpack.c.b16 %v902, %v901
      %v969 = vpack.c.b16 %v904, %v903
      %v970 = vpack.c.b16 %v906, %v905
      %1035 = vmatpush.bf16.msra.mxu0 %v914
      %1036 = vmatpush.bf16.msra.mxu0 %v913
      %1037 = vmatpush.bf16.msra.mxu0 %v912
      %1038 = vmatpush.bf16.msra.mxu0 %v911
      %1039 = vmatpush.bf16.msra.mxu0 %v910
      %1040 = vmatpush.bf16.msra.mxu0 %v909
      %1041 = vmatpush.bf16.msra.mxu0 %v908
      %1042 = vmatpush.bf16.msra.mxu0 %v907
      %1043 = vmatmul.bf16.gmra.mxu0 %v539
      %v1044 = vpop.f32.mrf.mxu0
      %v1045 = vadd.f32 0.0, %v1044
      %v1046 = vpop.f32.mrf.mxu0
      %v1047 = vadd.f32 0.0, %v1046
      %1048 = vmatmul.bf16.gmra.mxu0 %v547
      %v1049 = vpop.f32.mrf.mxu0
      %v1050 = vadd.f32 0.0, %v1049
      %v1051 = vpop.f32.mrf.mxu0
      %v1052 = vadd.f32 0.0, %v1051
      %1053 = vmatmul.bf16.gmra.mxu0 %v555
      %v1054 = vpop.f32.mrf.mxu0
      %v1055 = vadd.f32 0.0, %v1054
      %v1056 = vpop.f32.mrf.mxu0
      %v1057 = vadd.f32 0.0, %v1056
      %1058 = vmatmul.bf16.gmra.mxu0 %v563
      %v1059 = vpop.f32.mrf.mxu0
      %v1060 = vadd.f32 0.0, %v1059
      %v1061 = vpop.f32.mrf.mxu0
      %v1062 = vadd.f32 0.0, %v1061
      %1063 = vmatmul.bf16.gmra.mxu0 %v571
      %v1064 = vpop.f32.mrf.mxu0
      %v1065 = vadd.f32 0.0, %v1064
      %v1066 = vpop.f32.mrf.mxu0
      %v1067 = vadd.f32 0.0, %v1066
      %1068 = vmatmul.bf16.gmra.mxu0 %v579
      %v1069 = vpop.f32.mrf.mxu0
      %v1070 = vadd.f32 0.0, %v1069
      %v1071 = vpop.f32.mrf.mxu0
      %v1072 = vadd.f32 0.0, %v1071
      %1073 = vmatmul.bf16.gmra.mxu0 %v587
      %v1074 = vpop.f32.mrf.mxu0
      %v1075 = vadd.f32 0.0, %v1074
      %v1076 = vpop.f32.mrf.mxu0
      %1077 = vdwg.mxu0
      %1078 = vmatpush.bf16.msra.mxu0 %v922
      %1079 = vmatpush.bf16.msra.mxu0 %v921
      %1080 = vmatpush.bf16.msra.mxu0 %v920
      %1081 = vmatpush.bf16.msra.mxu0 %v919
      %1082 = vmatpush.bf16.msra.mxu0 %v918
      %1083 = vmatpush.bf16.msra.mxu0 %v917
      %1084 = vmatpush.bf16.msra.mxu0 %v916
      %1085 = vmatpush.bf16.msra.mxu0 %v915
      %1086 = vmatmul.bf16.gmra.mxu0 %v540
      %v1087 = vpop.f32.mrf.mxu0
      %v1088 = vadd.f32 %v1045, %v1087
      %v1089 = vpop.f32.mrf.mxu0
      %v1090 = vadd.f32 %v1047, %v1089
      %1091 = vmatmul.bf16.gmra.mxu0 %v548
      %v1092 = vpop.f32.mrf.mxu0
      %v1093 = vadd.f32 %v1050, %v1092
      %v1094 = vpop.f32.mrf.mxu0
      %v1095 = vadd.f32 %v1052, %v1094
      %1096 = vmatmul.bf16.gmra.mxu0 %v556
      %v1097 = vpop.f32.mrf.mxu0
      %v1098 = vadd.f32 %v1055, %v1097
      %v1099 = vpop.f32.mrf.mxu0
      %v1100 = vadd.f32 %v1057, %v1099
      %1101 = vmatmul.bf16.gmra.mxu0 %v564
      %v1102 = vpop.f32.mrf.mxu0
      %v1103 = vadd.f32 %v1060, %v1102
      %v1104 = vpop.f32.mrf.mxu0
      %v1105 = vadd.f32 %v1062, %v1104
      %1106 = vmatmul.bf16.gmra.mxu0 %v572
      %v1107 = vpop.f32.mrf.mxu0
      %v1108 = vadd.f32 %v1065, %v1107
      %v1109 = vpop.f32.mrf.mxu0
      %v1110 = vadd.f32 %v1067, %v1109
      %1111 = vmatmul.bf16.gmra.mxu0 %v580
      %v1112 = vpop.f32.mrf.mxu0
      %v1113 = vadd.f32 %v1070, %v1112
      %v1114 = vpop.f32.mrf.mxu0
      %v1115 = vadd.f32 %v1072, %v1114
      %1116 = vmatmul.bf16.gmra.mxu0 %v588
      %v1117 = vpop.f32.mrf.mxu0
      %v1118 = vadd.f32 %v1075, %v1117
      %v1119 = vpop.f32.mrf.mxu0
      %1120 = vdwg.mxu0
      %1121 = vmatpush.bf16.msra.mxu0 %v930
      %1122 = vmatpush.bf16.msra.mxu0 %v929
      %1123 = vmatpush.bf16.msra.mxu0 %v928
      %1124 = vmatpush.bf16.msra.mxu0 %v927
      %1125 = vmatpush.bf16.msra.mxu0 %v926
      %1126 = vmatpush.bf16.msra.mxu0 %v925
      %1127 = vmatpush.bf16.msra.mxu0 %v924
      %1128 = vmatpush.bf16.msra.mxu0 %v923
      %1129 = vmatmul.bf16.gmra.mxu0 %v541
      %v1130 = vpop.f32.mrf.mxu0
      %v1131 = vadd.f32 %v1088, %v1130
      %v1132 = vpop.f32.mrf.mxu0
      %v1133 = vadd.f32 %v1090, %v1132
      %1134 = vmatmul.bf16.gmra.mxu0 %v549
      %v1135 = vpop.f32.mrf.mxu0
      %v1136 = vadd.f32 %v1093, %v1135
      %v1137 = vpop.f32.mrf.mxu0
      %v1138 = vadd.f32 %v1095, %v1137
      %1139 = vmatmul.bf16.gmra.mxu0 %v557
      %v1140 = vpop.f32.mrf.mxu0
      %v1141 = vadd.f32 %v1098, %v1140
      %v1142 = vpop.f32.mrf.mxu0
      %v1143 = vadd.f32 %v1100, %v1142
      %1144 = vmatmul.bf16.gmra.mxu0 %v565
      %v1145 = vpop.f32.mrf.mxu0
      %v1146 = vadd.f32 %v1103, %v1145
      %v1147 = vpop.f32.mrf.mxu0
      %v1148 = vadd.f32 %v1105, %v1147
      %1149 = vmatmul.bf16.gmra.mxu0 %v573
      %v1150 = vpop.f32.mrf.mxu0
      %v1151 = vadd.f32 %v1108, %v1150
      %v1152 = vpop.f32.mrf.mxu0
      %v1153 = vadd.f32 %v1110, %v1152
      %1154 = vmatmul.bf16.gmra.mxu0 %v581
      %v1155 = vpop.f32.mrf.mxu0
      %v1156 = vadd.f32 %v1113, %v1155
      %v1157 = vpop.f32.mrf.mxu0
      %v1158 = vadd.f32 %v1115, %v1157
      %1159 = vmatmul.bf16.gmra.mxu0 %v589
      %v1160 = vpop.f32.mrf.mxu0
      %v1161 = vadd.f32 %v1118, %v1160
      %v1162 = vpop.f32.mrf.mxu0
      %1163 = vdwg.mxu0
      %1164 = vmatpush.bf16.msra.mxu0 %v938
      %1165 = vmatpush.bf16.msra.mxu0 %v937
      %1166 = vmatpush.bf16.msra.mxu0 %v936
      %1167 = vmatpush.bf16.msra.mxu0 %v935
      %1168 = vmatpush.bf16.msra.mxu0 %v934
      %1169 = vmatpush.bf16.msra.mxu0 %v933
      %1170 = vmatpush.bf16.msra.mxu0 %v932
      %1171 = vmatpush.bf16.msra.mxu0 %v931
      %1172 = vmatmul.bf16.gmra.mxu0 %v542
      %v1173 = vpop.f32.mrf.mxu0
      %v1174 = vadd.f32 %v1131, %v1173
      %v1175 = vpop.f32.mrf.mxu0
      %v1176 = vadd.f32 %v1133, %v1175
      %1177 = vmatmul.bf16.gmra.mxu0 %v550
      %v1178 = vpop.f32.mrf.mxu0
      %v1179 = vadd.f32 %v1136, %v1178
      %v1180 = vpop.f32.mrf.mxu0
      %v1181 = vadd.f32 %v1138, %v1180
      %1182 = vmatmul.bf16.gmra.mxu0 %v558
      %v1183 = vpop.f32.mrf.mxu0
      %v1184 = vadd.f32 %v1141, %v1183
      %v1185 = vpop.f32.mrf.mxu0
      %v1186 = vadd.f32 %v1143, %v1185
      %1187 = vmatmul.bf16.gmra.mxu0 %v566
      %v1188 = vpop.f32.mrf.mxu0
      %v1189 = vadd.f32 %v1146, %v1188
      %v1190 = vpop.f32.mrf.mxu0
      %v1191 = vadd.f32 %v1148, %v1190
      %1192 = vmatmul.bf16.gmra.mxu0 %v574
      %v1193 = vpop.f32.mrf.mxu0
      %v1194 = vadd.f32 %v1151, %v1193
      %v1195 = vpop.f32.mrf.mxu0
      %v1196 = vadd.f32 %v1153, %v1195
      %1197 = vmatmul.bf16.gmra.mxu0 %v582
      %v1198 = vpop.f32.mrf.mxu0
      %v1199 = vadd.f32 %v1156, %v1198
      %v1200 = vpop.f32.mrf.mxu0
      %v1201 = vadd.f32 %v1158, %v1200
      %1202 = vmatmul.bf16.gmra.mxu0 %v590
      %v1203 = vpop.f32.mrf.mxu0
      %v1204 = vadd.f32 %v1161, %v1203
      %v1205 = vpop.f32.mrf.mxu0
      %1206 = vdwg.mxu0
      %1207 = vmatpush.bf16.msra.mxu0 %v946
      %1208 = vmatpush.bf16.msra.mxu0 %v945
      %1209 = vmatpush.bf16.msra.mxu0 %v944
      %1210 = vmatpush.bf16.msra.mxu0 %v943
      %1211 = vmatpush.bf16.msra.mxu0 %v942
      %1212 = vmatpush.bf16.msra.mxu0 %v941
      %1213 = vmatpush.bf16.msra.mxu0 %v940
      %1214 = vmatpush.bf16.msra.mxu0 %v939
      %1215 = vmatmul.bf16.gmra.mxu0 %v543
      %v1216 = vpop.f32.mrf.mxu0
      %v1217 = vadd.f32 %v1174, %v1216
      %v1218 = vpop.f32.mrf.mxu0
      %v1219 = vadd.f32 %v1176, %v1218
      %1220 = vmatmul.bf16.gmra.mxu0 %v551
      %v1221 = vpop.f32.mrf.mxu0
      %v1222 = vadd.f32 %v1179, %v1221
      %v1223 = vpop.f32.mrf.mxu0
      %v1224 = vadd.f32 %v1181, %v1223
      %1225 = vmatmul.bf16.gmra.mxu0 %v559
      %v1226 = vpop.f32.mrf.mxu0
      %v1227 = vadd.f32 %v1184, %v1226
      %v1228 = vpop.f32.mrf.mxu0
      %v1229 = vadd.f32 %v1186, %v1228
      %1230 = vmatmul.bf16.gmra.mxu0 %v567
      %v1231 = vpop.f32.mrf.mxu0
      %v1232 = vadd.f32 %v1189, %v1231
      %v1233 = vpop.f32.mrf.mxu0
      %v1234 = vadd.f32 %v1191, %v1233
      %1235 = vmatmul.bf16.gmra.mxu0 %v575
      %v1236 = vpop.f32.mrf.mxu0
      %v1237 = vadd.f32 %v1194, %v1236
      %v1238 = vpop.f32.mrf.mxu0
      %v1239 = vadd.f32 %v1196, %v1238
      %1240 = vmatmul.bf16.gmra.mxu0 %v583
      %v1241 = vpop.f32.mrf.mxu0
      %v1242 = vadd.f32 %v1199, %v1241
      %v1243 = vpop.f32.mrf.mxu0
      %v1244 = vadd.f32 %v1201, %v1243
      %1245 = vmatmul.bf16.gmra.mxu0 %v591
      %v1246 = vpop.f32.mrf.mxu0
      %v1247 = vadd.f32 %v1204, %v1246
      %v1248 = vpop.f32.mrf.mxu0
      %1249 = vdwg.mxu0
      %1250 = vmatpush.bf16.msra.mxu0 %v954
      %1251 = vmatpush.bf16.msra.mxu0 %v953
      %1252 = vmatpush.bf16.msra.mxu0 %v952
      %1253 = vmatpush.bf16.msra.mxu0 %v951
      %1254 = vmatpush.bf16.msra.mxu0 %v950
      %1255 = vmatpush.bf16.msra.mxu0 %v949
      %1256 = vmatpush.bf16.msra.mxu0 %v948
      %1257 = vmatpush.bf16.msra.mxu0 %v947
      %1258 = vmatmul.bf16.gmra.mxu0 %v544
      %v1259 = vpop.f32.mrf.mxu0
      %v1260 = vadd.f32 %v1217, %v1259
      %v1261 = vpop.f32.mrf.mxu0
      %v1262 = vadd.f32 %v1219, %v1261
      %1263 = vmatmul.bf16.gmra.mxu0 %v552
      %v1264 = vpop.f32.mrf.mxu0
      %v1265 = vadd.f32 %v1222, %v1264
      %v1266 = vpop.f32.mrf.mxu0
      %v1267 = vadd.f32 %v1224, %v1266
      %1268 = vmatmul.bf16.gmra.mxu0 %v560
      %v1269 = vpop.f32.mrf.mxu0
      %v1270 = vadd.f32 %v1227, %v1269
      %v1271 = vpop.f32.mrf.mxu0
      %v1272 = vadd.f32 %v1229, %v1271
      %1273 = vmatmul.bf16.gmra.mxu0 %v568
      %v1274 = vpop.f32.mrf.mxu0
      %v1275 = vadd.f32 %v1232, %v1274
      %v1276 = vpop.f32.mrf.mxu0
      %v1277 = vadd.f32 %v1234, %v1276
      %1278 = vmatmul.bf16.gmra.mxu0 %v576
      %v1279 = vpop.f32.mrf.mxu0
      %v1280 = vadd.f32 %v1237, %v1279
      %v1281 = vpop.f32.mrf.mxu0
      %v1282 = vadd.f32 %v1239, %v1281
      %1283 = vmatmul.bf16.gmra.mxu0 %v584
      %v1284 = vpop.f32.mrf.mxu0
      %v1285 = vadd.f32 %v1242, %v1284
      %v1286 = vpop.f32.mrf.mxu0
      %v1287 = vadd.f32 %v1244, %v1286
      %1288 = vmatmul.bf16.gmra.mxu0 %v592
      %v1289 = vpop.f32.mrf.mxu0
      %v1290 = vadd.f32 %v1247, %v1289
      %v1291 = vpop.f32.mrf.mxu0
      %1292 = vdwg.mxu0
      %1293 = vmatpush.bf16.msra.mxu0 %v962
      %1294 = vmatpush.bf16.msra.mxu0 %v961
      %1295 = vmatpush.bf16.msra.mxu0 %v960
      %1296 = vmatpush.bf16.msra.mxu0 %v959
      %1297 = vmatpush.bf16.msra.mxu0 %v958
      %1298 = vmatpush.bf16.msra.mxu0 %v957
      %1299 = vmatpush.bf16.msra.mxu0 %v956
      %1300 = vmatpush.bf16.msra.mxu0 %v955
      %1301 = vmatmul.bf16.gmra.mxu0 %v545
      %v1302 = vpop.f32.mrf.mxu0
      %v1303 = vadd.f32 %v1260, %v1302
      %v1304 = vpop.f32.mrf.mxu0
      %v1305 = vadd.f32 %v1262, %v1304
      %1306 = vmatmul.bf16.gmra.mxu0 %v553
      %v1307 = vpop.f32.mrf.mxu0
      %v1308 = vadd.f32 %v1265, %v1307
      %v1309 = vpop.f32.mrf.mxu0
      %v1310 = vadd.f32 %v1267, %v1309
      %1311 = vmatmul.bf16.gmra.mxu0 %v561
      %v1312 = vpop.f32.mrf.mxu0
      %v1313 = vadd.f32 %v1270, %v1312
      %v1314 = vpop.f32.mrf.mxu0
      %v1315 = vadd.f32 %v1272, %v1314
      %1316 = vmatmul.bf16.gmra.mxu0 %v569
      %v1317 = vpop.f32.mrf.mxu0
      %v1318 = vadd.f32 %v1275, %v1317
      %v1319 = vpop.f32.mrf.mxu0
      %v1320 = vadd.f32 %v1277, %v1319
      %1321 = vmatmul.bf16.gmra.mxu0 %v577
      %v1322 = vpop.f32.mrf.mxu0
      %v1323 = vadd.f32 %v1280, %v1322
      %v1324 = vpop.f32.mrf.mxu0
      %v1325 = vadd.f32 %v1282, %v1324
      %1326 = vmatmul.bf16.gmra.mxu0 %v585
      %v1327 = vpop.f32.mrf.mxu0
      %v1328 = vadd.f32 %v1285, %v1327
      %v1329 = vpop.f32.mrf.mxu0
      %v1330 = vadd.f32 %v1287, %v1329
      %1331 = vmatmul.bf16.gmra.mxu0 %v593
      %v1332 = vpop.f32.mrf.mxu0
      %v1333 = vadd.f32 %v1290, %v1332
      %v1334 = vpop.f32.mrf.mxu0
      %1335 = vdwg.mxu0
      %1336 = vmatpush.bf16.msra.mxu0 %v970
      %1337 = vmatpush.bf16.msra.mxu0 %v969
      %1338 = vmatpush.bf16.msra.mxu0 %v968
      %1339 = vmatpush.bf16.msra.mxu0 %v967
      %1340 = vmatpush.bf16.msra.mxu0 %v966
      %1341 = vmatpush.bf16.msra.mxu0 %v965
      %1342 = vmatpush.bf16.msra.mxu0 %v964
      %1343 = vmatpush.bf16.msra.mxu0 %v963
      %1344 = vmatmul.bf16.gmra.mxu0 %v546
      %v1345 = vpop.f32.mrf.mxu0
      %v1346 = vadd.f32 %v1303, %v1345
      %v1347 = vpop.f32.mrf.mxu0
      %v1348 = vadd.f32 %v1305, %v1347
      %1349 = vmatmul.bf16.gmra.mxu0 %v554
      %v1350 = vpop.f32.mrf.mxu0
      %v1351 = vadd.f32 %v1308, %v1350
      %v1352 = vpop.f32.mrf.mxu0
      %v1353 = vadd.f32 %v1310, %v1352
      %1354 = vmatmul.bf16.gmra.mxu0 %v562
      %v1355 = vpop.f32.mrf.mxu0
      %v1356 = vadd.f32 %v1313, %v1355
      %v1357 = vpop.f32.mrf.mxu0
      %v1358 = vadd.f32 %v1315, %v1357
      %1359 = vmatmul.bf16.gmra.mxu0 %v570
      %v1360 = vpop.f32.mrf.mxu0
      %v1361 = vadd.f32 %v1318, %v1360
      %v1362 = vpop.f32.mrf.mxu0
      %v1363 = vadd.f32 %v1320, %v1362
      %1364 = vmatmul.bf16.gmra.mxu0 %v578
      %v1365 = vpop.f32.mrf.mxu0
      %v1366 = vadd.f32 %v1323, %v1365
      %v1367 = vpop.f32.mrf.mxu0
      %v1368 = vadd.f32 %v1325, %v1367
      %1369 = vmatmul.bf16.gmra.mxu0 %v586
      %v1370 = vpop.f32.mrf.mxu0
      %v1371 = vadd.f32 %v1328, %v1370
      %v1372 = vpop.f32.mrf.mxu0
      %v1373 = vadd.f32 %v1330, %v1372
      %1374 = vmatmul.bf16.gmra.mxu0 %v594
      %v1375 = vpop.f32.mrf.mxu0
      %v1376 = vadd.f32 %v1333, %v1375
      %v1377 = vpop.f32.mrf.mxu0
      %1378 = vdwg.mxu0
      %s1379 = smul.u32 %s15, 104
      %s1380 = scalar_lea.vmem %s4, %s1379
      %1381 = vst [vmem:[%s1380] sm:$0xff] %v1346
      %1382 = vst [vmem:[%s1380 + $0x8] sm:$0xff] %v1348
      %1383 = vst [vmem:[%s1380 + $0x10] sm:$0xff] %v1351
      %1384 = vst [vmem:[%s1380 + $0x18] sm:$0xff] %v1353
      %1385 = vst [vmem:[%s1380 + $0x20] sm:$0xff] %v1356
      %1386 = vst [vmem:[%s1380 + $0x28] sm:$0xff] %v1358
      %1387 = vst [vmem:[%s1380 + $0x30] sm:$0xff] %v1361
      %1388 = vst [vmem:[%s1380 + $0x38] sm:$0xff] %v1363
      %1389 = vst [vmem:[%s1380 + $0x40] sm:$0xff] %v1366
      %1390 = vst [vmem:[%s1380 + $0x48] sm:$0xff] %v1368
      %1391 = vst [vmem:[%s1380 + $0x50] sm:$0xff] %v1371
      %1392 = vst [vmem:[%s1380 + $0x58] sm:$0xff] %v1373
      %1393 = vst [vmem:[%s1380 + $0x60] sm:$0x3] %v1376
      %p1394 = scmp.eq.s32.totalorder %s15, 3
      // Predicated region
      $region37: #{generator_forward.4} parent=35 // pred_check
        %p1395 = pneg %p1394
      $region38: #{generator_forward.4} parent=35 // pred_check_branch
        %1397 = sbr.rel (%p1395) target = $region40
      $region39: #{generator_forward.4} parent=35 // pred_region
        %v1398 = vld [vmem:[%s4] sm:$0xff]
        %v1399 = vld [vmem:[%s4 + $0x8] sm:$0xff]
        %v1400 = vld [vmem:[%s4 + $0x10] sm:$0xff]
        %v1401 = vld [vmem:[%s4 + $0x18] sm:$0xff]
        %v1402 = vld [vmem:[%s4 + $0x20] sm:$0xff]
        %v1403 = vld [vmem:[%s4 + $0x28] sm:$0xff]
        %v1404 = vld [vmem:[%s4 + $0x30] sm:$0xff]
        %v1405 = vld [vmem:[%s4 + $0x38] sm:$0xff]
        %v1406 = vld [vmem:[%s4 + $0x40] sm:$0xff]
        %v1407 = vld [vmem:[%s4 + $0x48] sm:$0xff]
        %v1408 = vld [vmem:[%s4 + $0x50] sm:$0xff]
        %v1409 = vld [vmem:[%s4 + $0x58] sm:$0xff]
        %v1410 = vld [vmem:[%s4 + $0x60] sm:$0x3]
        %v1411 = vadd.f32 %v1398, %v1399
        %v1412 = vadd.f32 %v1411, %v1400
        %v1413 = vadd.f32 %v1412, %v1401
        %v1414 = vadd.f32 %v1413, %v1402
        %v1415 = vadd.f32 %v1414, %v1403
        %v1416 = vadd.f32 %v1415, %v1404
        %v1417 = vadd.f32 %v1416, %v1405
        %v1418 = vadd.f32 %v1417, %v1406
        %v1419 = vadd.f32 %v1418, %v1407
        %v1420 = vadd.f32 %v1419, %v1408
        %v1421 = vadd.f32 %v1420, %v1409
        %vm1422 = vcmask 1041408
        %v1423 = vsel %vm1422, %v1410, 0.0
        %v1424 = vadd.f32 %v1421, %v1423
        %v1425 = vrot.slane %v1424, 4
        %v1426 = vadd.f32 %v1424, %v1425
        %v1427 = vrot.slane %v1426, 2
        %v1428 = vadd.f32 %v1426, %v1427
        %v1429 = vrot.slane %v1428, 1
        %v1430 = vadd.f32 %v1428, %v1429
        %v1431 = vadd.f32 %v1430, 0.0
        %s1432 = scalar_lea.vmem %s4, 104
        %v1433 = vld [vmem:[%s1432] sm:$0xff]
        %v1434 = vld [vmem:[%s1432 + $0x8] sm:$0xff]
        %v1435 = vld [vmem:[%s1432 + $0x10] sm:$0xff]
        %v1436 = vld [vmem:[%s1432 + $0x18] sm:$0xff]
        %v1437 = vld [vmem:[%s1432 + $0x20] sm:$0xff]
        %v1438 = vld [vmem:[%s1432 + $0x28] sm:$0xff]
        %v1439 = vld [vmem:[%s1432 + $0x30] sm:$0xff]
        %v1440 = vld [vmem:[%s1432 + $0x38] sm:$0xff]
        %v1441 = vld [vmem:[%s1432 + $0x40] sm:$0xff]
        %v1442 = vld [vmem:[%s1432 + $0x48] sm:$0xff]
        %v1443 = vld [vmem:[%s1432 + $0x50] sm:$0xff]
        %v1444 = vld [vmem:[%s1432 + $0x58] sm:$0xff]
        %v1445 = vld [vmem:[%s1432 + $0x60] sm:$0x3]
        %v1446 = vadd.f32 %v1433, %v1434
        %v1447 = vadd.f32 %v1446, %v1435
        %v1448 = vadd.f32 %v1447, %v1436
        %v1449 = vadd.f32 %v1448, %v1437
        %v1450 = vadd.f32 %v1449, %v1438
        %v1451 = vadd.f32 %v1450, %v1439
        %v1452 = vadd.f32 %v1451, %v1440
        %v1453 = vadd.f32 %v1452, %v1441
        %v1454 = vadd.f32 %v1453, %v1442
        %v1455 = vadd.f32 %v1454, %v1443
        %v1456 = vadd.f32 %v1455, %v1444
        %v1457 = vsel %vm1422, %v1445, 0.0
        %v1458 = vadd.f32 %v1456, %v1457
        %v1459 = vrot.slane %v1458, 4
        %v1460 = vadd.f32 %v1458, %v1459
        %v1461 = vrot.slane %v1460, 2
        %v1462 = vadd.f32 %v1460, %v1461
        %v1463 = vrot.slane %v1462, 1
        %v1464 = vadd.f32 %v1462, %v1463
        %v1465 = vadd.f32 %v1431, %v1464
        %s1466 = scalar_lea.vmem %s4, 208
        %v1467 = vld [vmem:[%s1466] sm:$0xff]
        %v1468 = vld [vmem:[%s1466 + $0x8] sm:$0xff]
        %v1469 = vld [vmem:[%s1466 + $0x10] sm:$0xff]
        %v1470 = vld [vmem:[%s1466 + $0x18] sm:$0xff]
        %v1471 = vld [vmem:[%s1466 + $0x20] sm:$0xff]
        %v1472 = vld [vmem:[%s1466 + $0x28] sm:$0xff]
        %v1473 = vld [vmem:[%s1466 + $0x30] sm:$0xff]
        %v1474 = vld [vmem:[%s1466 + $0x38] sm:$0xff]
        %v1475 = vld [vmem:[%s1466 + $0x40] sm:$0xff]
        %v1476 = vld [vmem:[%s1466 + $0x48] sm:$0xff]
        %v1477 = vld [vmem:[%s1466 + $0x50] sm:$0xff]
        %v1478 = vld [vmem:[%s1466 + $0x58] sm:$0xff]
        %v1479 = vld [vmem:[%s1466 + $0x60] sm:$0x3]
        %v1480 = vadd.f32 %v1467, %v1468
        %v1481 = vadd.f32 %v1480, %v1469
        %v1482 = vadd.f32 %v1481, %v1470
        %v1483 = vadd.f32 %v1482, %v1471
        %v1484 = vadd.f32 %v1483, %v1472
        %v1485 = vadd.f32 %v1484, %v1473
        %v1486 = vadd.f32 %v1485, %v1474
        %v1487 = vadd.f32 %v1486, %v1475
        %v1488 = vadd.f32 %v1487, %v1476
        %v1489 = vadd.f32 %v1488, %v1477
        %v1490 = vadd.f32 %v1489, %v1478
        %v1491 = vsel %vm1422, %v1479, 0.0
        %v1492 = vadd.f32 %v1490, %v1491
        %v1493 = vrot.slane %v1492, 4
        %v1494 = vadd.f32 %v1492, %v1493
        %v1495 = vrot.slane %v1494, 2
        %v1496 = vadd.f32 %v1494, %v1495
        %v1497 = vrot.slane %v1496, 1
        %v1498 = vadd.f32 %v1496, %v1497
        %v1499 = vadd.f32 %v1465, %v1498
        %s1500 = scalar_lea.vmem %s4, 312
        %v1501 = vld [vmem:[%s1500] sm:$0xff]
        %v1502 = vld [vmem:[%s1500 + $0x8] sm:$0xff]
        %v1503 = vld [vmem:[%s1500 + $0x10] sm:$0xff]
        %v1504 = vld [vmem:[%s1500 + $0x18] sm:$0xff]
        %v1505 = vld [vmem:[%s1500 + $0x20] sm:$0xff]
        %v1506 = vld [vmem:[%s1500 + $0x28] sm:$0xff]
        %v1507 = vld [vmem:[%s1500 + $0x30] sm:$0xff]
        %v1508 = vld [vmem:[%s1500 + $0x38] sm:$0xff]
        %v1509 = vld [vmem:[%s1500 + $0x40] sm:$0xff]
        %v1510 = vld [vmem:[%s1500 + $0x48] sm:$0xff]
        %v1511 = vld [vmem:[%s1500 + $0x50] sm:$0xff]
        %v1512 = vld [vmem:[%s1500 + $0x58] sm:$0xff]
        %v1513 = vld [vmem:[%s1500 + $0x60] sm:$0x3]
        %v1514 = vadd.f32 %v1501, %v1502
        %v1515 = vadd.f32 %v1514, %v1503
        %v1516 = vadd.f32 %v1515, %v1504
        %v1517 = vadd.f32 %v1516, %v1505
        %v1518 = vadd.f32 %v1517, %v1506
        %v1519 = vadd.f32 %v1518, %v1507
        %v1520 = vadd.f32 %v1519, %v1508
        %v1521 = vadd.f32 %v1520, %v1509
        %v1522 = vadd.f32 %v1521, %v1510
        %v1523 = vadd.f32 %v1522, %v1511
        %v1524 = vadd.f32 %v1523, %v1512
        %v1525 = vsel %vm1422, %v1513, 0.0
        %v1526 = vadd.f32 %v1524, %v1525
        %v1527 = vrot.slane %v1526, 4
        %v1528 = vadd.f32 %v1526, %v1527
        %v1529 = vrot.slane %v1528, 2
        %v1530 = vadd.f32 %v1528, %v1529
        %v1531 = vrot.slane %v1530, 1
        %v1532 = vadd.f32 %v1530, %v1531
        %v1533 = vadd.f32 %v1499, %v1532
        %v1534 = vrcp.pop 392.0
        %v1535 = vmul.f32 392.0, %v1534
        %v1536 = vsub.f32 1.0, %v1535
        %v1537 = vmul.f32 %v1534, %v1536
        %v1538 = vadd.f32 %v1534, %v1537
        %vm1539 = vweird.f32 %v1534
        %v1540 = vsel %vm1539, %v1534, %v1538
        %v1541 = vmul.f32 %v1533, %v1540
        %v1542 = vsub.f32 %v1398, %v1541
        %v1543 = vsub.f32 %v1399, %v1541
        %v1544 = vsub.f32 %v1400, %v1541
        %v1545 = vsub.f32 %v1401, %v1541
        %v1546 = vsub.f32 %v1402, %v1541
        %v1547 = vsub.f32 %v1403, %v1541
        %v1548 = vsub.f32 %v1404, %v1541
        %v1549 = vsub.f32 %v1405, %v1541
        %v1550 = vsub.f32 %v1406, %v1541
        %v1551 = vsub.f32 %v1407, %v1541
        %v1552 = vsub.f32 %v1408, %v1541
        %v1553 = vsub.f32 %v1409, %v1541
        %v1554 = vsub.f32 %v1410, %v1541
        %v1555 = vmul.f32 %v1542, %v1542
        %v1556 = vmul.f32 %v1543, %v1543
        %v1557 = vmul.f32 %v1544, %v1544
        %v1558 = vmul.f32 %v1545, %v1545
        %v1559 = vmul.f32 %v1546, %v1546
        %v1560 = vmul.f32 %v1547, %v1547
        %v1561 = vmul.f32 %v1548, %v1548
        %v1562 = vmul.f32 %v1549, %v1549
        %v1563 = vmul.f32 %v1550, %v1550
        %v1564 = vmul.f32 %v1551, %v1551
        %v1565 = vmul.f32 %v1552, %v1552
        %v1566 = vmul.f32 %v1553, %v1553
        %v1567 = vmul.f32 %v1554, %v1554
        %v1568 = vadd.f32 %v1555, %v1556
        %v1569 = vadd.f32 %v1568, %v1557
        %v1570 = vadd.f32 %v1569, %v1558
        %v1571 = vadd.f32 %v1570, %v1559
        %v1572 = vadd.f32 %v1571, %v1560
        %v1573 = vadd.f32 %v1572, %v1561
        %v1574 = vadd.f32 %v1573, %v1562
        %v1575 = vadd.f32 %v1574, %v1563
        %v1576 = vadd.f32 %v1575, %v1564
        %v1577 = vadd.f32 %v1576, %v1565
        %v1578 = vadd.f32 %v1577, %v1566
        %v1579 = vsel %vm1422, %v1567, 0.0
        %v1580 = vadd.f32 %v1578, %v1579
        %v1581 = vrot.slane %v1580, 4
        %v1582 = vadd.f32 %v1580, %v1581
        %v1583 = vrot.slane %v1582, 2
        %v1584 = vadd.f32 %v1582, %v1583
        %v1585 = vrot.slane %v1584, 1
        %v1586 = vadd.f32 %v1584, %v1585
        %v1587 = vadd.f32 %v1586, 0.0
        %v1588 = vsub.f32 %v1433, %v1541
        %v1589 = vsub.f32 %v1434, %v1541
        %v1590 = vsub.f32 %v1435, %v1541
        %v1591 = vsub.f32 %v1436, %v1541
        %v1592 = vsub.f32 %v1437, %v1541
        %v1593 = vsub.f32 %v1438, %v1541
        %v1594 = vsub.f32 %v1439, %v1541
        %v1595 = vsub.f32 %v1440, %v1541
        %v1596 = vsub.f32 %v1441, %v1541
        %v1597 = vsub.f32 %v1442, %v1541
        %v1598 = vsub.f32 %v1443, %v1541
        %v1599 = vsub.f32 %v1444, %v1541
        %v1600 = vsub.f32 %v1445, %v1541
        %v1601 = vmul.f32 %v1588, %v1588
        %v1602 = vmul.f32 %v1589, %v1589
        %v1603 = vmul.f32 %v1590, %v1590
        %v1604 = vmul.f32 %v1591, %v1591
        %v1605 = vmul.f32 %v1592, %v1592
        %v1606 = vmul.f32 %v1593, %v1593
        %v1607 = vmul.f32 %v1594, %v1594
        %v1608 = vmul.f32 %v1595, %v1595
        %v1609 = vmul.f32 %v1596, %v1596
        %v1610 = vmul.f32 %v1597, %v1597
        %v1611 = vmul.f32 %v1598, %v1598
        %v1612 = vmul.f32 %v1599, %v1599
        %v1613 = vmul.f32 %v1600, %v1600
        %v1614 = vadd.f32 %v1601, %v1602
        %v1615 = vadd.f32 %v1614, %v1603
        %v1616 = vadd.f32 %v1615, %v1604
        %v1617 = vadd.f32 %v1616, %v1605
        %v1618 = vadd.f32 %v1617, %v1606
        %v1619 = vadd.f32 %v1618, %v1607
        %v1620 = vadd.f32 %v1619, %v1608
        %v1621 = vadd.f32 %v1620, %v1609
        %v1622 = vadd.f32 %v1621, %v1610
        %v1623 = vadd.f32 %v1622, %v1611
        %v1624 = vadd.f32 %v1623, %v1612
        %v1625 = vsel %vm1422, %v1613, 0.0
        %v1626 = vadd.f32 %v1624, %v1625
        %v1627 = vrot.slane %v1626, 4
        %v1628 = vadd.f32 %v1626, %v1627
        %v1629 = vrot.slane %v1628, 2
        %v1630 = vadd.f32 %v1628, %v1629
        %v1631 = vrot.slane %v1630, 1
        %v1632 = vadd.f32 %v1630, %v1631
        %v1633 = vadd.f32 %v1587, %v1632
        %v1634 = vsub.f32 %v1467, %v1541
        %v1635 = vsub.f32 %v1468, %v1541
        %v1636 = vsub.f32 %v1469, %v1541
        %v1637 = vsub.f32 %v1470, %v1541
        %v1638 = vsub.f32 %v1471, %v1541
        %v1639 = vsub.f32 %v1472, %v1541
        %v1640 = vsub.f32 %v1473, %v1541
        %v1641 = vsub.f32 %v1474, %v1541
        %v1642 = vsub.f32 %v1475, %v1541
        %v1643 = vsub.f32 %v1476, %v1541
        %v1644 = vsub.f32 %v1477, %v1541
        %v1645 = vsub.f32 %v1478, %v1541
        %v1646 = vsub.f32 %v1479, %v1541
        %v1647 = vmul.f32 %v1634, %v1634
        %v1648 = vmul.f32 %v1635, %v1635
        %v1649 = vmul.f32 %v1636, %v1636
        %v1650 = vmul.f32 %v1637, %v1637
        %v1651 = vmul.f32 %v1638, %v1638
        %v1652 = vmul.f32 %v1639, %v1639
        %v1653 = vmul.f32 %v1640, %v1640
        %v1654 = vmul.f32 %v1641, %v1641
        %v1655 = vmul.f32 %v1642, %v1642
        %v1656 = vmul.f32 %v1643, %v1643
        %v1657 = vmul.f32 %v1644, %v1644
        %v1658 = vmul.f32 %v1645, %v1645
        %v1659 = vmul.f32 %v1646, %v1646
        %v1660 = vadd.f32 %v1647, %v1648
        %v1661 = vadd.f32 %v1660, %v1649
        %v1662 = vadd.f32 %v1661, %v1650
        %v1663 = vadd.f32 %v1662, %v1651
        %v1664 = vadd.f32 %v1663, %v1652
        %v1665 = vadd.f32 %v1664, %v1653
        %v1666 = vadd.f32 %v1665, %v1654
        %v1667 = vadd.f32 %v1666, %v1655
        %v1668 = vadd.f32 %v1667, %v1656
        %v1669 = vadd.f32 %v1668, %v1657
        %v1670 = vadd.f32 %v1669, %v1658
        %v1671 = vsel %vm1422, %v1659, 0.0
        %v1672 = vadd.f32 %v1670, %v1671
        %v1673 = vrot.slane %v1672, 4
        %v1674 = vadd.f32 %v1672, %v1673
        %v1675 = vrot.slane %v1674, 2
        %v1676 = vadd.f32 %v1674, %v1675
        %v1677 = vrot.slane %v1676, 1
        %v1678 = vadd.f32 %v1676, %v1677
        %v1679 = vadd.f32 %v1633, %v1678
        %v1680 = vsub.f32 %v1501, %v1541
        %v1681 = vsub.f32 %v1502, %v1541
        %v1682 = vsub.f32 %v1503, %v1541
        %v1683 = vsub.f32 %v1504, %v1541
        %v1684 = vsub.f32 %v1505, %v1541
        %v1685 = vsub.f32 %v1506, %v1541
        %v1686 = vsub.f32 %v1507, %v1541
        %v1687 = vsub.f32 %v1508, %v1541
        %v1688 = vsub.f32 %v1509, %v1541
        %v1689 = vsub.f32 %v1510, %v1541
        %v1690 = vsub.f32 %v1511, %v1541
        %v1691 = vsub.f32 %v1512, %v1541
        %v1692 = vsub.f32 %v1513, %v1541
        %v1693 = vmul.f32 %v1680, %v1680
        %v1694 = vmul.f32 %v1681, %v1681
        %v1695 = vmul.f32 %v1682, %v1682
        %v1696 = vmul.f32 %v1683, %v1683
        %v1697 = vmul.f32 %v1684, %v1684
        %v1698 = vmul.f32 %v1685, %v1685
        %v1699 = vmul.f32 %v1686, %v1686
        %v1700 = vmul.f32 %v1687, %v1687
        %v1701 = vmul.f32 %v1688, %v1688
        %v1702 = vmul.f32 %v1689, %v1689
        %v1703 = vmul.f32 %v1690, %v1690
        %v1704 = vmul.f32 %v1691, %v1691
        %v1705 = vmul.f32 %v1692, %v1692
        %v1706 = vadd.f32 %v1693, %v1694
        %v1707 = vadd.f32 %v1706, %v1695
        %v1708 = vadd.f32 %v1707, %v1696
        %v1709 = vadd.f32 %v1708, %v1697
        %v1710 = vadd.f32 %v1709, %v1698
        %v1711 = vadd.f32 %v1710, %v1699
        %v1712 = vadd.f32 %v1711, %v1700
        %v1713 = vadd.f32 %v1712, %v1701
        %v1714 = vadd.f32 %v1713, %v1702
        %v1715 = vadd.f32 %v1714, %v1703
        %v1716 = vadd.f32 %v1715, %v1704
        %v1717 = vsel %vm1422, %v1705, 0.0
        %v1718 = vadd.f32 %v1716, %v1717
        %v1719 = vrot.slane %v1718, 4
        %v1720 = vadd.f32 %v1718, %v1719
        %v1721 = vrot.slane %v1720, 2
        %v1722 = vadd.f32 %v1720, %v1721
        %v1723 = vrot.slane %v1722, 1
        %v1724 = vadd.f32 %v1722, %v1723
        %v1725 = vadd.f32 %v1679, %v1724
        %v1726 = vmul.f32 %v1725, %v1540
        %v1727 = vld [vmem:[%s2] sm:$0x1]
        %v1728 = vadd.f32 %v1726, 1e-05
        %v1729 = vrsqrt.pop %v1728
        %v1730 = vmul.f32 %v1729, %v1728
        %v1731 = vmul.f32 %v1730, %v1729
        %v1732 = vmul.f32 0.5, %v1731
        %v1733 = vsub.f32 1.5, %v1732
        %v1734 = vmul.f32 %v1729, %v1733
        %vm1735 = vweird.f32 %v1728
        %vm1736 = vweird.f32 %v1729
        %vm1737 = vmor %vm1735, %vm1736
        %v1738 = vsel %vm1737, %v1729, %v1734
        %v1739 = vmul.f32 %v1727, %v1738
        %v1740 = vld [vmem:[%s3] sm:$0x1]
        %v1741 = vmul.f32 %v1541, %v1739
        %v1742 = vsub.f32 %v1740, %v1741
        %v1744 = vperm.slane %v1739, 0
        %v1746 = vmul.f32 %v1398, %v1744
        %v1747 = vmul.f32 %v1399, %v1744
        %v1748 = vmul.f32 %v1400, %v1744
        %v1749 = vmul.f32 %v1401, %v1744
        %v1750 = vmul.f32 %v1402, %v1744
        %v1751 = vmul.f32 %v1403, %v1744
        %v1752 = vmul.f32 %v1404, %v1744
        %v1753 = vmul.f32 %v1405, %v1744
        %v1754 = vmul.f32 %v1406, %v1744
        %v1755 = vmul.f32 %v1407, %v1744
        %v1756 = vmul.f32 %v1408, %v1744
        %v1757 = vmul.f32 %v1409, %v1744
        %v1758 = vmul.f32 %v1410, %v1744
        %v1760 = vperm.slane %v1742, 0
        %v1762 = vadd.f32 %v1746, %v1760
        %v1763 = vadd.f32 %v1747, %v1760
        %v1764 = vadd.f32 %v1748, %v1760
        %v1765 = vadd.f32 %v1749, %v1760
        %v1766 = vadd.f32 %v1750, %v1760
        %v1767 = vadd.f32 %v1751, %v1760
        %v1768 = vadd.f32 %v1752, %v1760
        %v1769 = vadd.f32 %v1753, %v1760
        %v1770 = vadd.f32 %v1754, %v1760
        %v1771 = vadd.f32 %v1755, %v1760
        %v1772 = vadd.f32 %v1756, %v1760
        %v1773 = vadd.f32 %v1757, %v1760
        %v1774 = vadd.f32 %v1758, %v1760
        %v1775 = vmax.f32 %v1762, 0.0
        %v1776 = vmax.f32 %v1763, 0.0
        %v1777 = vmax.f32 %v1764, 0.0
        %v1778 = vmax.f32 %v1765, 0.0
        %v1779 = vmax.f32 %v1766, 0.0
        %v1780 = vmax.f32 %v1767, 0.0
        %v1781 = vmax.f32 %v1768, 0.0
        %v1782 = vmax.f32 %v1769, 0.0
        %v1783 = vmax.f32 %v1770, 0.0
        %v1784 = vmax.f32 %v1771, 0.0
        %v1785 = vmax.f32 %v1772, 0.0
        %v1786 = vmax.f32 %v1773, 0.0
        %v1787 = vmax.f32 %v1774, 0.0
        %1788 = vst [vmem:[%s4] sm:$0xff] %v1775
        %1789 = vst [vmem:[%s4 + $0x8] sm:$0xff] %v1776
        %1790 = vst [vmem:[%s4 + $0x10] sm:$0xff] %v1777
        %1791 = vst [vmem:[%s4 + $0x18] sm:$0xff] %v1778
        %1792 = vst [vmem:[%s4 + $0x20] sm:$0xff] %v1779
        %1793 = vst [vmem:[%s4 + $0x28] sm:$0xff] %v1780
        %1794 = vst [vmem:[%s4 + $0x30] sm:$0xff] %v1781
        %1795 = vst [vmem:[%s4 + $0x38] sm:$0xff] %v1782
        %1796 = vst [vmem:[%s4 + $0x40] sm:$0xff] %v1783
        %1797 = vst [vmem:[%s4 + $0x48] sm:$0xff] %v1784
        %1798 = vst [vmem:[%s4 + $0x50] sm:$0xff] %v1785
        %1799 = vst [vmem:[%s4 + $0x58] sm:$0xff] %v1786
        %1800 = vst [vmem:[%s4 + $0x60] sm:$0x3] %v1787
        %v1801 = vld [vmem:[%s1432] sm:$0xff]
        %v1802 = vld [vmem:[%s1432 + $0x8] sm:$0xff]
        %v1803 = vld [vmem:[%s1432 + $0x10] sm:$0xff]
        %v1804 = vld [vmem:[%s1432 + $0x18] sm:$0xff]
        %v1805 = vld [vmem:[%s1432 + $0x20] sm:$0xff]
        %v1806 = vld [vmem:[%s1432 + $0x28] sm:$0xff]
        %v1807 = vld [vmem:[%s1432 + $0x30] sm:$0xff]
        %v1808 = vld [vmem:[%s1432 + $0x38] sm:$0xff]
        %v1809 = vld [vmem:[%s1432 + $0x40] sm:$0xff]
        %v1810 = vld [vmem:[%s1432 + $0x48] sm:$0xff]
        %v1811 = vld [vmem:[%s1432 + $0x50] sm:$0xff]
        %v1812 = vld [vmem:[%s1432 + $0x58] sm:$0xff]
        %v1813 = vld [vmem:[%s1432 + $0x60] sm:$0x3]
        %v1814 = vmul.f32 %v1801, %v1744
        %v1815 = vmul.f32 %v1802, %v1744
        %v1816 = vmul.f32 %v1803, %v1744
        %v1817 = vmul.f32 %v1804, %v1744
        %v1818 = vmul.f32 %v1805, %v1744
        %v1819 = vmul.f32 %v1806, %v1744
        %v1820 = vmul.f32 %v1807, %v1744
        %v1821 = vmul.f32 %v1808, %v1744
        %v1822 = vmul.f32 %v1809, %v1744
        %v1823 = vmul.f32 %v1810, %v1744
        %v1824 = vmul.f32 %v1811, %v1744
        %v1825 = vmul.f32 %v1812, %v1744
        %v1826 = vmul.f32 %v1813, %v1744
        %v1827 = vadd.f32 %v1814, %v1760
        %v1828 = vadd.f32 %v1815, %v1760
        %v1829 = vadd.f32 %v1816, %v1760
        %v1830 = vadd.f32 %v1817, %v1760
        %v1831 = vadd.f32 %v1818, %v1760
        %v1832 = vadd.f32 %v1819, %v1760
        %v1833 = vadd.f32 %v1820, %v1760
        %v1834 = vadd.f32 %v1821, %v1760
        %v1835 = vadd.f32 %v1822, %v1760
        %v1836 = vadd.f32 %v1823, %v1760
        %v1837 = vadd.f32 %v1824, %v1760
        %v1838 = vadd.f32 %v1825, %v1760
        %v1839 = vadd.f32 %v1826, %v1760
        %v1840 = vmax.f32 %v1827, 0.0
        %v1841 = vmax.f32 %v1828, 0.0
        %v1842 = vmax.f32 %v1829, 0.0
        %v1843 = vmax.f32 %v1830, 0.0
        %v1844 = vmax.f32 %v1831, 0.0
        %v1845 = vmax.f32 %v1832, 0.0
        %v1846 = vmax.f32 %v1833, 0.0
        %v1847 = vmax.f32 %v1834, 0.0
        %v1848 = vmax.f32 %v1835, 0.0
        %v1849 = vmax.f32 %v1836, 0.0
        %v1850 = vmax.f32 %v1837, 0.0
        %v1851 = vmax.f32 %v1838, 0.0
        %v1852 = vmax.f32 %v1839, 0.0
        %1853 = vst [vmem:[%s1432] sm:$0xff] %v1840
        %1854 = vst [vmem:[%s1432 + $0x8] sm:$0xff] %v1841
        %1855 = vst [vmem:[%s1432 + $0x10] sm:$0xff] %v1842
        %1856 = vst [vmem:[%s1432 + $0x18] sm:$0xff] %v1843
        %1857 = vst [vmem:[%s1432 + $0x20] sm:$0xff] %v1844
        %1858 = vst [vmem:[%s1432 + $0x28] sm:$0xff] %v1845
        %1859 = vst [vmem:[%s1432 + $0x30] sm:$0xff] %v1846
        %1860 = vst [vmem:[%s1432 + $0x38] sm:$0xff] %v1847
        %1861 = vst [vmem:[%s1432 + $0x40] sm:$0xff] %v1848
        %1862 = vst [vmem:[%s1432 + $0x48] sm:$0xff] %v1849
        %1863 = vst [vmem:[%s1432 + $0x50] sm:$0xff] %v1850
        %1864 = vst [vmem:[%s1432 + $0x58] sm:$0xff] %v1851
        %1865 = vst [vmem:[%s1432 + $0x60] sm:$0x3] %v1852
        %v1866 = vld [vmem:[%s1466] sm:$0xff]
        %v1867 = vld [vmem:[%s1466 + $0x8] sm:$0xff]
        %v1868 = vld [vmem:[%s1466 + $0x10] sm:$0xff]
        %v1869 = vld [vmem:[%s1466 + $0x18] sm:$0xff]
        %v1870 = vld [vmem:[%s1466 + $0x20] sm:$0xff]
        %v1871 = vld [vmem:[%s1466 + $0x28] sm:$0xff]
        %v1872 = vld [vmem:[%s1466 + $0x30] sm:$0xff]
        %v1873 = vld [vmem:[%s1466 + $0x38] sm:$0xff]
        %v1874 = vld [vmem:[%s1466 + $0x40] sm:$0xff]
        %v1875 = vld [vmem:[%s1466 + $0x48] sm:$0xff]
        %v1876 = vld [vmem:[%s1466 + $0x50] sm:$0xff]
        %v1877 = vld [vmem:[%s1466 + $0x58] sm:$0xff]
        %v1878 = vld [vmem:[%s1466 + $0x60] sm:$0x3]
        %v1879 = vmul.f32 %v1866, %v1744
        %v1880 = vmul.f32 %v1867, %v1744
        %v1881 = vmul.f32 %v1868, %v1744
        %v1882 = vmul.f32 %v1869, %v1744
        %v1883 = vmul.f32 %v1870, %v1744
        %v1884 = vmul.f32 %v1871, %v1744
        %v1885 = vmul.f32 %v1872, %v1744
        %v1886 = vmul.f32 %v1873, %v1744
        %v1887 = vmul.f32 %v1874, %v1744
        %v1888 = vmul.f32 %v1875, %v1744
        %v1889 = vmul.f32 %v1876, %v1744
        %v1890 = vmul.f32 %v1877, %v1744
        %v1891 = vmul.f32 %v1878, %v1744
        %v1892 = vadd.f32 %v1879, %v1760
        %v1893 = vadd.f32 %v1880, %v1760
        %v1894 = vadd.f32 %v1881, %v1760
        %v1895 = vadd.f32 %v1882, %v1760
        %v1896 = vadd.f32 %v1883, %v1760
        %v1897 = vadd.f32 %v1884, %v1760
        %v1898 = vadd.f32 %v1885, %v1760
        %v1899 = vadd.f32 %v1886, %v1760
        %v1900 = vadd.f32 %v1887, %v1760
        %v1901 = vadd.f32 %v1888, %v1760
        %v1902 = vadd.f32 %v1889, %v1760
        %v1903 = vadd.f32 %v1890, %v1760
        %v1904 = vadd.f32 %v1891, %v1760
        %v1905 = vmax.f32 %v1892, 0.0
        %v1906 = vmax.f32 %v1893, 0.0
        %v1907 = vmax.f32 %v1894, 0.0
        %v1908 = vmax.f32 %v1895, 0.0
        %v1909 = vmax.f32 %v1896, 0.0
        %v1910 = vmax.f32 %v1897, 0.0
        %v1911 = vmax.f32 %v1898, 0.0
        %v1912 = vmax.f32 %v1899, 0.0
        %v1913 = vmax.f32 %v1900, 0.0
        %v1914 = vmax.f32 %v1901, 0.0
        %v1915 = vmax.f32 %v1902, 0.0
        %v1916 = vmax.f32 %v1903, 0.0
        %v1917 = vmax.f32 %v1904, 0.0
        %1918 = vst [vmem:[%s1466] sm:$0xff] %v1905
        %1919 = vst [vmem:[%s1466 + $0x8] sm:$0xff] %v1906
        %1920 = vst [vmem:[%s1466 + $0x10] sm:$0xff] %v1907
        %1921 = vst [vmem:[%s1466 + $0x18] sm:$0xff] %v1908
        %1922 = vst [vmem:[%s1466 + $0x20] sm:$0xff] %v1909
        %1923 = vst [vmem:[%s1466 + $0x28] sm:$0xff] %v1910
        %1924 = vst [vmem:[%s1466 + $0x30] sm:$0xff] %v1911
        %1925 = vst [vmem:[%s1466 + $0x38] sm:$0xff] %v1912
        %1926 = vst [vmem:[%s1466 + $0x40] sm:$0xff] %v1913
        %1927 = vst [vmem:[%s1466 + $0x48] sm:$0xff] %v1914
        %1928 = vst [vmem:[%s1466 + $0x50] sm:$0xff] %v1915
        %1929 = vst [vmem:[%s1466 + $0x58] sm:$0xff] %v1916
        %1930 = vst [vmem:[%s1466 + $0x60] sm:$0x3] %v1917
        %v1931 = vld [vmem:[%s1500] sm:$0xff]
        %v1932 = vld [vmem:[%s1500 + $0x8] sm:$0xff]
        %v1933 = vld [vmem:[%s1500 + $0x10] sm:$0xff]
        %v1934 = vld [vmem:[%s1500 + $0x18] sm:$0xff]
        %v1935 = vld [vmem:[%s1500 + $0x20] sm:$0xff]
        %v1936 = vld [vmem:[%s1500 + $0x28] sm:$0xff]
        %v1937 = vld [vmem:[%s1500 + $0x30] sm:$0xff]
        %v1938 = vld [vmem:[%s1500 + $0x38] sm:$0xff]
        %v1939 = vld [vmem:[%s1500 + $0x40] sm:$0xff]
        %v1940 = vld [vmem:[%s1500 + $0x48] sm:$0xff]
        %v1941 = vld [vmem:[%s1500 + $0x50] sm:$0xff]
        %v1942 = vld [vmem:[%s1500 + $0x58] sm:$0xff]
        %v1943 = vld [vmem:[%s1500 + $0x60] sm:$0x3]
        %v1944 = vmul.f32 %v1931, %v1744
        %v1945 = vmul.f32 %v1932, %v1744
        %v1946 = vmul.f32 %v1933, %v1744
        %v1947 = vmul.f32 %v1934, %v1744
        %v1948 = vmul.f32 %v1935, %v1744
        %v1949 = vmul.f32 %v1936, %v1744
        %v1950 = vmul.f32 %v1937, %v1744
        %v1951 = vmul.f32 %v1938, %v1744
        %v1952 = vmul.f32 %v1939, %v1744
        %v1953 = vmul.f32 %v1940, %v1744
        %v1954 = vmul.f32 %v1941, %v1744
        %v1955 = vmul.f32 %v1942, %v1744
        %v1956 = vmul.f32 %v1943, %v1744
        %v1957 = vadd.f32 %v1944, %v1760
        %v1958 = vadd.f32 %v1945, %v1760
        %v1959 = vadd.f32 %v1946, %v1760
        %v1960 = vadd.f32 %v1947, %v1760
        %v1961 = vadd.f32 %v1948, %v1760
        %v1962 = vadd.f32 %v1949, %v1760
        %v1963 = vadd.f32 %v1950, %v1760
        %v1964 = vadd.f32 %v1951, %v1760
        %v1965 = vadd.f32 %v1952, %v1760
        %v1966 = vadd.f32 %v1953, %v1760
        %v1967 = vadd.f32 %v1954, %v1760
        %v1968 = vadd.f32 %v1955, %v1760
        %v1969 = vadd.f32 %v1956, %v1760
        %v1970 = vmax.f32 %v1957, 0.0
        %v1971 = vmax.f32 %v1958, 0.0
        %v1972 = vmax.f32 %v1959, 0.0
        %v1973 = vmax.f32 %v1960, 0.0
        %v1974 = vmax.f32 %v1961, 0.0
        %v1975 = vmax.f32 %v1962, 0.0
        %v1976 = vmax.f32 %v1963, 0.0
        %v1977 = vmax.f32 %v1964, 0.0
        %v1978 = vmax.f32 %v1965, 0.0
        %v1979 = vmax.f32 %v1966, 0.0
        %v1980 = vmax.f32 %v1967, 0.0
        %v1981 = vmax.f32 %v1968, 0.0
        %v1982 = vmax.f32 %v1969, 0.0
        %1983 = vst [vmem:[%s1500] sm:$0xff] %v1970
        %1984 = vst [vmem:[%s1500 + $0x8] sm:$0xff] %v1971
        %1985 = vst [vmem:[%s1500 + $0x10] sm:$0xff] %v1972
        %1986 = vst [vmem:[%s1500 + $0x18] sm:$0xff] %v1973
        %1987 = vst [vmem:[%s1500 + $0x20] sm:$0xff] %v1974
        %1988 = vst [vmem:[%s1500 + $0x28] sm:$0xff] %v1975
        %1989 = vst [vmem:[%s1500 + $0x30] sm:$0xff] %v1976
        %1990 = vst [vmem:[%s1500 + $0x38] sm:$0xff] %v1977
        %1991 = vst [vmem:[%s1500 + $0x40] sm:$0xff] %v1978
        %1992 = vst [vmem:[%s1500 + $0x48] sm:$0xff] %v1979
        %1993 = vst [vmem:[%s1500 + $0x50] sm:$0xff] %v1980
        %1994 = vst [vmem:[%s1500 + $0x58] sm:$0xff] %v1981
        %1995 = vst [vmem:[%s1500 + $0x60] sm:$0x3] %v1982
      $region40: #{generator_forward.4} parent=35 // pred_fallthru
        _
      // Predicated region
      $region41: #{generator_forward.4} parent=35 // pred_check
        %p1996 = pneg %p122
      $region42: #{generator_forward.4} parent=35 // pred_check_branch
        %1998 = sbr.rel (%p1996) target = $region44
      $region43: #{generator_forward.4} parent=35 // pred_region
        _
      $region44: #{generator_forward.4} parent=35 // pred_fallthru
        _
      // Predicated region
      $region45: #{generator_forward.4} parent=35 // pred_check
        %p1999 = pneg %p122
      $region46: #{generator_forward.4} parent=35 // pred_check_branch
        %2001 = sbr.rel (%p1999) target = $region48
      $region47: #{generator_forward.4} parent=35 // pred_region
        _
      $region48: #{generator_forward.4} parent=35 // pred_fallthru
        _
    $region36: #{generator_forward.4} parent=5 // pred_fallthru
      _
    %p2002 = scmp.le.s32.totalorder 2, %s10
    // Predicated region
    $region49: #{generator_forward.4} parent=5 // pred_check
      %p2003 = pneg %p2002
    $region50: #{generator_forward.4} parent=5 // pred_check_branch
      %2005 = sbr.rel (%p2003) target = $region52
    $region51: #{generator_forward.4} parent=5 // pred_region
      %s2006 = ssub.s32 %s10, 2
    $region52: #{generator_forward.4} parent=5 // pred_fallthru
      _
  $region6: #{generator_forward.4} parent=0 // loop_footer
    %s14 = sadd.s32 1, %s10
  $region7: #{generator_forward.4} parent=0 // loop_footer_branch
    %9 = sbr.rel target = $region3
  $region8: #{generator_forward.4} parent=0 // loop_exit
    _

// kernel: generator_forward.5
$region0: #{generator_forward.5}
  #allocation0 [shape = 'u32[]', space=smem, size = 0x4, offset = 0x4, fixed_abs, tag = 'smem constant byte address 0x4 - core index']
  #allocation1 [shape = 'u32[72,128]{1,0:T(1,128)}', space=vmem, size = 0x9000, scoped, tag = 'internal scratch']
  %s0 = inlined_call_operand.vmem [shape: bf16[4,392,512], index: 0, kind: input, shape index: {}]
  %s1 = inlined_call_operand.vmem [shape: bf16[4,512,128], index: 1, kind: input, shape index: {}]
  %s2 = inlined_call_operand.vmem [shape: f32[4,392,128], index: 2, kind: output, shape index: {}]
  %s3 = sld [smem:[#allocation0]]
  $region41: #{generator_forward.5} parent=0
    _
  %s5 = ssub.s32 1, %s3
  %s6 = scalar_select 0, %s5, %s3
  loop: start=0, step=1, limit=6
  $region2: #{generator_forward.5} parent=0 // loop_pre_header
    _
  $region3: #{generator_forward.5} parent=0 // loop_header
    %s8 = sphi 0, %s12
    %p9 = scmp.ge.s32.totalorder %s8, 6
    %s18 = sphi 0, %s20
    %s21 = sphi 0, %s18
    %s22 = sphi 0, %s21
    %s38 = sphi 0, %s22
    %s44 = sphi 0, %s46
    %s47 = sphi 0, %s44
    %s48 = sphi 0, %s47
    %s64 = sphi 0, %s48
    %s70 = sphi 0, %s72
    %s73 = sphi 0, %s70
    %s74 = sphi 0, %s73
    %s90 = sphi 0, %s74
  $region4: #{generator_forward.5} parent=0 // loop_header_branch
    %11 = sbr.rel (%p9) target = $region8
  $region5: #{generator_forward.5} parent=0 // loop_body
    %s13 = ssub.s32 %s8, 1
    %s14 = ssub.s32 %s8, 2
    %s15 = sadd.s32 %s8, 1
    %s16 = ssub.s32 %s8, %s15
    %p17 = scmp.eq.s32.totalorder %s16, 0
    %s19 = sadd.s32 %s18, 1
    %s20 = scalar_select %p17, %s18, %s19
    %p23 = pneg %p17
    %p24 = scmp.eq.s32.totalorder %s8, 3
    %p25 = por %p23, %p24
    %p26 = scmp.ne.s32.totalorder %s18, %s21
    %p27 = scmp.eq.s32.totalorder %s8, 0
    %p28 = por %p26, %p27
    %p29 = scmp.ne.s32.totalorder %s18, %s21
    %p30 = scmp.eq.s32.totalorder %s13, 3
    %p31 = por %p29, %p30
    %p32 = scmp.ne.s32.totalorder %s21, %s22
    %p33 = scmp.eq.s32.totalorder %s13, 0
    %p34 = por %p32, %p33
    %p35 = scmp.ne.s32.totalorder %s21, %s22
    %p36 = scmp.eq.s32.totalorder %s14, 3
    %p37 = por %p35, %p36
    %p39 = scmp.ne.s32.totalorder %s22, %s38
    %p40 = scmp.eq.s32.totalorder %s14, 0
    %p41 = por %p39, %p40
    %s42 = ssub.s32 %s8, %s15
    %p43 = scmp.eq.s32.totalorder %s42, 0
    %s45 = sadd.s32 %s44, 1
    %s46 = scalar_select %p43, %s44, %s45
    %p49 = pneg %p43
    %p50 = scmp.eq.s32.totalorder %s8, 3
    %p51 = por %p49, %p50
    %p52 = scmp.ne.s32.totalorder %s44, %s47
    %p53 = scmp.eq.s32.totalorder %s8, 0
    %p54 = por %p52, %p53
    %p55 = scmp.ne.s32.totalorder %s44, %s47
    %p56 = scmp.eq.s32.totalorder %s13, 3
    %p57 = por %p55, %p56
    %p58 = scmp.ne.s32.totalorder %s47, %s48
    %p59 = scmp.eq.s32.totalorder %s13, 0
    %p60 = por %p58, %p59
    %p61 = scmp.ne.s32.totalorder %s47, %s48
    %p62 = scmp.eq.s32.totalorder %s14, 3
    %p63 = por %p61, %p62
    %p65 = scmp.ne.s32.totalorder %s48, %s64
    %p66 = scmp.eq.s32.totalorder %s14, 0
    %p67 = por %p65, %p66
    %s68 = ssub.s32 %s8, %s15
    %p69 = scmp.eq.s32.totalorder %s68, 0
    %s71 = sadd.s32 %s70, 1
    %s72 = scalar_select %p69, %s70, %s71
    %p75 = pneg %p69
    %p76 = scmp.eq.s32.totalorder %s8, 3
    %p77 = por %p75, %p76
    %p78 = scmp.ne.s32.totalorder %s70, %s73
    %p79 = scmp.eq.s32.totalorder %s8, 0
    %p80 = por %p78, %p79
    %p81 = scmp.ne.s32.totalorder %s70, %s73
    %p82 = scmp.eq.s32.totalorder %s13, 3
    %p83 = por %p81, %p82
    %p84 = scmp.ne.s32.totalorder %s73, %s74
    %p85 = scmp.eq.s32.totalorder %s13, 0
    %p86 = por %p84, %p85
    %p87 = scmp.ne.s32.totalorder %s73, %s74
    %p88 = scmp.eq.s32.totalorder %s14, 3
    %p89 = por %p87, %p88
    %p91 = scmp.ne.s32.totalorder %s74, %s90
    %p92 = scmp.eq.s32.totalorder %s14, 0
    %p93 = por %p91, %p92
    %p94 = scmp.le.s32.totalorder 1, %s8
    %p95 = scmp.lt.s32.totalorder %s8, 5
    %p96 = pnand %p94, %p95
    %p97 = pneg %p96
    // Predicated region
    $region9: #{generator_forward.5} parent=5 // pred_check
      _
    $region10: #{generator_forward.5} parent=5 // pred_check_branch
      %99 = sbr.rel (%p96) target = $region12
    $region11: #{generator_forward.5} parent=5 // pred_region
      %s100 = ssub.s32 %s8, 1
    $region12: #{generator_forward.5} parent=5 // pred_fallthru
      _
    %p101 = scmp.lt.s32.totalorder %s8, 4
    // Predicated region
    $region13: #{generator_forward.5} parent=5 // pred_check
      %p102 = pneg %p101
    $region14: #{generator_forward.5} parent=5 // pred_check_branch
      %104 = sbr.rel (%p102) target = $region16
    $region15: #{generator_forward.5} parent=5 // pred_region
      // Predicated region
      $region17: #{generator_forward.5} parent=15 // pred_check
        %p105 = pneg %p28
      $region18: #{generator_forward.5} parent=15 // pred_check_branch
        %107 = sbr.rel (%p105) target = $region20
      $region19: #{generator_forward.5} parent=15 // pred_region
        %p108 = scmp.lt.s32.totalorder %s8, 3
        %s109 = scalar_select %p108, %s8, 3
        %s110 = smul.addr %s109, 196
        %s111 = smul.addr %s110, 4
        %s112 = scalar_lea.vmem %s0, %s111
      $region20: #{generator_forward.5} parent=15 // pred_fallthru
        _
      // Predicated region
      $region21: #{generator_forward.5} parent=15 // pred_check
        %p113 = pneg %p54
      $region22: #{generator_forward.5} parent=15 // pred_check_branch
        %115 = sbr.rel (%p113) target = $region24
      $region23: #{generator_forward.5} parent=15 // pred_region
        %p116 = scmp.lt.s32.totalorder %s8, 3
        %s117 = scalar_select %p116, %s8, 3
        %s118 = smul.addr %s117, 64
        %s119 = smul.addr %s118, 4
        %s120 = scalar_lea.vmem %s1, %s119
      $region24: #{generator_forward.5} parent=15 // pred_fallthru
        _
    $region16: #{generator_forward.5} parent=5 // pred_fallthru
      _
    %p121 = scmp.le.s32.totalorder 1, %s8
    %p122 = scmp.lt.s32.totalorder %s8, 5
    %p123 = pnand %p121, %p122
    %p124 = pneg %p123
    // Predicated region
    $region25: #{generator_forward.5} parent=5 // pred_check
      _
    $region26: #{generator_forward.5} parent=5 // pred_check_branch
      %126 = sbr.rel (%p123) target = $region28
    $region27: #{generator_forward.5} parent=5 // pred_region
      %s127 = ssub.s32 %s8, 1
      %p128 = scmp.lt.s32.totalorder %s13, 3
      %s129 = scalar_select %p128, %s13, 3
      %s130 = smul.addr %s129, 196
      %s131 = smul.addr %s130, 4
      %s132 = scalar_lea.vmem %s0, %s131
      %p133 = pneg %p34
      %p134 = pneg %p31
      %p135 = scmp.lt.s32.totalorder %s13, 3
      %s136 = scalar_select %p135, %s13, 3
      %s137 = smul.addr %s136, 64
      %s138 = smul.addr %s137, 4
      %s139 = scalar_lea.vmem %s1, %s138
      %p140 = pneg %p60
      %p141 = pneg %p57
      %p142 = pneg %p86
      %p143 = pneg %p83
      %p144 = scmp.lt.s32.totalorder %s13, 3
      %s145 = scalar_select %p144, %s13, 3
      %s146 = smul.addr %s145, 49
      %s147 = smul.addr %s146, 8
      %s148 = scalar_lea.vmem %s2, %s147
      %p149 = scmp.lt.s32.totalorder %s13, 3
      %s150 = scalar_select %p149, %s13, 3
      %s151 = smul.addr %s150, 196
      %s152 = smul.addr %s151, 4
      %s153 = scalar_lea.vmem %s0, %s152
      %p154 = scmp.lt.s32.totalorder %s13, 3
      %s155 = scalar_select %p154, %s13, 3
      %s156 = smul.addr %s155, 64
      %s157 = smul.addr %s156, 4
      %s158 = scalar_lea.vmem %s1, %s157
      %p159 = scmp.lt.s32.totalorder %s13, 3
      %s160 = scalar_select %p159, %s13, 3
      %s161 = smul.addr %s160, 49
      %s162 = smul.addr %s161, 8
      %s163 = scalar_lea.vmem %s2, %s162
      %v164 = vld [vmem:[%s153] sm:$0xff]
      %v165 = vld [vmem:[%s153 + $0x8] sm:$0xff]
      %v166 = vld [vmem:[%s153 + $0x10] sm:$0xff]
      %v167 = vld [vmem:[%s153 + $0x18] sm:$0xff]
      %v168 = vld [vmem:[%s153 + $0x20] sm:$0xff]
      %v169 = vld [vmem:[%s153 + $0x28] sm:$0xff]
      %v170 = vld [vmem:[%s153 + $0x30] sm:$0xff]
      %v171 = vld [vmem:[%s153 + $0x38] sm:$0xff]
      %v172 = vld [vmem:[%s153 + $0x40] sm:$0xff]
      %v173 = vld [vmem:[%s153 + $0x48] sm:$0xff]
      %v174 = vld [vmem:[%s153 + $0x50] sm:$0xff]
      %v175 = vld [vmem:[%s153 + $0x58] sm:$0xff]
      %v176 = vld [vmem:[%s153 + $0x60] sm:$0xff]
      %v177 = vld [vmem:[%s153 + $0x68] sm:$0xff]
      %v178 = vld [vmem:[%s153 + $0x70] sm:$0xff]
      %v179 = vld [vmem:[%s153 + $0x78] sm:$0xff]
      %v180 = vld [vmem:[%s153 + $0x80] sm:$0xff]
      %v181 = vld [vmem:[%s153 + $0x88] sm:$0xff]
      %v182 = vld [vmem:[%s153 + $0x90] sm:$0xff]
      %v183 = vld [vmem:[%s153 + $0x98] sm:$0xff]
      %v184 = vld [vmem:[%s153 + $0xa0] sm:$0xff]
      %v185 = vld [vmem:[%s153 + $0xa8] sm:$0xff]
      %v186 = vld [vmem:[%s153 + $0xb0] sm:$0xff]
      %v187 = vld [vmem:[%s153 + $0xb8] sm:$0xff]
      %v188 = vld [vmem:[%s153 + $0xc0] sm:$0xff]
      %v189 = vld [vmem:[%s153 + $0xc8] sm:$0xff]
      %v190 = vld [vmem:[%s153 + $0xd0] sm:$0xff]
      %v191 = vld [vmem:[%s153 + $0xd8] sm:$0xff]
      %v192 = vld [vmem:[%s153 + $0xe0] sm:$0xff]
      %v193 = vld [vmem:[%s153 + $0xe8] sm:$0xff]
      %v194 = vld [vmem:[%s153 + $0xf0] sm:$0xff]
      %v195 = vld [vmem:[%s153 + $0xf8] sm:$0xff]
      %v196 = vld [vmem:[%s153 + $0x100] sm:$0xff]
      %v197 = vld [vmem:[%s153 + $0x108] sm:$0xff]
      %v198 = vld [vmem:[%s153 + $0x110] sm:$0xff]
      %v199 = vld [vmem:[%s153 + $0x118] sm:$0xff]
      %v200 = vld [vmem:[%s153 + $0x120] sm:$0xff]
      %v201 = vld [vmem:[%s153 + $0x128] sm:$0xff]
      %v202 = vld [vmem:[%s153 + $0x130] sm:$0xff]
      %v203 = vld [vmem:[%s153 + $0x138] sm:$0xff]
      %v204 = vld [vmem:[%s153 + $0x140] sm:$0xff]
      %v205 = vld [vmem:[%s153 + $0x148] sm:$0xff]
      %v206 = vld [vmem:[%s153 + $0x150] sm:$0xff]
      %v207 = vld [vmem:[%s153 + $0x158] sm:$0xff]
      %v208 = vld [vmem:[%s153 + $0x160] sm:$0xff]
      %v209 = vld [vmem:[%s153 + $0x168] sm:$0xff]
      %v210 = vld [vmem:[%s153 + $0x170] sm:$0xff]
      %v211 = vld [vmem:[%s153 + $0x178] sm:$0xff]
      %v212 = vld [vmem:[%s153 + $0x180] sm:$0xff]
      %v213 = vld [vmem:[%s153 + $0x188] sm:$0xff]
      %v214 = vld [vmem:[%s153 + $0x190] sm:$0xff]
      %v215 = vld [vmem:[%s153 + $0x198] sm:$0xff]
      %v216 = vld [vmem:[%s153 + $0x1a0] sm:$0xff]
      %v217 = vld [vmem:[%s153 + $0x1a8] sm:$0xff]
      %v218 = vld [vmem:[%s153 + $0x1b0] sm:$0xff]
      %v219 = vld [vmem:[%s153 + $0x1b8] sm:$0xff]
      %v220 = vld [vmem:[%s153 + $0x1c0] sm:$0xff]
      %v221 = vld [vmem:[%s153 + $0x1c8] sm:$0xff]
      %v222 = vld [vmem:[%s153 + $0x1d0] sm:$0xff]
      %v223 = vld [vmem:[%s153 + $0x1d8] sm:$0xff]
      %v224 = vld [vmem:[%s153 + $0x1e0] sm:$0xff]
      %v225 = vld [vmem:[%s153 + $0x1e8] sm:$0xff]
      %v226 = vld [vmem:[%s153 + $0x1f0] sm:$0xff]
      %v227 = vld [vmem:[%s153 + $0x1f8] sm:$0xff]
      %v228 = vld [vmem:[%s153 + $0x200] sm:$0xff]
      %v229 = vld [vmem:[%s153 + $0x208] sm:$0xff]
      %v230 = vld [vmem:[%s153 + $0x210] sm:$0xff]
      %v231 = vld [vmem:[%s153 + $0x218] sm:$0xff]
      %v232 = vld [vmem:[%s153 + $0x220] sm:$0xff]
      %v233 = vld [vmem:[%s153 + $0x228] sm:$0xff]
      %v234 = vld [vmem:[%s153 + $0x230] sm:$0xff]
      %v235 = vld [vmem:[%s153 + $0x238] sm:$0xff]
      %v236 = vld [vmem:[%s153 + $0x240] sm:$0xff]
      %v237 = vld [vmem:[%s153 + $0x248] sm:$0xff]
      %v238 = vld [vmem:[%s153 + $0x250] sm:$0xff]
      %v239 = vld [vmem:[%s153 + $0x258] sm:$0xff]
      %v240 = vld [vmem:[%s153 + $0x260] sm:$0xff]
      %v241 = vld [vmem:[%s153 + $0x268] sm:$0xff]
      %v242 = vld [vmem:[%s153 + $0x270] sm:$0xff]
      %v243 = vld [vmem:[%s153 + $0x278] sm:$0xff]
      %v244 = vld [vmem:[%s153 + $0x280] sm:$0xff]
      %v245 = vld [vmem:[%s153 + $0x288] sm:$0xff]
      %v246 = vld [vmem:[%s153 + $0x290] sm:$0xff]
      %v247 = vld [vmem:[%s153 + $0x298] sm:$0xff]
      %v248 = vld [vmem:[%s153 + $0x2a0] sm:$0xff]
      %v249 = vld [vmem:[%s153 + $0x2a8] sm:$0xff]
      %v250 = vld [vmem:[%s153 + $0x2b0] sm:$0xff]
      %v251 = vld [vmem:[%s153 + $0x2b8] sm:$0xff]
      %v252 = vld [vmem:[%s153 + $0x2c0] sm:$0xff]
      %v253 = vld [vmem:[%s153 + $0x2c8] sm:$0xff]
      %v254 = vld [vmem:[%s153 + $0x2d0] sm:$0xff]
      %v255 = vld [vmem:[%s153 + $0x2d8] sm:$0xff]
      %v256 = vld [vmem:[%s153 + $0x2e0] sm:$0xff]
      %v257 = vld [vmem:[%s153 + $0x2e8] sm:$0xff]
      %v258 = vld [vmem:[%s153 + $0x2f0] sm:$0xff]
      %v259 = vld [vmem:[%s153 + $0x2f8] sm:$0xff]
      %v260 = vld [vmem:[%s153 + $0x300] sm:$0xff]
      %v261 = vld [vmem:[%s153 + $0x308] sm:$0xff]
      %v262 = vld [vmem:[%s158] sm:$0xf]
      %v263 = vld [vmem:[%s158 + $0x4] sm:$0xf]
      %v264 = vld [vmem:[%s158 + $0x8] sm:$0xf]
      %v265 = vld [vmem:[%s158 + $0xc] sm:$0xf]
      %v266 = vld [vmem:[%s158 + $0x10] sm:$0xf]
      %v267 = vld [vmem:[%s158 + $0x14] sm:$0xf]
      %v268 = vld [vmem:[%s158 + $0x18] sm:$0xf]
      %v269 = vld [vmem:[%s158 + $0x1c] sm:$0xf]
      %v270 = vld [vmem:[%s158 + $0x20] sm:$0xf]
      %v271 = vld [vmem:[%s158 + $0x24] sm:$0xf]
      %v272 = vld [vmem:[%s158 + $0x28] sm:$0xf]
      %v273 = vld [vmem:[%s158 + $0x2c] sm:$0xf]
      %v274 = vld [vmem:[%s158 + $0x30] sm:$0xf]
      %v275 = vld [vmem:[%s158 + $0x34] sm:$0xf]
      %v276 = vld [vmem:[%s158 + $0x38] sm:$0xf]
      %v277 = vld [vmem:[%s158 + $0x3c] sm:$0xf]
      %v278 = vld [vmem:[%s158 + $0x40] sm:$0xf]
      %v279 = vld [vmem:[%s158 + $0x44] sm:$0xf]
      %v280 = vld [vmem:[%s158 + $0x48] sm:$0xf]
      %v281 = vld [vmem:[%s158 + $0x4c] sm:$0xf]
      %v282 = vld [vmem:[%s158 + $0x50] sm:$0xf]
      %v283 = vld [vmem:[%s158 + $0x54] sm:$0xf]
      %v284 = vld [vmem:[%s158 + $0x58] sm:$0xf]
      %v285 = vld [vmem:[%s158 + $0x5c] sm:$0xf]
      %v286 = vld [vmem:[%s158 + $0x60] sm:$0xf]
      %v287 = vld [vmem:[%s158 + $0x64] sm:$0xf]
      %v288 = vld [vmem:[%s158 + $0x68] sm:$0xf]
      %v289 = vld [vmem:[%s158 + $0x6c] sm:$0xf]
      %v290 = vld [vmem:[%s158 + $0x70] sm:$0xf]
      %v291 = vld [vmem:[%s158 + $0x74] sm:$0xf]
      %v292 = vld [vmem:[%s158 + $0x78] sm:$0xf]
      %v293 = vld [vmem:[%s158 + $0x7c] sm:$0xf]
      %v294 = vld [vmem:[%s158 + $0x80] sm:$0xf]
      %v295 = vld [vmem:[%s158 + $0x84] sm:$0xf]
      %v296 = vld [vmem:[%s158 + $0x88] sm:$0xf]
      %v297 = vld [vmem:[%s158 + $0x8c] sm:$0xf]
      %v298 = vld [vmem:[%s158 + $0x90] sm:$0xf]
      %v299 = vld [vmem:[%s158 + $0x94] sm:$0xf]
      %v300 = vld [vmem:[%s158 + $0x98] sm:$0xf]
      %v301 = vld [vmem:[%s158 + $0x9c] sm:$0xf]
      %v302 = vld [vmem:[%s158 + $0xa0] sm:$0xf]
      %v303 = vld [vmem:[%s158 + $0xa4] sm:$0xf]
      %v304 = vld [vmem:[%s158 + $0xa8] sm:$0xf]
      %v305 = vld [vmem:[%s158 + $0xac] sm:$0xf]
      %v306 = vld [vmem:[%s158 + $0xb0] sm:$0xf]
      %v307 = vld [vmem:[%s158 + $0xb4] sm:$0xf]
      %v308 = vld [vmem:[%s158 + $0xb8] sm:$0xf]
      %v309 = vld [vmem:[%s158 + $0xbc] sm:$0xf]
      %v310 = vld [vmem:[%s158 + $0xc0] sm:$0xf]
      %v311 = vld [vmem:[%s158 + $0xc4] sm:$0xf]
      %v312 = vld [vmem:[%s158 + $0xc8] sm:$0xf]
      %v313 = vld [vmem:[%s158 + $0xcc] sm:$0xf]
      %v314 = vld [vmem:[%s158 + $0xd0] sm:$0xf]
      %v315 = vld [vmem:[%s158 + $0xd4] sm:$0xf]
      %v316 = vld [vmem:[%s158 + $0xd8] sm:$0xf]
      %v317 = vld [vmem:[%s158 + $0xdc] sm:$0xf]
      %v318 = vld [vmem:[%s158 + $0xe0] sm:$0xf]
      %v319 = vld [vmem:[%s158 + $0xe4] sm:$0xf]
      %v320 = vld [vmem:[%s158 + $0xe8] sm:$0xf]
      %v321 = vld [vmem:[%s158 + $0xec] sm:$0xf]
      %v322 = vld [vmem:[%s158 + $0xf0] sm:$0xf]
      %v323 = vld [vmem:[%s158 + $0xf4] sm:$0xf]
      %v324 = vld [vmem:[%s158 + $0xf8] sm:$0xf]
      %v325 = vld [vmem:[%s158 + $0xfc] sm:$0xf]
      %v424 = vunpack.c.l.b16 %v164
      %v425 = vunpack.c.h.b16 %v164
      %v426 = vunpack.c.l.b16 %v165
      %v427 = vunpack.c.h.b16 %v165
      %v428 = vunpack.c.l.b16 %v166
      %v429 = vunpack.c.h.b16 %v166
      %v430 = vunpack.c.l.b16 %v167
      %v431 = vunpack.c.h.b16 %v167
      %v432 = vunpack.c.l.b16 %v168
      %v433 = vunpack.c.h.b16 %v168
      %v434 = vunpack.c.l.b16 %v169
      %v435 = vunpack.c.h.b16 %v169
      %v436 = vunpack.c.l.b16 %v170
      %v437 = vunpack.c.h.b16 %v170
      %v438 = vunpack.c.l.b16 %v171
      %v439 = vunpack.c.h.b16 %v171
      %v440 = vunpack.c.l.b16 %v172
      %v441 = vunpack.c.h.b16 %v172
      %v442 = vunpack.c.l.b16 %v173
      %v443 = vunpack.c.h.b16 %v173
      %v444 = vunpack.c.l.b16 %v174
      %v445 = vunpack.c.h.b16 %v174
      %v446 = vunpack.c.l.b16 %v175
      %v447 = vunpack.c.h.b16 %v175
      %v448 = vunpack.c.l.b16 %v176
      %v449 = vunpack.c.h.b16 %v176
      %v450 = vunpack.c.l.b16 %v177
      %v451 = vunpack.c.h.b16 %v177
      %v452 = vunpack.c.l.b16 %v178
      %v453 = vunpack.c.h.b16 %v178
      %v454 = vunpack.c.l.b16 %v179
      %v455 = vunpack.c.h.b16 %v179
      %v456 = vunpack.c.l.b16 %v180
      %v457 = vunpack.c.h.b16 %v180
      %v458 = vunpack.c.l.b16 %v181
      %v459 = vunpack.c.h.b16 %v181
      %v460 = vunpack.c.l.b16 %v182
      %v461 = vunpack.c.h.b16 %v182
      %v462 = vunpack.c.l.b16 %v183
      %v463 = vunpack.c.h.b16 %v183
      %v464 = vunpack.c.l.b16 %v184
      %v465 = vunpack.c.h.b16 %v184
      %v466 = vunpack.c.l.b16 %v185
      %v467 = vunpack.c.h.b16 %v185
      %v468 = vunpack.c.l.b16 %v186
      %v469 = vunpack.c.h.b16 %v186
      %v470 = vunpack.c.l.b16 %v187
      %v471 = vunpack.c.h.b16 %v187
      %v472 = vunpack.c.l.b16 %v188
      %v473 = vunpack.c.h.b16 %v188
      %v474 = vunpack.c.l.b16 %v189
      %v475 = vunpack.c.h.b16 %v189
      %v476 = vunpack.c.l.b16 %v190
      %v477 = vunpack.c.h.b16 %v190
      %v478 = vunpack.c.l.b16 %v191
      %v479 = vunpack.c.h.b16 %v191
      %v480 = vunpack.c.l.b16 %v192
      %v481 = vunpack.c.h.b16 %v192
      %v482 = vunpack.c.l.b16 %v193
      %v483 = vunpack.c.h.b16 %v193
      %v484 = vunpack.c.l.b16 %v194
      %v485 = vunpack.c.h.b16 %v194
      %v486 = vunpack.c.l.b16 %v195
      %v487 = vunpack.c.h.b16 %v195
      %v488 = vunpack.c.l.b16 %v196
      %v489 = vunpack.c.h.b16 %v196
      %v490 = vunpack.c.l.b16 %v197
      %v491 = vunpack.c.h.b16 %v197
      %v492 = vunpack.c.l.b16 %v198
      %v493 = vunpack.c.h.b16 %v198
      %v494 = vunpack.c.l.b16 %v199
      %v495 = vunpack.c.h.b16 %v199
      %v496 = vunpack.c.l.b16 %v200
      %v497 = vunpack.c.h.b16 %v200
      %v498 = vunpack.c.l.b16 %v201
      %v499 = vunpack.c.h.b16 %v201
      %v500 = vunpack.c.l.b16 %v202
      %v501 = vunpack.c.h.b16 %v202
      %v502 = vunpack.c.l.b16 %v203
      %v503 = vunpack.c.h.b16 %v203
      %v504 = vunpack.c.l.b16 %v204
      %v505 = vunpack.c.h.b16 %v204
      %v506 = vunpack.c.l.b16 %v205
      %v507 = vunpack.c.h.b16 %v205
      %v508 = vunpack.c.l.b16 %v206
      %v509 = vunpack.c.h.b16 %v206
      %v510 = vunpack.c.l.b16 %v207
      %v511 = vunpack.c.h.b16 %v207
      %v512 = vunpack.c.l.b16 %v208
      %v513 = vunpack.c.h.b16 %v208
      %v514 = vunpack.c.l.b16 %v209
      %v515 = vunpack.c.h.b16 %v209
      %v516 = vunpack.c.l.b16 %v210
      %v517 = vunpack.c.h.b16 %v210
      %v518 = vunpack.c.l.b16 %v211
      %v519 = vunpack.c.h.b16 %v211
      %v520 = vunpack.c.l.b16 %v212
      %v521 = vunpack.c.h.b16 %v212
      %v522 = vunpack.c.l.b16 %v213
      %v523 = vunpack.c.h.b16 %v213
      %v524 = vunpack.c.l.b16 %v214
      %v525 = vunpack.c.h.b16 %v214
      %v526 = vunpack.c.l.b16 %v215
      %v527 = vunpack.c.h.b16 %v215
      %v528 = vunpack.c.l.b16 %v216
      %v529 = vunpack.c.h.b16 %v216
      %v530 = vunpack.c.l.b16 %v217
      %v531 = vunpack.c.h.b16 %v217
      %v532 = vunpack.c.l.b16 %v218
      %v533 = vunpack.c.h.b16 %v218
      %v534 = vunpack.c.l.b16 %v219
      %v535 = vunpack.c.h.b16 %v219
      %v536 = vunpack.c.l.b16 %v220
      %v537 = vunpack.c.h.b16 %v220
      %v538 = vunpack.c.l.b16 %v221
      %v539 = vunpack.c.h.b16 %v221
      %v540 = vunpack.c.l.b16 %v222
      %v541 = vunpack.c.h.b16 %v222
      %v542 = vunpack.c.l.b16 %v223
      %v543 = vunpack.c.h.b16 %v223
      %v544 = vunpack.c.l.b16 %v224
      %v545 = vunpack.c.h.b16 %v224
      %v546 = vunpack.c.l.b16 %v225
      %v547 = vunpack.c.h.b16 %v225
      %v548 = vunpack.c.l.b16 %v226
      %v549 = vunpack.c.h.b16 %v226
      %v550 = vunpack.c.l.b16 %v227
      %v551 = vunpack.c.h.b16 %v227
      %v552 = vunpack.c.l.b16 %v228
      %v553 = vunpack.c.h.b16 %v228
      %v554 = vunpack.c.l.b16 %v229
      %v555 = vunpack.c.h.b16 %v229
      %v556 = vunpack.c.l.b16 %v230
      %v557 = vunpack.c.h.b16 %v230
      %v558 = vunpack.c.l.b16 %v231
      %v559 = vunpack.c.h.b16 %v231
      %v560 = vunpack.c.l.b16 %v232
      %v561 = vunpack.c.h.b16 %v232
      %v562 = vunpack.c.l.b16 %v233
      %v563 = vunpack.c.h.b16 %v233
      %v564 = vunpack.c.l.b16 %v234
      %v565 = vunpack.c.h.b16 %v234
      %v566 = vunpack.c.l.b16 %v235
      %v567 = vunpack.c.h.b16 %v235
      %v568 = vunpack.c.l.b16 %v236
      %v569 = vunpack.c.h.b16 %v236
      %v570 = vunpack.c.l.b16 %v237
      %v571 = vunpack.c.h.b16 %v237
      %v572 = vunpack.c.l.b16 %v238
      %v573 = vunpack.c.h.b16 %v238
      %v574 = vunpack.c.l.b16 %v239
      %v575 = vunpack.c.h.b16 %v239
      %v576 = vunpack.c.l.b16 %v240
      %v577 = vunpack.c.h.b16 %v240
      %v578 = vunpack.c.l.b16 %v241
      %v579 = vunpack.c.h.b16 %v241
      %v580 = vunpack.c.l.b16 %v242
      %v581 = vunpack.c.h.b16 %v242
      %v582 = vunpack.c.l.b16 %v243
      %v583 = vunpack.c.h.b16 %v243
      %v584 = vunpack.c.l.b16 %v244
      %v585 = vunpack.c.h.b16 %v244
      %v586 = vunpack.c.l.b16 %v245
      %v587 = vunpack.c.h.b16 %v245
      %v588 = vunpack.c.l.b16 %v246
      %v589 = vunpack.c.h.b16 %v246
      %v590 = vunpack.c.l.b16 %v247
      %v591 = vunpack.c.h.b16 %v247
      %v592 = vunpack.c.l.b16 %v248
      %v593 = vunpack.c.h.b16 %v248
      %v594 = vunpack.c.l.b16 %v249
      %v595 = vunpack.c.h.b16 %v249
      %v596 = vunpack.c.l.b16 %v250
      %v597 = vunpack.c.h.b16 %v250
      %v598 = vunpack.c.l.b16 %v251
      %v599 = vunpack.c.h.b16 %v251
      %v600 = vunpack.c.l.b16 %v252
      %v601 = vunpack.c.h.b16 %v252
      %v602 = vunpack.c.l.b16 %v253
      %v603 = vunpack.c.h.b16 %v253
      %v604 = vunpack.c.l.b16 %v254
      %v605 = vunpack.c.h.b16 %v254
      %v606 = vunpack.c.l.b16 %v255
      %v607 = vunpack.c.h.b16 %v255
      %v608 = vunpack.c.l.b16 %v256
      %v609 = vunpack.c.h.b16 %v256
      %v610 = vunpack.c.l.b16 %v257
      %v611 = vunpack.c.h.b16 %v257
      %v612 = vunpack.c.l.b16 %v258
      %v613 = vunpack.c.h.b16 %v258
      %v614 = vunpack.c.l.b16 %v259
      %v615 = vunpack.c.h.b16 %v259
      %v616 = vunpack.c.l.b16 %v260
      %v617 = vunpack.c.h.b16 %v260
      %v618 = vunpack.c.l.b16 %v261
      %v619 = vunpack.c.h.b16 %v261
      %v620 = vpack.c.b16 %v428, %v424
      %v621 = vpack.c.b16 %v429, %v425
      %v622 = vpack.c.b16 %v430, %v426
      %v623 = vpack.c.b16 %v431, %v427
      %v624 = vpack.c.b16 %v436, %v432
      %v625 = vpack.c.b16 %v437, %v433
      %v626 = vpack.c.b16 %v438, %v434
      %v627 = vpack.c.b16 %v439, %v435
      %v628 = vpack.c.b16 %v444, %v440
      %v629 = vpack.c.b16 %v445, %v441
      %v630 = vpack.c.b16 %v446, %v442
      %v631 = vpack.c.b16 %v447, %v443
      %v632 = vpack.c.b16 %v452, %v448
      %v633 = vpack.c.b16 %v453, %v449
      %v634 = vpack.c.b16 %v454, %v450
      %v635 = vpack.c.b16 %v455, %v451
      %v636 = vpack.c.b16 %v460, %v456
      %v637 = vpack.c.b16 %v461, %v457
      %v638 = vpack.c.b16 %v462, %v458
      %v639 = vpack.c.b16 %v463, %v459
      %v640 = vpack.c.b16 %v468, %v464
      %v641 = vpack.c.b16 %v469, %v465
      %v642 = vpack.c.b16 %v470, %v466
      %v643 = vpack.c.b16 %v471, %v467
      %v644 = vpack.c.b16 %v476, %v472
      %v645 = vpack.c.b16 %v477, %v473
      %v646 = vpack.c.b16 %v478, %v474
      %v647 = vpack.c.b16 %v479, %v475
      %v648 = vpack.c.b16 %v484, %v480
      %v649 = vpack.c.b16 %v485, %v481
      %v650 = vpack.c.b16 %v486, %v482
      %v651 = vpack.c.b16 %v487, %v483
      %v652 = vpack.c.b16 %v492, %v488
      %v653 = vpack.c.b16 %v493, %v489
      %v654 = vpack.c.b16 %v494, %v490
      %v655 = vpack.c.b16 %v495, %v491
      %v656 = vpack.c.b16 %v500, %v496
      %v657 = vpack.c.b16 %v501, %v497
      %v658 = vpack.c.b16 %v502, %v498
      %v659 = vpack.c.b16 %v503, %v499
      %v660 = vpack.c.b16 %v508, %v504
      %v661 = vpack.c.b16 %v509, %v505
      %v662 = vpack.c.b16 %v510, %v506
      %v663 = vpack.c.b16 %v511, %v507
      %v664 = vpack.c.b16 %v516, %v512
      %v665 = vpack.c.b16 %v517, %v513
      %v666 = vpack.c.b16 %v518, %v514
      %v667 = vpack.c.b16 %v519, %v515
      %v668 = vpack.c.b16 %v524, %v520
      %v669 = vpack.c.b16 %v525, %v521
      %v670 = vpack.c.b16 %v526, %v522
      %v671 = vpack.c.b16 %v527, %v523
      %v672 = vpack.c.b16 %v532, %v528
      %v673 = vpack.c.b16 %v533, %v529
      %v674 = vpack.c.b16 %v534, %v530
      %v675 = vpack.c.b16 %v535, %v531
      %v676 = vpack.c.b16 %v540, %v536
      %v677 = vpack.c.b16 %v541, %v537
      %v678 = vpack.c.b16 %v542, %v538
      %v679 = vpack.c.b16 %v543, %v539
      %v680 = vpack.c.b16 %v548, %v544
      %v681 = vpack.c.b16 %v549, %v545
      %v682 = vpack.c.b16 %v550, %v546
      %v683 = vpack.c.b16 %v551, %v547
      %v684 = vpack.c.b16 %v556, %v552
      %v685 = vpack.c.b16 %v557, %v553
      %v686 = vpack.c.b16 %v558, %v554
      %v687 = vpack.c.b16 %v559, %v555
      %v688 = vpack.c.b16 %v564, %v560
      %v689 = vpack.c.b16 %v565, %v561
      %v690 = vpack.c.b16 %v566, %v562
      %v691 = vpack.c.b16 %v567, %v563
      %v692 = vpack.c.b16 %v572, %v568
      %v693 = vpack.c.b16 %v573, %v569
      %v694 = vpack.c.b16 %v574, %v570
      %v695 = vpack.c.b16 %v575, %v571
      %v696 = vpack.c.b16 %v580, %v576
      %v697 = vpack.c.b16 %v581, %v577
      %v698 = vpack.c.b16 %v582, %v578
      %v699 = vpack.c.b16 %v583, %v579
      %v700 = vpack.c.b16 %v588, %v584
      %v701 = vpack.c.b16 %v589, %v585
      %v702 = vpack.c.b16 %v590, %v586
      %v703 = vpack.c.b16 %v591, %v587
      %v704 = vpack.c.b16 %v596, %v592
      %v705 = vpack.c.b16 %v597, %v593
      %v706 = vpack.c.b16 %v598, %v594
      %v707 = vpack.c.b16 %v599, %v595
      %v708 = vpack.c.b16 %v604, %v600
      %v709 = vpack.c.b16 %v605, %v601
      %v710 = vpack.c.b16 %v606, %v602
      %v711 = vpack.c.b16 %v607, %v603
      %v712 = vpack.c.b16 %v612, %v608
      %v713 = vpack.c.b16 %v613, %v609
      %v714 = vpack.c.b16 %v614, %v610
      %v715 = vpack.c.b16 %v615, %v611
      %v716 = vpack.c.b16 %v616, %v616
      %v717 = vpack.c.b16 %v617, %v617
      %v718 = vpack.c.b16 %v618, %v618
      %v719 = vpack.c.b16 %v619, %v619
      %v884 = vunpack.c.l.b16 %v262
      %v885 = vunpack.c.l.b16 %v263
      %v886 = vunpack.c.l.b16 %v264
      %v887 = vunpack.c.l.b16 %v265
      %v888 = vunpack.c.l.b16 %v266
      %v889 = vunpack.c.l.b16 %v267
      %v890 = vunpack.c.l.b16 %v268
      %v891 = vunpack.c.l.b16 %v269
      %v892 = vunpack.c.l.b16 %v270
      %v893 = vunpack.c.l.b16 %v271
      %v894 = vunpack.c.l.b16 %v272
      %v895 = vunpack.c.l.b16 %v273
      %v896 = vunpack.c.l.b16 %v274
      %v897 = vunpack.c.l.b16 %v275
      %v898 = vunpack.c.l.b16 %v276
      %v899 = vunpack.c.l.b16 %v277
      %v900 = vunpack.c.l.b16 %v278
      %v901 = vunpack.c.l.b16 %v279
      %v902 = vunpack.c.l.b16 %v280
      %v903 = vunpack.c.l.b16 %v281
      %v904 = vunpack.c.l.b16 %v282
      %v905 = vunpack.c.l.b16 %v283
      %v906 = vunpack.c.l.b16 %v284
      %v907 = vunpack.c.l.b16 %v285
      %v908 = vunpack.c.l.b16 %v286
      %v909 = vunpack.c.l.b16 %v287
      %v910 = vunpack.c.l.b16 %v288
      %v911 = vunpack.c.l.b16 %v289
      %v912 = vunpack.c.l.b16 %v290
      %v913 = vunpack.c.l.b16 %v291
      %v914 = vunpack.c.l.b16 %v292
      %v915 = vunpack.c.l.b16 %v293
      %v916 = vunpack.c.l.b16 %v294
      %v917 = vunpack.c.l.b16 %v295
      %v918 = vunpack.c.l.b16 %v296
      %v919 = vunpack.c.l.b16 %v297
      %v920 = vunpack.c.l.b16 %v298
      %v921 = vunpack.c.l.b16 %v299
      %v922 = vunpack.c.l.b16 %v300
      %v923 = vunpack.c.l.b16 %v301
      %v924 = vunpack.c.l.b16 %v302
      %v925 = vunpack.c.l.b16 %v303
      %v926 = vunpack.c.l.b16 %v304
      %v927 = vunpack.c.l.b16 %v305
      %v928 = vunpack.c.l.b16 %v306
      %v929 = vunpack.c.l.b16 %v307
      %v930 = vunpack.c.l.b16 %v308
      %v931 = vunpack.c.l.b16 %v309
      %v932 = vunpack.c.l.b16 %v310
      %v933 = vunpack.c.l.b16 %v311
      %v934 = vunpack.c.l.b16 %v312
      %v935 = vunpack.c.l.b16 %v313
      %v936 = vunpack.c.l.b16 %v314
      %v937 = vunpack.c.l.b16 %v315
      %v938 = vunpack.c.l.b16 %v316
      %v939 = vunpack.c.l.b16 %v317
      %v940 = vunpack.c.l.b16 %v318
      %v941 = vunpack.c.l.b16 %v319
      %v942 = vunpack.c.l.b16 %v320
      %v943 = vunpack.c.l.b16 %v321
      %v944 = vunpack.c.l.b16 %v322
      %v945 = vunpack.c.l.b16 %v323
      %v946 = vunpack.c.l.b16 %v324
      %v947 = vunpack.c.l.b16 %v325
      %v948 = vpack.c.b16 %v885, %v884
      %v949 = vpack.c.b16 %v887, %v886
      %v950 = vpack.c.b16 %v889, %v888
      %v951 = vpack.c.b16 %v891, %v890
      %v952 = vpack.c.b16 %v893, %v892
      %v953 = vpack.c.b16 %v895, %v894
      %v954 = vpack.c.b16 %v897, %v896
      %v955 = vpack.c.b16 %v899, %v898
      %v956 = vpack.c.b16 %v901, %v900
      %v957 = vpack.c.b16 %v903, %v902
      %v958 = vpack.c.b16 %v905, %v904
      %v959 = vpack.c.b16 %v907, %v906
      %v960 = vpack.c.b16 %v909, %v908
      %v961 = vpack.c.b16 %v911, %v910
      %v962 = vpack.c.b16 %v913, %v912
      %v963 = vpack.c.b16 %v915, %v914
      %v964 = vpack.c.b16 %v917, %v916
      %v965 = vpack.c.b16 %v919, %v918
      %v966 = vpack.c.b16 %v921, %v920
      %v967 = vpack.c.b16 %v923, %v922
      %v968 = vpack.c.b16 %v925, %v924
      %v969 = vpack.c.b16 %v927, %v926
      %v970 = vpack.c.b16 %v929, %v928
      %v971 = vpack.c.b16 %v931, %v930
      %v972 = vpack.c.b16 %v933, %v932
      %v973 = vpack.c.b16 %v935, %v934
      %v974 = vpack.c.b16 %v937, %v936
      %v975 = vpack.c.b16 %v939, %v938
      %v976 = vpack.c.b16 %v941, %v940
      %v977 = vpack.c.b16 %v943, %v942
      %v978 = vpack.c.b16 %v945, %v944
      %v979 = vpack.c.b16 %v947, %v946
      %1012 = vmatpush.bf16.msra.mxu0 %v955
      %1013 = vmatpush.bf16.msra.mxu0 %v954
      %1014 = vmatpush.bf16.msra.mxu0 %v953
      %1015 = vmatpush.bf16.msra.mxu0 %v952
      %1016 = vmatpush.bf16.msra.mxu0 %v951
      %1017 = vmatpush.bf16.msra.mxu0 %v950
      %1018 = vmatpush.bf16.msra.mxu0 %v949
      %1019 = vmatpush.bf16.msra.mxu0 %v948
      %1020 = vmatmul.bf16.gmra.mxu0 %v620
      %v1021 = vpop.f32.mrf.mxu0
      %v1022 = vadd.f32 0.0, %v1021
      %v1023 = vpop.f32.mrf.mxu0
      %v1024 = vadd.f32 0.0, %v1023
      %1025 = vmatmul.bf16.gmra.mxu0 %v624
      %v1026 = vpop.f32.mrf.mxu0
      %v1027 = vadd.f32 0.0, %v1026
      %v1028 = vpop.f32.mrf.mxu0
      %v1029 = vadd.f32 0.0, %v1028
      %1030 = vmatmul.bf16.gmra.mxu0 %v628
      %v1031 = vpop.f32.mrf.mxu0
      %v1032 = vadd.f32 0.0, %v1031
      %v1033 = vpop.f32.mrf.mxu0
      %v1034 = vadd.f32 0.0, %v1033
      %1035 = vmatmul.bf16.gmra.mxu0 %v632
      %v1036 = vpop.f32.mrf.mxu0
      %v1037 = vadd.f32 0.0, %v1036
      %v1038 = vpop.f32.mrf.mxu0
      %v1039 = vadd.f32 0.0, %v1038
      %1040 = vmatmul.bf16.gmra.mxu0 %v636
      %v1041 = vpop.f32.mrf.mxu0
      %v1042 = vadd.f32 0.0, %v1041
      %v1043 = vpop.f32.mrf.mxu0
      %v1044 = vadd.f32 0.0, %v1043
      %1045 = vmatmul.bf16.gmra.mxu0 %v640
      %v1046 = vpop.f32.mrf.mxu0
      %v1047 = vadd.f32 0.0, %v1046
      %v1048 = vpop.f32.mrf.mxu0
      %v1049 = vadd.f32 0.0, %v1048
      %1050 = vmatmul.bf16.gmra.mxu0 %v644
      %v1051 = vpop.f32.mrf.mxu0
      %v1052 = vadd.f32 0.0, %v1051
      %v1053 = vpop.f32.mrf.mxu0
      %v1054 = vadd.f32 0.0, %v1053
      %1055 = vmatmul.bf16.gmra.mxu0 %v648
      %v1056 = vpop.f32.mrf.mxu0
      %v1057 = vadd.f32 0.0, %v1056
      %v1058 = vpop.f32.mrf.mxu0
      %v1059 = vadd.f32 0.0, %v1058
      %1060 = vmatmul.bf16.gmra.mxu0 %v652
      %v1061 = vpop.f32.mrf.mxu0
      %v1062 = vadd.f32 0.0, %v1061
      %v1063 = vpop.f32.mrf.mxu0
      %v1064 = vadd.f32 0.0, %v1063
      %1065 = vmatmul.bf16.gmra.mxu0 %v656
      %v1066 = vpop.f32.mrf.mxu0
      %v1067 = vadd.f32 0.0, %v1066
      %v1068 = vpop.f32.mrf.mxu0
      %v1069 = vadd.f32 0.0, %v1068
      %1070 = vmatmul.bf16.gmra.mxu0 %v660
      %v1071 = vpop.f32.mrf.mxu0
      %v1072 = vadd.f32 0.0, %v1071
      %v1073 = vpop.f32.mrf.mxu0
      %v1074 = vadd.f32 0.0, %v1073
      %1075 = vmatmul.bf16.gmra.mxu0 %v664
      %v1076 = vpop.f32.mrf.mxu0
      %v1077 = vadd.f32 0.0, %v1076
      %v1078 = vpop.f32.mrf.mxu0
      %v1079 = vadd.f32 0.0, %v1078
      %1080 = vmatmul.bf16.gmra.mxu0 %v668
      %v1081 = vpop.f32.mrf.mxu0
      %v1082 = vadd.f32 0.0, %v1081
      %v1083 = vpop.f32.mrf.mxu0
      %v1084 = vadd.f32 0.0, %v1083
      %1085 = vmatmul.bf16.gmra.mxu0 %v672
      %v1086 = vpop.f32.mrf.mxu0
      %v1087 = vadd.f32 0.0, %v1086
      %v1088 = vpop.f32.mrf.mxu0
      %v1089 = vadd.f32 0.0, %v1088
      %1090 = vmatmul.bf16.gmra.mxu0 %v676
      %v1091 = vpop.f32.mrf.mxu0
      %v1092 = vadd.f32 0.0, %v1091
      %v1093 = vpop.f32.mrf.mxu0
      %v1094 = vadd.f32 0.0, %v1093
      %1095 = vmatmul.bf16.gmra.mxu0 %v680
      %v1096 = vpop.f32.mrf.mxu0
      %v1097 = vadd.f32 0.0, %v1096
      %v1098 = vpop.f32.mrf.mxu0
      %v1099 = vadd.f32 0.0, %v1098
      %1100 = vmatmul.bf16.gmra.mxu0 %v684
      %v1101 = vpop.f32.mrf.mxu0
      %v1102 = vadd.f32 0.0, %v1101
      %v1103 = vpop.f32.mrf.mxu0
      %v1104 = vadd.f32 0.0, %v1103
      %1105 = vmatmul.bf16.gmra.mxu0 %v688
      %v1106 = vpop.f32.mrf.mxu0
      %v1107 = vadd.f32 0.0, %v1106
      %v1108 = vpop.f32.mrf.mxu0
      %v1109 = vadd.f32 0.0, %v1108
      %1110 = vmatmul.bf16.gmra.mxu0 %v692
      %v1111 = vpop.f32.mrf.mxu0
      %v1112 = vadd.f32 0.0, %v1111
      %v1113 = vpop.f32.mrf.mxu0
      %v1114 = vadd.f32 0.0, %v1113
      %1115 = vmatmul.bf16.gmra.mxu0 %v696
      %v1116 = vpop.f32.mrf.mxu0
      %v1117 = vadd.f32 0.0, %v1116
      %v1118 = vpop.f32.mrf.mxu0
      %v1119 = vadd.f32 0.0, %v1118
      %1120 = vmatmul.bf16.gmra.mxu0 %v700
      %v1121 = vpop.f32.mrf.mxu0
      %v1122 = vadd.f32 0.0, %v1121
      %v1123 = vpop.f32.mrf.mxu0
      %v1124 = vadd.f32 0.0, %v1123
      %1125 = vmatmul.bf16.gmra.mxu0 %v704
      %v1126 = vpop.f32.mrf.mxu0
      %v1127 = vadd.f32 0.0, %v1126
      %v1128 = vpop.f32.mrf.mxu0
      %v1129 = vadd.f32 0.0, %v1128
      %1130 = vmatmul.bf16.gmra.mxu0 %v708
      %v1131 = vpop.f32.mrf.mxu0
      %v1132 = vadd.f32 0.0, %v1131
      %v1133 = vpop.f32.mrf.mxu0
      %v1134 = vadd.f32 0.0, %v1133
      %1135 = vmatmul.bf16.gmra.mxu0 %v712
      %v1136 = vpop.f32.mrf.mxu0
      %v1137 = vadd.f32 0.0, %v1136
      %v1138 = vpop.f32.mrf.mxu0
      %v1139 = vadd.f32 0.0, %v1138
      %1140 = vmatmul.bf16.gmra.mxu0 %v716
      %v1141 = vpop.f32.mrf.mxu0
      %v1142 = vadd.f32 0.0, %v1141
      %v1143 = vpop.f32.mrf.mxu0
      %1144 = vdwg.mxu0
      %1145 = vmatpush.bf16.msra.mxu0 %v963
      %1146 = vmatpush.bf16.msra.mxu0 %v962
      %1147 = vmatpush.bf16.msra.mxu0 %v961
      %1148 = vmatpush.bf16.msra.mxu0 %v960
      %1149 = vmatpush.bf16.msra.mxu0 %v959
      %1150 = vmatpush.bf16.msra.mxu0 %v958
      %1151 = vmatpush.bf16.msra.mxu0 %v957
      %1152 = vmatpush.bf16.msra.mxu0 %v956
      %1153 = vmatmul.bf16.gmra.mxu0 %v621
      %v1154 = vpop.f32.mrf.mxu0
      %v1155 = vadd.f32 %v1022, %v1154
      %v1156 = vpop.f32.mrf.mxu0
      %v1157 = vadd.f32 %v1024, %v1156
      %1158 = vmatmul.bf16.gmra.mxu0 %v625
      %v1159 = vpop.f32.mrf.mxu0
      %v1160 = vadd.f32 %v1027, %v1159
      %v1161 = vpop.f32.mrf.mxu0
      %v1162 = vadd.f32 %v1029, %v1161
      %1163 = vmatmul.bf16.gmra.mxu0 %v629
      %v1164 = vpop.f32.mrf.mxu0
      %v1165 = vadd.f32 %v1032, %v1164
      %v1166 = vpop.f32.mrf.mxu0
      %v1167 = vadd.f32 %v1034, %v1166
      %1168 = vmatmul.bf16.gmra.mxu0 %v633
      %v1169 = vpop.f32.mrf.mxu0
      %v1170 = vadd.f32 %v1037, %v1169
      %v1171 = vpop.f32.mrf.mxu0
      %v1172 = vadd.f32 %v1039, %v1171
      %1173 = vmatmul.bf16.gmra.mxu0 %v637
      %v1174 = vpop.f32.mrf.mxu0
      %v1175 = vadd.f32 %v1042, %v1174
      %v1176 = vpop.f32.mrf.mxu0
      %v1177 = vadd.f32 %v1044, %v1176
      %1178 = vmatmul.bf16.gmra.mxu0 %v641
      %v1179 = vpop.f32.mrf.mxu0
      %v1180 = vadd.f32 %v1047, %v1179
      %v1181 = vpop.f32.mrf.mxu0
      %v1182 = vadd.f32 %v1049, %v1181
      %1183 = vmatmul.bf16.gmra.mxu0 %v645
      %v1184 = vpop.f32.mrf.mxu0
      %v1185 = vadd.f32 %v1052, %v1184
      %v1186 = vpop.f32.mrf.mxu0
      %v1187 = vadd.f32 %v1054, %v1186
      %1188 = vmatmul.bf16.gmra.mxu0 %v649
      %v1189 = vpop.f32.mrf.mxu0
      %v1190 = vadd.f32 %v1057, %v1189
      %v1191 = vpop.f32.mrf.mxu0
      %v1192 = vadd.f32 %v1059, %v1191
      %1193 = vmatmul.bf16.gmra.mxu0 %v653
      %v1194 = vpop.f32.mrf.mxu0
      %v1195 = vadd.f32 %v1062, %v1194
      %v1196 = vpop.f32.mrf.mxu0
      %v1197 = vadd.f32 %v1064, %v1196
      %1198 = vmatmul.bf16.gmra.mxu0 %v657
      %v1199 = vpop.f32.mrf.mxu0
      %v1200 = vadd.f32 %v1067, %v1199
      %v1201 = vpop.f32.mrf.mxu0
      %v1202 = vadd.f32 %v1069, %v1201
      %1203 = vmatmul.bf16.gmra.mxu0 %v661
      %v1204 = vpop.f32.mrf.mxu0
      %v1205 = vadd.f32 %v1072, %v1204
      %v1206 = vpop.f32.mrf.mxu0
      %v1207 = vadd.f32 %v1074, %v1206
      %1208 = vmatmul.bf16.gmra.mxu0 %v665
      %v1209 = vpop.f32.mrf.mxu0
      %v1210 = vadd.f32 %v1077, %v1209
      %v1211 = vpop.f32.mrf.mxu0
      %v1212 = vadd.f32 %v1079, %v1211
      %1213 = vmatmul.bf16.gmra.mxu0 %v669
      %v1214 = vpop.f32.mrf.mxu0
      %v1215 = vadd.f32 %v1082, %v1214
      %v1216 = vpop.f32.mrf.mxu0
      %v1217 = vadd.f32 %v1084, %v1216
      %1218 = vmatmul.bf16.gmra.mxu0 %v673
      %v1219 = vpop.f32.mrf.mxu0
      %v1220 = vadd.f32 %v1087, %v1219
      %v1221 = vpop.f32.mrf.mxu0
      %v1222 = vadd.f32 %v1089, %v1221
      %1223 = vmatmul.bf16.gmra.mxu0 %v677
      %v1224 = vpop.f32.mrf.mxu0
      %v1225 = vadd.f32 %v1092, %v1224
      %v1226 = vpop.f32.mrf.mxu0
      %v1227 = vadd.f32 %v1094, %v1226
      %1228 = vmatmul.bf16.gmra.mxu0 %v681
      %v1229 = vpop.f32.mrf.mxu0
      %v1230 = vadd.f32 %v1097, %v1229
      %v1231 = vpop.f32.mrf.mxu0
      %v1232 = vadd.f32 %v1099, %v1231
      %1233 = vmatmul.bf16.gmra.mxu0 %v685
      %v1234 = vpop.f32.mrf.mxu0
      %v1235 = vadd.f32 %v1102, %v1234
      %v1236 = vpop.f32.mrf.mxu0
      %v1237 = vadd.f32 %v1104, %v1236
      %1238 = vmatmul.bf16.gmra.mxu0 %v689
      %v1239 = vpop.f32.mrf.mxu0
      %v1240 = vadd.f32 %v1107, %v1239
      %v1241 = vpop.f32.mrf.mxu0
      %v1242 = vadd.f32 %v1109, %v1241
      %1243 = vmatmul.bf16.gmra.mxu0 %v693
      %v1244 = vpop.f32.mrf.mxu0
      %v1245 = vadd.f32 %v1112, %v1244
      %v1246 = vpop.f32.mrf.mxu0
      %v1247 = vadd.f32 %v1114, %v1246
      %1248 = vmatmul.bf16.gmra.mxu0 %v697
      %v1249 = vpop.f32.mrf.mxu0
      %v1250 = vadd.f32 %v1117, %v1249
      %v1251 = vpop.f32.mrf.mxu0
      %v1252 = vadd.f32 %v1119, %v1251
      %1253 = vmatmul.bf16.gmra.mxu0 %v701
      %v1254 = vpop.f32.mrf.mxu0
      %v1255 = vadd.f32 %v1122, %v1254
      %v1256 = vpop.f32.mrf.mxu0
      %v1257 = vadd.f32 %v1124, %v1256
      %1258 = vmatmul.bf16.gmra.mxu0 %v705
      %v1259 = vpop.f32.mrf.mxu0
      %v1260 = vadd.f32 %v1127, %v1259
      %v1261 = vpop.f32.mrf.mxu0
      %v1262 = vadd.f32 %v1129, %v1261
      %1263 = vmatmul.bf16.gmra.mxu0 %v709
      %v1264 = vpop.f32.mrf.mxu0
      %v1265 = vadd.f32 %v1132, %v1264
      %v1266 = vpop.f32.mrf.mxu0
      %v1267 = vadd.f32 %v1134, %v1266
      %1268 = vmatmul.bf16.gmra.mxu0 %v713
      %v1269 = vpop.f32.mrf.mxu0
      %v1270 = vadd.f32 %v1137, %v1269
      %v1271 = vpop.f32.mrf.mxu0
      %v1272 = vadd.f32 %v1139, %v1271
      %1273 = vmatmul.bf16.gmra.mxu0 %v717
      %v1274 = vpop.f32.mrf.mxu0
      %v1275 = vadd.f32 %v1142, %v1274
      %v1276 = vpop.f32.mrf.mxu0
      %1277 = vdwg.mxu0
      %1278 = vmatpush.bf16.msra.mxu0 %v971
      %1279 = vmatpush.bf16.msra.mxu0 %v970
      %1280 = vmatpush.bf16.msra.mxu0 %v969
      %1281 = vmatpush.bf16.msra.mxu0 %v968
      %1282 = vmatpush.bf16.msra.mxu0 %v967
      %1283 = vmatpush.bf16.msra.mxu0 %v966
      %1284 = vmatpush.bf16.msra.mxu0 %v965
      %1285 = vmatpush.bf16.msra.mxu0 %v964
      %1286 = vmatmul.bf16.gmra.mxu0 %v622
      %v1287 = vpop.f32.mrf.mxu0
      %v1288 = vadd.f32 %v1155, %v1287
      %v1289 = vpop.f32.mrf.mxu0
      %v1290 = vadd.f32 %v1157, %v1289
      %1291 = vmatmul.bf16.gmra.mxu0 %v626
      %v1292 = vpop.f32.mrf.mxu0
      %v1293 = vadd.f32 %v1160, %v1292
      %v1294 = vpop.f32.mrf.mxu0
      %v1295 = vadd.f32 %v1162, %v1294
      %1296 = vmatmul.bf16.gmra.mxu0 %v630
      %v1297 = vpop.f32.mrf.mxu0
      %v1298 = vadd.f32 %v1165, %v1297
      %v1299 = vpop.f32.mrf.mxu0
      %v1300 = vadd.f32 %v1167, %v1299
      %1301 = vmatmul.bf16.gmra.mxu0 %v634
      %v1302 = vpop.f32.mrf.mxu0
      %v1303 = vadd.f32 %v1170, %v1302
      %v1304 = vpop.f32.mrf.mxu0
      %v1305 = vadd.f32 %v1172, %v1304
      %1306 = vmatmul.bf16.gmra.mxu0 %v638
      %v1307 = vpop.f32.mrf.mxu0
      %v1308 = vadd.f32 %v1175, %v1307
      %v1309 = vpop.f32.mrf.mxu0
      %v1310 = vadd.f32 %v1177, %v1309
      %1311 = vmatmul.bf16.gmra.mxu0 %v642
      %v1312 = vpop.f32.mrf.mxu0
      %v1313 = vadd.f32 %v1180, %v1312
      %v1314 = vpop.f32.mrf.mxu0
      %v1315 = vadd.f32 %v1182, %v1314
      %1316 = vmatmul.bf16.gmra.mxu0 %v646
      %v1317 = vpop.f32.mrf.mxu0
      %v1318 = vadd.f32 %v1185, %v1317
      %v1319 = vpop.f32.mrf.mxu0
      %v1320 = vadd.f32 %v1187, %v1319
      %1321 = vmatmul.bf16.gmra.mxu0 %v650
      %v1322 = vpop.f32.mrf.mxu0
      %v1323 = vadd.f32 %v1190, %v1322
      %v1324 = vpop.f32.mrf.mxu0
      %v1325 = vadd.f32 %v1192, %v1324
      %1326 = vmatmul.bf16.gmra.mxu0 %v654
      %v1327 = vpop.f32.mrf.mxu0
      %v1328 = vadd.f32 %v1195, %v1327
      %v1329 = vpop.f32.mrf.mxu0
      %v1330 = vadd.f32 %v1197, %v1329
      %1331 = vmatmul.bf16.gmra.mxu0 %v658
      %v1332 = vpop.f32.mrf.mxu0
      %v1333 = vadd.f32 %v1200, %v1332
      %v1334 = vpop.f32.mrf.mxu0
      %v1335 = vadd.f32 %v1202, %v1334
      %1336 = vmatmul.bf16.gmra.mxu0 %v662
      %v1337 = vpop.f32.mrf.mxu0
      %v1338 = vadd.f32 %v1205, %v1337
      %v1339 = vpop.f32.mrf.mxu0
      %v1340 = vadd.f32 %v1207, %v1339
      %1341 = vmatmul.bf16.gmra.mxu0 %v666
      %v1342 = vpop.f32.mrf.mxu0
      %v1343 = vadd.f32 %v1210, %v1342
      %v1344 = vpop.f32.mrf.mxu0
      %v1345 = vadd.f32 %v1212, %v1344
      %1346 = vmatmul.bf16.gmra.mxu0 %v670
      %v1347 = vpop.f32.mrf.mxu0
      %v1348 = vadd.f32 %v1215, %v1347
      %v1349 = vpop.f32.mrf.mxu0
      %v1350 = vadd.f32 %v1217, %v1349
      %1351 = vmatmul.bf16.gmra.mxu0 %v674
      %v1352 = vpop.f32.mrf.mxu0
      %v1353 = vadd.f32 %v1220, %v1352
      %v1354 = vpop.f32.mrf.mxu0
      %v1355 = vadd.f32 %v1222, %v1354
      %1356 = vmatmul.bf16.gmra.mxu0 %v678
      %v1357 = vpop.f32.mrf.mxu0
      %v1358 = vadd.f32 %v1225, %v1357
      %v1359 = vpop.f32.mrf.mxu0
      %v1360 = vadd.f32 %v1227, %v1359
      %1361 = vmatmul.bf16.gmra.mxu0 %v682
      %v1362 = vpop.f32.mrf.mxu0
      %v1363 = vadd.f32 %v1230, %v1362
      %v1364 = vpop.f32.mrf.mxu0
      %v1365 = vadd.f32 %v1232, %v1364
      %1366 = vmatmul.bf16.gmra.mxu0 %v686
      %v1367 = vpop.f32.mrf.mxu0
      %v1368 = vadd.f32 %v1235, %v1367
      %v1369 = vpop.f32.mrf.mxu0
      %v1370 = vadd.f32 %v1237, %v1369
      %1371 = vmatmul.bf16.gmra.mxu0 %v690
      %v1372 = vpop.f32.mrf.mxu0
      %v1373 = vadd.f32 %v1240, %v1372
      %v1374 = vpop.f32.mrf.mxu0
      %v1375 = vadd.f32 %v1242, %v1374
      %1376 = vmatmul.bf16.gmra.mxu0 %v694
      %v1377 = vpop.f32.mrf.mxu0
      %v1378 = vadd.f32 %v1245, %v1377
      %v1379 = vpop.f32.mrf.mxu0
      %v1380 = vadd.f32 %v1247, %v1379
      %1381 = vmatmul.bf16.gmra.mxu0 %v698
      %v1382 = vpop.f32.mrf.mxu0
      %v1383 = vadd.f32 %v1250, %v1382
      %v1384 = vpop.f32.mrf.mxu0
      %v1385 = vadd.f32 %v1252, %v1384
      %1386 = vmatmul.bf16.gmra.mxu0 %v702
      %v1387 = vpop.f32.mrf.mxu0
      %v1388 = vadd.f32 %v1255, %v1387
      %v1389 = vpop.f32.mrf.mxu0
      %v1390 = vadd.f32 %v1257, %v1389
      %1391 = vmatmul.bf16.gmra.mxu0 %v706
      %v1392 = vpop.f32.mrf.mxu0
      %v1393 = vadd.f32 %v1260, %v1392
      %v1394 = vpop.f32.mrf.mxu0
      %v1395 = vadd.f32 %v1262, %v1394
      %1396 = vmatmul.bf16.gmra.mxu0 %v710
      %v1397 = vpop.f32.mrf.mxu0
      %v1398 = vadd.f32 %v1265, %v1397
      %v1399 = vpop.f32.mrf.mxu0
      %v1400 = vadd.f32 %v1267, %v1399
      %1401 = vmatmul.bf16.gmra.mxu0 %v714
      %v1402 = vpop.f32.mrf.mxu0
      %v1403 = vadd.f32 %v1270, %v1402
      %v1404 = vpop.f32.mrf.mxu0
      %v1405 = vadd.f32 %v1272, %v1404
      %1406 = vmatmul.bf16.gmra.mxu0 %v718
      %v1407 = vpop.f32.mrf.mxu0
      %v1408 = vadd.f32 %v1275, %v1407
      %v1409 = vpop.f32.mrf.mxu0
      %1410 = vdwg.mxu0
      %1411 = vmatpush.bf16.msra.mxu0 %v979
      %1412 = vmatpush.bf16.msra.mxu0 %v978
      %1413 = vmatpush.bf16.msra.mxu0 %v977
      %1414 = vmatpush.bf16.msra.mxu0 %v976
      %1415 = vmatpush.bf16.msra.mxu0 %v975
      %1416 = vmatpush.bf16.msra.mxu0 %v974
      %1417 = vmatpush.bf16.msra.mxu0 %v973
      %1418 = vmatpush.bf16.msra.mxu0 %v972
      %1419 = vmatmul.bf16.gmra.mxu0 %v623
      %v1420 = vpop.f32.mrf.mxu0
      %v1421 = vadd.f32 %v1288, %v1420
      %v1422 = vpop.f32.mrf.mxu0
      %v1423 = vadd.f32 %v1290, %v1422
      %1424 = vmatmul.bf16.gmra.mxu0 %v627
      %v1425 = vpop.f32.mrf.mxu0
      %v1426 = vadd.f32 %v1293, %v1425
      %v1427 = vpop.f32.mrf.mxu0
      %v1428 = vadd.f32 %v1295, %v1427
      %1429 = vmatmul.bf16.gmra.mxu0 %v631
      %v1430 = vpop.f32.mrf.mxu0
      %v1431 = vadd.f32 %v1298, %v1430
      %v1432 = vpop.f32.mrf.mxu0
      %v1433 = vadd.f32 %v1300, %v1432
      %1434 = vmatmul.bf16.gmra.mxu0 %v635
      %v1435 = vpop.f32.mrf.mxu0
      %v1436 = vadd.f32 %v1303, %v1435
      %v1437 = vpop.f32.mrf.mxu0
      %v1438 = vadd.f32 %v1305, %v1437
      %1439 = vmatmul.bf16.gmra.mxu0 %v639
      %v1440 = vpop.f32.mrf.mxu0
      %v1441 = vadd.f32 %v1308, %v1440
      %v1442 = vpop.f32.mrf.mxu0
      %v1443 = vadd.f32 %v1310, %v1442
      %1444 = vmatmul.bf16.gmra.mxu0 %v643
      %v1445 = vpop.f32.mrf.mxu0
      %v1446 = vadd.f32 %v1313, %v1445
      %v1447 = vpop.f32.mrf.mxu0
      %v1448 = vadd.f32 %v1315, %v1447
      %1449 = vmatmul.bf16.gmra.mxu0 %v647
      %v1450 = vpop.f32.mrf.mxu0
      %v1451 = vadd.f32 %v1318, %v1450
      %v1452 = vpop.f32.mrf.mxu0
      %v1453 = vadd.f32 %v1320, %v1452
      %1454 = vmatmul.bf16.gmra.mxu0 %v651
      %v1455 = vpop.f32.mrf.mxu0
      %v1456 = vadd.f32 %v1323, %v1455
      %v1457 = vpop.f32.mrf.mxu0
      %v1458 = vadd.f32 %v1325, %v1457
      %1459 = vmatmul.bf16.gmra.mxu0 %v655
      %v1460 = vpop.f32.mrf.mxu0
      %v1461 = vadd.f32 %v1328, %v1460
      %v1462 = vpop.f32.mrf.mxu0
      %v1463 = vadd.f32 %v1330, %v1462
      %1464 = vmatmul.bf16.gmra.mxu0 %v659
      %v1465 = vpop.f32.mrf.mxu0
      %v1466 = vadd.f32 %v1333, %v1465
      %v1467 = vpop.f32.mrf.mxu0
      %v1468 = vadd.f32 %v1335, %v1467
      %1469 = vmatmul.bf16.gmra.mxu0 %v663
      %v1470 = vpop.f32.mrf.mxu0
      %v1471 = vadd.f32 %v1338, %v1470
      %v1472 = vpop.f32.mrf.mxu0
      %v1473 = vadd.f32 %v1340, %v1472
      %1474 = vmatmul.bf16.gmra.mxu0 %v667
      %v1475 = vpop.f32.mrf.mxu0
      %v1476 = vadd.f32 %v1343, %v1475
      %v1477 = vpop.f32.mrf.mxu0
      %v1478 = vadd.f32 %v1345, %v1477
      %1479 = vmatmul.bf16.gmra.mxu0 %v671
      %v1480 = vpop.f32.mrf.mxu0
      %v1481 = vadd.f32 %v1348, %v1480
      %v1482 = vpop.f32.mrf.mxu0
      %v1483 = vadd.f32 %v1350, %v1482
      %1484 = vmatmul.bf16.gmra.mxu0 %v675
      %v1485 = vpop.f32.mrf.mxu0
      %v1486 = vadd.f32 %v1353, %v1485
      %v1487 = vpop.f32.mrf.mxu0
      %v1488 = vadd.f32 %v1355, %v1487
      %1489 = vmatmul.bf16.gmra.mxu0 %v679
      %v1490 = vpop.f32.mrf.mxu0
      %v1491 = vadd.f32 %v1358, %v1490
      %v1492 = vpop.f32.mrf.mxu0
      %v1493 = vadd.f32 %v1360, %v1492
      %1494 = vmatmul.bf16.gmra.mxu0 %v683
      %v1495 = vpop.f32.mrf.mxu0
      %v1496 = vadd.f32 %v1363, %v1495
      %v1497 = vpop.f32.mrf.mxu0
      %v1498 = vadd.f32 %v1365, %v1497
      %1499 = vmatmul.bf16.gmra.mxu0 %v687
      %v1500 = vpop.f32.mrf.mxu0
      %v1501 = vadd.f32 %v1368, %v1500
      %v1502 = vpop.f32.mrf.mxu0
      %v1503 = vadd.f32 %v1370, %v1502
      %1504 = vmatmul.bf16.gmra.mxu0 %v691
      %v1505 = vpop.f32.mrf.mxu0
      %v1506 = vadd.f32 %v1373, %v1505
      %v1507 = vpop.f32.mrf.mxu0
      %v1508 = vadd.f32 %v1375, %v1507
      %1509 = vmatmul.bf16.gmra.mxu0 %v695
      %v1510 = vpop.f32.mrf.mxu0
      %v1511 = vadd.f32 %v1378, %v1510
      %v1512 = vpop.f32.mrf.mxu0
      %v1513 = vadd.f32 %v1380, %v1512
      %1514 = vmatmul.bf16.gmra.mxu0 %v699
      %v1515 = vpop.f32.mrf.mxu0
      %v1516 = vadd.f32 %v1383, %v1515
      %v1517 = vpop.f32.mrf.mxu0
      %v1518 = vadd.f32 %v1385, %v1517
      %1519 = vmatmul.bf16.gmra.mxu0 %v703
      %v1520 = vpop.f32.mrf.mxu0
      %v1521 = vadd.f32 %v1388, %v1520
      %v1522 = vpop.f32.mrf.mxu0
      %v1523 = vadd.f32 %v1390, %v1522
      %1524 = vmatmul.bf16.gmra.mxu0 %v707
      %v1525 = vpop.f32.mrf.mxu0
      %v1526 = vadd.f32 %v1393, %v1525
      %v1527 = vpop.f32.mrf.mxu0
      %v1528 = vadd.f32 %v1395, %v1527
      %1529 = vmatmul.bf16.gmra.mxu0 %v711
      %v1530 = vpop.f32.mrf.mxu0
      %v1531 = vadd.f32 %v1398, %v1530
      %v1532 = vpop.f32.mrf.mxu0
      %v1533 = vadd.f32 %v1400, %v1532
      %1534 = vmatmul.bf16.gmra.mxu0 %v715
      %v1535 = vpop.f32.mrf.mxu0
      %v1536 = vadd.f32 %v1403, %v1535
      %v1537 = vpop.f32.mrf.mxu0
      %v1538 = vadd.f32 %v1405, %v1537
      %1539 = vmatmul.bf16.gmra.mxu0 %v719
      %v1540 = vpop.f32.mrf.mxu0
      %v1541 = vadd.f32 %v1408, %v1540
      %v1542 = vpop.f32.mrf.mxu0
      %1543 = vdwg.mxu0
      %v1544 = vtanh.pop %v1421
      %v1545 = vtanh.pop %v1423
      %v1546 = vtanh.pop %v1426
      %v1547 = vtanh.pop %v1428
      %v1548 = vtanh.pop %v1431
      %v1549 = vtanh.pop %v1433
      %v1550 = vtanh.pop %v1436
      %v1551 = vtanh.pop %v1438
      %v1552 = vtanh.pop %v1441
      %v1553 = vtanh.pop %v1443
      %v1554 = vtanh.pop %v1446
      %v1555 = vtanh.pop %v1448
      %v1556 = vtanh.pop %v1451
      %v1557 = vtanh.pop %v1453
      %v1558 = vtanh.pop %v1456
      %v1559 = vtanh.pop %v1458
      %v1560 = vtanh.pop %v1461
      %v1561 = vtanh.pop %v1463
      %v1562 = vtanh.pop %v1466
      %v1563 = vtanh.pop %v1468
      %v1564 = vtanh.pop %v1471
      %v1565 = vtanh.pop %v1473
      %v1566 = vtanh.pop %v1476
      %v1567 = vtanh.pop %v1478
      %v1568 = vtanh.pop %v1481
      %v1569 = vtanh.pop %v1483
      %v1570 = vtanh.pop %v1486
      %v1571 = vtanh.pop %v1488
      %v1572 = vtanh.pop %v1491
      %v1573 = vtanh.pop %v1493
      %v1574 = vtanh.pop %v1496
      %v1575 = vtanh.pop %v1498
      %v1576 = vtanh.pop %v1501
      %v1577 = vtanh.pop %v1503
      %v1578 = vtanh.pop %v1506
      %v1579 = vtanh.pop %v1508
      %v1580 = vtanh.pop %v1511
      %v1581 = vtanh.pop %v1513
      %v1582 = vtanh.pop %v1516
      %v1583 = vtanh.pop %v1518
      %v1584 = vtanh.pop %v1521
      %v1585 = vtanh.pop %v1523
      %v1586 = vtanh.pop %v1526
      %v1587 = vtanh.pop %v1528
      %v1588 = vtanh.pop %v1531
      %v1589 = vtanh.pop %v1533
      %v1590 = vtanh.pop %v1536
      %v1591 = vtanh.pop %v1538
      %v1592 = vtanh.pop %v1541
      %1593 = vst [vmem:[%s163] sm:$0xff] %v1544
      %1594 = vst [vmem:[%s163 + $0x8] sm:$0xff] %v1545
      %1595 = vst [vmem:[%s163 + $0x10] sm:$0xff] %v1546
      %1596 = vst [vmem:[%s163 + $0x18] sm:$0xff] %v1547
      %1597 = vst [vmem:[%s163 + $0x20] sm:$0xff] %v1548
      %1598 = vst [vmem:[%s163 + $0x28] sm:$0xff] %v1549
      %1599 = vst [vmem:[%s163 + $0x30] sm:$0xff] %v1550
      %1600 = vst [vmem:[%s163 + $0x38] sm:$0xff] %v1551
      %1601 = vst [vmem:[%s163 + $0x40] sm:$0xff] %v1552
      %1602 = vst [vmem:[%s163 + $0x48] sm:$0xff] %v1553
      %1603 = vst [vmem:[%s163 + $0x50] sm:$0xff] %v1554
      %1604 = vst [vmem:[%s163 + $0x58] sm:$0xff] %v1555
      %1605 = vst [vmem:[%s163 + $0x60] sm:$0xff] %v1556
      %1606 = vst [vmem:[%s163 + $0x68] sm:$0xff] %v1557
      %1607 = vst [vmem:[%s163 + $0x70] sm:$0xff] %v1558
      %1608 = vst [vmem:[%s163 + $0x78] sm:$0xff] %v1559
      %1609 = vst [vmem:[%s163 + $0x80] sm:$0xff] %v1560
      %1610 = vst [vmem:[%s163 + $0x88] sm:$0xff] %v1561
      %1611 = vst [vmem:[%s163 + $0x90] sm:$0xff] %v1562
      %1612 = vst [vmem:[%s163 + $0x98] sm:$0xff] %v1563
      %1613 = vst [vmem:[%s163 + $0xa0] sm:$0xff] %v1564
      %1614 = vst [vmem:[%s163 + $0xa8] sm:$0xff] %v1565
      %1615 = vst [vmem:[%s163 + $0xb0] sm:$0xff] %v1566
      %1616 = vst [vmem:[%s163 + $0xb8] sm:$0xff] %v1567
      %1617 = vst [vmem:[%s163 + $0xc0] sm:$0xff] %v1568
      %1618 = vst [vmem:[%s163 + $0xc8] sm:$0xff] %v1569
      %1619 = vst [vmem:[%s163 + $0xd0] sm:$0xff] %v1570
      %1620 = vst [vmem:[%s163 + $0xd8] sm:$0xff] %v1571
      %1621 = vst [vmem:[%s163 + $0xe0] sm:$0xff] %v1572
      %1622 = vst [vmem:[%s163 + $0xe8] sm:$0xff] %v1573
      %1623 = vst [vmem:[%s163 + $0xf0] sm:$0xff] %v1574
      %1624 = vst [vmem:[%s163 + $0xf8] sm:$0xff] %v1575
      %1625 = vst [vmem:[%s163 + $0x100] sm:$0xff] %v1576
      %1626 = vst [vmem:[%s163 + $0x108] sm:$0xff] %v1577
      %1627 = vst [vmem:[%s163 + $0x110] sm:$0xff] %v1578
      %1628 = vst [vmem:[%s163 + $0x118] sm:$0xff] %v1579
      %1629 = vst [vmem:[%s163 + $0x120] sm:$0xff] %v1580
      %1630 = vst [vmem:[%s163 + $0x128] sm:$0xff] %v1581
      %1631 = vst [vmem:[%s163 + $0x130] sm:$0xff] %v1582
      %1632 = vst [vmem:[%s163 + $0x138] sm:$0xff] %v1583
      %1633 = vst [vmem:[%s163 + $0x140] sm:$0xff] %v1584
      %1634 = vst [vmem:[%s163 + $0x148] sm:$0xff] %v1585
      %1635 = vst [vmem:[%s163 + $0x150] sm:$0xff] %v1586
      %1636 = vst [vmem:[%s163 + $0x158] sm:$0xff] %v1587
      %1637 = vst [vmem:[%s163 + $0x160] sm:$0xff] %v1588
      %1638 = vst [vmem:[%s163 + $0x168] sm:$0xff] %v1589
      %1639 = vst [vmem:[%s163 + $0x170] sm:$0xff] %v1590
      %1640 = vst [vmem:[%s163 + $0x178] sm:$0xff] %v1591
      %1641 = vst [vmem:[%s163 + $0x180] sm:$0xff] %v1592
      %p1642 = scmp.lt.s32.totalorder %s13, 3
      %s1643 = scalar_select %p1642, %s13, 3
      %s1644 = smul.addr %s1643, 49
      %s1645 = smul.addr %s1644, 8
      %s1646 = scalar_lea.vmem %s2, %s1645
      // Predicated region
      $region29: #{generator_forward.5} parent=27 // pred_check
        %p1647 = pneg %p83
      $region30: #{generator_forward.5} parent=27 // pred_check_branch
        %1649 = sbr.rel (%p1647) target = $region32
      $region31: #{generator_forward.5} parent=27 // pred_region
        _
      $region32: #{generator_forward.5} parent=27 // pred_fallthru
        _
    $region28: #{generator_forward.5} parent=5 // pred_fallthru
      _
    %p1650 = scmp.le.s32.totalorder 2, %s8
    // Predicated region
    $region33: #{generator_forward.5} parent=5 // pred_check
      %p1651 = pneg %p1650
    $region34: #{generator_forward.5} parent=5 // pred_check_branch
      %1653 = sbr.rel (%p1651) target = $region36
    $region35: #{generator_forward.5} parent=5 // pred_region
      %s1654 = ssub.s32 %s8, 2
      // Predicated region
      $region37: #{generator_forward.5} parent=35 // pred_check
        %p1655 = pneg %p89
      $region38: #{generator_forward.5} parent=35 // pred_check_branch
        %1657 = sbr.rel (%p1655) target = $region40
      $region39: #{generator_forward.5} parent=35 // pred_region
        %p1658 = scmp.lt.s32.totalorder %s14, 3
        %s1659 = scalar_select %p1658, %s14, 3
        %s1660 = smul.addr %s1659, 49
        %s1661 = smul.addr %s1660, 8
        %s1662 = scalar_lea.vmem %s2, %s1661
      $region40: #{generator_forward.5} parent=35 // pred_fallthru
        _
    $region36: #{generator_forward.5} parent=5 // pred_fallthru
      _
  $region6: #{generator_forward.5} parent=0 // loop_footer
    %s12 = sadd.s32 1, %s8
  $region7: #{generator_forward.5} parent=0 // loop_footer_branch
    %7 = sbr.rel target = $region3
  $region8: #{generator_forward.5} parent=0 // loop_exit
    _

</llo_original>
